<compile_context>
chip_gen: v7x
topology: tpu7x:2x2x1
jax: 0.10.0
libtpu: 0.0.40
codegen_flags: <defaults>
</compile_context>

<pallas_src>
import functools

import numpy as np
import jax
import jax.numpy as jnp
from jax.experimental import pallas as pl
from jax.experimental.pallas import tpu as pltpu


# --------------------------------------------------------------------------
# Host-side constant builders (data-independent, numpy float64 for accuracy).
# --------------------------------------------------------------------------
def _round_up(n, m=128):
    return ((n + m - 1) // m) * m


def _rfft_mats(n):
    """x (., n) @ cr -> Re(rfft(x));  x @ ci -> Im(rfft(x))."""
    f_bins = n // 2 + 1
    l = np.arange(n, dtype=np.float64)[:, None]
    f = np.arange(f_bins, dtype=np.float64)[None, :]
    ang = 2.0 * np.pi * l * f / n
    return np.cos(ang), -np.sin(ang)                       # (n, F), (n, F)


def _irfft_mats(n):
    """re @ ar + im @ ai == irfft(re + i*im, n) (imag of DC/Nyquist ignored)."""
    f_bins = n // 2 + 1
    f = np.arange(f_bins, dtype=np.float64)[:, None]
    l = np.arange(n, dtype=np.float64)[None, :]
    ang = 2.0 * np.pi * f * l / n
    c = np.full((f_bins, 1), 2.0)
    c[0, 0] = 1.0
    if n % 2 == 0:
        c[-1, 0] = 1.0
    return c * np.cos(ang) / n, -c * np.sin(ang) / n       # (F, n), (F, n)


def _freq_band_masks(num_experts, f_bins, bound_params_np):
    """Replicates FrequencyBands.forward (data-independent -> host numpy)."""
    raw = 1.0 / (1.0 + np.exp(-np.asarray(bound_params_np, np.float64)))
    all_bounds = np.concatenate([[0.0], raw, [1.0]])
    sorted_b = np.sort(all_bounds)
    indices = (sorted_b * (f_bins - 1)).astype(np.int64)
    masks = np.zeros((num_experts, f_bins), dtype=np.float64)
    for i in range(num_experts):
        start = int(indices[i])
        end = int(indices[i + 1]) if i < num_experts - 1 else f_bins
        if end > start:
            masks[i, start:end] = 1.0
    return masks


def _stack_complex_padded(w_re, w_im, in_pad, out_pad):
    """ComplexLinear (out,in) weights -> padded (2*in_pad, 2*out_pad) matrix
    acting on padded [re | im] rows:
        [zr|zi] @ S = [zr@Wr.T - zi@Wi.T | zr@Wi.T + zi@Wr.T]
    pad rows / columns are zero."""
    o, i = w_re.shape
    s = np.zeros((2 * in_pad, 2 * out_pad), dtype=np.float64)
    s[:i, :o] = w_re.T
    s[in_pad:in_pad + i, :o] = -w_im.T
    s[:i, out_pad:out_pad + o] = w_im.T
    s[in_pad:in_pad + i, out_pad:out_pad + o] = w_re.T
    return s


def _pad_vec_stacked(b_re, b_im, out_pad):
    v = np.zeros(2 * out_pad, dtype=np.float64)
    v[:b_re.shape[0]] = b_re
    v[out_pad:out_pad + b_im.shape[0]] = b_im
    return v


def _pick_row_tile(batch, channels, target_rows=1024, sublane_mult=8, min_grid=2):
    """Rows per grid tile: whole batches, sublane-aligned, <= target, and
    (when possible) at least `min_grid` grid steps so both v7x TCs get work."""
    m = batch * channels
    cands = []
    for bt in range(1, batch + 1):
        if batch % bt:
            continue
        tm = bt * channels
        if tm % sublane_mult == 0 and tm <= target_rows:
            cands.append(tm)
    if not cands:
        return m          # fall back to the full array (block == array dim is legal)
    good = [t for t in cands if m // t >= min_grid]
    return max(good) if good else max(cands)


def _vmem_limit_bytes():
    """~75% of physical VMEM (per-TC), capped; safe 48 MiB fallback (v7x)."""
    cap = None
    try:
        info = pltpu.get_tpu_info()
        cap = getattr(info, "vmem_capacity_bytes", None)
    except Exception:
        cap = None
    if not cap:
        return 48 * 1024 * 1024
    return int(min(cap * 3 // 4, 100 * 1024 * 1024))


def _const_spec(a, single_buffer):
    """Full-shape block, constant block index -> VMEM-resident constant.
    Single-buffered when supported (it is only DMA'd once anyway)."""
    nd = a.ndim
    idx = lambda i, _nd=nd: (0,) * _nd
    if single_buffer and hasattr(pl, "Buffered"):
        try:
            return pl.BlockSpec(a.shape, idx, pipeline_mode=pl.Buffered(1))
        except TypeError:
            pass
    return pl.BlockSpec(a.shape, idx)


# --------------------------------------------------------------------------
# The Pallas kernel (one row-tile per grid step; weights VMEM-resident).
# --------------------------------------------------------------------------
def _freqmoe_kernel(x_ref, fftL_ref, ifftL_ref,
                    gmean_ref, gexp_ref, gw_ref, gb_ref,
                    ew1_ref, eb1_ref, ew2_ref, eb2_ref,
                    ra1_ref, rb1_ref, rout_ref, rbout_ref,
                    y_ref, *, f_pad, l_pad, n_experts, n_refine):
    def mm(a, b):
        # cast the activation to the weight dtype at the MXU boundary,
        # always accumulate in f32.
        return jnp.dot(a.astype(b.dtype), b, preferred_element_type=jnp.float32)

    two_f = 2 * f_pad
    x = x_ref[...]                                    # (TM, L_pad) f32

    # ---- rfft via one real-DFT matmul (stacked, padded [re | im]) ----
    xf = mm(x, fftL_ref[...])                         # (TM, 2*Fp_in)

    # ---- gate: mean(|Xf|) over channels -> linear -> softmax -> rows ----
    xr = xf[:, :f_pad]                                # 128-aligned lane slices
    xi = xf[:, f_pad:]
    mag = jnp.sqrt(xr * xr + xi * xi)                 # (TM, Fp_in)
    mag_b = mm(gmean_ref[...], mag)                   # (TB, Fp_in)  channel mean
    logits = mm(mag_b, gw_ref[...]) + gb_ref[...]     # (TB, N)
    logits = logits - jnp.max(logits, axis=-1, keepdims=True)
    eg = jnp.exp(logits)
    gate = eg / jnp.sum(eg, axis=-1, keepdims=True)   # (TB, N)
    gate_rows = mm(gexp_ref[...], gate)               # (TM, N)  broadcast per row

    # ---- experts: band masks folded into W1; both layers fused across experts.
    #      Gate applied per expert as a lane-aligned VPU scale (no gsel matmul).
    h_all = jnp.maximum(mm(xf, ew1_ref[...]) + eb1_ref[...], 0.0)   # (TM, N*2Fp)
    parts = []
    for i in range(n_experts):
        gi = gate_rows[:, i:i + 1]                                   # (TM, 1)
        parts.append(h_all[:, i * two_f:(i + 1) * two_f] * gi)
    h_scaled = parts[0] if n_experts == 1 else jnp.concatenate(parts, axis=-1)
    comb = mm(h_scaled, ew2_ref[...]) + mm(gate_rows, eb2_ref[...])  # (TM, 2Fp)

    # ---- irfft(n=L) and residual ----
    x_recon = mm(comb, ifftL_ref[...])                # (TM, L_pad)
    residual = x - x_recon

    # ---- residual refinement: rfft folded into layer-1, irfft folded into a
    #      single fused [reconstruction | forecast] output matmul per block ----
    y_pred = jnp.zeros(y_ref.shape, jnp.float32)
    for k in range(n_refine):                         # short static loop (K small)
        # TODO(synk): nn.Dropout is treated as identity (eval / inference mode).
        hk = jnp.maximum(mm(residual, ra1_ref[k]) + rb1_ref[k], 0.0)   # (TM, 2Fp_out)
        corr = mm(hk, rout_ref[k]) + rbout_ref[k]                      # (TM, Lp+Hp)
        residual = residual - corr[:, :l_pad]
        y_pred = y_pred + corr[:, l_pad:]
    y_ref[...] = y_pred.astype(y_ref.dtype)


# --------------------------------------------------------------------------
# Parameters (deterministic, shapes match the PyTorch module).
# --------------------------------------------------------------------------
def init_params(key, num_experts, lookback, horizon, num_refine_blocks):
    f_in = lookback // 2 + 1
    f_out = (lookback + horizon) // 2 + 1
    keys = jax.random.split(key, 10)

    def rnd(k, shape):
        return 0.1 * jax.random.normal(k, shape, jnp.float32)

    return {
        # experts: ComplexLinear(F,F) -> complex ReLU -> ComplexLinear(F,F)
        'ew1_re': rnd(keys[0], (num_experts, f_in, f_in)),   # (out, in)
        'ew1_im': rnd(keys[1], (num_experts, f_in, f_in)),
        'eb1_re': jnp.zeros((num_experts, f_in), jnp.float32),
        'eb1_im': jnp.zeros((num_experts, f_in), jnp.float32),
        'ew2_re': rnd(keys[2], (num_experts, f_in, f_in)),
        'ew2_im': rnd(keys[3], (num_experts, f_in, f_in)),
        'eb2_re': jnp.zeros((num_experts, f_in), jnp.float32),
        'eb2_im': jnp.zeros((num_experts, f_in), jnp.float32),
        # gate: nn.Linear(F_in, N)
        'gate_w': rnd(keys[4], (num_experts, f_in)),
        'gate_b': rnd(keys[5], (num_experts,)),
        # FrequencyBands
        'bound_params': jnp.zeros((num_experts - 1,), jnp.float32),
        # refine: up1 ComplexLinear(F_in, F_out), up2 ComplexLinear(F_out, F_out)
        'rw1_re': rnd(keys[6], (num_refine_blocks, f_out, f_in)),
        'rw1_im': rnd(keys[7], (num_refine_blocks, f_out, f_in)),
        'rb1_re': jnp.zeros((num_refine_blocks, f_out), jnp.float32),
        'rb1_im': jnp.zeros((num_refine_blocks, f_out), jnp.float32),
        'rw2_re': rnd(keys[8], (num_refine_blocks, f_out, f_out)),
        'rw2_im': rnd(keys[9], (num_refine_blocks, f_out, f_out)),
        'rb2_re': jnp.zeros((num_refine_blocks, f_out), jnp.float32),
        'rb2_im': jnp.zeros((num_refine_blocks, f_out), jnp.float32),
    }


# --------------------------------------------------------------------------
# Wrapper: host-side weight fusion + padding + tiled pallas_call.
# NOTE: constants are built from concrete parameter values with numpy, so this
# wrapper is inference-only (not traceable / differentiable w.r.t. params).
# --------------------------------------------------------------------------
def freqmoe_forward(x, params, num_experts, lookback, horizon, num_refine_blocks,
                    row_tile=None, compute_dtype=jnp.float32,
                    dft_dtype=jnp.float32):
    B, C, L = x.shape
    assert L == lookback
    H = horizon
    f_in = L // 2 + 1
    f_out = (L + H) // 2 + 1
    M = B * C
    N = num_experts
    K = num_refine_blocks

    # ---- lane padding (128-aligned frequency / time / horizon axes) ----
    Fp_in = _round_up(f_in)
    Fp_out = _round_up(f_out)
    L_pad = _round_up(L)
    H_pad = _round_up(H)

    # ---- row tiling: whole batches per tile (gate needs full channel groups) ----
    sublane = 16 if compute_dtype == jnp.bfloat16 else 8
    TM = _pick_row_tile(B, C, sublane_mult=sublane) if row_tile is None else row_tile
    assert TM % C == 0 and M % TM == 0, "row tile must hold whole batches"
    TB = TM // C

    # ---- DFT / inverse-DFT stacked, padded matrices ----
    cr, ci = _rfft_mats(L)                                   # (L, F_in)
    fftL = np.zeros((L_pad, 2 * Fp_in))
    fftL[:L, :f_in] = cr
    fftL[:L, Fp_in:Fp_in + f_in] = ci

    ilr, ili = _irfft_mats(L)                                # (F_in, L)
    ifftL = np.zeros((2 * Fp_in, L_pad))
    ifftL[:f_in, :L] = ilr
    ifftL[Fp_in:Fp_in + f_in, :L] = ili

    ihr, ihi = _irfft_mats(L + H)                            # (F_out, L+H)
    irec = np.zeros((2 * Fp_out, L_pad))
    irec[:f_out, :L] = ihr[:, :L]
    irec[Fp_out:Fp_out + f_out, :L] = ihi[:, :L]
    ifct = np.zeros((2 * Fp_out, H_pad))
    ifct[:f_out, :H] = ihr[:, L:]
    ifct[Fp_out:Fp_out + f_out, :H] = ihi[:, L:]

    p64 = {k: np.asarray(v, np.float64) for k, v in params.items()}
    masks = _freq_band_masks(N, f_in, p64['bound_params'])   # (N, F_in)

    # ---- experts: mask-fold layer 1, batch both layers across experts ----
    ew1_blocks, eb1_parts, ew2_blocks, eb2_rows = [], [], [], []
    for i in range(N):
        s1 = _stack_complex_padded(p64['ew1_re'][i], p64['ew1_im'][i], Fp_in, Fp_in)
        mrow = np.zeros(2 * Fp_in)
        mrow[:f_in] = masks[i]
        mrow[Fp_in:Fp_in + f_in] = masks[i]
        ew1_blocks.append(mrow[:, None] * s1)                # fold band mask
        eb1_parts.append(_pad_vec_stacked(p64['eb1_re'][i], p64['eb1_im'][i], Fp_in))
        ew2_blocks.append(_stack_complex_padded(p64['ew2_re'][i], p64['ew2_im'][i],
                                                Fp_in, Fp_in))
        eb2_rows.append(_pad_vec_stacked(p64['eb2_re'][i], p64['eb2_im'][i], Fp_in))
    ew1 = np.concatenate(ew1_blocks, axis=1)                 # (2Fp, N*2Fp)
    eb1 = np.concatenate(eb1_parts)[None, :]                 # (1, N*2Fp)
    ew2 = np.concatenate(ew2_blocks, axis=0)                 # (N*2Fp, 2Fp)
    eb2 = np.stack(eb2_rows, axis=0)                         # (N, 2Fp)

    # ---- gate ----
    gw = np.zeros((Fp_in, N))
    gw[:f_in, :] = p64['gate_w'].T
    gb = p64['gate_b'][None, :]                              # (1, N)

    # ---- per-tile channel-mean / gate-broadcast constants (tiny, O(TM*TB)) ----
    gmean_t = np.zeros((TB, TM))
    gexp_t = np.zeros((TM, TB))
    for r in range(TM):
        b = r // C
        gmean_t[b, r] = 1.0 / C
        gexp_t[r, b] = 1.0

    # ---- refine blocks: rfft folded into layer 1; layer 2 + split irfft fused
    #      into ONE wide output matmul [reconstruction | forecast] ----
    ra1 = np.zeros((K, L_pad, 2 * Fp_out))
    rb1 = np.zeros((K, 1, 2 * Fp_out))
    rout = np.zeros((K, 2 * Fp_out, L_pad + H_pad))
    rbout = np.zeros((K, 1, L_pad + H_pad))
    for k in range(K):
        s1 = _stack_complex_padded(p64['rw1_re'][k], p64['rw1_im'][k], Fp_in, Fp_out)
        b1 = _pad_vec_stacked(p64['rb1_re'][k], p64['rb1_im'][k], Fp_out)
        s2 = _stack_complex_padded(p64['rw2_re'][k], p64['rw2_im'][k], Fp_out, Fp_out)
        b2 = _pad_vec_stacked(p64['rb2_re'][k], p64['rb2_im'][k], Fp_out)
        ra1[k] = fftL @ s1
        rb1[k, 0] = b1
        rout[k, :, :L_pad] = s2 @ irec
        rout[k, :, L_pad:] = s2 @ ifct
        rbout[k, 0, :L_pad] = b2 @ irec
        rbout[k, 0, L_pad:] = b2 @ ifct

    f32 = jnp.float32
    cd = compute_dtype   # big weight matrices (bf16 on v6e/v7x for MXU rate)
    dd = dft_dtype       # DFT matrices (f32 default; bf16 knob for v5e)
    consts = [
        jnp.asarray(fftL, dd), jnp.asarray(ifftL, dd),
        jnp.asarray(gmean_t, f32), jnp.asarray(gexp_t, f32),
        jnp.asarray(gw, f32), jnp.asarray(gb, f32),
        jnp.asarray(ew1, cd), jnp.asarray(eb1, f32),
        jnp.asarray(ew2, cd), jnp.asarray(eb2, f32),
        jnp.asarray(ra1, cd), jnp.asarray(rb1, f32),
        jnp.asarray(rout, cd), jnp.asarray(rbout, f32),
    ]

    x_rows = x.reshape(M, L).astype(jnp.float32)
    if L_pad != L:
        x_rows = jnp.pad(x_rows, ((0, 0), (0, L_pad - L)))

    kernel = functools.partial(_freqmoe_kernel, f_pad=Fp_in, l_pad=L_pad,
                               n_experts=N, n_refine=K)
    vmem_limit = _vmem_limit_bytes()

    def run(single_buffer):
        in_specs = ([pl.BlockSpec((TM, L_pad), lambda i: (i, 0))]
                    + [_const_spec(a, single_buffer) for a in consts])
        return pl.pallas_call(
            kernel,
            out_shape=jax.ShapeDtypeStruct((M, H_pad), jnp.float32),
            grid=(M // TM,),
            in_specs=in_specs,
            out_specs=pl.BlockSpec((TM, H_pad), lambda i: (i, 0)),
            compiler_params=pltpu.CompilerParams(
                dimension_semantics=("parallel",),
                vmem_limit_bytes=vmem_limit),
        )(x_rows, *consts)

    try:
        out = run(True)
    except Exception:
        # Fall back to default (double-buffered) constants if single-buffering
        # is rejected by this jax/Mosaic version.
        out = run(False)
    return out[:, :H].reshape(B, C, H)


# --------------------------------------------------------------------------
# Pure-JAX reference (uses jnp.fft) for correctness checking.
# --------------------------------------------------------------------------
def reference_forward(x, params, num_experts, lookback, horizon, num_refine_blocks):
    B, C, L = x.shape
    H = horizon
    f_in = L // 2 + 1
    masks = jnp.asarray(
        _freq_band_masks(num_experts, f_in, np.asarray(params['bound_params'])),
        jnp.float32)

    def clin(zr, zi, wre, wim, bre, bim):
        or_ = zr @ wre.T - zi @ wim.T + bre
        oi_ = zr @ wim.T + zi @ wre.T + bim
        return or_, oi_

    Xf = jnp.fft.rfft(x, axis=-1)
    xr, xi = jnp.real(Xf), jnp.imag(Xf)
    mag = jnp.mean(jnp.sqrt(xr * xr + xi * xi), axis=1)          # (B, F)
    logits = mag @ params['gate_w'].T + params['gate_b']
    gate = jax.nn.softmax(logits, axis=-1)                       # (B, N)

    comb_r = jnp.zeros_like(xr)
    comb_i = jnp.zeros_like(xi)
    for i in range(num_experts):
        m = masks[i][None, None, :]
        hr, hi = clin(xr * m, xi * m, params['ew1_re'][i], params['ew1_im'][i],
                      params['eb1_re'][i], params['eb1_im'][i])
        hr = jnp.maximum(hr, 0.0)
        hi = jnp.maximum(hi, 0.0)
        yr, yi = clin(hr, hi, params['ew2_re'][i], params['ew2_im'][i],
                      params['eb2_re'][i], params['eb2_im'][i])
        gi = gate[:, i][:, None, None]
        comb_r = comb_r + yr * gi
        comb_i = comb_i + yi * gi
    x_recon = jnp.fft.irfft(jax.lax.complex(comb_r, comb_i), n=L, axis=-1)
    residual = x - x_recon
    y_pred = jnp.zeros((B, C, H), x.dtype)
    for k in range(num_refine_blocks):
        Rf = jnp.fft.rfft(residual, axis=-1)
        rr, ri = jnp.real(Rf), jnp.imag(Rf)
        hr, hi = clin(rr, ri, params['rw1_re'][k], params['rw1_im'][k],
                      params['rb1_re'][k], params['rb1_im'][k])
        hr = jnp.maximum(hr, 0.0)
        hi = jnp.maximum(hi, 0.0)
        ur, ui = clin(hr, hi, params['rw2_re'][k], params['rw2_im'][k],
                      params['rb2_re'][k], params['rb2_im'][k])
        corr = jnp.fft.irfft(jax.lax.complex(ur, ui), n=L + H, axis=-1)
        residual = residual - corr[..., :L]
        y_pred = y_pred + corr[..., L:]
    return y_pred


if __name__ == "__main__":
    B, C, L, H = 4, 4, 16, 8
    N_EXPERTS, K_REFINE = 2, 3

    key = jax.random.PRNGKey(0)
    kx, kp = jax.random.split(key)
    x = jax.random.normal(kx, (B, C, L), jnp.float32)
    params = init_params(kp, N_EXPERTS, L, H, K_REFINE)

    # f32 path: auto row tile picks TM=8 -> grid=(2,) (exercises pipelined
    # row tiling and keeps both v7x TensorCores busy).
    y = jax.block_until_ready(
        freqmoe_forward(x, params, N_EXPERTS, L, H, K_REFINE))
    y_ref = jax.block_until_ready(
        reference_forward(x, params, N_EXPERTS, L, H, K_REFINE))

    assert y.shape == (B, C, H)
    np.testing.assert_allclose(np.asarray(y), np.asarray(y_ref),
                               rtol=2e-3, atol=2e-3)

    # bf16-weight path (v6e/v7x MXU rate; coarse sanity check only —
    # validate accuracy at representative shapes before enabling by default).
    y_bf16 = jax.block_until_ready(
        freqmoe_forward(x, params, N_EXPERTS, L, H, K_REFINE,
                        compute_dtype=jnp.bfloat16))
    assert y_bf16.shape == (B, C, H)
    assert np.all(np.isfinite(np.asarray(y_bf16)))

    print("KERNEL_OK")
</pallas_src>

<mosaic_0001>
module attributes {stable_mosaic.version = 11 : i64} {
  func.func @_freqmoe_kernel(%arg0: i32, %arg1: memref<8x128xf32, #tpu.memory_space<vmem>>, %arg2: memref<128x256xf32, #tpu.memory_space<vmem>>, %arg3: memref<256x128xf32, #tpu.memory_space<vmem>>, %arg4: memref<2x8xf32, #tpu.memory_space<vmem>>, %arg5: memref<8x2xf32, #tpu.memory_space<vmem>>, %arg6: memref<128x2xf32, #tpu.memory_space<vmem>>, %arg7: memref<1x2xf32, #tpu.memory_space<vmem>>, %arg8: memref<256x512xf32, #tpu.memory_space<vmem>>, %arg9: memref<1x512xf32, #tpu.memory_space<vmem>>, %arg10: memref<512x256xf32, #tpu.memory_space<vmem>>, %arg11: memref<2x256xf32, #tpu.memory_space<vmem>>, %arg12: memref<3x128x256xf32, #tpu.memory_space<vmem>>, %arg13: memref<3x1x256xf32, #tpu.memory_space<vmem>>, %arg14: memref<3x256x256xf32, #tpu.memory_space<vmem>>, %arg15: memref<3x1x256xf32, #tpu.memory_space<vmem>>, %arg16: memref<8x128xf32, #tpu.memory_space<vmem>>) attributes {dimension_semantics = [#tpu.dimension_semantics<parallel>], iteration_bounds = array<i64: 2>, scalar_prefetch = 0 : i64, scratch_operands = 0 : i64, tpu.core_type = #tpu.core_type<tc>, window_params = [{transform_indices = @transform_0, window_bounds = array<i64: 8, 128>}, {pipeline_mode = #tpu.pipeline_mode<synchronous>, transform_indices = @transform_1, window_bounds = array<i64: 128, 256>}, {pipeline_mode = #tpu.pipeline_mode<synchronous>, transform_indices = @transform_2, window_bounds = array<i64: 256, 128>}, {pipeline_mode = #tpu.pipeline_mode<synchronous>, transform_indices = @transform_3, window_bounds = array<i64: 2, 8>}, {pipeline_mode = #tpu.pipeline_mode<synchronous>, transform_indices = @transform_4, window_bounds = array<i64: 8, 2>}, {pipeline_mode = #tpu.pipeline_mode<synchronous>, transform_indices = @transform_5, window_bounds = array<i64: 128, 2>}, {pipeline_mode = #tpu.pipeline_mode<synchronous>, transform_indices = @transform_6, window_bounds = array<i64: 1, 2>}, {pipeline_mode = #tpu.pipeline_mode<synchronous>, transform_indices = @transform_7, window_bounds = array<i64: 256, 512>}, {pipeline_mode = #tpu.pipeline_mode<synchronous>, transform_indices = @transform_8, window_bounds = array<i64: 1, 512>}, {pipeline_mode = #tpu.pipeline_mode<synchronous>, transform_indices = @transform_9, window_bounds = array<i64: 512, 256>}, {pipeline_mode = #tpu.pipeline_mode<synchronous>, transform_indices = @transform_10, window_bounds = array<i64: 2, 256>}, {pipeline_mode = #tpu.pipeline_mode<synchronous>, transform_indices = @transform_11, window_bounds = array<i64: 3, 128, 256>}, {pipeline_mode = #tpu.pipeline_mode<synchronous>, transform_indices = @transform_12, window_bounds = array<i64: 3, 1, 256>}, {pipeline_mode = #tpu.pipeline_mode<synchronous>, transform_indices = @transform_13, window_bounds = array<i64: 3, 256, 256>}, {pipeline_mode = #tpu.pipeline_mode<synchronous>, transform_indices = @transform_14, window_bounds = array<i64: 3, 1, 256>}, {transform_indices = @transform_15, window_bounds = array<i64: 8, 128>}]} {
    %c0 = arith.constant 0 : index
    %c0_0 = arith.constant 0 : index
    %0 = vector.load %arg1[%c0, %c0_0] : memref<8x128xf32, #tpu.memory_space<vmem>>, vector<8x128xf32>
    %c0_1 = arith.constant 0 : index
    %c0_2 = arith.constant 0 : index
    %1 = vector.load %arg2[%c0_1, %c0_2] : memref<128x256xf32, #tpu.memory_space<vmem>>, vector<128x256xf32>
    %cst = arith.constant dense<0.000000e+00> : vector<8x256xf32>
    %2 = tpu.matmul %0, %1, %cst {dimension_numbers = #tpu.dot_dimension_numbers<[1], [0], [0], [1], [0, 0, 1, 1], [], []>} : vector<8x128xf32>, vector<128x256xf32>, vector<8x256xf32> -> vector<8x256xf32>
    %3 = vector.extract_strided_slice %2 {offsets = [0, 0], sizes = [8, 128], strides = [1, 1]} : vector<8x256xf32> to vector<8x128xf32>
    %4 = vector.extract_strided_slice %2 {offsets = [0, 128], sizes = [8, 128], strides = [1, 1]} : vector<8x256xf32> to vector<8x128xf32>
    %5 = arith.mulf %3, %3 : vector<8x128xf32>
    %6 = arith.mulf %4, %4 : vector<8x128xf32>
    %7 = arith.addf %5, %6 : vector<8x128xf32>
    %8 = math.sqrt %7 : vector<8x128xf32>
    %c0_3 = arith.constant 0 : index
    %c0_4 = arith.constant 0 : index
    %9 = vector.load %arg4[%c0_3, %c0_4] : memref<2x8xf32, #tpu.memory_space<vmem>>, vector<2x8xf32>
    %cst_5 = arith.constant dense<0.000000e+00> : vector<2x128xf32>
    %10 = tpu.matmul %9, %8, %cst_5 {dimension_numbers = #tpu.dot_dimension_numbers<[1], [0], [0], [1], [0, 0, 1, 1], [], []>} : vector<2x8xf32>, vector<8x128xf32>, vector<2x128xf32> -> vector<2x128xf32>
    %c0_6 = arith.constant 0 : index
    %c0_7 = arith.constant 0 : index
    %11 = vector.load %arg6[%c0_6, %c0_7] : memref<128x2xf32, #tpu.memory_space<vmem>>, vector<128x2xf32>
    %cst_8 = arith.constant dense<0.000000e+00> : vector<2x2xf32>
    %12 = tpu.matmul %10, %11, %cst_8 {dimension_numbers = #tpu.dot_dimension_numbers<[1], [0], [0], [1], [0, 0, 1, 1], [], []>} : vector<2x128xf32>, vector<128x2xf32>, vector<2x2xf32> -> vector<2x2xf32>
    %c0_9 = arith.constant 0 : index
    %c0_10 = arith.constant 0 : index
    %13 = vector.load %arg7[%c0_9, %c0_10] : memref<1x2xf32, #tpu.memory_space<vmem>>, vector<1x2xf32>
    %14 = vector.broadcast %13 : vector<1x2xf32> to vector<2x2xf32>
    %15 = arith.addf %12, %14 : vector<2x2xf32>
    %cst_11 = arith.constant dense<0xFF800000> : vector<2xf32>
    %16 = vector.multi_reduction <maximumf>, %15, %cst_11 [1] : vector<2x2xf32> to vector<2xf32>
    %17 = vector.shape_cast %16 : vector<2xf32> to vector<2x1xf32>
    %18 = vector.broadcast %17 : vector<2x1xf32> to vector<2x2xf32>
    %19 = arith.subf %15, %18 : vector<2x2xf32>
    %20 = math.exp %19 : vector<2x2xf32>
    %cst_12 = arith.constant dense<0.000000e+00> : vector<2xf32>
    %21 = vector.multi_reduction <add>, %20, %cst_12 [1] : vector<2x2xf32> to vector<2xf32>
    %22 = vector.shape_cast %21 : vector<2xf32> to vector<2x1xf32>
    %23 = vector.broadcast %22 : vector<2x1xf32> to vector<2x2xf32>
    %24 = arith.divf %20, %23 : vector<2x2xf32>
    %c0_13 = arith.constant 0 : index
    %c0_14 = arith.constant 0 : index
    %25 = vector.load %arg5[%c0_13, %c0_14] : memref<8x2xf32, #tpu.memory_space<vmem>>, vector<8x2xf32>
    %cst_15 = arith.constant dense<0.000000e+00> : vector<8x2xf32>
    %26 = tpu.matmul %25, %24, %cst_15 {dimension_numbers = #tpu.dot_dimension_numbers<[1], [0], [0], [1], [0, 0, 1, 1], [], []>} : vector<8x2xf32>, vector<2x2xf32>, vector<8x2xf32> -> vector<8x2xf32>
    %c0_16 = arith.constant 0 : index
    %c0_17 = arith.constant 0 : index
    %27 = vector.load %arg8[%c0_16, %c0_17] : memref<256x512xf32, #tpu.memory_space<vmem>>, vector<256x512xf32>
    %cst_18 = arith.constant dense<0.000000e+00> : vector<8x512xf32>
    %28 = tpu.matmul %2, %27, %cst_18 {dimension_numbers = #tpu.dot_dimension_numbers<[1], [0], [0], [1], [0, 0, 1, 1], [], []>} : vector<8x256xf32>, vector<256x512xf32>, vector<8x512xf32> -> vector<8x512xf32>
    %c0_19 = arith.constant 0 : index
    %c0_20 = arith.constant 0 : index
    %29 = vector.load %arg9[%c0_19, %c0_20] : memref<1x512xf32, #tpu.memory_space<vmem>>, vector<1x512xf32>
    %30 = vector.broadcast %29 : vector<1x512xf32> to vector<8x512xf32>
    %31 = arith.addf %28, %30 : vector<8x512xf32>
    %cst_21 = arith.constant 0.000000e+00 : f32
    %32 = vector.broadcast %cst_21 : f32 to vector<8x512xf32>
    %33 = arith.maximumf %31, %32 : vector<8x512xf32>
    %34 = vector.extract_strided_slice %26 {offsets = [0, 0], sizes = [8, 1], strides = [1, 1]} : vector<8x2xf32> to vector<8x1xf32>
    %35 = vector.extract_strided_slice %33 {offsets = [0, 0], sizes = [8, 256], strides = [1, 1]} : vector<8x512xf32> to vector<8x256xf32>
    %36 = vector.broadcast %34 : vector<8x1xf32> to vector<8x256xf32>
    %37 = arith.mulf %35, %36 : vector<8x256xf32>
    %38 = vector.extract_strided_slice %26 {offsets = [0, 1], sizes = [8, 1], strides = [1, 1]} : vector<8x2xf32> to vector<8x1xf32>
    %39 = vector.extract_strided_slice %33 {offsets = [0, 256], sizes = [8, 256], strides = [1, 1]} : vector<8x512xf32> to vector<8x256xf32>
    %40 = vector.broadcast %38 : vector<8x1xf32> to vector<8x256xf32>
    %41 = arith.mulf %39, %40 : vector<8x256xf32>
    %42 = tpu.concatenate %37, %41 in 1 : vector<8x256xf32>, vector<8x256xf32> -> vector<8x512xf32>
    %c0_22 = arith.constant 0 : index
    %c0_23 = arith.constant 0 : index
    %43 = vector.load %arg10[%c0_22, %c0_23] : memref<512x256xf32, #tpu.memory_space<vmem>>, vector<512x256xf32>
    %cst_24 = arith.constant dense<0.000000e+00> : vector<8x256xf32>
    %44 = tpu.matmul %42, %43, %cst_24 {dimension_numbers = #tpu.dot_dimension_numbers<[1], [0], [0], [1], [0, 0, 1, 1], [], []>} : vector<8x512xf32>, vector<512x256xf32>, vector<8x256xf32> -> vector<8x256xf32>
    %c0_25 = arith.constant 0 : index
    %c0_26 = arith.constant 0 : index
    %45 = vector.load %arg11[%c0_25, %c0_26] : memref<2x256xf32, #tpu.memory_space<vmem>>, vector<2x256xf32>
    %cst_27 = arith.constant dense<0.000000e+00> : vector<8x256xf32>
    %46 = tpu.matmul %26, %45, %cst_27 {dimension_numbers = #tpu.dot_dimension_numbers<[1], [0], [0], [1], [0, 0, 1, 1], [], []>} : vector<8x2xf32>, vector<2x256xf32>, vector<8x256xf32> -> vector<8x256xf32>
    %47 = arith.addf %44, %46 : vector<8x256xf32>
    %c0_28 = arith.constant 0 : index
    %c0_29 = arith.constant 0 : index
    %48 = vector.load %arg3[%c0_28, %c0_29] : memref<256x128xf32, #tpu.memory_space<vmem>>, vector<256x128xf32>
    %cst_30 = arith.constant dense<0.000000e+00> : vector<8x128xf32>
    %49 = tpu.matmul %47, %48, %cst_30 {dimension_numbers = #tpu.dot_dimension_numbers<[1], [0], [0], [1], [0, 0, 1, 1], [], []>} : vector<8x256xf32>, vector<256x128xf32>, vector<8x128xf32> -> vector<8x128xf32>
    %50 = arith.subf %0, %49 : vector<8x128xf32>
    %cst_31 = arith.constant 0.000000e+00 : f32
    %51 = vector.broadcast %cst_31 : f32 to vector<8x128xf32>
    %c0_32 = arith.constant 0 : index
    %c0_33 = arith.constant 0 : index
    %c0_34 = arith.constant 0 : index
    %52 = vector.load %arg12[%c0_32, %c0_33, %c0_34] : memref<3x128x256xf32, #tpu.memory_space<vmem>>, vector<1x128x256xf32>
    %53 = vector.shape_cast %52 : vector<1x128x256xf32> to vector<128x256xf32>
    %cst_35 = arith.constant dense<0.000000e+00> : vector<8x256xf32>
    %54 = tpu.matmul %50, %53, %cst_35 {dimension_numbers = #tpu.dot_dimension_numbers<[1], [0], [0], [1], [0, 0, 1, 1], [], []>} : vector<8x128xf32>, vector<128x256xf32>, vector<8x256xf32> -> vector<8x256xf32>
    %c0_36 = arith.constant 0 : index
    %c0_37 = arith.constant 0 : index
    %c0_38 = arith.constant 0 : index
    %55 = vector.load %arg13[%c0_36, %c0_37, %c0_38] : memref<3x1x256xf32, #tpu.memory_space<vmem>>, vector<1x1x256xf32>
    %56 = vector.shape_cast %55 : vector<1x1x256xf32> to vector<1x256xf32>
    %57 = vector.broadcast %56 : vector<1x256xf32> to vector<8x256xf32>
    %58 = arith.addf %54, %57 : vector<8x256xf32>
    %cst_39 = arith.constant 0.000000e+00 : f32
    %59 = vector.broadcast %cst_39 : f32 to vector<8x256xf32>
    %60 = arith.maximumf %58, %59 : vector<8x256xf32>
    %c0_40 = arith.constant 0 : index
    %c0_41 = arith.constant 0 : index
    %c0_42 = arith.constant 0 : index
    %61 = vector.load %arg14[%c0_40, %c0_41, %c0_42] : memref<3x256x256xf32, #tpu.memory_space<vmem>>, vector<1x256x256xf32>
    %62 = vector.shape_cast %61 : vector<1x256x256xf32> to vector<256x256xf32>
    %cst_43 = arith.constant dense<0.000000e+00> : vector<8x256xf32>
    %63 = tpu.matmul %60, %62, %cst_43 {dimension_numbers = #tpu.dot_dimension_numbers<[1], [0], [0], [1], [0, 0, 1, 1], [], []>} : vector<8x256xf32>, vector<256x256xf32>, vector<8x256xf32> -> vector<8x256xf32>
    %c0_44 = arith.constant 0 : index
    %c0_45 = arith.constant 0 : index
    %c0_46 = arith.constant 0 : index
    %64 = vector.load %arg15[%c0_44, %c0_45, %c0_46] : memref<3x1x256xf32, #tpu.memory_space<vmem>>, vector<1x1x256xf32>
    %65 = vector.shape_cast %64 : vector<1x1x256xf32> to vector<1x256xf32>
    %66 = vector.broadcast %65 : vector<1x256xf32> to vector<8x256xf32>
    %67 = arith.addf %63, %66 : vector<8x256xf32>
    %68 = vector.extract_strided_slice %67 {offsets = [0, 0], sizes = [8, 128], strides = [1, 1]} : vector<8x256xf32> to vector<8x128xf32>
    %69 = arith.subf %50, %68 : vector<8x128xf32>
    %70 = vector.extract_strided_slice %67 {offsets = [0, 128], sizes = [8, 128], strides = [1, 1]} : vector<8x256xf32> to vector<8x128xf32>
    %71 = arith.addf %51, %70 : vector<8x128xf32>
    %c1 = arith.constant 1 : index
    %c0_47 = arith.constant 0 : index
    %c0_48 = arith.constant 0 : index
    %72 = vector.load %arg12[%c1, %c0_47, %c0_48] : memref<3x128x256xf32, #tpu.memory_space<vmem>>, vector<1x128x256xf32>
    %73 = vector.shape_cast %72 : vector<1x128x256xf32> to vector<128x256xf32>
    %cst_49 = arith.constant dense<0.000000e+00> : vector<8x256xf32>
    %74 = tpu.matmul %69, %73, %cst_49 {dimension_numbers = #tpu.dot_dimension_numbers<[1], [0], [0], [1], [0, 0, 1, 1], [], []>} : vector<8x128xf32>, vector<128x256xf32>, vector<8x256xf32> -> vector<8x256xf32>
    %c1_50 = arith.constant 1 : index
    %c0_51 = arith.constant 0 : index
    %c0_52 = arith.constant 0 : index
    %75 = vector.load %arg13[%c1_50, %c0_51, %c0_52] : memref<3x1x256xf32, #tpu.memory_space<vmem>>, vector<1x1x256xf32>
    %76 = vector.shape_cast %75 : vector<1x1x256xf32> to vector<1x256xf32>
    %77 = vector.broadcast %76 : vector<1x256xf32> to vector<8x256xf32>
    %78 = arith.addf %74, %77 : vector<8x256xf32>
    %cst_53 = arith.constant 0.000000e+00 : f32
    %79 = vector.broadcast %cst_53 : f32 to vector<8x256xf32>
    %80 = arith.maximumf %78, %79 : vector<8x256xf32>
    %c1_54 = arith.constant 1 : index
    %c0_55 = arith.constant 0 : index
    %c0_56 = arith.constant 0 : index
    %81 = vector.load %arg14[%c1_54, %c0_55, %c0_56] : memref<3x256x256xf32, #tpu.memory_space<vmem>>, vector<1x256x256xf32>
    %82 = vector.shape_cast %81 : vector<1x256x256xf32> to vector<256x256xf32>
    %cst_57 = arith.constant dense<0.000000e+00> : vector<8x256xf32>
    %83 = tpu.matmul %80, %82, %cst_57 {dimension_numbers = #tpu.dot_dimension_numbers<[1], [0], [0], [1], [0, 0, 1, 1], [], []>} : vector<8x256xf32>, vector<256x256xf32>, vector<8x256xf32> -> vector<8x256xf32>
    %c1_58 = arith.constant 1 : index
    %c0_59 = arith.constant 0 : index
    %c0_60 = arith.constant 0 : index
    %84 = vector.load %arg15[%c1_58, %c0_59, %c0_60] : memref<3x1x256xf32, #tpu.memory_space<vmem>>, vector<1x1x256xf32>
    %85 = vector.shape_cast %84 : vector<1x1x256xf32> to vector<1x256xf32>
    %86 = vector.broadcast %85 : vector<1x256xf32> to vector<8x256xf32>
    %87 = arith.addf %83, %86 : vector<8x256xf32>
    %88 = vector.extract_strided_slice %87 {offsets = [0, 0], sizes = [8, 128], strides = [1, 1]} : vector<8x256xf32> to vector<8x128xf32>
    %89 = arith.subf %69, %88 : vector<8x128xf32>
    %90 = vector.extract_strided_slice %87 {offsets = [0, 128], sizes = [8, 128], strides = [1, 1]} : vector<8x256xf32> to vector<8x128xf32>
    %91 = arith.addf %71, %90 : vector<8x128xf32>
    %c2 = arith.constant 2 : index
    %c0_61 = arith.constant 0 : index
    %c0_62 = arith.constant 0 : index
    %92 = vector.load %arg12[%c2, %c0_61, %c0_62] : memref<3x128x256xf32, #tpu.memory_space<vmem>>, vector<1x128x256xf32>
    %93 = vector.shape_cast %92 : vector<1x128x256xf32> to vector<128x256xf32>
    %cst_63 = arith.constant dense<0.000000e+00> : vector<8x256xf32>
    %94 = tpu.matmul %89, %93, %cst_63 {dimension_numbers = #tpu.dot_dimension_numbers<[1], [0], [0], [1], [0, 0, 1, 1], [], []>} : vector<8x128xf32>, vector<128x256xf32>, vector<8x256xf32> -> vector<8x256xf32>
    %c2_64 = arith.constant 2 : index
    %c0_65 = arith.constant 0 : index
    %c0_66 = arith.constant 0 : index
    %95 = vector.load %arg13[%c2_64, %c0_65, %c0_66] : memref<3x1x256xf32, #tpu.memory_space<vmem>>, vector<1x1x256xf32>
    %96 = vector.shape_cast %95 : vector<1x1x256xf32> to vector<1x256xf32>
    %97 = vector.broadcast %96 : vector<1x256xf32> to vector<8x256xf32>
    %98 = arith.addf %94, %97 : vector<8x256xf32>
    %cst_67 = arith.constant 0.000000e+00 : f32
    %99 = vector.broadcast %cst_67 : f32 to vector<8x256xf32>
    %100 = arith.maximumf %98, %99 : vector<8x256xf32>
    %c2_68 = arith.constant 2 : index
    %c0_69 = arith.constant 0 : index
    %c0_70 = arith.constant 0 : index
    %101 = vector.load %arg14[%c2_68, %c0_69, %c0_70] : memref<3x256x256xf32, #tpu.memory_space<vmem>>, vector<1x256x256xf32>
    %102 = vector.shape_cast %101 : vector<1x256x256xf32> to vector<256x256xf32>
    %cst_71 = arith.constant dense<0.000000e+00> : vector<8x256xf32>
    %103 = tpu.matmul %100, %102, %cst_71 {dimension_numbers = #tpu.dot_dimension_numbers<[1], [0], [0], [1], [0, 0, 1, 1], [], []>} : vector<8x256xf32>, vector<256x256xf32>, vector<8x256xf32> -> vector<8x256xf32>
    %c2_72 = arith.constant 2 : index
    %c0_73 = arith.constant 0 : index
    %c0_74 = arith.constant 0 : index
    %104 = vector.load %arg15[%c2_72, %c0_73, %c0_74] : memref<3x1x256xf32, #tpu.memory_space<vmem>>, vector<1x1x256xf32>
    %105 = vector.shape_cast %104 : vector<1x1x256xf32> to vector<1x256xf32>
    %106 = vector.broadcast %105 : vector<1x256xf32> to vector<8x256xf32>
    %107 = arith.addf %103, %106 : vector<8x256xf32>
    %108 = vector.extract_strided_slice %107 {offsets = [0, 128], sizes = [8, 128], strides = [1, 1]} : vector<8x256xf32> to vector<8x128xf32>
    %109 = arith.addf %91, %108 : vector<8x128xf32>
    %c0_75 = arith.constant 0 : index
    %c0_76 = arith.constant 0 : index
    %110 = vector.load %arg16[%c0_75, %c0_76] : memref<8x128xf32, #tpu.memory_space<vmem>>, vector<8x128xf32>
    tpu.vector_store %arg16[%c0_75, %c0_76], %109 {strides = array<i32>} : memref<8x128xf32, #tpu.memory_space<vmem>>, vector<8x128xf32>,
    return
  }
  func.func @transform_0(%arg0: i32) -> (i32, i32) {
    %c0_i32 = arith.constant 0 : i32
    %c0_i32_0 = arith.constant 0 : i32
    return %arg0, %c0_i32 : i32, i32
  }
  func.func @transform_1(%arg0: i32) -> (i32, i32) {
    %c0_i32 = arith.constant 0 : i32
    %c0_i32_0 = arith.constant 0 : i32
    %c0_i32_1 = arith.constant 0 : i32
    return %c0_i32, %c0_i32_0 : i32, i32
  }
  func.func @transform_2(%arg0: i32) -> (i32, i32) {
    %c0_i32 = arith.constant 0 : i32
    %c0_i32_0 = arith.constant 0 : i32
    %c0_i32_1 = arith.constant 0 : i32
    return %c0_i32, %c0_i32_0 : i32, i32
  }
  func.func @transform_3(%arg0: i32) -> (i32, i32) {
    %c0_i32 = arith.constant 0 : i32
    %c0_i32_0 = arith.constant 0 : i32
    %c0_i32_1 = arith.constant 0 : i32
    return %c0_i32, %c0_i32_0 : i32, i32
  }
  func.func @transform_4(%arg0: i32) -> (i32, i32) {
    %c0_i32 = arith.constant 0 : i32
    %c0_i32_0 = arith.constant 0 : i32
    %c0_i32_1 = arith.constant 0 : i32
    return %c0_i32, %c0_i32_0 : i32, i32
  }
  func.func @transform_5(%arg0: i32) -> (i32, i32) {
    %c0_i32 = arith.constant 0 : i32
    %c0_i32_0 = arith.constant 0 : i32
    %c0_i32_1 = arith.constant 0 : i32
    return %c0_i32, %c0_i32_0 : i32, i32
  }
  func.func @transform_6(%arg0: i32) -> (i32, i32) {
    %c0_i32 = arith.constant 0 : i32
    %c0_i32_0 = arith.constant 0 : i32
    %c0_i32_1 = arith.constant 0 : i32
    return %c0_i32, %c0_i32_0 : i32, i32
  }
  func.func @transform_7(%arg0: i32) -> (i32, i32) {
    %c0_i32 = arith.constant 0 : i32
    %c0_i32_0 = arith.constant 0 : i32
    %c0_i32_1 = arith.constant 0 : i32
    return %c0_i32, %c0_i32_0 : i32, i32
  }
  func.func @transform_8(%arg0: i32) -> (i32, i32) {
    %c0_i32 = arith.constant 0 : i32
    %c0_i32_0 = arith.constant 0 : i32
    %c0_i32_1 = arith.constant 0 : i32
    return %c0_i32, %c0_i32_0 : i32, i32
  }
  func.func @transform_9(%arg0: i32) -> (i32, i32) {
    %c0_i32 = arith.constant 0 : i32
    %c0_i32_0 = arith.constant 0 : i32
    %c0_i32_1 = arith.constant 0 : i32
    return %c0_i32, %c0_i32_0 : i32, i32
  }
  func.func @transform_10(%arg0: i32) -> (i32, i32) {
    %c0_i32 = arith.constant 0 : i32
    %c0_i32_0 = arith.constant 0 : i32
    %c0_i32_1 = arith.constant 0 : i32
    return %c0_i32, %c0_i32_0 : i32, i32
  }
  func.func @transform_11(%arg0: i32) -> (i32, i32, i32) {
    %c0_i32 = arith.constant 0 : i32
    %c0_i32_0 = arith.constant 0 : i32
    %c0_i32_1 = arith.constant 0 : i32
    %c0_i32_2 = arith.constant 0 : i32
    return %c0_i32, %c0_i32_0, %c0_i32_1 : i32, i32, i32
  }
  func.func @transform_12(%arg0: i32) -> (i32, i32, i32) {
    %c0_i32 = arith.constant 0 : i32
    %c0_i32_0 = arith.constant 0 : i32
    %c0_i32_1 = arith.constant 0 : i32
    %c0_i32_2 = arith.constant 0 : i32
    return %c0_i32, %c0_i32_0, %c0_i32_1 : i32, i32, i32
  }
  func.func @transform_13(%arg0: i32) -> (i32, i32, i32) {
    %c0_i32 = arith.constant 0 : i32
    %c0_i32_0 = arith.constant 0 : i32
    %c0_i32_1 = arith.constant 0 : i32
    %c0_i32_2 = arith.constant 0 : i32
    return %c0_i32, %c0_i32_0, %c0_i32_1 : i32, i32, i32
  }
  func.func @transform_14(%arg0: i32) -> (i32, i32, i32) {
    %c0_i32 = arith.constant 0 : i32
    %c0_i32_0 = arith.constant 0 : i32
    %c0_i32_1 = arith.constant 0 : i32
    %c0_i32_2 = arith.constant 0 : i32
    return %c0_i32, %c0_i32_0, %c0_i32_1 : i32, i32, i32
  }
  func.func @transform_15(%arg0: i32) -> (i32, i32) {
    %c0_i32 = arith.constant 0 : i32
    %c0_i32_0 = arith.constant 0 : i32
    return %arg0, %c0_i32 : i32, i32
  }
}

module attributes {stable_mosaic.version = 11 : i64} {
  func.func @_freqmoe_kernel(%arg0: i32, %arg1: memref<8x128xf32, #tpu.memory_space<vmem>>, %arg2: memref<128x256xf32, #tpu.memory_space<vmem>>, %arg3: memref<256x128xf32, #tpu.memory_space<vmem>>, %arg4: memref<2x8xf32, #tpu.memory_space<vmem>>, %arg5: memref<8x2xf32, #tpu.memory_space<vmem>>, %arg6: memref<128x2xf32, #tpu.memory_space<vmem>>, %arg7: memref<1x2xf32, #tpu.memory_space<vmem>>, %arg8: memref<256x512xf32, #tpu.memory_space<vmem>>, %arg9: memref<1x512xf32, #tpu.memory_space<vmem>>, %arg10: memref<512x256xf32, #tpu.memory_space<vmem>>, %arg11: memref<2x256xf32, #tpu.memory_space<vmem>>, %arg12: memref<3x128x256xf32, #tpu.memory_space<vmem>>, %arg13: memref<3x1x256xf32, #tpu.memory_space<vmem>>, %arg14: memref<3x256x256xf32, #tpu.memory_space<vmem>>, %arg15: memref<3x1x256xf32, #tpu.memory_space<vmem>>, %arg16: memref<8x128xf32, #tpu.memory_space<vmem>>) attributes {dimension_semantics = [#tpu.dimension_semantics<parallel>], iteration_bounds = array<i64: 2>, scalar_prefetch = 0 : i64, scratch_operands = 0 : i64, tpu.core_type = #tpu.core_type<tc>, window_params = [{transform_indices = @transform_0, window_bounds = array<i64: 8, 128>}, {pipeline_mode = #tpu.pipeline_mode<synchronous>, transform_indices = @transform_1, window_bounds = array<i64: 128, 256>}, {pipeline_mode = #tpu.pipeline_mode<synchronous>, transform_indices = @transform_2, window_bounds = array<i64: 256, 128>}, {pipeline_mode = #tpu.pipeline_mode<synchronous>, transform_indices = @transform_3, window_bounds = array<i64: 2, 8>}, {pipeline_mode = #tpu.pipeline_mode<synchronous>, transform_indices = @transform_4, window_bounds = array<i64: 8, 2>}, {pipeline_mode = #tpu.pipeline_mode<synchronous>, transform_indices = @transform_5, window_bounds = array<i64: 128, 2>}, {pipeline_mode = #tpu.pipeline_mode<synchronous>, transform_indices = @transform_6, window_bounds = array<i64: 1, 2>}, {pipeline_mode = #tpu.pipeline_mode<synchronous>, transform_indices = @transform_7, window_bounds = array<i64: 256, 512>}, {pipeline_mode = #tpu.pipeline_mode<synchronous>, transform_indices = @transform_8, window_bounds = array<i64: 1, 512>}, {pipeline_mode = #tpu.pipeline_mode<synchronous>, transform_indices = @transform_9, window_bounds = array<i64: 512, 256>}, {pipeline_mode = #tpu.pipeline_mode<synchronous>, transform_indices = @transform_10, window_bounds = array<i64: 2, 256>}, {pipeline_mode = #tpu.pipeline_mode<synchronous>, transform_indices = @transform_11, window_bounds = array<i64: 3, 128, 256>}, {pipeline_mode = #tpu.pipeline_mode<synchronous>, transform_indices = @transform_12, window_bounds = array<i64: 3, 1, 256>}, {pipeline_mode = #tpu.pipeline_mode<synchronous>, transform_indices = @transform_13, window_bounds = array<i64: 3, 256, 256>}, {pipeline_mode = #tpu.pipeline_mode<synchronous>, transform_indices = @transform_14, window_bounds = array<i64: 3, 1, 256>}, {transform_indices = @transform_15, window_bounds = array<i64: 8, 128>}]} {
    %c0 = arith.constant 0 : index
    %c0_0 = arith.constant 0 : index
    %0 = vector.load %arg1[%c0, %c0_0] : memref<8x128xf32, #tpu.memory_space<vmem>>, vector<8x128xf32>
    %c0_1 = arith.constant 0 : index
    %c0_2 = arith.constant 0 : index
    %1 = vector.load %arg2[%c0_1, %c0_2] : memref<128x256xf32, #tpu.memory_space<vmem>>, vector<128x256xf32>
    %cst = arith.constant dense<0.000000e+00> : vector<8x256xf32>
    %2 = tpu.matmul %0, %1, %cst {dimension_numbers = #tpu.dot_dimension_numbers<[1], [0], [0], [1], [0, 0, 1, 1], [], []>} : vector<8x128xf32>, vector<128x256xf32>, vector<8x256xf32> -> vector<8x256xf32>
    %3 = vector.extract_strided_slice %2 {offsets = [0, 0], sizes = [8, 128], strides = [1, 1]} : vector<8x256xf32> to vector<8x128xf32>
    %4 = vector.extract_strided_slice %2 {offsets = [0, 128], sizes = [8, 128], strides = [1, 1]} : vector<8x256xf32> to vector<8x128xf32>
    %5 = arith.mulf %3, %3 : vector<8x128xf32>
    %6 = arith.mulf %4, %4 : vector<8x128xf32>
    %7 = arith.addf %5, %6 : vector<8x128xf32>
    %8 = math.sqrt %7 : vector<8x128xf32>
    %c0_3 = arith.constant 0 : index
    %c0_4 = arith.constant 0 : index
    %9 = vector.load %arg4[%c0_3, %c0_4] : memref<2x8xf32, #tpu.memory_space<vmem>>, vector<2x8xf32>
    %cst_5 = arith.constant dense<0.000000e+00> : vector<2x128xf32>
    %10 = tpu.matmul %9, %8, %cst_5 {dimension_numbers = #tpu.dot_dimension_numbers<[1], [0], [0], [1], [0, 0, 1, 1], [], []>} : vector<2x8xf32>, vector<8x128xf32>, vector<2x128xf32> -> vector<2x128xf32>
    %c0_6 = arith.constant 0 : index
    %c0_7 = arith.constant 0 : index
    %11 = vector.load %arg6[%c0_6, %c0_7] : memref<128x2xf32, #tpu.memory_space<vmem>>, vector<128x2xf32>
    %cst_8 = arith.constant dense<0.000000e+00> : vector<2x2xf32>
    %12 = tpu.matmul %10, %11, %cst_8 {dimension_numbers = #tpu.dot_dimension_numbers<[1], [0], [0], [1], [0, 0, 1, 1], [], []>} : vector<2x128xf32>, vector<128x2xf32>, vector<2x2xf32> -> vector<2x2xf32>
    %c0_9 = arith.constant 0 : index
    %c0_10 = arith.constant 0 : index
    %13 = vector.load %arg7[%c0_9, %c0_10] : memref<1x2xf32, #tpu.memory_space<vmem>>, vector<1x2xf32>
    %14 = vector.broadcast %13 : vector<1x2xf32> to vector<2x2xf32>
    %15 = arith.addf %12, %14 : vector<2x2xf32>
    %cst_11 = arith.constant dense<0xFF800000> : vector<2xf32>
    %16 = vector.multi_reduction <maximumf>, %15, %cst_11 [1] : vector<2x2xf32> to vector<2xf32>
    %17 = vector.shape_cast %16 : vector<2xf32> to vector<2x1xf32>
    %18 = vector.broadcast %17 : vector<2x1xf32> to vector<2x2xf32>
    %19 = arith.subf %15, %18 : vector<2x2xf32>
    %20 = math.exp %19 : vector<2x2xf32>
    %cst_12 = arith.constant dense<0.000000e+00> : vector<2xf32>
    %21 = vector.multi_reduction <add>, %20, %cst_12 [1] : vector<2x2xf32> to vector<2xf32>
    %22 = vector.shape_cast %21 : vector<2xf32> to vector<2x1xf32>
    %23 = vector.broadcast %22 : vector<2x1xf32> to vector<2x2xf32>
    %24 = arith.divf %20, %23 : vector<2x2xf32>
    %c0_13 = arith.constant 0 : index
    %c0_14 = arith.constant 0 : index
    %25 = vector.load %arg5[%c0_13, %c0_14] : memref<8x2xf32, #tpu.memory_space<vmem>>, vector<8x2xf32>
    %cst_15 = arith.constant dense<0.000000e+00> : vector<8x2xf32>
    %26 = tpu.matmul %25, %24, %cst_15 {dimension_numbers = #tpu.dot_dimension_numbers<[1], [0], [0], [1], [0, 0, 1, 1], [], []>} : vector<8x2xf32>, vector<2x2xf32>, vector<8x2xf32> -> vector<8x2xf32>
    %c0_16 = arith.constant 0 : index
    %c0_17 = arith.constant 0 : index
    %27 = vector.load %arg8[%c0_16, %c0_17] : memref<256x512xf32, #tpu.memory_space<vmem>>, vector<256x512xf32>
    %cst_18 = arith.constant dense<0.000000e+00> : vector<8x512xf32>
    %28 = tpu.matmul %2, %27, %cst_18 {dimension_numbers = #tpu.dot_dimension_numbers<[1], [0], [0], [1], [0, 0, 1, 1], [], []>} : vector<8x256xf32>, vector<256x512xf32>, vector<8x512xf32> -> vector<8x512xf32>
    %c0_19 = arith.constant 0 : index
    %c0_20 = arith.constant 0 : index
    %29 = vector.load %arg9[%c0_19, %c0_20] : memref<1x512xf32, #tpu.memory_space<vmem>>, vector<1x512xf32>
    %30 = vector.broadcast %29 : vector<1x512xf32> to vector<8x512xf32>
    %31 = arith.addf %28, %30 : vector<8x512xf32>
    %cst_21 = arith.constant 0.000000e+00 : f32
    %32 = vector.broadcast %cst_21 : f32 to vector<8x512xf32>
    %33 = arith.maximumf %31, %32 : vector<8x512xf32>
    %34 = vector.extract_strided_slice %26 {offsets = [0, 0], sizes = [8, 1], strides = [1, 1]} : vector<8x2xf32> to vector<8x1xf32>
    %35 = vector.extract_strided_slice %33 {offsets = [0, 0], sizes = [8, 256], strides = [1, 1]} : vector<8x512xf32> to vector<8x256xf32>
    %36 = vector.broadcast %34 : vector<8x1xf32> to vector<8x256xf32>
    %37 = arith.mulf %35, %36 : vector<8x256xf32>
    %38 = vector.extract_strided_slice %26 {offsets = [0, 1], sizes = [8, 1], strides = [1, 1]} : vector<8x2xf32> to vector<8x1xf32>
    %39 = vector.extract_strided_slice %33 {offsets = [0, 256], sizes = [8, 256], strides = [1, 1]} : vector<8x512xf32> to vector<8x256xf32>
    %40 = vector.broadcast %38 : vector<8x1xf32> to vector<8x256xf32>
    %41 = arith.mulf %39, %40 : vector<8x256xf32>
    %42 = tpu.concatenate %37, %41 in 1 : vector<8x256xf32>, vector<8x256xf32> -> vector<8x512xf32>
    %c0_22 = arith.constant 0 : index
    %c0_23 = arith.constant 0 : index
    %43 = vector.load %arg10[%c0_22, %c0_23] : memref<512x256xf32, #tpu.memory_space<vmem>>, vector<512x256xf32>
    %cst_24 = arith.constant dense<0.000000e+00> : vector<8x256xf32>
    %44 = tpu.matmul %42, %43, %cst_24 {dimension_numbers = #tpu.dot_dimension_numbers<[1], [0], [0], [1], [0, 0, 1, 1], [], []>} : vector<8x512xf32>, vector<512x256xf32>, vector<8x256xf32> -> vector<8x256xf32>
    %c0_25 = arith.constant 0 : index
    %c0_26 = arith.constant 0 : index
    %45 = vector.load %arg11[%c0_25, %c0_26] : memref<2x256xf32, #tpu.memory_space<vmem>>, vector<2x256xf32>
    %cst_27 = arith.constant dense<0.000000e+00> : vector<8x256xf32>
    %46 = tpu.matmul %26, %45, %cst_27 {dimension_numbers = #tpu.dot_dimension_numbers<[1], [0], [0], [1], [0, 0, 1, 1], [], []>} : vector<8x2xf32>, vector<2x256xf32>, vector<8x256xf32> -> vector<8x256xf32>
    %47 = arith.addf %44, %46 : vector<8x256xf32>
    %c0_28 = arith.constant 0 : index
    %c0_29 = arith.constant 0 : index
    %48 = vector.load %arg3[%c0_28, %c0_29] : memref<256x128xf32, #tpu.memory_space<vmem>>, vector<256x128xf32>
    %cst_30 = arith.constant dense<0.000000e+00> : vector<8x128xf32>
    %49 = tpu.matmul %47, %48, %cst_30 {dimension_numbers = #tpu.dot_dimension_numbers<[1], [0], [0], [1], [0, 0, 1, 1], [], []>} : vector<8x256xf32>, vector<256x128xf32>, vector<8x128xf32> -> vector<8x128xf32>
    %50 = arith.subf %0, %49 : vector<8x128xf32>
    %cst_31 = arith.constant 0.000000e+00 : f32
    %51 = vector.broadcast %cst_31 : f32 to vector<8x128xf32>
    %c0_32 = arith.constant 0 : index
    %c0_33 = arith.constant 0 : index
    %c0_34 = arith.constant 0 : index
    %52 = vector.load %arg12[%c0_32, %c0_33, %c0_34] : memref<3x128x256xf32, #tpu.memory_space<vmem>>, vector<1x128x256xf32>
    %53 = vector.shape_cast %52 : vector<1x128x256xf32> to vector<128x256xf32>
    %cst_35 = arith.constant dense<0.000000e+00> : vector<8x256xf32>
    %54 = tpu.matmul %50, %53, %cst_35 {dimension_numbers = #tpu.dot_dimension_numbers<[1], [0], [0], [1], [0, 0, 1, 1], [], []>} : vector<8x128xf32>, vector<128x256xf32>, vector<8x256xf32> -> vector<8x256xf32>
    %c0_36 = arith.constant 0 : index
    %c0_37 = arith.constant 0 : index
    %c0_38 = arith.constant 0 : index
    %55 = vector.load %arg13[%c0_36, %c0_37, %c0_38] : memref<3x1x256xf32, #tpu.memory_space<vmem>>, vector<1x1x256xf32>
    %56 = vector.shape_cast %55 : vector<1x1x256xf32> to vector<1x256xf32>
    %57 = vector.broadcast %56 : vector<1x256xf32> to vector<8x256xf32>
    %58 = arith.addf %54, %57 : vector<8x256xf32>
    %cst_39 = arith.constant 0.000000e+00 : f32
    %59 = vector.broadcast %cst_39 : f32 to vector<8x256xf32>
    %60 = arith.maximumf %58, %59 : vector<8x256xf32>
    %c0_40 = arith.constant 0 : index
    %c0_41 = arith.constant 0 : index
    %c0_42 = arith.constant 0 : index
    %61 = vector.load %arg14[%c0_40, %c0_41, %c0_42] : memref<3x256x256xf32, #tpu.memory_space<vmem>>, vector<1x256x256xf32>
    %62 = vector.shape_cast %61 : vector<1x256x256xf32> to vector<256x256xf32>
    %cst_43 = arith.constant dense<0.000000e+00> : vector<8x256xf32>
    %63 = tpu.matmul %60, %62, %cst_43 {dimension_numbers = #tpu.dot_dimension_numbers<[1], [0], [0], [1], [0, 0, 1, 1], [], []>} : vector<8x256xf32>, vector<256x256xf32>, vector<8x256xf32> -> vector<8x256xf32>
    %c0_44 = arith.constant 0 : index
    %c0_45 = arith.constant 0 : index
    %c0_46 = arith.constant 0 : index
    %64 = vector.load %arg15[%c0_44, %c0_45, %c0_46] : memref<3x1x256xf32, #tpu.memory_space<vmem>>, vector<1x1x256xf32>
    %65 = vector.shape_cast %64 : vector<1x1x256xf32> to vector<1x256xf32>
    %66 = vector.broadcast %65 : vector<1x256xf32> to vector<8x256xf32>
    %67 = arith.addf %63, %66 : vector<8x256xf32>
    %68 = vector.extract_strided_slice %67 {offsets = [0, 0], sizes = [8, 128], strides = [1, 1]} : vector<8x256xf32> to vector<8x128xf32>
    %69 = arith.subf %50, %68 : vector<8x128xf32>
    %70 = vector.extract_strided_slice %67 {offsets = [0, 128], sizes = [8, 128], strides = [1, 1]} : vector<8x256xf32> to vector<8x128xf32>
    %71 = arith.addf %51, %70 : vector<8x128xf32>
    %c1 = arith.constant 1 : index
    %c0_47 = arith.constant 0 : index
    %c0_48 = arith.constant 0 : index
    %72 = vector.load %arg12[%c1, %c0_47, %c0_48] : memref<3x128x256xf32, #tpu.memory_space<vmem>>, vector<1x128x256xf32>
    %73 = vector.shape_cast %72 : vector<1x128x256xf32> to vector<128x256xf32>
    %cst_49 = arith.constant dense<0.000000e+00> : vector<8x256xf32>
    %74 = tpu.matmul %69, %73, %cst_49 {dimension_numbers = #tpu.dot_dimension_numbers<[1], [0], [0], [1], [0, 0, 1, 1], [], []>} : vector<8x128xf32>, vector<128x256xf32>, vector<8x256xf32> -> vector<8x256xf32>
    %c1_50 = arith.constant 1 : index
    %c0_51 = arith.constant 0 : index
    %c0_52 = arith.constant 0 : index
    %75 = vector.load %arg13[%c1_50, %c0_51, %c0_52] : memref<3x1x256xf32, #tpu.memory_space<vmem>>, vector<1x1x256xf32>
    %76 = vector.shape_cast %75 : vector<1x1x256xf32> to vector<1x256xf32>
    %77 = vector.broadcast %76 : vector<1x256xf32> to vector<8x256xf32>
    %78 = arith.addf %74, %77 : vector<8x256xf32>
    %cst_53 = arith.constant 0.000000e+00 : f32
    %79 = vector.broadcast %cst_53 : f32 to vector<8x256xf32>
    %80 = arith.maximumf %78, %79 : vector<8x256xf32>
    %c1_54 = arith.constant 1 : index
    %c0_55 = arith.constant 0 : index
    %c0_56 = arith.constant 0 : index
    %81 = vector.load %arg14[%c1_54, %c0_55, %c0_56] : memref<3x256x256xf32, #tpu.memory_space<vmem>>, vector<1x256x256xf32>
    %82 = vector.shape_cast %81 : vector<1x256x256xf32> to vector<256x256xf32>
    %cst_57 = arith.constant dense<0.000000e+00> : vector<8x256xf32>
    %83 = tpu.matmul %80, %82, %cst_57 {dimension_numbers = #tpu.dot_dimension_numbers<[1], [0], [0], [1], [0, 0, 1, 1], [], []>} : vector<8x256xf32>, vector<256x256xf32>, vector<8x256xf32> -> vector<8x256xf32>
    %c1_58 = arith.constant 1 : index
    %c0_59 = arith.constant 0 : index
    %c0_60 = arith.constant 0 : index
    %84 = vector.load %arg15[%c1_58, %c0_59, %c0_60] : memref<3x1x256xf32, #tpu.memory_space<vmem>>, vector<1x1x256xf32>
    %85 = vector.shape_cast %84 : vector<1x1x256xf32> to vector<1x256xf32>
    %86 = vector.broadcast %85 : vector<1x256xf32> to vector<8x256xf32>
    %87 = arith.addf %83, %86 : vector<8x256xf32>
    %88 = vector.extract_strided_slice %87 {offsets = [0, 0], sizes = [8, 128], strides = [1, 1]} : vector<8x256xf32> to vector<8x128xf32>
    %89 = arith.subf %69, %88 : vector<8x128xf32>
    %90 = vector.extract_strided_slice %87 {offsets = [0, 128], sizes = [8, 128], strides = [1, 1]} : vector<8x256xf32> to vector<8x128xf32>
    %91 = arith.addf %71, %90 : vector<8x128xf32>
    %c2 = arith.constant 2 : index
    %c0_61 = arith.constant 0 : index
    %c0_62 = arith.constant 0 : index
    %92 = vector.load %arg12[%c2, %c0_61, %c0_62] : memref<3x128x256xf32, #tpu.memory_space<vmem>>, vector<1x128x256xf32>
    %93 = vector.shape_cast %92 : vector<1x128x256xf32> to vector<128x256xf32>
    %cst_63 = arith.constant dense<0.000000e+00> : vector<8x256xf32>
    %94 = tpu.matmul %89, %93, %cst_63 {dimension_numbers = #tpu.dot_dimension_numbers<[1], [0], [0], [1], [0, 0, 1, 1], [], []>} : vector<8x128xf32>, vector<128x256xf32>, vector<8x256xf32> -> vector<8x256xf32>
    %c2_64 = arith.constant 2 : index
    %c0_65 = arith.constant 0 : index
    %c0_66 = arith.constant 0 : index
    %95 = vector.load %arg13[%c2_64, %c0_65, %c0_66] : memref<3x1x256xf32, #tpu.memory_space<vmem>>, vector<1x1x256xf32>
    %96 = vector.shape_cast %95 : vector<1x1x256xf32> to vector<1x256xf32>
    %97 = vector.broadcast %96 : vector<1x256xf32> to vector<8x256xf32>
    %98 = arith.addf %94, %97 : vector<8x256xf32>
    %cst_67 = arith.constant 0.000000e+00 : f32
    %99 = vector.broadcast %cst_67 : f32 to vector<8x256xf32>
    %100 = arith.maximumf %98, %99 : vector<8x256xf32>
    %c2_68 = arith.constant 2 : index
    %c0_69 = arith.constant 0 : index
    %c0_70 = arith.constant 0 : index
    %101 = vector.load %arg14[%c2_68, %c0_69, %c0_70] : memref<3x256x256xf32, #tpu.memory_space<vmem>>, vector<1x256x256xf32>
    %102 = vector.shape_cast %101 : vector<1x256x256xf32> to vector<256x256xf32>
    %cst_71 = arith.constant dense<0.000000e+00> : vector<8x256xf32>
    %103 = tpu.matmul %100, %102, %cst_71 {dimension_numbers = #tpu.dot_dimension_numbers<[1], [0], [0], [1], [0, 0, 1, 1], [], []>} : vector<8x256xf32>, vector<256x256xf32>, vector<8x256xf32> -> vector<8x256xf32>
    %c2_72 = arith.constant 2 : index
    %c0_73 = arith.constant 0 : index
    %c0_74 = arith.constant 0 : index
    %104 = vector.load %arg15[%c2_72, %c0_73, %c0_74] : memref<3x1x256xf32, #tpu.memory_space<vmem>>, vector<1x1x256xf32>
    %105 = vector.shape_cast %104 : vector<1x1x256xf32> to vector<1x256xf32>
    %106 = vector.broadcast %105 : vector<1x256xf32> to vector<8x256xf32>
    %107 = arith.addf %103, %106 : vector<8x256xf32>
    %108 = vector.extract_strided_slice %107 {offsets = [0, 128], sizes = [8, 128], strides = [1, 1]} : vector<8x256xf32> to vector<8x128xf32>
    %109 = arith.addf %91, %108 : vector<8x128xf32>
    %c0_75 = arith.constant 0 : index
    %c0_76 = arith.constant 0 : index
    %110 = vector.load %arg16[%c0_75, %c0_76] : memref<8x128xf32, #tpu.memory_space<vmem>>, vector<8x128xf32>
    tpu.vector_store %arg16[%c0_75, %c0_76], %109 {strides = array<i32>} : memref<8x128xf32, #tpu.memory_space<vmem>>, vector<8x128xf32>,
    return
  }
  func.func @transform_0(%arg0: i32) -> (i32, i32) {
    %c0_i32 = arith.constant 0 : i32
    %c0_i32_0 = arith.constant 0 : i32
    return %arg0, %c0_i32 : i32, i32
  }
  func.func @transform_1(%arg0: i32) -> (i32, i32) {
    %c0_i32 = arith.constant 0 : i32
    %c0_i32_0 = arith.constant 0 : i32
    %c0_i32_1 = arith.constant 0 : i32
    return %c0_i32, %c0_i32_0 : i32, i32
  }
  func.func @transform_2(%arg0: i32) -> (i32, i32) {
    %c0_i32 = arith.constant 0 : i32
    %c0_i32_0 = arith.constant 0 : i32
    %c0_i32_1 = arith.constant 0 : i32
    return %c0_i32, %c0_i32_0 : i32, i32
  }
  func.func @transform_3(%arg0: i32) -> (i32, i32) {
    %c0_i32 = arith.constant 0 : i32
    %c0_i32_0 = arith.constant 0 : i32
    %c0_i32_1 = arith.constant 0 : i32
    return %c0_i32, %c0_i32_0 : i32, i32
  }
  func.func @transform_4(%arg0: i32) -> (i32, i32) {
    %c0_i32 = arith.constant 0 : i32
    %c0_i32_0 = arith.constant 0 : i32
    %c0_i32_1 = arith.constant 0 : i32
    return %c0_i32, %c0_i32_0 : i32, i32
  }
  func.func @transform_5(%arg0: i32) -> (i32, i32) {
    %c0_i32 = arith.constant 0 : i32
    %c0_i32_0 = arith.constant 0 : i32
    %c0_i32_1 = arith.constant 0 : i32
    return %c0_i32, %c0_i32_0 : i32, i32
  }
  func.func @transform_6(%arg0: i32) -> (i32, i32) {
    %c0_i32 = arith.constant 0 : i32
    %c0_i32_0 = arith.constant 0 : i32
    %c0_i32_1 = arith.constant 0 : i32
    return %c0_i32, %c0_i32_0 : i32, i32
  }
  func.func @transform_7(%arg0: i32) -> (i32, i32) {
    %c0_i32 = arith.constant 0 : i32
    %c0_i32_0 = arith.constant 0 : i32
    %c0_i32_1 = arith.constant 0 : i32
    return %c0_i32, %c0_i32_0 : i32, i32
  }
  func.func @transform_8(%arg0: i32) -> (i32, i32) {
    %c0_i32 = arith.constant 0 : i32
    %c0_i32_0 = arith.constant 0 : i32
    %c0_i32_1 = arith.constant 0 : i32
    return %c0_i32, %c0_i32_0 : i32, i32
  }
  func.func @transform_9(%arg0: i32) -> (i32, i32) {
    %c0_i32 = arith.constant 0 : i32
    %c0_i32_0 = arith.constant 0 : i32
    %c0_i32_1 = arith.constant 0 : i32
    return %c0_i32, %c0_i32_0 : i32, i32
  }
  func.func @transform_10(%arg0: i32) -> (i32, i32) {
    %c0_i32 = arith.constant 0 : i32
    %c0_i32_0 = arith.constant 0 : i32
    %c0_i32_1 = arith.constant 0 : i32
    return %c0_i32, %c0_i32_0 : i32, i32
  }
  func.func @transform_11(%arg0: i32) -> (i32, i32, i32) {
    %c0_i32 = arith.constant 0 : i32
    %c0_i32_0 = arith.constant 0 : i32
    %c0_i32_1 = arith.constant 0 : i32
    %c0_i32_2 = arith.constant 0 : i32
    return %c0_i32, %c0_i32_0, %c0_i32_1 : i32, i32, i32
  }
  func.func @transform_12(%arg0: i32) -> (i32, i32, i32) {
    %c0_i32 = arith.constant 0 : i32
    %c0_i32_0 = arith.constant 0 : i32
    %c0_i32_1 = arith.constant 0 : i32
    %c0_i32_2 = arith.constant 0 : i32
    return %c0_i32, %c0_i32_0, %c0_i32_1 : i32, i32, i32
  }
  func.func @transform_13(%arg0: i32) -> (i32, i32, i32) {
    %c0_i32 = arith.constant 0 : i32
    %c0_i32_0 = arith.constant 0 : i32
    %c0_i32_1 = arith.constant 0 : i32
    %c0_i32_2 = arith.constant 0 : i32
    return %c0_i32, %c0_i32_0, %c0_i32_1 : i32, i32, i32
  }
  func.func @transform_14(%arg0: i32) -> (i32, i32, i32) {
    %c0_i32 = arith.constant 0 : i32
    %c0_i32_0 = arith.constant 0 : i32
    %c0_i32_1 = arith.constant 0 : i32
    %c0_i32_2 = arith.constant 0 : i32
    return %c0_i32, %c0_i32_0, %c0_i32_1 : i32, i32, i32
  }
  func.func @transform_15(%arg0: i32) -> (i32, i32) {
    %c0_i32 = arith.constant 0 : i32
    %c0_i32_0 = arith.constant 0 : i32
    return %arg0, %c0_i32 : i32, i32
  }
}

</mosaic_0001>

<llo_original>
// kernel: tpu_custom_call.1
$region0: #{tpu_custom_call.1}
  #allocation0 [shape = 'u32[]', space=smem, size = 0x4, offset = 0x4, fixed_abs, tag = 'smem constant byte address 0x4 - core index']
  #allocation1 [shape = 'u32[144,128]{1,0:T(1,128)}', space=vmem, size = 0x12000, scoped, tag = 'internal scratch']
  %s0 = inlined_call_operand.vmem [shape: f32[16,128], index: 0, kind: input, shape index: {}]
  %s1 = inlined_call_operand.hbm [shape: f32[128,256], index: 1, kind: input, shape index: {}]
  %s2 = inlined_call_operand.hbm [shape: f32[256,128], index: 2, kind: input, shape index: {}]
  %s3 = inlined_call_operand.vmem [shape: f32[2,8], index: 3, kind: input, shape index: {}]
  %s4 = inlined_call_operand.vmem [shape: f32[8,2], index: 4, kind: input, shape index: {}]
  %s5 = inlined_call_operand.vmem [shape: f32[128,2], index: 5, kind: input, shape index: {}]
  %s6 = inlined_call_operand.vmem [shape: f32[1,2], index: 6, kind: input, shape index: {}]
  %s7 = inlined_call_operand.hbm [shape: f32[256,512], index: 7, kind: input, shape index: {}]
  %s8 = inlined_call_operand.vmem [shape: f32[1,512], index: 8, kind: input, shape index: {}]
  %s9 = inlined_call_operand.hbm [shape: f32[512,256], index: 9, kind: input, shape index: {}]
  %s10 = inlined_call_operand.vmem [shape: f32[2,256], index: 10, kind: input, shape index: {}]
  %s11 = inlined_call_operand.hbm [shape: f32[3,128,256], index: 11, kind: input, shape index: {}]
  %s12 = inlined_call_operand.vmem [shape: f32[3,1,256], index: 12, kind: input, shape index: {}]
  %s13 = inlined_call_operand.hbm [shape: f32[3,256,256], index: 13, kind: input, shape index: {}]
  %s14 = inlined_call_operand.vmem [shape: f32[3,1,256], index: 14, kind: input, shape index: {}]
  %s15 = inlined_call_operand.hbm [shape: f32[16,128], index: 15, kind: output, shape index: {}]
  %s16 = sld [smem:[#allocation0]]
  $region117: #{tpu_custom_call.1} parent=0
    _
  %s18 = ssub.s32 1, %s16
  %s19 = scalar_select 0, %s18, %s16
  $region1: #{tpu_custom_call.1} parent=0
    #allocation2 [shape = 'u8[131072]{0}', space=vmem, size = 0x20000, scoped, tag = 'input window, operand 1, single buffered']
    #allocation3 [shape = 's32[2]{0}', space=sflag, size = 0x8, scoped, tag = 'scoped memory for tpu_custom_call.1']
    #allocation4 [shape = 's32[2]{0}', space=sflag, size = 0x8, scoped, tag = 'scoped memory for tpu_custom_call.1']
    #allocation5 [shape = 'u8[131072]{0}', space=vmem, size = 0x20000, scoped, tag = 'input window, operand 2, single buffered']
    #allocation6 [shape = 's32[1]{0}', space=sflag, size = 0x4, scoped, tag = 'scoped memory for tpu_custom_call.1']
    #allocation7 [shape = 'u8[524288]{0}', space=vmem, size = 0x80000, scoped, tag = 'input window, operand 7, single buffered']
    #allocation8 [shape = 'u8[524288]{0}', space=vmem, size = 0x80000, scoped, tag = 'input window, operand 9, single buffered']
    #allocation9 [shape = 's32[1]{0}', space=sflag, size = 0x4, scoped, tag = 'scoped memory for tpu_custom_call.1']
    #allocation10 [shape = 'u8[393216]{0}', space=vmem, size = 0x60000, scoped, tag = 'input window, operand 11, single buffered']
    #allocation11 [shape = 'u8[786432]{0}', space=vmem, size = 0xc0000, scoped, tag = 'input window, operand 13, single buffered']
    #allocation12 [shape = 's32[1]{0}', space=sflag, size = 0x4, scoped, tag = 'scoped memory for tpu_custom_call.1']
    #allocation13 [shape = 'u8[8192]{0}', space=vmem, size = 0x2000, scoped, tag = 'output window, operand 0']
    %20 = vsyncpa [#allocation3], 0
    %21 = vsyncpa [#allocation6], 0
    %22 = vsyncpa [#allocation9], 0
    %23 = vsyncpa [#allocation12], 0
    %24 = vsyncpa [#allocation4], 0
    %s25 = scalar_lea.sflag [#allocation4], 1
    %26 = vsyncpa %s25, 0
    loop: start=0, step=1, limit=4
    $region2: #{tpu_custom_call.1} parent=1 // loop_pre_header
      _
    $region3: #{tpu_custom_call.1} parent=1 // loop_header
      %s28 = sphi 0, %s32
      %p29 = scmp.ge.s32.totalorder %s28, 4
      %s38 = sphi 0, %s40
      %s41 = sphi 0, %s38
      %s42 = sphi 0, %s41
      %s58 = sphi 0, %s42
      %s62 = sphi 0, %s62
      %s64 = sphi 0, %s62
      %s65 = sphi 0, %s64
      %s79 = sphi 0, %s65
      %s83 = sphi 0, %s83
      %s85 = sphi 0, %s83
      %s86 = sphi 0, %s85
      %s100 = sphi 0, %s86
      %s104 = sphi 0, %s104
      %s106 = sphi 0, %s104
      %s107 = sphi 0, %s106
      %s121 = sphi 0, %s107
      %s125 = sphi 0, %s125
      %s127 = sphi 0, %s125
      %s128 = sphi 0, %s127
      %s142 = sphi 0, %s128
      %s146 = sphi 0, %s146
      %s148 = sphi 0, %s146
      %s149 = sphi 0, %s148
      %s163 = sphi 0, %s149
      %s167 = sphi 0, %s167
      %s169 = sphi 0, %s167
      %s170 = sphi 0, %s169
      %s184 = sphi 0, %s170
      %s188 = sphi 0, %s188
      %s190 = sphi 0, %s188
      %s191 = sphi 0, %s190
      %s205 = sphi 0, %s191
      %s209 = sphi 0, %s209
      %s211 = sphi 0, %s209
      %s212 = sphi 0, %s211
      %s226 = sphi 0, %s212
      %s230 = sphi 0, %s230
      %s232 = sphi 0, %s230
      %s233 = sphi 0, %s232
      %s247 = sphi 0, %s233
      %s251 = sphi 0, %s251
      %s253 = sphi 0, %s251
      %s254 = sphi 0, %s253
      %s268 = sphi 0, %s254
      %s272 = sphi 0, %s272
      %s274 = sphi 0, %s272
      %s275 = sphi 0, %s274
      %s289 = sphi 0, %s275
      %s293 = sphi 0, %s293
      %s295 = sphi 0, %s293
      %s296 = sphi 0, %s295
      %s310 = sphi 0, %s296
      %s314 = sphi 0, %s314
      %s316 = sphi 0, %s314
      %s317 = sphi 0, %s316
      %s331 = sphi 0, %s317
      %s335 = sphi 0, %s335
      %s337 = sphi 0, %s335
      %s338 = sphi 0, %s337
      %s352 = sphi 0, %s338
      %s358 = sphi 0, %s360
      %s361 = sphi 0, %s358
      %s362 = sphi 0, %s361
      %s378 = sphi 0, %s362
    $region4: #{tpu_custom_call.1} parent=1 // loop_header_branch
      %31 = sbr.rel (%p29) target = $region8
    $region5: #{tpu_custom_call.1} parent=1 // loop_body
      %s33 = ssub.s32 %s28, 1
      %s34 = ssub.s32 %s28, 2
      %s35 = sadd.s32 %s28, 1
      %s36 = ssub.s32 %s28, %s35
      %p37 = scmp.eq.s32.totalorder %s36, 0
      %s39 = sadd.s32 %s38, 1
      %s40 = scalar_select %p37, %s38, %s39
      %p43 = pneg %p37
      %p44 = scmp.eq.s32.totalorder %s28, 1
      %p45 = por %p43, %p44
      %p46 = scmp.ne.s32.totalorder %s38, %s41
      %p47 = scmp.eq.s32.totalorder %s28, 0
      %p48 = por %p46, %p47
      %p49 = scmp.ne.s32.totalorder %s38, %s41
      %p50 = scmp.eq.s32.totalorder %s33, 1
      %p51 = por %p49, %p50
      %p52 = scmp.ne.s32.totalorder %s41, %s42
      %p53 = scmp.eq.s32.totalorder %s33, 0
      %p54 = por %p52, %p53
      %p55 = scmp.ne.s32.totalorder %s41, %s42
      %p56 = scmp.eq.s32.totalorder %s34, 1
      %p57 = por %p55, %p56
      %p59 = scmp.ne.s32.totalorder %s42, %s58
      %p60 = scmp.eq.s32.totalorder %s34, 0
      %p61 = por %p59, %p60
      %s63 = sadd.s32 %s62, 1
      %p66 = scmp.eq.s32.totalorder %s28, 1
      %p67 = scmp.ne.s32.totalorder %s62, %s64
      %p68 = scmp.eq.s32.totalorder %s28, 0
      %p69 = por %p67, %p68
      %p70 = scmp.ne.s32.totalorder %s62, %s64
      %p71 = scmp.eq.s32.totalorder %s33, 1
      %p72 = por %p70, %p71
      %p73 = scmp.ne.s32.totalorder %s64, %s65
      %p74 = scmp.eq.s32.totalorder %s33, 0
      %p75 = por %p73, %p74
      %p76 = scmp.ne.s32.totalorder %s64, %s65
      %p77 = scmp.eq.s32.totalorder %s34, 1
      %p78 = por %p76, %p77
      %p80 = scmp.ne.s32.totalorder %s65, %s79
      %p81 = scmp.eq.s32.totalorder %s34, 0
      %p82 = por %p80, %p81
      %s84 = sadd.s32 %s83, 1
      %p87 = scmp.eq.s32.totalorder %s28, 1
      %p88 = scmp.ne.s32.totalorder %s83, %s85
      %p89 = scmp.eq.s32.totalorder %s28, 0
      %p90 = por %p88, %p89
      %p91 = scmp.ne.s32.totalorder %s83, %s85
      %p92 = scmp.eq.s32.totalorder %s33, 1
      %p93 = por %p91, %p92
      %p94 = scmp.ne.s32.totalorder %s85, %s86
      %p95 = scmp.eq.s32.totalorder %s33, 0
      %p96 = por %p94, %p95
      %p97 = scmp.ne.s32.totalorder %s85, %s86
      %p98 = scmp.eq.s32.totalorder %s34, 1
      %p99 = por %p97, %p98
      %p101 = scmp.ne.s32.totalorder %s86, %s100
      %p102 = scmp.eq.s32.totalorder %s34, 0
      %p103 = por %p101, %p102
      %s105 = sadd.s32 %s104, 1
      %p108 = scmp.eq.s32.totalorder %s28, 1
      %p109 = scmp.ne.s32.totalorder %s104, %s106
      %p110 = scmp.eq.s32.totalorder %s28, 0
      %p111 = por %p109, %p110
      %p112 = scmp.ne.s32.totalorder %s104, %s106
      %p113 = scmp.eq.s32.totalorder %s33, 1
      %p114 = por %p112, %p113
      %p115 = scmp.ne.s32.totalorder %s106, %s107
      %p116 = scmp.eq.s32.totalorder %s33, 0
      %p117 = por %p115, %p116
      %p118 = scmp.ne.s32.totalorder %s106, %s107
      %p119 = scmp.eq.s32.totalorder %s34, 1
      %p120 = por %p118, %p119
      %p122 = scmp.ne.s32.totalorder %s107, %s121
      %p123 = scmp.eq.s32.totalorder %s34, 0
      %p124 = por %p122, %p123
      %s126 = sadd.s32 %s125, 1
      %p129 = scmp.eq.s32.totalorder %s28, 1
      %p130 = scmp.ne.s32.totalorder %s125, %s127
      %p131 = scmp.eq.s32.totalorder %s28, 0
      %p132 = por %p130, %p131
      %p133 = scmp.ne.s32.totalorder %s125, %s127
      %p134 = scmp.eq.s32.totalorder %s33, 1
      %p135 = por %p133, %p134
      %p136 = scmp.ne.s32.totalorder %s127, %s128
      %p137 = scmp.eq.s32.totalorder %s33, 0
      %p138 = por %p136, %p137
      %p139 = scmp.ne.s32.totalorder %s127, %s128
      %p140 = scmp.eq.s32.totalorder %s34, 1
      %p141 = por %p139, %p140
      %p143 = scmp.ne.s32.totalorder %s128, %s142
      %p144 = scmp.eq.s32.totalorder %s34, 0
      %p145 = por %p143, %p144
      %s147 = sadd.s32 %s146, 1
      %p150 = scmp.eq.s32.totalorder %s28, 1
      %p151 = scmp.ne.s32.totalorder %s146, %s148
      %p152 = scmp.eq.s32.totalorder %s28, 0
      %p153 = por %p151, %p152
      %p154 = scmp.ne.s32.totalorder %s146, %s148
      %p155 = scmp.eq.s32.totalorder %s33, 1
      %p156 = por %p154, %p155
      %p157 = scmp.ne.s32.totalorder %s148, %s149
      %p158 = scmp.eq.s32.totalorder %s33, 0
      %p159 = por %p157, %p158
      %p160 = scmp.ne.s32.totalorder %s148, %s149
      %p161 = scmp.eq.s32.totalorder %s34, 1
      %p162 = por %p160, %p161
      %p164 = scmp.ne.s32.totalorder %s149, %s163
      %p165 = scmp.eq.s32.totalorder %s34, 0
      %p166 = por %p164, %p165
      %s168 = sadd.s32 %s167, 1
      %p171 = scmp.eq.s32.totalorder %s28, 1
      %p172 = scmp.ne.s32.totalorder %s167, %s169
      %p173 = scmp.eq.s32.totalorder %s28, 0
      %p174 = por %p172, %p173
      %p175 = scmp.ne.s32.totalorder %s167, %s169
      %p176 = scmp.eq.s32.totalorder %s33, 1
      %p177 = por %p175, %p176
      %p178 = scmp.ne.s32.totalorder %s169, %s170
      %p179 = scmp.eq.s32.totalorder %s33, 0
      %p180 = por %p178, %p179
      %p181 = scmp.ne.s32.totalorder %s169, %s170
      %p182 = scmp.eq.s32.totalorder %s34, 1
      %p183 = por %p181, %p182
      %p185 = scmp.ne.s32.totalorder %s170, %s184
      %p186 = scmp.eq.s32.totalorder %s34, 0
      %p187 = por %p185, %p186
      %s189 = sadd.s32 %s188, 1
      %p192 = scmp.eq.s32.totalorder %s28, 1
      %p193 = scmp.ne.s32.totalorder %s188, %s190
      %p194 = scmp.eq.s32.totalorder %s28, 0
      %p195 = por %p193, %p194
      %p196 = scmp.ne.s32.totalorder %s188, %s190
      %p197 = scmp.eq.s32.totalorder %s33, 1
      %p198 = por %p196, %p197
      %p199 = scmp.ne.s32.totalorder %s190, %s191
      %p200 = scmp.eq.s32.totalorder %s33, 0
      %p201 = por %p199, %p200
      %p202 = scmp.ne.s32.totalorder %s190, %s191
      %p203 = scmp.eq.s32.totalorder %s34, 1
      %p204 = por %p202, %p203
      %p206 = scmp.ne.s32.totalorder %s191, %s205
      %p207 = scmp.eq.s32.totalorder %s34, 0
      %p208 = por %p206, %p207
      %s210 = sadd.s32 %s209, 1
      %p213 = scmp.eq.s32.totalorder %s28, 1
      %p214 = scmp.ne.s32.totalorder %s209, %s211
      %p215 = scmp.eq.s32.totalorder %s28, 0
      %p216 = por %p214, %p215
      %p217 = scmp.ne.s32.totalorder %s209, %s211
      %p218 = scmp.eq.s32.totalorder %s33, 1
      %p219 = por %p217, %p218
      %p220 = scmp.ne.s32.totalorder %s211, %s212
      %p221 = scmp.eq.s32.totalorder %s33, 0
      %p222 = por %p220, %p221
      %p223 = scmp.ne.s32.totalorder %s211, %s212
      %p224 = scmp.eq.s32.totalorder %s34, 1
      %p225 = por %p223, %p224
      %p227 = scmp.ne.s32.totalorder %s212, %s226
      %p228 = scmp.eq.s32.totalorder %s34, 0
      %p229 = por %p227, %p228
      %s231 = sadd.s32 %s230, 1
      %p234 = scmp.eq.s32.totalorder %s28, 1
      %p235 = scmp.ne.s32.totalorder %s230, %s232
      %p236 = scmp.eq.s32.totalorder %s28, 0
      %p237 = por %p235, %p236
      %p238 = scmp.ne.s32.totalorder %s230, %s232
      %p239 = scmp.eq.s32.totalorder %s33, 1
      %p240 = por %p238, %p239
      %p241 = scmp.ne.s32.totalorder %s232, %s233
      %p242 = scmp.eq.s32.totalorder %s33, 0
      %p243 = por %p241, %p242
      %p244 = scmp.ne.s32.totalorder %s232, %s233
      %p245 = scmp.eq.s32.totalorder %s34, 1
      %p246 = por %p244, %p245
      %p248 = scmp.ne.s32.totalorder %s233, %s247
      %p249 = scmp.eq.s32.totalorder %s34, 0
      %p250 = por %p248, %p249
      %s252 = sadd.s32 %s251, 1
      %p255 = scmp.eq.s32.totalorder %s28, 1
      %p256 = scmp.ne.s32.totalorder %s251, %s253
      %p257 = scmp.eq.s32.totalorder %s28, 0
      %p258 = por %p256, %p257
      %p259 = scmp.ne.s32.totalorder %s251, %s253
      %p260 = scmp.eq.s32.totalorder %s33, 1
      %p261 = por %p259, %p260
      %p262 = scmp.ne.s32.totalorder %s253, %s254
      %p263 = scmp.eq.s32.totalorder %s33, 0
      %p264 = por %p262, %p263
      %p265 = scmp.ne.s32.totalorder %s253, %s254
      %p266 = scmp.eq.s32.totalorder %s34, 1
      %p267 = por %p265, %p266
      %p269 = scmp.ne.s32.totalorder %s254, %s268
      %p270 = scmp.eq.s32.totalorder %s34, 0
      %p271 = por %p269, %p270
      %s273 = sadd.s32 %s272, 1
      %p276 = scmp.eq.s32.totalorder %s28, 1
      %p277 = scmp.ne.s32.totalorder %s272, %s274
      %p278 = scmp.eq.s32.totalorder %s28, 0
      %p279 = por %p277, %p278
      %p280 = scmp.ne.s32.totalorder %s272, %s274
      %p281 = scmp.eq.s32.totalorder %s33, 1
      %p282 = por %p280, %p281
      %p283 = scmp.ne.s32.totalorder %s274, %s275
      %p284 = scmp.eq.s32.totalorder %s33, 0
      %p285 = por %p283, %p284
      %p286 = scmp.ne.s32.totalorder %s274, %s275
      %p287 = scmp.eq.s32.totalorder %s34, 1
      %p288 = por %p286, %p287
      %p290 = scmp.ne.s32.totalorder %s275, %s289
      %p291 = scmp.eq.s32.totalorder %s34, 0
      %p292 = por %p290, %p291
      %s294 = sadd.s32 %s293, 1
      %p297 = scmp.eq.s32.totalorder %s28, 1
      %p298 = scmp.ne.s32.totalorder %s293, %s295
      %p299 = scmp.eq.s32.totalorder %s28, 0
      %p300 = por %p298, %p299
      %p301 = scmp.ne.s32.totalorder %s293, %s295
      %p302 = scmp.eq.s32.totalorder %s33, 1
      %p303 = por %p301, %p302
      %p304 = scmp.ne.s32.totalorder %s295, %s296
      %p305 = scmp.eq.s32.totalorder %s33, 0
      %p306 = por %p304, %p305
      %p307 = scmp.ne.s32.totalorder %s295, %s296
      %p308 = scmp.eq.s32.totalorder %s34, 1
      %p309 = por %p307, %p308
      %p311 = scmp.ne.s32.totalorder %s296, %s310
      %p312 = scmp.eq.s32.totalorder %s34, 0
      %p313 = por %p311, %p312
      %s315 = sadd.s32 %s314, 1
      %p318 = scmp.eq.s32.totalorder %s28, 1
      %p319 = scmp.ne.s32.totalorder %s314, %s316
      %p320 = scmp.eq.s32.totalorder %s28, 0
      %p321 = por %p319, %p320
      %p322 = scmp.ne.s32.totalorder %s314, %s316
      %p323 = scmp.eq.s32.totalorder %s33, 1
      %p324 = por %p322, %p323
      %p325 = scmp.ne.s32.totalorder %s316, %s317
      %p326 = scmp.eq.s32.totalorder %s33, 0
      %p327 = por %p325, %p326
      %p328 = scmp.ne.s32.totalorder %s316, %s317
      %p329 = scmp.eq.s32.totalorder %s34, 1
      %p330 = por %p328, %p329
      %p332 = scmp.ne.s32.totalorder %s317, %s331
      %p333 = scmp.eq.s32.totalorder %s34, 0
      %p334 = por %p332, %p333
      %s336 = sadd.s32 %s335, 1
      %p339 = scmp.eq.s32.totalorder %s28, 1
      %p340 = scmp.ne.s32.totalorder %s335, %s337
      %p341 = scmp.eq.s32.totalorder %s28, 0
      %p342 = por %p340, %p341
      %p343 = scmp.ne.s32.totalorder %s335, %s337
      %p344 = scmp.eq.s32.totalorder %s33, 1
      %p345 = por %p343, %p344
      %p346 = scmp.ne.s32.totalorder %s337, %s338
      %p347 = scmp.eq.s32.totalorder %s33, 0
      %p348 = por %p346, %p347
      %p349 = scmp.ne.s32.totalorder %s337, %s338
      %p350 = scmp.eq.s32.totalorder %s34, 1
      %p351 = por %p349, %p350
      %p353 = scmp.ne.s32.totalorder %s338, %s352
      %p354 = scmp.eq.s32.totalorder %s34, 0
      %p355 = por %p353, %p354
      %s356 = ssub.s32 %s28, %s35
      %p357 = scmp.eq.s32.totalorder %s356, 0
      %s359 = sadd.s32 %s358, 1
      %s360 = scalar_select %p357, %s358, %s359
      %p363 = pneg %p357
      %p364 = scmp.eq.s32.totalorder %s28, 1
      %p365 = por %p363, %p364
      %p366 = scmp.ne.s32.totalorder %s358, %s361
      %p367 = scmp.eq.s32.totalorder %s28, 0
      %p368 = por %p366, %p367
      %p369 = scmp.ne.s32.totalorder %s358, %s361
      %p370 = scmp.eq.s32.totalorder %s33, 1
      %p371 = por %p369, %p370
      %p372 = scmp.ne.s32.totalorder %s361, %s362
      %p373 = scmp.eq.s32.totalorder %s33, 0
      %p374 = por %p372, %p373
      %p375 = scmp.ne.s32.totalorder %s361, %s362
      %p376 = scmp.eq.s32.totalorder %s34, 1
      %p377 = por %p375, %p376
      %p379 = scmp.ne.s32.totalorder %s362, %s378
      %p380 = scmp.eq.s32.totalorder %s34, 0
      %p381 = por %p379, %p380
      %p382 = scmp.le.s32.totalorder 1, %s28
      %p383 = scmp.lt.s32.totalorder %s28, 3
      %p384 = pnand %p382, %p383
      %p385 = pneg %p384
      // Predicated region
      $region9: #{tpu_custom_call.1} parent=5 // pred_check
        _
      $region10: #{tpu_custom_call.1} parent=5 // pred_check_branch
        %387 = sbr.rel (%p384) target = $region12
      $region11: #{tpu_custom_call.1} parent=5 // pred_region
        %s388 = ssub.s32 %s28, 1
        // Predicated region
        $region13: #{tpu_custom_call.1} parent=11 // pred_check
          %p389 = pneg %p75
        $region14: #{tpu_custom_call.1} parent=11 // pred_check_branch
          %391 = sbr.rel (%p389) target = $region16
        $region15: #{tpu_custom_call.1} parent=11 // pred_region
          %s393 = ssub.s32 4096, 4096
          %394 = vsyncadd [#allocation3], %s393
          %s395 = sshll.u32 [#allocation2], 4
          %s396 = int_to_ptr.vmem [resolvable:$true] %s395
          %401 = dma.hbm_to_vmem [thread:$0]  %s1, 4096, %s396, [#allocation3], 256, 256, 16
        $region16: #{tpu_custom_call.1} parent=11 // pred_fallthru
          _
        // Predicated region
        $region17: #{tpu_custom_call.1} parent=11 // pred_check
          %p402 = pneg %p96
        $region18: #{tpu_custom_call.1} parent=11 // pred_check_branch
          %404 = sbr.rel (%p402) target = $region20
        $region19: #{tpu_custom_call.1} parent=11 // pred_region
          %s406 = ssub.s32 4096, 4096
          %407 = vsyncadd [#allocation6], %s406
          %s408 = sshll.u32 [#allocation5], 4
          %s409 = int_to_ptr.vmem [resolvable:$true] %s408
          %414 = dma.hbm_to_vmem [thread:$0]  %s2, 4096, %s409, [#allocation6], 128, 128, 8
        $region20: #{tpu_custom_call.1} parent=11 // pred_fallthru
          _
        // Predicated region
        $region21: #{tpu_custom_call.1} parent=11 // pred_check
          %p415 = pneg %p117
        $region22: #{tpu_custom_call.1} parent=11 // pred_check_branch
          %417 = sbr.rel (%p415) target = $region24
        $region23: #{tpu_custom_call.1} parent=11 // pred_region
          _
        $region24: #{tpu_custom_call.1} parent=11 // pred_fallthru
          _
        // Predicated region
        $region25: #{tpu_custom_call.1} parent=11 // pred_check
          %p418 = pneg %p138
        $region26: #{tpu_custom_call.1} parent=11 // pred_check_branch
          %420 = sbr.rel (%p418) target = $region28
        $region27: #{tpu_custom_call.1} parent=11 // pred_region
          _
        $region28: #{tpu_custom_call.1} parent=11 // pred_fallthru
          _
        // Predicated region
        $region29: #{tpu_custom_call.1} parent=11 // pred_check
          %p421 = pneg %p159
        $region30: #{tpu_custom_call.1} parent=11 // pred_check_branch
          %423 = sbr.rel (%p421) target = $region32
        $region31: #{tpu_custom_call.1} parent=11 // pred_region
          _
        $region32: #{tpu_custom_call.1} parent=11 // pred_fallthru
          _
        // Predicated region
        $region33: #{tpu_custom_call.1} parent=11 // pred_check
          %p424 = pneg %p180
        $region34: #{tpu_custom_call.1} parent=11 // pred_check_branch
          %426 = sbr.rel (%p424) target = $region36
        $region35: #{tpu_custom_call.1} parent=11 // pred_region
          _
        $region36: #{tpu_custom_call.1} parent=11 // pred_fallthru
          _
        // Predicated region
        $region37: #{tpu_custom_call.1} parent=11 // pred_check
          %p427 = pneg %p201
        $region38: #{tpu_custom_call.1} parent=11 // pred_check_branch
          %429 = sbr.rel (%p427) target = $region40
        $region39: #{tpu_custom_call.1} parent=11 // pred_region
          %s431 = ssub.s32 16384, 16384
          %432 = vsyncadd [#allocation6], %s431
          %s433 = sshll.u32 [#allocation7], 4
          %s434 = int_to_ptr.vmem [resolvable:$true] %s433
          %439 = dma.hbm_to_vmem [thread:$0]  %s7, 16384, %s434, [#allocation6], 512, 512, 32
        $region40: #{tpu_custom_call.1} parent=11 // pred_fallthru
          _
        // Predicated region
        $region41: #{tpu_custom_call.1} parent=11 // pred_check
          %p440 = pneg %p222
        $region42: #{tpu_custom_call.1} parent=11 // pred_check_branch
          %442 = sbr.rel (%p440) target = $region44
        $region43: #{tpu_custom_call.1} parent=11 // pred_region
          _
        $region44: #{tpu_custom_call.1} parent=11 // pred_fallthru
          _
        // Predicated region
        $region45: #{tpu_custom_call.1} parent=11 // pred_check
          %p443 = pneg %p243
        $region46: #{tpu_custom_call.1} parent=11 // pred_check_branch
          %445 = sbr.rel (%p443) target = $region48
        $region47: #{tpu_custom_call.1} parent=11 // pred_region
          %s447 = ssub.s32 16384, 16384
          %448 = vsyncadd [#allocation9], %s447
          %s449 = sshll.u32 [#allocation8], 4
          %s450 = int_to_ptr.vmem [resolvable:$true] %s449
          %455 = dma.hbm_to_vmem [thread:$0]  %s9, 16384, %s450, [#allocation9], 256, 256, 16
        $region48: #{tpu_custom_call.1} parent=11 // pred_fallthru
          _
        // Predicated region
        $region49: #{tpu_custom_call.1} parent=11 // pred_check
          %p456 = pneg %p264
        $region50: #{tpu_custom_call.1} parent=11 // pred_check_branch
          %458 = sbr.rel (%p456) target = $region52
        $region51: #{tpu_custom_call.1} parent=11 // pred_region
          _
        $region52: #{tpu_custom_call.1} parent=11 // pred_fallthru
          _
        // Predicated region
        $region53: #{tpu_custom_call.1} parent=11 // pred_check
          %p459 = pneg %p285
        $region54: #{tpu_custom_call.1} parent=11 // pred_check_branch
          %461 = sbr.rel (%p459) target = $region56
        $region55: #{tpu_custom_call.1} parent=11 // pred_region
          %s463 = ssub.s32 12288, 12288
          %464 = vsyncadd [#allocation9], %s463
          %s465 = sshll.u32 [#allocation10], 4
          %s466 = int_to_ptr.vmem [resolvable:$true] %s465
          %471 = dma.hbm_to_vmem [thread:$0]  %s11, 12288, %s466, [#allocation9], 256, 256, 16
        $region56: #{tpu_custom_call.1} parent=11 // pred_fallthru
          _
        // Predicated region
        $region57: #{tpu_custom_call.1} parent=11 // pred_check
          %p472 = pneg %p306
        $region58: #{tpu_custom_call.1} parent=11 // pred_check_branch
          %474 = sbr.rel (%p472) target = $region60
        $region59: #{tpu_custom_call.1} parent=11 // pred_region
          _
        $region60: #{tpu_custom_call.1} parent=11 // pred_fallthru
          _
        // Predicated region
        $region61: #{tpu_custom_call.1} parent=11 // pred_check
          %p475 = pneg %p327
        $region62: #{tpu_custom_call.1} parent=11 // pred_check_branch
          %477 = sbr.rel (%p475) target = $region64
        $region63: #{tpu_custom_call.1} parent=11 // pred_region
          %s479 = ssub.s32 24576, 24576
          %480 = vsyncadd [#allocation12], %s479
          %s481 = sshll.u32 [#allocation11], 4
          %s482 = int_to_ptr.vmem [resolvable:$true] %s481
          %487 = dma.hbm_to_vmem [thread:$0]  %s13, 24576, %s482, [#allocation12], 256, 256, 16
        $region64: #{tpu_custom_call.1} parent=11 // pred_fallthru
          _
        // Predicated region
        $region65: #{tpu_custom_call.1} parent=11 // pred_check
          %p488 = pneg %p348
        $region66: #{tpu_custom_call.1} parent=11 // pred_check_branch
          %490 = sbr.rel (%p488) target = $region68
        $region67: #{tpu_custom_call.1} parent=11 // pred_region
          _
        $region68: #{tpu_custom_call.1} parent=11 // pred_fallthru
          _
      $region12: #{tpu_custom_call.1} parent=5 // pred_fallthru
        _
      %p491 = scmp.lt.s32.totalorder %s28, 2
      // Predicated region
      $region69: #{tpu_custom_call.1} parent=5 // pred_check
        %p492 = pneg %p491
      $region70: #{tpu_custom_call.1} parent=5 // pred_check_branch
        %494 = sbr.rel (%p492) target = $region72
      $region71: #{tpu_custom_call.1} parent=5 // pred_region
        // Predicated region
        $region73: #{tpu_custom_call.1} parent=71 // pred_check
          %p495 = pneg %p48
        $region74: #{tpu_custom_call.1} parent=71 // pred_check_branch
          %497 = sbr.rel (%p495) target = $region76
        $region75: #{tpu_custom_call.1} parent=71 // pred_region
          %p498 = scmp.lt.s32.totalorder %s28, 1
          %s499 = scalar_select %p498, %s28, 1
          %s500 = smul.addr %s499, 8
          %s501 = scalar_lea.vmem %s0, %s500
        $region76: #{tpu_custom_call.1} parent=71 // pred_fallthru
          _
      $region72: #{tpu_custom_call.1} parent=5 // pred_fallthru
        _
      %p502 = scmp.le.s32.totalorder 1, %s28
      %p503 = scmp.lt.s32.totalorder %s28, 3
      %p504 = pnand %p502, %p503
      %p505 = pneg %p504
      // Predicated region
      $region77: #{tpu_custom_call.1} parent=5 // pred_check
        _
      $region78: #{tpu_custom_call.1} parent=5 // pred_check_branch
        %507 = sbr.rel (%p504) target = $region80
      $region79: #{tpu_custom_call.1} parent=5 // pred_region
        %s508 = ssub.s32 %s28, 1
        // Predicated region
        $region81: #{tpu_custom_call.1} parent=79 // pred_check
          %p509 = pneg %p75
        $region82: #{tpu_custom_call.1} parent=79 // pred_check_branch
          %511 = sbr.rel (%p509) target = $region84
        $region83: #{tpu_custom_call.1} parent=79 // pred_region
          %512 = dma.done [#allocation3], 4096
        $region84: #{tpu_custom_call.1} parent=79 // pred_fallthru
          _
        // Predicated region
        $region85: #{tpu_custom_call.1} parent=79 // pred_check
          %p513 = pneg %p96
        $region86: #{tpu_custom_call.1} parent=79 // pred_check_branch
          %515 = sbr.rel (%p513) target = $region88
        $region87: #{tpu_custom_call.1} parent=79 // pred_region
          %516 = dma.done [#allocation6], 4096
        $region88: #{tpu_custom_call.1} parent=79 // pred_fallthru
          _
        // Predicated region
        $region89: #{tpu_custom_call.1} parent=79 // pred_check
          %p517 = pneg %p201
        $region90: #{tpu_custom_call.1} parent=79 // pred_check_branch
          %519 = sbr.rel (%p517) target = $region92
        $region91: #{tpu_custom_call.1} parent=79 // pred_region
          %520 = dma.done [#allocation6], 16384
        $region92: #{tpu_custom_call.1} parent=79 // pred_fallthru
          _
        // Predicated region
        $region93: #{tpu_custom_call.1} parent=79 // pred_check
          %p521 = pneg %p243
        $region94: #{tpu_custom_call.1} parent=79 // pred_check_branch
          %523 = sbr.rel (%p521) target = $region96
        $region95: #{tpu_custom_call.1} parent=79 // pred_region
          %524 = dma.done [#allocation9], 16384
        $region96: #{tpu_custom_call.1} parent=79 // pred_fallthru
          _
        // Predicated region
        $region97: #{tpu_custom_call.1} parent=79 // pred_check
          %p525 = pneg %p285
        $region98: #{tpu_custom_call.1} parent=79 // pred_check_branch
          %527 = sbr.rel (%p525) target = $region100
        $region99: #{tpu_custom_call.1} parent=79 // pred_region
          %528 = dma.done [#allocation9], 12288
        $region100: #{tpu_custom_call.1} parent=79 // pred_fallthru
          _
        // Predicated region
        $region101: #{tpu_custom_call.1} parent=79 // pred_check
          %p529 = pneg %p327
        $region102: #{tpu_custom_call.1} parent=79 // pred_check_branch
          %531 = sbr.rel (%p529) target = $region104
        $region103: #{tpu_custom_call.1} parent=79 // pred_region
          %532 = dma.done [#allocation12], 24576
        $region104: #{tpu_custom_call.1} parent=79 // pred_fallthru
          _
        %p533 = scmp.lt.s32.totalorder %s33, 1
        %s534 = scalar_select %p533, %s33, 1
        %s535 = smul.addr %s534, 8
        %s536 = scalar_lea.vmem %s0, %s535
        %p537 = pneg %p54
        %p538 = pneg %p51
        %p539 = pneg %p75
        %p540 = pneg %p72
        %p541 = pneg %p96
        %p542 = pneg %p93
        %p543 = pneg %p117
        %p544 = pneg %p114
        %p545 = pneg %p138
        %p546 = pneg %p135
        %p547 = pneg %p159
        %p548 = pneg %p156
        %p549 = pneg %p180
        %p550 = pneg %p177
        %p551 = pneg %p201
        %p552 = pneg %p198
        %p553 = pneg %p222
        %p554 = pneg %p219
        %p555 = pneg %p243
        %p556 = pneg %p240
        %p557 = pneg %p264
        %p558 = pneg %p261
        %p559 = pneg %p285
        %p560 = pneg %p282
        %p561 = pneg %p306
        %p562 = pneg %p303
        %p563 = pneg %p327
        %p564 = pneg %p324
        %p565 = pneg %p348
        %p566 = pneg %p345
        %p567 = pneg %p374
        %p568 = pneg %p371
        %s569 = sand.u32 %s361, 1
        %s570 = scalar_lea.sflag [#allocation4], %s569
        %s571 = sand.u32 %s361, 1
        %s572 = smul.addr %s571, 8
        %s573 = scalar_lea.vmem [#allocation13], %s572
        %p574 = scmp.lt.s32.totalorder %s33, 1
        %s575 = scalar_select %p574, %s33, 1
        %s576 = smul.addr %s575, 8
        %s577 = scalar_lea.vmem %s0, %s576
        %v578 = vld [vmem:[%s577] sm:$0xff]
        %v579 = vld [vmem:[#allocation2] sm:$0xff]
        %v580 = vld [vmem:[#allocation2 + $0x8] sm:$0xff]
        %v581 = vld [vmem:[#allocation2 + $0x10] sm:$0xff]
        %v582 = vld [vmem:[#allocation2 + $0x18] sm:$0xff]
        %v583 = vld [vmem:[#allocation2 + $0x20] sm:$0xff]
        %v584 = vld [vmem:[#allocation2 + $0x28] sm:$0xff]
        %v585 = vld [vmem:[#allocation2 + $0x30] sm:$0xff]
        %v586 = vld [vmem:[#allocation2 + $0x38] sm:$0xff]
        %v587 = vld [vmem:[#allocation2 + $0x40] sm:$0xff]
        %v588 = vld [vmem:[#allocation2 + $0x48] sm:$0xff]
        %v589 = vld [vmem:[#allocation2 + $0x50] sm:$0xff]
        %v590 = vld [vmem:[#allocation2 + $0x58] sm:$0xff]
        %v591 = vld [vmem:[#allocation2 + $0x60] sm:$0xff]
        %v592 = vld [vmem:[#allocation2 + $0x68] sm:$0xff]
        %v593 = vld [vmem:[#allocation2 + $0x70] sm:$0xff]
        %v594 = vld [vmem:[#allocation2 + $0x78] sm:$0xff]
        %v595 = vld [vmem:[#allocation2 + $0x80] sm:$0xff]
        %v596 = vld [vmem:[#allocation2 + $0x88] sm:$0xff]
        %v597 = vld [vmem:[#allocation2 + $0x90] sm:$0xff]
        %v598 = vld [vmem:[#allocation2 + $0x98] sm:$0xff]
        %v599 = vld [vmem:[#allocation2 + $0xa0] sm:$0xff]
        %v600 = vld [vmem:[#allocation2 + $0xa8] sm:$0xff]
        %v601 = vld [vmem:[#allocation2 + $0xb0] sm:$0xff]
        %v602 = vld [vmem:[#allocation2 + $0xb8] sm:$0xff]
        %v603 = vld [vmem:[#allocation2 + $0xc0] sm:$0xff]
        %v604 = vld [vmem:[#allocation2 + $0xc8] sm:$0xff]
        %v605 = vld [vmem:[#allocation2 + $0xd0] sm:$0xff]
        %v606 = vld [vmem:[#allocation2 + $0xd8] sm:$0xff]
        %v607 = vld [vmem:[#allocation2 + $0xe0] sm:$0xff]
        %v608 = vld [vmem:[#allocation2 + $0xe8] sm:$0xff]
        %v609 = vld [vmem:[#allocation2 + $0xf0] sm:$0xff]
        %v610 = vld [vmem:[#allocation2 + $0xf8] sm:$0xff]
        %611 = vmatprep.subr.mxu0 %v580
        %612 = vmatpush1.msra.mxu0 %v579
        %613 = vmatprep.subr.mxu0 %v582
        %614 = vmatpush1.msra.mxu0 %v581
        %615 = vmatprep.subr.mxu0 %v584
        %616 = vmatpush1.msra.mxu0 %v583
        %617 = vmatprep.subr.mxu0 %v586
        %618 = vmatpush1.msra.mxu0 %v585
        %619 = vmatprep.subr.mxu0 %v588
        %620 = vmatpush1.msra.mxu0 %v587
        %621 = vmatprep.subr.mxu0 %v590
        %622 = vmatpush1.msra.mxu0 %v589
        %623 = vmatprep.subr.mxu0 %v592
        %624 = vmatpush1.msra.mxu0 %v591
        %625 = vmatprep.subr.mxu0 %v594
        %626 = vmatpush1.msra.mxu0 %v593
        %627 = vmatprep.subr.mxu0 %v596
        %628 = vmatpush1.msra.mxu0 %v595
        %629 = vmatprep.subr.mxu0 %v598
        %630 = vmatpush1.msra.mxu0 %v597
        %631 = vmatprep.subr.mxu0 %v600
        %632 = vmatpush1.msra.mxu0 %v599
        %633 = vmatprep.subr.mxu0 %v602
        %634 = vmatpush1.msra.mxu0 %v601
        %635 = vmatprep.subr.mxu0 %v604
        %636 = vmatpush1.msra.mxu0 %v603
        %637 = vmatprep.subr.mxu0 %v606
        %638 = vmatpush1.msra.mxu0 %v605
        %639 = vmatprep.subr.mxu0 %v608
        %640 = vmatpush1.msra.mxu0 %v607
        %641 = vmatprep.subr.mxu0 %v610
        %642 = vmatpush1.msra.mxu0 %v609
        %643 = vmatprep.subr.mxu0 0.0
        %644 = vmatpush1.msra.mxu0 0.0
        %645 = vmatprep.subr.mxu0 0.0
        %646 = vmatpush1.msra.mxu0 0.0
        %647 = vmatprep.subr.mxu0 0.0
        %648 = vmatpush1.msra.mxu0 0.0
        %649 = vmatprep.subr.mxu0 0.0
        %650 = vmatpush1.msra.mxu0 0.0
        %651 = vmatprep.subr.mxu0 0.0
        %652 = vmatpush1.msra.mxu0 0.0
        %653 = vmatprep.subr.mxu0 0.0
        %654 = vmatpush1.msra.mxu0 0.0
        %655 = vmatprep.subr.mxu0 0.0
        %656 = vmatpush1.msra.mxu0 0.0
        %657 = vmatprep.subr.mxu0 0.0
        %658 = vmatpush1.msra.mxu0 0.0
        %659 = vmatprep.subr.mxu0 0.0
        %660 = vmatpush1.msra.mxu0 0.0
        %661 = vmatprep.subr.mxu0 0.0
        %662 = vmatpush1.msra.mxu0 0.0
        %663 = vmatprep.subr.mxu0 0.0
        %664 = vmatpush1.msra.mxu0 0.0
        %665 = vmatprep.subr.mxu0 0.0
        %666 = vmatpush1.msra.mxu0 0.0
        %667 = vmatprep.subr.mxu0 0.0
        %668 = vmatpush1.msra.mxu0 0.0
        %669 = vmatprep.subr.mxu0 0.0
        %670 = vmatpush1.msra.mxu0 0.0
        %671 = vmatprep.subr.mxu0 0.0
        %672 = vmatpush1.msra.mxu0 0.0
        %673 = vmatprep.subr.mxu0 0.0
        %674 = vmatpush1.msra.mxu0 0.0
        %675 = vmatprep.mubr.f32.mxu0 0.0
        %676 = vmatmul.mubr.f32.gmra.mrb[0].mxu0 %v578
        %v677 = vpop.f32.mrb[0].mxu0
        %v678 = vadd.f32 0.0, %v677
        %v679 = vpop.f32.mrb[0].mxu0
        %v680 = vadd.f32 0.0, %v679
        %681 = vdwg.mxu0
        %v682 = vmul.f32 %v678, %v678
        %v683 = vmul.f32 %v680, %v680
        %v684 = vadd.f32 %v682, %v683
        %v685 = vrsqrt.pop %v684
        %v686 = vmul.f32 %v684, %v685
        %vm687 = vcmp.eq.f32.partialorder %v684, inf
        %v688 = vsel %vm687, %v684, %v686
        %vm689 = vcmp.eq.f32.partialorder %v684, 0.0
        %v690 = vand.u32 %v684, 2147483648
        %v691 = vsel %vm689, %v690, %v688
        %v692 = vld [vmem:[%s3] sm:$0x3]
        %vm693 = vcmask 64512
        %v695 = vsel %vm693, %v692, 0
        %697 = vmatprep.subr.mxu0 0.0
        %698 = vmatpush1.msra.mxu0 %v691
        %699 = vmatprep.subr.mxu0 0.0
        %700 = vmatpush1.msra.mxu0 0.0
        %701 = vmatprep.subr.mxu0 0.0
        %702 = vmatpush1.msra.mxu0 0.0
        %703 = vmatprep.subr.mxu0 0.0
        %704 = vmatpush1.msra.mxu0 0.0
        %705 = vmatprep.subr.mxu0 0.0
        %706 = vmatpush1.msra.mxu0 0.0
        %707 = vmatprep.subr.mxu0 0.0
        %708 = vmatpush1.msra.mxu0 0.0
        %709 = vmatprep.subr.mxu0 0.0
        %710 = vmatpush1.msra.mxu0 0.0
        %711 = vmatprep.subr.mxu0 0.0
        %712 = vmatpush1.msra.mxu0 0.0
        %713 = vmatprep.subr.mxu0 0.0
        %714 = vmatpush1.msra.mxu0 0.0
        %715 = vmatprep.subr.mxu0 0.0
        %716 = vmatpush1.msra.mxu0 0.0
        %717 = vmatprep.subr.mxu0 0.0
        %718 = vmatpush1.msra.mxu0 0.0
        %719 = vmatprep.subr.mxu0 0.0
        %720 = vmatpush1.msra.mxu0 0.0
        %721 = vmatprep.subr.mxu0 0.0
        %722 = vmatpush1.msra.mxu0 0.0
        %723 = vmatprep.subr.mxu0 0.0
        %724 = vmatpush1.msra.mxu0 0.0
        %725 = vmatprep.subr.mxu0 0.0
        %726 = vmatpush1.msra.mxu0 0.0
        %727 = vmatprep.subr.mxu0 0.0
        %728 = vmatpush1.msra.mxu0 0.0
        %729 = vmatprep.subr.mxu0 0.0
        %730 = vmatpush1.msra.mxu0 0.0
        %731 = vmatprep.subr.mxu0 0.0
        %732 = vmatpush1.msra.mxu0 0.0
        %733 = vmatprep.subr.mxu0 0.0
        %734 = vmatpush1.msra.mxu0 0.0
        %735 = vmatprep.subr.mxu0 0.0
        %736 = vmatpush1.msra.mxu0 0.0
        %737 = vmatprep.subr.mxu0 0.0
        %738 = vmatpush1.msra.mxu0 0.0
        %739 = vmatprep.subr.mxu0 0.0
        %740 = vmatpush1.msra.mxu0 0.0
        %741 = vmatprep.subr.mxu0 0.0
        %742 = vmatpush1.msra.mxu0 0.0
        %743 = vmatprep.subr.mxu0 0.0
        %744 = vmatpush1.msra.mxu0 0.0
        %745 = vmatprep.subr.mxu0 0.0
        %746 = vmatpush1.msra.mxu0 0.0
        %747 = vmatprep.subr.mxu0 0.0
        %748 = vmatpush1.msra.mxu0 0.0
        %749 = vmatprep.subr.mxu0 0.0
        %750 = vmatpush1.msra.mxu0 0.0
        %751 = vmatprep.subr.mxu0 0.0
        %752 = vmatpush1.msra.mxu0 0.0
        %753 = vmatprep.subr.mxu0 0.0
        %754 = vmatpush1.msra.mxu0 0.0
        %755 = vmatprep.subr.mxu0 0.0
        %756 = vmatpush1.msra.mxu0 0.0
        %757 = vmatprep.subr.mxu0 0.0
        %758 = vmatpush1.msra.mxu0 0.0
        %759 = vmatprep.subr.mxu0 0.0
        %760 = vmatpush1.msra.mxu0 0.0
        %761 = vmatprep.mubr.f32.mxu0 0.0
        %762 = vmatmul.mubr.f32.gmra.mrb[0].mxu0 %v695
        %v763 = vpop.f32.mrb[0].mxu0
        %v764 = vadd.f32 0.0, %v763
        %v765 = vpop.f32.mrb[0].mxu0
        %766 = vdwg.mxu0
        %v767 = vld [vmem:[%s5] sm:$0xff]
        %v768 = vld [vmem:[%s5 + $0x8] sm:$0xff]
        %v769 = vld [vmem:[%s5 + $0x10] sm:$0xff]
        %v770 = vld [vmem:[%s5 + $0x18] sm:$0xff]
        %v771 = vld [vmem:[%s5 + $0x20] sm:$0xff]
        %v772 = vld [vmem:[%s5 + $0x28] sm:$0xff]
        %v773 = vld [vmem:[%s5 + $0x30] sm:$0xff]
        %v774 = vld [vmem:[%s5 + $0x38] sm:$0xff]
        %v775 = vld [vmem:[%s5 + $0x40] sm:$0xff]
        %v776 = vld [vmem:[%s5 + $0x48] sm:$0xff]
        %v777 = vld [vmem:[%s5 + $0x50] sm:$0xff]
        %v778 = vld [vmem:[%s5 + $0x58] sm:$0xff]
        %v779 = vld [vmem:[%s5 + $0x60] sm:$0xff]
        %v780 = vld [vmem:[%s5 + $0x68] sm:$0xff]
        %v781 = vld [vmem:[%s5 + $0x70] sm:$0xff]
        %v782 = vld [vmem:[%s5 + $0x78] sm:$0xff]
        %v783 = vld [vmem:[%s6] sm:$0x1]
        %v785 = vlaneseq
        %v786 = vshrl.u32 %v785, 7
        %v787 = vsub.s32 0, %v786
        %v788 = vrot.slane %v783, %v787
        %790 = vmatprep.subr.mxu0 0.0
        %791 = vmatpush1.msra.mxu0 %v767
        %792 = vmatprep.subr.mxu0 0.0
        %793 = vmatpush1.msra.mxu0 %v768
        %794 = vmatprep.subr.mxu0 0.0
        %795 = vmatpush1.msra.mxu0 %v769
        %796 = vmatprep.subr.mxu0 0.0
        %797 = vmatpush1.msra.mxu0 %v770
        %798 = vmatprep.subr.mxu0 0.0
        %799 = vmatpush1.msra.mxu0 %v771
        %800 = vmatprep.subr.mxu0 0.0
        %801 = vmatpush1.msra.mxu0 %v772
        %802 = vmatprep.subr.mxu0 0.0
        %803 = vmatpush1.msra.mxu0 %v773
        %804 = vmatprep.subr.mxu0 0.0
        %805 = vmatpush1.msra.mxu0 %v774
        %806 = vmatprep.subr.mxu0 0.0
        %807 = vmatpush1.msra.mxu0 %v775
        %808 = vmatprep.subr.mxu0 0.0
        %809 = vmatpush1.msra.mxu0 %v776
        %810 = vmatprep.subr.mxu0 0.0
        %811 = vmatpush1.msra.mxu0 %v777
        %812 = vmatprep.subr.mxu0 0.0
        %813 = vmatpush1.msra.mxu0 %v778
        %814 = vmatprep.subr.mxu0 0.0
        %815 = vmatpush1.msra.mxu0 %v779
        %816 = vmatprep.subr.mxu0 0.0
        %817 = vmatpush1.msra.mxu0 %v780
        %818 = vmatprep.subr.mxu0 0.0
        %819 = vmatpush1.msra.mxu0 %v781
        %820 = vmatprep.subr.mxu0 0.0
        %821 = vmatpush1.msra.mxu0 %v782
        %822 = vmatprep.subr.mxu0 0.0
        %823 = vmatpush1.msra.mxu0 0.0
        %824 = vmatprep.subr.mxu0 0.0
        %825 = vmatpush1.msra.mxu0 0.0
        %826 = vmatprep.subr.mxu0 0.0
        %827 = vmatpush1.msra.mxu0 0.0
        %828 = vmatprep.subr.mxu0 0.0
        %829 = vmatpush1.msra.mxu0 0.0
        %830 = vmatprep.subr.mxu0 0.0
        %831 = vmatpush1.msra.mxu0 0.0
        %832 = vmatprep.subr.mxu0 0.0
        %833 = vmatpush1.msra.mxu0 0.0
        %834 = vmatprep.subr.mxu0 0.0
        %835 = vmatpush1.msra.mxu0 0.0
        %836 = vmatprep.subr.mxu0 0.0
        %837 = vmatpush1.msra.mxu0 0.0
        %838 = vmatprep.subr.mxu0 0.0
        %839 = vmatpush1.msra.mxu0 0.0
        %840 = vmatprep.subr.mxu0 0.0
        %841 = vmatpush1.msra.mxu0 0.0
        %842 = vmatprep.subr.mxu0 0.0
        %843 = vmatpush1.msra.mxu0 0.0
        %844 = vmatprep.subr.mxu0 0.0
        %845 = vmatpush1.msra.mxu0 0.0
        %846 = vmatprep.subr.mxu0 0.0
        %847 = vmatpush1.msra.mxu0 0.0
        %848 = vmatprep.subr.mxu0 0.0
        %849 = vmatpush1.msra.mxu0 0.0
        %850 = vmatprep.subr.mxu0 0.0
        %851 = vmatpush1.msra.mxu0 0.0
        %852 = vmatprep.subr.mxu0 0.0
        %853 = vmatpush1.msra.mxu0 0.0
        %854 = vmatprep.mubr.f32.mxu0 0.0
        %855 = vmatmul.mubr.f32.gmra.mrb[0].mxu0 %v764
        %v856 = vpop.f32.mrb[0].mxu0
        %v857 = vadd.f32 %v788, %v856
        %v858 = vpop.f32.mrb[0].mxu0
        %859 = vdwg.mxu0
        %vm860 = vcmask 9216
        %v861 = vsel %vm860, %v857, -inf
        %862 = vmax.xlane.f32.xlu0 %v861
        %v863 = vpop.xlane.xlu0 %862
        %v864 = vsub.f32 %v857, %v863
        %v865 = vmul.f32 %v864, 1.442695
        %v866 = vpow.pop %v865
        %v867 = vsel %vm860, %v866, 0.0
        %868 = vadd.xlane.f32.xlu0 %v867
        %v869 = vpop.xlane.xlu0 %868
        %v870 = vrcp.pop %v869
        %v871 = vmul.f32 %v866, %v870
        %v872 = vld [vmem:[%s4] sm:$0xff]
        %vm873 = vcmask 15360
        %v875 = vsel %vm873, %v872, 0
        %vm877 = vcmask 1041408
        %v879 = vsel %vm877, %v871, 0
        %881 = vmatprep.subr.mxu0 0.0
        %882 = vmatpush1.msra.mxu0 %v879
        %883 = vmatprep.subr.mxu0 0.0
        %884 = vmatpush1.msra.mxu0 0.0
        %885 = vmatprep.subr.mxu0 0.0
        %886 = vmatpush1.msra.mxu0 0.0
        %887 = vmatprep.subr.mxu0 0.0
        %888 = vmatpush1.msra.mxu0 0.0
        %889 = vmatprep.subr.mxu0 0.0
        %890 = vmatpush1.msra.mxu0 0.0
        %891 = vmatprep.subr.mxu0 0.0
        %892 = vmatpush1.msra.mxu0 0.0
        %893 = vmatprep.subr.mxu0 0.0
        %894 = vmatpush1.msra.mxu0 0.0
        %895 = vmatprep.subr.mxu0 0.0
        %896 = vmatpush1.msra.mxu0 0.0
        %897 = vmatprep.subr.mxu0 0.0
        %898 = vmatpush1.msra.mxu0 0.0
        %899 = vmatprep.subr.mxu0 0.0
        %900 = vmatpush1.msra.mxu0 0.0
        %901 = vmatprep.subr.mxu0 0.0
        %902 = vmatpush1.msra.mxu0 0.0
        %903 = vmatprep.subr.mxu0 0.0
        %904 = vmatpush1.msra.mxu0 0.0
        %905 = vmatprep.subr.mxu0 0.0
        %906 = vmatpush1.msra.mxu0 0.0
        %907 = vmatprep.subr.mxu0 0.0
        %908 = vmatpush1.msra.mxu0 0.0
        %909 = vmatprep.subr.mxu0 0.0
        %910 = vmatpush1.msra.mxu0 0.0
        %911 = vmatprep.subr.mxu0 0.0
        %912 = vmatpush1.msra.mxu0 0.0
        %913 = vmatprep.subr.mxu0 0.0
        %914 = vmatpush1.msra.mxu0 0.0
        %915 = vmatprep.subr.mxu0 0.0
        %916 = vmatpush1.msra.mxu0 0.0
        %917 = vmatprep.subr.mxu0 0.0
        %918 = vmatpush1.msra.mxu0 0.0
        %919 = vmatprep.subr.mxu0 0.0
        %920 = vmatpush1.msra.mxu0 0.0
        %921 = vmatprep.subr.mxu0 0.0
        %922 = vmatpush1.msra.mxu0 0.0
        %923 = vmatprep.subr.mxu0 0.0
        %924 = vmatpush1.msra.mxu0 0.0
        %925 = vmatprep.subr.mxu0 0.0
        %926 = vmatpush1.msra.mxu0 0.0
        %927 = vmatprep.subr.mxu0 0.0
        %928 = vmatpush1.msra.mxu0 0.0
        %929 = vmatprep.subr.mxu0 0.0
        %930 = vmatpush1.msra.mxu0 0.0
        %931 = vmatprep.subr.mxu0 0.0
        %932 = vmatpush1.msra.mxu0 0.0
        %933 = vmatprep.subr.mxu0 0.0
        %934 = vmatpush1.msra.mxu0 0.0
        %935 = vmatprep.subr.mxu0 0.0
        %936 = vmatpush1.msra.mxu0 0.0
        %937 = vmatprep.subr.mxu0 0.0
        %938 = vmatpush1.msra.mxu0 0.0
        %939 = vmatprep.subr.mxu0 0.0
        %940 = vmatpush1.msra.mxu0 0.0
        %941 = vmatprep.subr.mxu0 0.0
        %942 = vmatpush1.msra.mxu0 0.0
        %943 = vmatprep.subr.mxu0 0.0
        %944 = vmatpush1.msra.mxu0 0.0
        %945 = vmatprep.mubr.f32.mxu0 0.0
        %946 = vmatmul.mubr.f32.gmra.mrb[0].mxu0 %v875
        %v947 = vpop.f32.mrb[0].mxu0
        %v948 = vadd.f32 0.0, %v947
        %v949 = vpop.f32.mrb[0].mxu0
        %950 = vdwg.mxu0
        %v951 = vld [vmem:[#allocation7] sm:$0xff]
        %v952 = vld [vmem:[#allocation7 + $0x8] sm:$0xff]
        %v953 = vld [vmem:[#allocation7 + $0x10] sm:$0xff]
        %v954 = vld [vmem:[#allocation7 + $0x18] sm:$0xff]
        %v955 = vld [vmem:[#allocation7 + $0x20] sm:$0xff]
        %v956 = vld [vmem:[#allocation7 + $0x28] sm:$0xff]
        %v957 = vld [vmem:[#allocation7 + $0x30] sm:$0xff]
        %v958 = vld [vmem:[#allocation7 + $0x38] sm:$0xff]
        %v959 = vld [vmem:[#allocation7 + $0x40] sm:$0xff]
        %v960 = vld [vmem:[#allocation7 + $0x48] sm:$0xff]
        %v961 = vld [vmem:[#allocation7 + $0x50] sm:$0xff]
        %v962 = vld [vmem:[#allocation7 + $0x58] sm:$0xff]
        %v963 = vld [vmem:[#allocation7 + $0x60] sm:$0xff]
        %v964 = vld [vmem:[#allocation7 + $0x68] sm:$0xff]
        %v965 = vld [vmem:[#allocation7 + $0x70] sm:$0xff]
        %v966 = vld [vmem:[#allocation7 + $0x78] sm:$0xff]
        %v967 = vld [vmem:[#allocation7 + $0x80] sm:$0xff]
        %v968 = vld [vmem:[#allocation7 + $0x88] sm:$0xff]
        %v969 = vld [vmem:[#allocation7 + $0x90] sm:$0xff]
        %v970 = vld [vmem:[#allocation7 + $0x98] sm:$0xff]
        %v971 = vld [vmem:[#allocation7 + $0xa0] sm:$0xff]
        %v972 = vld [vmem:[#allocation7 + $0xa8] sm:$0xff]
        %v973 = vld [vmem:[#allocation7 + $0xb0] sm:$0xff]
        %v974 = vld [vmem:[#allocation7 + $0xb8] sm:$0xff]
        %v975 = vld [vmem:[#allocation7 + $0xc0] sm:$0xff]
        %v976 = vld [vmem:[#allocation7 + $0xc8] sm:$0xff]
        %v977 = vld [vmem:[#allocation7 + $0xd0] sm:$0xff]
        %v978 = vld [vmem:[#allocation7 + $0xd8] sm:$0xff]
        %v979 = vld [vmem:[#allocation7 + $0xe0] sm:$0xff]
        %v980 = vld [vmem:[#allocation7 + $0xe8] sm:$0xff]
        %v981 = vld [vmem:[#allocation7 + $0xf0] sm:$0xff]
        %v982 = vld [vmem:[#allocation7 + $0xf8] sm:$0xff]
        %v983 = vld [vmem:[#allocation7 + $0x100] sm:$0xff]
        %v984 = vld [vmem:[#allocation7 + $0x108] sm:$0xff]
        %v985 = vld [vmem:[#allocation7 + $0x110] sm:$0xff]
        %v986 = vld [vmem:[#allocation7 + $0x118] sm:$0xff]
        %v987 = vld [vmem:[#allocation7 + $0x120] sm:$0xff]
        %v988 = vld [vmem:[#allocation7 + $0x128] sm:$0xff]
        %v989 = vld [vmem:[#allocation7 + $0x130] sm:$0xff]
        %v990 = vld [vmem:[#allocation7 + $0x138] sm:$0xff]
        %v991 = vld [vmem:[#allocation7 + $0x140] sm:$0xff]
        %v992 = vld [vmem:[#allocation7 + $0x148] sm:$0xff]
        %v993 = vld [vmem:[#allocation7 + $0x150] sm:$0xff]
        %v994 = vld [vmem:[#allocation7 + $0x158] sm:$0xff]
        %v995 = vld [vmem:[#allocation7 + $0x160] sm:$0xff]
        %v996 = vld [vmem:[#allocation7 + $0x168] sm:$0xff]
        %v997 = vld [vmem:[#allocation7 + $0x170] sm:$0xff]
        %v998 = vld [vmem:[#allocation7 + $0x178] sm:$0xff]
        %v999 = vld [vmem:[#allocation7 + $0x180] sm:$0xff]
        %v1000 = vld [vmem:[#allocation7 + $0x188] sm:$0xff]
        %v1001 = vld [vmem:[#allocation7 + $0x190] sm:$0xff]
        %v1002 = vld [vmem:[#allocation7 + $0x198] sm:$0xff]
        %v1003 = vld [vmem:[#allocation7 + $0x1a0] sm:$0xff]
        %v1004 = vld [vmem:[#allocation7 + $0x1a8] sm:$0xff]
        %v1005 = vld [vmem:[#allocation7 + $0x1b0] sm:$0xff]
        %v1006 = vld [vmem:[#allocation7 + $0x1b8] sm:$0xff]
        %v1007 = vld [vmem:[#allocation7 + $0x1c0] sm:$0xff]
        %v1008 = vld [vmem:[#allocation7 + $0x1c8] sm:$0xff]
        %v1009 = vld [vmem:[#allocation7 + $0x1d0] sm:$0xff]
        %v1010 = vld [vmem:[#allocation7 + $0x1d8] sm:$0xff]
        %v1011 = vld [vmem:[#allocation7 + $0x1e0] sm:$0xff]
        %v1012 = vld [vmem:[#allocation7 + $0x1e8] sm:$0xff]
        %v1013 = vld [vmem:[#allocation7 + $0x1f0] sm:$0xff]
        %v1014 = vld [vmem:[#allocation7 + $0x1f8] sm:$0xff]
        %v1015 = vld [vmem:[#allocation7 + $0x200] sm:$0xff]
        %v1016 = vld [vmem:[#allocation7 + $0x208] sm:$0xff]
        %v1017 = vld [vmem:[#allocation7 + $0x210] sm:$0xff]
        %v1018 = vld [vmem:[#allocation7 + $0x218] sm:$0xff]
        %v1019 = vld [vmem:[#allocation7 + $0x220] sm:$0xff]
        %v1020 = vld [vmem:[#allocation7 + $0x228] sm:$0xff]
        %v1021 = vld [vmem:[#allocation7 + $0x230] sm:$0xff]
        %v1022 = vld [vmem:[#allocation7 + $0x238] sm:$0xff]
        %v1023 = vld [vmem:[#allocation7 + $0x240] sm:$0xff]
        %v1024 = vld [vmem:[#allocation7 + $0x248] sm:$0xff]
        %v1025 = vld [vmem:[#allocation7 + $0x250] sm:$0xff]
        %v1026 = vld [vmem:[#allocation7 + $0x258] sm:$0xff]
        %v1027 = vld [vmem:[#allocation7 + $0x260] sm:$0xff]
        %v1028 = vld [vmem:[#allocation7 + $0x268] sm:$0xff]
        %v1029 = vld [vmem:[#allocation7 + $0x270] sm:$0xff]
        %v1030 = vld [vmem:[#allocation7 + $0x278] sm:$0xff]
        %v1031 = vld [vmem:[#allocation7 + $0x280] sm:$0xff]
        %v1032 = vld [vmem:[#allocation7 + $0x288] sm:$0xff]
        %v1033 = vld [vmem:[#allocation7 + $0x290] sm:$0xff]
        %v1034 = vld [vmem:[#allocation7 + $0x298] sm:$0xff]
        %v1035 = vld [vmem:[#allocation7 + $0x2a0] sm:$0xff]
        %v1036 = vld [vmem:[#allocation7 + $0x2a8] sm:$0xff]
        %v1037 = vld [vmem:[#allocation7 + $0x2b0] sm:$0xff]
        %v1038 = vld [vmem:[#allocation7 + $0x2b8] sm:$0xff]
        %v1039 = vld [vmem:[#allocation7 + $0x2c0] sm:$0xff]
        %v1040 = vld [vmem:[#allocation7 + $0x2c8] sm:$0xff]
        %v1041 = vld [vmem:[#allocation7 + $0x2d0] sm:$0xff]
        %v1042 = vld [vmem:[#allocation7 + $0x2d8] sm:$0xff]
        %v1043 = vld [vmem:[#allocation7 + $0x2e0] sm:$0xff]
        %v1044 = vld [vmem:[#allocation7 + $0x2e8] sm:$0xff]
        %v1045 = vld [vmem:[#allocation7 + $0x2f0] sm:$0xff]
        %v1046 = vld [vmem:[#allocation7 + $0x2f8] sm:$0xff]
        %v1047 = vld [vmem:[#allocation7 + $0x300] sm:$0xff]
        %v1048 = vld [vmem:[#allocation7 + $0x308] sm:$0xff]
        %v1049 = vld [vmem:[#allocation7 + $0x310] sm:$0xff]
        %v1050 = vld [vmem:[#allocation7 + $0x318] sm:$0xff]
        %v1051 = vld [vmem:[#allocation7 + $0x320] sm:$0xff]
        %v1052 = vld [vmem:[#allocation7 + $0x328] sm:$0xff]
        %v1053 = vld [vmem:[#allocation7 + $0x330] sm:$0xff]
        %v1054 = vld [vmem:[#allocation7 + $0x338] sm:$0xff]
        %v1055 = vld [vmem:[#allocation7 + $0x340] sm:$0xff]
        %v1056 = vld [vmem:[#allocation7 + $0x348] sm:$0xff]
        %v1057 = vld [vmem:[#allocation7 + $0x350] sm:$0xff]
        %v1058 = vld [vmem:[#allocation7 + $0x358] sm:$0xff]
        %v1059 = vld [vmem:[#allocation7 + $0x360] sm:$0xff]
        %v1060 = vld [vmem:[#allocation7 + $0x368] sm:$0xff]
        %v1061 = vld [vmem:[#allocation7 + $0x370] sm:$0xff]
        %v1062 = vld [vmem:[#allocation7 + $0x378] sm:$0xff]
        %v1063 = vld [vmem:[#allocation7 + $0x380] sm:$0xff]
        %v1064 = vld [vmem:[#allocation7 + $0x388] sm:$0xff]
        %v1065 = vld [vmem:[#allocation7 + $0x390] sm:$0xff]
        %v1066 = vld [vmem:[#allocation7 + $0x398] sm:$0xff]
        %v1067 = vld [vmem:[#allocation7 + $0x3a0] sm:$0xff]
        %v1068 = vld [vmem:[#allocation7 + $0x3a8] sm:$0xff]
        %v1069 = vld [vmem:[#allocation7 + $0x3b0] sm:$0xff]
        %v1070 = vld [vmem:[#allocation7 + $0x3b8] sm:$0xff]
        %v1071 = vld [vmem:[#allocation7 + $0x3c0] sm:$0xff]
        %v1072 = vld [vmem:[#allocation7 + $0x3c8] sm:$0xff]
        %v1073 = vld [vmem:[#allocation7 + $0x3d0] sm:$0xff]
        %v1074 = vld [vmem:[#allocation7 + $0x3d8] sm:$0xff]
        %v1075 = vld [vmem:[#allocation7 + $0x3e0] sm:$0xff]
        %v1076 = vld [vmem:[#allocation7 + $0x3e8] sm:$0xff]
        %v1077 = vld [vmem:[#allocation7 + $0x3f0] sm:$0xff]
        %v1078 = vld [vmem:[#allocation7 + $0x3f8] sm:$0xff]
        %v1079 = vld [vmem:[%s8] sm:$0xf]
        %v1081 = vlaneseq
        %v1082 = vshrl.u32 %v1081, 7
        %v1083 = vsub.s32 0, %v1082
        %v1084 = vrot.slane %v1079, %v1083
        %v1085 = vlaneseq
        %v1086 = vshrl.u32 %v1085, 7
        %v1087 = vsub.s32 1, %v1086
        %v1088 = vrot.slane %v1079, %v1087
        %v1089 = vlaneseq
        %v1090 = vshrl.u32 %v1089, 7
        %v1091 = vsub.s32 2, %v1090
        %v1092 = vrot.slane %v1079, %v1091
        %v1093 = vlaneseq
        %v1094 = vshrl.u32 %v1093, 7
        %v1095 = vsub.s32 3, %v1094
        %v1096 = vrot.slane %v1079, %v1095
        %1101 = vmatprep.subr.mxu0 %v952
        %1102 = vmatpush1.msra.mxu0 %v951
        %1103 = vmatprep.subr.mxu0 %v956
        %1104 = vmatpush1.msra.mxu0 %v955
        %1105 = vmatprep.subr.mxu0 %v960
        %1106 = vmatpush1.msra.mxu0 %v959
        %1107 = vmatprep.subr.mxu0 %v964
        %1108 = vmatpush1.msra.mxu0 %v963
        %1109 = vmatprep.subr.mxu0 %v968
        %1110 = vmatpush1.msra.mxu0 %v967
        %1111 = vmatprep.subr.mxu0 %v972
        %1112 = vmatpush1.msra.mxu0 %v971
        %1113 = vmatprep.subr.mxu0 %v976
        %1114 = vmatpush1.msra.mxu0 %v975
        %1115 = vmatprep.subr.mxu0 %v980
        %1116 = vmatpush1.msra.mxu0 %v979
        %1117 = vmatprep.subr.mxu0 %v984
        %1118 = vmatpush1.msra.mxu0 %v983
        %1119 = vmatprep.subr.mxu0 %v988
        %1120 = vmatpush1.msra.mxu0 %v987
        %1121 = vmatprep.subr.mxu0 %v992
        %1122 = vmatpush1.msra.mxu0 %v991
        %1123 = vmatprep.subr.mxu0 %v996
        %1124 = vmatpush1.msra.mxu0 %v995
        %1125 = vmatprep.subr.mxu0 %v1000
        %1126 = vmatpush1.msra.mxu0 %v999
        %1127 = vmatprep.subr.mxu0 %v1004
        %1128 = vmatpush1.msra.mxu0 %v1003
        %1129 = vmatprep.subr.mxu0 %v1008
        %1130 = vmatpush1.msra.mxu0 %v1007
        %1131 = vmatprep.subr.mxu0 %v1012
        %1132 = vmatpush1.msra.mxu0 %v1011
        %1133 = vmatprep.subr.mxu0 %v1016
        %1134 = vmatpush1.msra.mxu0 %v1015
        %1135 = vmatprep.subr.mxu0 %v1020
        %1136 = vmatpush1.msra.mxu0 %v1019
        %1137 = vmatprep.subr.mxu0 %v1024
        %1138 = vmatpush1.msra.mxu0 %v1023
        %1139 = vmatprep.subr.mxu0 %v1028
        %1140 = vmatpush1.msra.mxu0 %v1027
        %1141 = vmatprep.subr.mxu0 %v1032
        %1142 = vmatpush1.msra.mxu0 %v1031
        %1143 = vmatprep.subr.mxu0 %v1036
        %1144 = vmatpush1.msra.mxu0 %v1035
        %1145 = vmatprep.subr.mxu0 %v1040
        %1146 = vmatpush1.msra.mxu0 %v1039
        %1147 = vmatprep.subr.mxu0 %v1044
        %1148 = vmatpush1.msra.mxu0 %v1043
        %1149 = vmatprep.subr.mxu0 %v1048
        %1150 = vmatpush1.msra.mxu0 %v1047
        %1151 = vmatprep.subr.mxu0 %v1052
        %1152 = vmatpush1.msra.mxu0 %v1051
        %1153 = vmatprep.subr.mxu0 %v1056
        %1154 = vmatpush1.msra.mxu0 %v1055
        %1155 = vmatprep.subr.mxu0 %v1060
        %1156 = vmatpush1.msra.mxu0 %v1059
        %1157 = vmatprep.subr.mxu0 %v1064
        %1158 = vmatpush1.msra.mxu0 %v1063
        %1159 = vmatprep.subr.mxu0 %v1068
        %1160 = vmatpush1.msra.mxu0 %v1067
        %1161 = vmatprep.subr.mxu0 %v1072
        %1162 = vmatpush1.msra.mxu0 %v1071
        %1163 = vmatprep.subr.mxu0 %v1076
        %1164 = vmatpush1.msra.mxu0 %v1075
        %1165 = vmatprep.mubr.f32.mxu0 %v680
        %1166 = vmatmul.mubr.f32.gmra.mrb[0].mxu0 %v678
        %v1167 = vpop.f32.mrb[0].mxu0
        %v1168 = vadd.f32 %v1084, %v1167
        %v1169 = vpop.f32.mrb[0].mxu0
        %v1170 = vadd.f32 %v1088, %v1169
        %1171 = vdwg.mxu0
        %1172 = vmatprep.subr.mxu0 %v954
        %1173 = vmatpush1.msra.mxu0 %v953
        %1174 = vmatprep.subr.mxu0 %v958
        %1175 = vmatpush1.msra.mxu0 %v957
        %1176 = vmatprep.subr.mxu0 %v962
        %1177 = vmatpush1.msra.mxu0 %v961
        %1178 = vmatprep.subr.mxu0 %v966
        %1179 = vmatpush1.msra.mxu0 %v965
        %1180 = vmatprep.subr.mxu0 %v970
        %1181 = vmatpush1.msra.mxu0 %v969
        %1182 = vmatprep.subr.mxu0 %v974
        %1183 = vmatpush1.msra.mxu0 %v973
        %1184 = vmatprep.subr.mxu0 %v978
        %1185 = vmatpush1.msra.mxu0 %v977
        %1186 = vmatprep.subr.mxu0 %v982
        %1187 = vmatpush1.msra.mxu0 %v981
        %1188 = vmatprep.subr.mxu0 %v986
        %1189 = vmatpush1.msra.mxu0 %v985
        %1190 = vmatprep.subr.mxu0 %v990
        %1191 = vmatpush1.msra.mxu0 %v989
        %1192 = vmatprep.subr.mxu0 %v994
        %1193 = vmatpush1.msra.mxu0 %v993
        %1194 = vmatprep.subr.mxu0 %v998
        %1195 = vmatpush1.msra.mxu0 %v997
        %1196 = vmatprep.subr.mxu0 %v1002
        %1197 = vmatpush1.msra.mxu0 %v1001
        %1198 = vmatprep.subr.mxu0 %v1006
        %1199 = vmatpush1.msra.mxu0 %v1005
        %1200 = vmatprep.subr.mxu0 %v1010
        %1201 = vmatpush1.msra.mxu0 %v1009
        %1202 = vmatprep.subr.mxu0 %v1014
        %1203 = vmatpush1.msra.mxu0 %v1013
        %1204 = vmatprep.subr.mxu0 %v1018
        %1205 = vmatpush1.msra.mxu0 %v1017
        %1206 = vmatprep.subr.mxu0 %v1022
        %1207 = vmatpush1.msra.mxu0 %v1021
        %1208 = vmatprep.subr.mxu0 %v1026
        %1209 = vmatpush1.msra.mxu0 %v1025
        %1210 = vmatprep.subr.mxu0 %v1030
        %1211 = vmatpush1.msra.mxu0 %v1029
        %1212 = vmatprep.subr.mxu0 %v1034
        %1213 = vmatpush1.msra.mxu0 %v1033
        %1214 = vmatprep.subr.mxu0 %v1038
        %1215 = vmatpush1.msra.mxu0 %v1037
        %1216 = vmatprep.subr.mxu0 %v1042
        %1217 = vmatpush1.msra.mxu0 %v1041
        %1218 = vmatprep.subr.mxu0 %v1046
        %1219 = vmatpush1.msra.mxu0 %v1045
        %1220 = vmatprep.subr.mxu0 %v1050
        %1221 = vmatpush1.msra.mxu0 %v1049
        %1222 = vmatprep.subr.mxu0 %v1054
        %1223 = vmatpush1.msra.mxu0 %v1053
        %1224 = vmatprep.subr.mxu0 %v1058
        %1225 = vmatpush1.msra.mxu0 %v1057
        %1226 = vmatprep.subr.mxu0 %v1062
        %1227 = vmatpush1.msra.mxu0 %v1061
        %1228 = vmatprep.subr.mxu0 %v1066
        %1229 = vmatpush1.msra.mxu0 %v1065
        %1230 = vmatprep.subr.mxu0 %v1070
        %1231 = vmatpush1.msra.mxu0 %v1069
        %1232 = vmatprep.subr.mxu0 %v1074
        %1233 = vmatpush1.msra.mxu0 %v1073
        %1234 = vmatprep.subr.mxu0 %v1078
        %1235 = vmatpush1.msra.mxu0 %v1077
        %1236 = vmatprep.mubr.f32.mxu0 %v680
        %1237 = vmatmul.mubr.f32.gmra.mrb[0].mxu0 %v678
        %v1238 = vpop.f32.mrb[0].mxu0
        %v1239 = vadd.f32 %v1092, %v1238
        %v1240 = vpop.f32.mrb[0].mxu0
        %v1241 = vadd.f32 %v1096, %v1240
        %1242 = vdwg.mxu0
        %v1243 = vmax.f32 %v1168, 0.0
        %v1244 = vmax.f32 %v1170, 0.0
        %v1245 = vmax.f32 %v1239, 0.0
        %v1246 = vmax.f32 %v1241, 0.0
        %1248 = vset.pattern.permute.xlu0 0
        %1249 = vperm.xlu0 %1248, %v948
        %v1250 = vpop.permute.xlu0 %1249
        %v1252 = vmul.f32 %v1243, %v1250
        %v1253 = vmul.f32 %v1244, %v1250
        %1254 = vset.pattern.permute.xlu0 1
        %1255 = vperm.xlu0 %1254, %v948
        %v1256 = vpop.permute.xlu0 %1255
        %v1258 = vmul.f32 %v1245, %v1256
        %v1259 = vmul.f32 %v1246, %v1256
        %v1260 = vld [vmem:[#allocation8] sm:$0xff]
        %v1261 = vld [vmem:[#allocation8 + $0x8] sm:$0xff]
        %v1262 = vld [vmem:[#allocation8 + $0x10] sm:$0xff]
        %v1263 = vld [vmem:[#allocation8 + $0x18] sm:$0xff]
        %v1264 = vld [vmem:[#allocation8 + $0x20] sm:$0xff]
        %v1265 = vld [vmem:[#allocation8 + $0x28] sm:$0xff]
        %v1266 = vld [vmem:[#allocation8 + $0x30] sm:$0xff]
        %v1267 = vld [vmem:[#allocation8 + $0x38] sm:$0xff]
        %v1268 = vld [vmem:[#allocation8 + $0x40] sm:$0xff]
        %v1269 = vld [vmem:[#allocation8 + $0x48] sm:$0xff]
        %v1270 = vld [vmem:[#allocation8 + $0x50] sm:$0xff]
        %v1271 = vld [vmem:[#allocation8 + $0x58] sm:$0xff]
        %v1272 = vld [vmem:[#allocation8 + $0x60] sm:$0xff]
        %v1273 = vld [vmem:[#allocation8 + $0x68] sm:$0xff]
        %v1274 = vld [vmem:[#allocation8 + $0x70] sm:$0xff]
        %v1275 = vld [vmem:[#allocation8 + $0x78] sm:$0xff]
        %v1276 = vld [vmem:[#allocation8 + $0x80] sm:$0xff]
        %v1277 = vld [vmem:[#allocation8 + $0x88] sm:$0xff]
        %v1278 = vld [vmem:[#allocation8 + $0x90] sm:$0xff]
        %v1279 = vld [vmem:[#allocation8 + $0x98] sm:$0xff]
        %v1280 = vld [vmem:[#allocation8 + $0xa0] sm:$0xff]
        %v1281 = vld [vmem:[#allocation8 + $0xa8] sm:$0xff]
        %v1282 = vld [vmem:[#allocation8 + $0xb0] sm:$0xff]
        %v1283 = vld [vmem:[#allocation8 + $0xb8] sm:$0xff]
        %v1284 = vld [vmem:[#allocation8 + $0xc0] sm:$0xff]
        %v1285 = vld [vmem:[#allocation8 + $0xc8] sm:$0xff]
        %v1286 = vld [vmem:[#allocation8 + $0xd0] sm:$0xff]
        %v1287 = vld [vmem:[#allocation8 + $0xd8] sm:$0xff]
        %v1288 = vld [vmem:[#allocation8 + $0xe0] sm:$0xff]
        %v1289 = vld [vmem:[#allocation8 + $0xe8] sm:$0xff]
        %v1290 = vld [vmem:[#allocation8 + $0xf0] sm:$0xff]
        %v1291 = vld [vmem:[#allocation8 + $0xf8] sm:$0xff]
        %v1292 = vld [vmem:[#allocation8 + $0x100] sm:$0xff]
        %v1293 = vld [vmem:[#allocation8 + $0x108] sm:$0xff]
        %v1294 = vld [vmem:[#allocation8 + $0x110] sm:$0xff]
        %v1295 = vld [vmem:[#allocation8 + $0x118] sm:$0xff]
        %v1296 = vld [vmem:[#allocation8 + $0x120] sm:$0xff]
        %v1297 = vld [vmem:[#allocation8 + $0x128] sm:$0xff]
        %v1298 = vld [vmem:[#allocation8 + $0x130] sm:$0xff]
        %v1299 = vld [vmem:[#allocation8 + $0x138] sm:$0xff]
        %v1300 = vld [vmem:[#allocation8 + $0x140] sm:$0xff]
        %v1301 = vld [vmem:[#allocation8 + $0x148] sm:$0xff]
        %v1302 = vld [vmem:[#allocation8 + $0x150] sm:$0xff]
        %v1303 = vld [vmem:[#allocation8 + $0x158] sm:$0xff]
        %v1304 = vld [vmem:[#allocation8 + $0x160] sm:$0xff]
        %v1305 = vld [vmem:[#allocation8 + $0x168] sm:$0xff]
        %v1306 = vld [vmem:[#allocation8 + $0x170] sm:$0xff]
        %v1307 = vld [vmem:[#allocation8 + $0x178] sm:$0xff]
        %v1308 = vld [vmem:[#allocation8 + $0x180] sm:$0xff]
        %v1309 = vld [vmem:[#allocation8 + $0x188] sm:$0xff]
        %v1310 = vld [vmem:[#allocation8 + $0x190] sm:$0xff]
        %v1311 = vld [vmem:[#allocation8 + $0x198] sm:$0xff]
        %v1312 = vld [vmem:[#allocation8 + $0x1a0] sm:$0xff]
        %v1313 = vld [vmem:[#allocation8 + $0x1a8] sm:$0xff]
        %v1314 = vld [vmem:[#allocation8 + $0x1b0] sm:$0xff]
        %v1315 = vld [vmem:[#allocation8 + $0x1b8] sm:$0xff]
        %v1316 = vld [vmem:[#allocation8 + $0x1c0] sm:$0xff]
        %v1317 = vld [vmem:[#allocation8 + $0x1c8] sm:$0xff]
        %v1318 = vld [vmem:[#allocation8 + $0x1d0] sm:$0xff]
        %v1319 = vld [vmem:[#allocation8 + $0x1d8] sm:$0xff]
        %v1320 = vld [vmem:[#allocation8 + $0x1e0] sm:$0xff]
        %v1321 = vld [vmem:[#allocation8 + $0x1e8] sm:$0xff]
        %v1322 = vld [vmem:[#allocation8 + $0x1f0] sm:$0xff]
        %v1323 = vld [vmem:[#allocation8 + $0x1f8] sm:$0xff]
        %v1324 = vld [vmem:[#allocation8 + $0x200] sm:$0xff]
        %v1325 = vld [vmem:[#allocation8 + $0x208] sm:$0xff]
        %v1326 = vld [vmem:[#allocation8 + $0x210] sm:$0xff]
        %v1327 = vld [vmem:[#allocation8 + $0x218] sm:$0xff]
        %v1328 = vld [vmem:[#allocation8 + $0x220] sm:$0xff]
        %v1329 = vld [vmem:[#allocation8 + $0x228] sm:$0xff]
        %v1330 = vld [vmem:[#allocation8 + $0x230] sm:$0xff]
        %v1331 = vld [vmem:[#allocation8 + $0x238] sm:$0xff]
        %v1332 = vld [vmem:[#allocation8 + $0x240] sm:$0xff]
        %v1333 = vld [vmem:[#allocation8 + $0x248] sm:$0xff]
        %v1334 = vld [vmem:[#allocation8 + $0x250] sm:$0xff]
        %v1335 = vld [vmem:[#allocation8 + $0x258] sm:$0xff]
        %v1336 = vld [vmem:[#allocation8 + $0x260] sm:$0xff]
        %v1337 = vld [vmem:[#allocation8 + $0x268] sm:$0xff]
        %v1338 = vld [vmem:[#allocation8 + $0x270] sm:$0xff]
        %v1339 = vld [vmem:[#allocation8 + $0x278] sm:$0xff]
        %v1340 = vld [vmem:[#allocation8 + $0x280] sm:$0xff]
        %v1341 = vld [vmem:[#allocation8 + $0x288] sm:$0xff]
        %v1342 = vld [vmem:[#allocation8 + $0x290] sm:$0xff]
        %v1343 = vld [vmem:[#allocation8 + $0x298] sm:$0xff]
        %v1344 = vld [vmem:[#allocation8 + $0x2a0] sm:$0xff]
        %v1345 = vld [vmem:[#allocation8 + $0x2a8] sm:$0xff]
        %v1346 = vld [vmem:[#allocation8 + $0x2b0] sm:$0xff]
        %v1347 = vld [vmem:[#allocation8 + $0x2b8] sm:$0xff]
        %v1348 = vld [vmem:[#allocation8 + $0x2c0] sm:$0xff]
        %v1349 = vld [vmem:[#allocation8 + $0x2c8] sm:$0xff]
        %v1350 = vld [vmem:[#allocation8 + $0x2d0] sm:$0xff]
        %v1351 = vld [vmem:[#allocation8 + $0x2d8] sm:$0xff]
        %v1352 = vld [vmem:[#allocation8 + $0x2e0] sm:$0xff]
        %v1353 = vld [vmem:[#allocation8 + $0x2e8] sm:$0xff]
        %v1354 = vld [vmem:[#allocation8 + $0x2f0] sm:$0xff]
        %v1355 = vld [vmem:[#allocation8 + $0x2f8] sm:$0xff]
        %v1356 = vld [vmem:[#allocation8 + $0x300] sm:$0xff]
        %v1357 = vld [vmem:[#allocation8 + $0x308] sm:$0xff]
        %v1358 = vld [vmem:[#allocation8 + $0x310] sm:$0xff]
        %v1359 = vld [vmem:[#allocation8 + $0x318] sm:$0xff]
        %v1360 = vld [vmem:[#allocation8 + $0x320] sm:$0xff]
        %v1361 = vld [vmem:[#allocation8 + $0x328] sm:$0xff]
        %v1362 = vld [vmem:[#allocation8 + $0x330] sm:$0xff]
        %v1363 = vld [vmem:[#allocation8 + $0x338] sm:$0xff]
        %v1364 = vld [vmem:[#allocation8 + $0x340] sm:$0xff]
        %v1365 = vld [vmem:[#allocation8 + $0x348] sm:$0xff]
        %v1366 = vld [vmem:[#allocation8 + $0x350] sm:$0xff]
        %v1367 = vld [vmem:[#allocation8 + $0x358] sm:$0xff]
        %v1368 = vld [vmem:[#allocation8 + $0x360] sm:$0xff]
        %v1369 = vld [vmem:[#allocation8 + $0x368] sm:$0xff]
        %v1370 = vld [vmem:[#allocation8 + $0x370] sm:$0xff]
        %v1371 = vld [vmem:[#allocation8 + $0x378] sm:$0xff]
        %v1372 = vld [vmem:[#allocation8 + $0x380] sm:$0xff]
        %v1373 = vld [vmem:[#allocation8 + $0x388] sm:$0xff]
        %v1374 = vld [vmem:[#allocation8 + $0x390] sm:$0xff]
        %v1375 = vld [vmem:[#allocation8 + $0x398] sm:$0xff]
        %v1376 = vld [vmem:[#allocation8 + $0x3a0] sm:$0xff]
        %v1377 = vld [vmem:[#allocation8 + $0x3a8] sm:$0xff]
        %v1378 = vld [vmem:[#allocation8 + $0x3b0] sm:$0xff]
        %v1379 = vld [vmem:[#allocation8 + $0x3b8] sm:$0xff]
        %v1380 = vld [vmem:[#allocation8 + $0x3c0] sm:$0xff]
        %v1381 = vld [vmem:[#allocation8 + $0x3c8] sm:$0xff]
        %v1382 = vld [vmem:[#allocation8 + $0x3d0] sm:$0xff]
        %v1383 = vld [vmem:[#allocation8 + $0x3d8] sm:$0xff]
        %v1384 = vld [vmem:[#allocation8 + $0x3e0] sm:$0xff]
        %v1385 = vld [vmem:[#allocation8 + $0x3e8] sm:$0xff]
        %v1386 = vld [vmem:[#allocation8 + $0x3f0] sm:$0xff]
        %v1387 = vld [vmem:[#allocation8 + $0x3f8] sm:$0xff]
        %v1388 = vld [vmem:[%s10] sm:$0xf]
        %v1391 = vunpack.c.l.s4 1983009808
        %v1392 = vunpack.c.0.s8 %v1391
        %v1393 = vlaneseq
        %v1394 = vshrl.u32 %v1393, 7
        %v1395 = vsub.s32 %v1392, %v1394
        %v1396 = vrot.slane %v1388, %v1395
        %v1397 = vcombine.high %v1396, %v1396
        %v1398 = vsel %vm873, %v948, 0
        %v1400 = vsel %vm877, %v1396, 0
        %v1402 = vsel %vm877, %v1397, 0
        %1404 = vmatprep.subr.mxu0 %v1402
        %1405 = vmatpush1.msra.mxu0 %v1400
        %1406 = vmatprep.subr.mxu0 0.0
        %1407 = vmatpush1.msra.mxu0 0.0
        %1408 = vmatprep.subr.mxu0 0.0
        %1409 = vmatpush1.msra.mxu0 0.0
        %1410 = vmatprep.subr.mxu0 0.0
        %1411 = vmatpush1.msra.mxu0 0.0
        %1412 = vmatprep.subr.mxu0 0.0
        %1413 = vmatpush1.msra.mxu0 0.0
        %1414 = vmatprep.subr.mxu0 0.0
        %1415 = vmatpush1.msra.mxu0 0.0
        %1416 = vmatprep.subr.mxu0 0.0
        %1417 = vmatpush1.msra.mxu0 0.0
        %1418 = vmatprep.subr.mxu0 0.0
        %1419 = vmatpush1.msra.mxu0 0.0
        %1420 = vmatprep.subr.mxu0 0.0
        %1421 = vmatpush1.msra.mxu0 0.0
        %1422 = vmatprep.subr.mxu0 0.0
        %1423 = vmatpush1.msra.mxu0 0.0
        %1424 = vmatprep.subr.mxu0 0.0
        %1425 = vmatpush1.msra.mxu0 0.0
        %1426 = vmatprep.subr.mxu0 0.0
        %1427 = vmatpush1.msra.mxu0 0.0
        %1428 = vmatprep.subr.mxu0 0.0
        %1429 = vmatpush1.msra.mxu0 0.0
        %1430 = vmatprep.subr.mxu0 0.0
        %1431 = vmatpush1.msra.mxu0 0.0
        %1432 = vmatprep.subr.mxu0 0.0
        %1433 = vmatpush1.msra.mxu0 0.0
        %1434 = vmatprep.subr.mxu0 0.0
        %1435 = vmatpush1.msra.mxu0 0.0
        %1436 = vmatprep.subr.mxu0 0.0
        %1437 = vmatpush1.msra.mxu0 0.0
        %1438 = vmatprep.subr.mxu0 0.0
        %1439 = vmatpush1.msra.mxu0 0.0
        %1440 = vmatprep.subr.mxu0 0.0
        %1441 = vmatpush1.msra.mxu0 0.0
        %1442 = vmatprep.subr.mxu0 0.0
        %1443 = vmatpush1.msra.mxu0 0.0
        %1444 = vmatprep.subr.mxu0 0.0
        %1445 = vmatpush1.msra.mxu0 0.0
        %1446 = vmatprep.subr.mxu0 0.0
        %1447 = vmatpush1.msra.mxu0 0.0
        %1448 = vmatprep.subr.mxu0 0.0
        %1449 = vmatpush1.msra.mxu0 0.0
        %1450 = vmatprep.subr.mxu0 0.0
        %1451 = vmatpush1.msra.mxu0 0.0
        %1452 = vmatprep.subr.mxu0 0.0
        %1453 = vmatpush1.msra.mxu0 0.0
        %1454 = vmatprep.subr.mxu0 0.0
        %1455 = vmatpush1.msra.mxu0 0.0
        %1456 = vmatprep.subr.mxu0 0.0
        %1457 = vmatpush1.msra.mxu0 0.0
        %1458 = vmatprep.subr.mxu0 0.0
        %1459 = vmatpush1.msra.mxu0 0.0
        %1460 = vmatprep.subr.mxu0 0.0
        %1461 = vmatpush1.msra.mxu0 0.0
        %1462 = vmatprep.subr.mxu0 0.0
        %1463 = vmatpush1.msra.mxu0 0.0
        %1464 = vmatprep.subr.mxu0 0.0
        %1465 = vmatpush1.msra.mxu0 0.0
        %1466 = vmatprep.subr.mxu0 0.0
        %1467 = vmatpush1.msra.mxu0 0.0
        %1468 = vmatprep.mubr.f32.mxu0 0.0
        %1469 = vmatmul.mubr.f32.gmra.mrb[0].mxu0 %v1398
        %v1470 = vpop.f32.mrb[0].mxu0
        %v1471 = vadd.f32 0.0, %v1470
        %v1472 = vpop.f32.mrb[0].mxu0
        %v1473 = vadd.f32 0.0, %v1472
        %1474 = vdwg.mxu0
        %1475 = vmatprep.subr.mxu0 %v1261
        %1476 = vmatpush1.msra.mxu0 %v1260
        %1477 = vmatprep.subr.mxu0 %v1263
        %1478 = vmatpush1.msra.mxu0 %v1262
        %1479 = vmatprep.subr.mxu0 %v1265
        %1480 = vmatpush1.msra.mxu0 %v1264
        %1481 = vmatprep.subr.mxu0 %v1267
        %1482 = vmatpush1.msra.mxu0 %v1266
        %1483 = vmatprep.subr.mxu0 %v1269
        %1484 = vmatpush1.msra.mxu0 %v1268
        %1485 = vmatprep.subr.mxu0 %v1271
        %1486 = vmatpush1.msra.mxu0 %v1270
        %1487 = vmatprep.subr.mxu0 %v1273
        %1488 = vmatpush1.msra.mxu0 %v1272
        %1489 = vmatprep.subr.mxu0 %v1275
        %1490 = vmatpush1.msra.mxu0 %v1274
        %1491 = vmatprep.subr.mxu0 %v1277
        %1492 = vmatpush1.msra.mxu0 %v1276
        %1493 = vmatprep.subr.mxu0 %v1279
        %1494 = vmatpush1.msra.mxu0 %v1278
        %1495 = vmatprep.subr.mxu0 %v1281
        %1496 = vmatpush1.msra.mxu0 %v1280
        %1497 = vmatprep.subr.mxu0 %v1283
        %1498 = vmatpush1.msra.mxu0 %v1282
        %1499 = vmatprep.subr.mxu0 %v1285
        %1500 = vmatpush1.msra.mxu0 %v1284
        %1501 = vmatprep.subr.mxu0 %v1287
        %1502 = vmatpush1.msra.mxu0 %v1286
        %1503 = vmatprep.subr.mxu0 %v1289
        %1504 = vmatpush1.msra.mxu0 %v1288
        %1505 = vmatprep.subr.mxu0 %v1291
        %1506 = vmatpush1.msra.mxu0 %v1290
        %1507 = vmatprep.subr.mxu0 %v1293
        %1508 = vmatpush1.msra.mxu0 %v1292
        %1509 = vmatprep.subr.mxu0 %v1295
        %1510 = vmatpush1.msra.mxu0 %v1294
        %1511 = vmatprep.subr.mxu0 %v1297
        %1512 = vmatpush1.msra.mxu0 %v1296
        %1513 = vmatprep.subr.mxu0 %v1299
        %1514 = vmatpush1.msra.mxu0 %v1298
        %1515 = vmatprep.subr.mxu0 %v1301
        %1516 = vmatpush1.msra.mxu0 %v1300
        %1517 = vmatprep.subr.mxu0 %v1303
        %1518 = vmatpush1.msra.mxu0 %v1302
        %1519 = vmatprep.subr.mxu0 %v1305
        %1520 = vmatpush1.msra.mxu0 %v1304
        %1521 = vmatprep.subr.mxu0 %v1307
        %1522 = vmatpush1.msra.mxu0 %v1306
        %1523 = vmatprep.subr.mxu0 %v1309
        %1524 = vmatpush1.msra.mxu0 %v1308
        %1525 = vmatprep.subr.mxu0 %v1311
        %1526 = vmatpush1.msra.mxu0 %v1310
        %1527 = vmatprep.subr.mxu0 %v1313
        %1528 = vmatpush1.msra.mxu0 %v1312
        %1529 = vmatprep.subr.mxu0 %v1315
        %1530 = vmatpush1.msra.mxu0 %v1314
        %1531 = vmatprep.subr.mxu0 %v1317
        %1532 = vmatpush1.msra.mxu0 %v1316
        %1533 = vmatprep.subr.mxu0 %v1319
        %1534 = vmatpush1.msra.mxu0 %v1318
        %1535 = vmatprep.subr.mxu0 %v1321
        %1536 = vmatpush1.msra.mxu0 %v1320
        %1537 = vmatprep.subr.mxu0 %v1323
        %1538 = vmatpush1.msra.mxu0 %v1322
        %1539 = vmatprep.mubr.f32.mxu0 %v1253
        %1540 = vmatmul.mubr.f32.gmra.mrb[0].mxu0 %v1252
        %v1541 = vpop.f32.mrb[0].mxu0
        %v1542 = vadd.f32 %v1471, %v1541
        %v1543 = vpop.f32.mrb[0].mxu0
        %v1544 = vadd.f32 %v1473, %v1543
        %1545 = vdwg.mxu0
        %1546 = vmatprep.subr.mxu0 %v1325
        %1547 = vmatpush1.msra.mxu0 %v1324
        %1548 = vmatprep.subr.mxu0 %v1327
        %1549 = vmatpush1.msra.mxu0 %v1326
        %1550 = vmatprep.subr.mxu0 %v1329
        %1551 = vmatpush1.msra.mxu0 %v1328
        %1552 = vmatprep.subr.mxu0 %v1331
        %1553 = vmatpush1.msra.mxu0 %v1330
        %1554 = vmatprep.subr.mxu0 %v1333
        %1555 = vmatpush1.msra.mxu0 %v1332
        %1556 = vmatprep.subr.mxu0 %v1335
        %1557 = vmatpush1.msra.mxu0 %v1334
        %1558 = vmatprep.subr.mxu0 %v1337
        %1559 = vmatpush1.msra.mxu0 %v1336
        %1560 = vmatprep.subr.mxu0 %v1339
        %1561 = vmatpush1.msra.mxu0 %v1338
        %1562 = vmatprep.subr.mxu0 %v1341
        %1563 = vmatpush1.msra.mxu0 %v1340
        %1564 = vmatprep.subr.mxu0 %v1343
        %1565 = vmatpush1.msra.mxu0 %v1342
        %1566 = vmatprep.subr.mxu0 %v1345
        %1567 = vmatpush1.msra.mxu0 %v1344
        %1568 = vmatprep.subr.mxu0 %v1347
        %1569 = vmatpush1.msra.mxu0 %v1346
        %1570 = vmatprep.subr.mxu0 %v1349
        %1571 = vmatpush1.msra.mxu0 %v1348
        %1572 = vmatprep.subr.mxu0 %v1351
        %1573 = vmatpush1.msra.mxu0 %v1350
        %1574 = vmatprep.subr.mxu0 %v1353
        %1575 = vmatpush1.msra.mxu0 %v1352
        %1576 = vmatprep.subr.mxu0 %v1355
        %1577 = vmatpush1.msra.mxu0 %v1354
        %1578 = vmatprep.subr.mxu0 %v1357
        %1579 = vmatpush1.msra.mxu0 %v1356
        %1580 = vmatprep.subr.mxu0 %v1359
        %1581 = vmatpush1.msra.mxu0 %v1358
        %1582 = vmatprep.subr.mxu0 %v1361
        %1583 = vmatpush1.msra.mxu0 %v1360
        %1584 = vmatprep.subr.mxu0 %v1363
        %1585 = vmatpush1.msra.mxu0 %v1362
        %1586 = vmatprep.subr.mxu0 %v1365
        %1587 = vmatpush1.msra.mxu0 %v1364
        %1588 = vmatprep.subr.mxu0 %v1367
        %1589 = vmatpush1.msra.mxu0 %v1366
        %1590 = vmatprep.subr.mxu0 %v1369
        %1591 = vmatpush1.msra.mxu0 %v1368
        %1592 = vmatprep.subr.mxu0 %v1371
        %1593 = vmatpush1.msra.mxu0 %v1370
        %1594 = vmatprep.subr.mxu0 %v1373
        %1595 = vmatpush1.msra.mxu0 %v1372
        %1596 = vmatprep.subr.mxu0 %v1375
        %1597 = vmatpush1.msra.mxu0 %v1374
        %1598 = vmatprep.subr.mxu0 %v1377
        %1599 = vmatpush1.msra.mxu0 %v1376
        %1600 = vmatprep.subr.mxu0 %v1379
        %1601 = vmatpush1.msra.mxu0 %v1378
        %1602 = vmatprep.subr.mxu0 %v1381
        %1603 = vmatpush1.msra.mxu0 %v1380
        %1604 = vmatprep.subr.mxu0 %v1383
        %1605 = vmatpush1.msra.mxu0 %v1382
        %1606 = vmatprep.subr.mxu0 %v1385
        %1607 = vmatpush1.msra.mxu0 %v1384
        %1608 = vmatprep.subr.mxu0 %v1387
        %1609 = vmatpush1.msra.mxu0 %v1386
        %1610 = vmatprep.mubr.f32.mxu0 %v1259
        %1611 = vmatmul.mubr.f32.gmra.mrb[0].mxu0 %v1258
        %v1612 = vpop.f32.mrb[0].mxu0
        %v1613 = vadd.f32 %v1542, %v1612
        %v1614 = vpop.f32.mrb[0].mxu0
        %v1615 = vadd.f32 %v1544, %v1614
        %1616 = vdwg.mxu0
        %v1617 = vld [vmem:[#allocation5] sm:$0xff]
        %v1618 = vld [vmem:[#allocation5 + $0x8] sm:$0xff]
        %v1619 = vld [vmem:[#allocation5 + $0x10] sm:$0xff]
        %v1620 = vld [vmem:[#allocation5 + $0x18] sm:$0xff]
        %v1621 = vld [vmem:[#allocation5 + $0x20] sm:$0xff]
        %v1622 = vld [vmem:[#allocation5 + $0x28] sm:$0xff]
        %v1623 = vld [vmem:[#allocation5 + $0x30] sm:$0xff]
        %v1624 = vld [vmem:[#allocation5 + $0x38] sm:$0xff]
        %v1625 = vld [vmem:[#allocation5 + $0x40] sm:$0xff]
        %v1626 = vld [vmem:[#allocation5 + $0x48] sm:$0xff]
        %v1627 = vld [vmem:[#allocation5 + $0x50] sm:$0xff]
        %v1628 = vld [vmem:[#allocation5 + $0x58] sm:$0xff]
        %v1629 = vld [vmem:[#allocation5 + $0x60] sm:$0xff]
        %v1630 = vld [vmem:[#allocation5 + $0x68] sm:$0xff]
        %v1631 = vld [vmem:[#allocation5 + $0x70] sm:$0xff]
        %v1632 = vld [vmem:[#allocation5 + $0x78] sm:$0xff]
        %v1633 = vld [vmem:[#allocation5 + $0x80] sm:$0xff]
        %v1634 = vld [vmem:[#allocation5 + $0x88] sm:$0xff]
        %v1635 = vld [vmem:[#allocation5 + $0x90] sm:$0xff]
        %v1636 = vld [vmem:[#allocation5 + $0x98] sm:$0xff]
        %v1637 = vld [vmem:[#allocation5 + $0xa0] sm:$0xff]
        %v1638 = vld [vmem:[#allocation5 + $0xa8] sm:$0xff]
        %v1639 = vld [vmem:[#allocation5 + $0xb0] sm:$0xff]
        %v1640 = vld [vmem:[#allocation5 + $0xb8] sm:$0xff]
        %v1641 = vld [vmem:[#allocation5 + $0xc0] sm:$0xff]
        %v1642 = vld [vmem:[#allocation5 + $0xc8] sm:$0xff]
        %v1643 = vld [vmem:[#allocation5 + $0xd0] sm:$0xff]
        %v1644 = vld [vmem:[#allocation5 + $0xd8] sm:$0xff]
        %v1645 = vld [vmem:[#allocation5 + $0xe0] sm:$0xff]
        %v1646 = vld [vmem:[#allocation5 + $0xe8] sm:$0xff]
        %v1647 = vld [vmem:[#allocation5 + $0xf0] sm:$0xff]
        %v1648 = vld [vmem:[#allocation5 + $0xf8] sm:$0xff]
        %1649 = vmatprep.subr.mxu0 0.0
        %1650 = vmatpush1.msra.mxu0 %v1617
        %1651 = vmatprep.subr.mxu0 0.0
        %1652 = vmatpush1.msra.mxu0 %v1618
        %1653 = vmatprep.subr.mxu0 0.0
        %1654 = vmatpush1.msra.mxu0 %v1619
        %1655 = vmatprep.subr.mxu0 0.0
        %1656 = vmatpush1.msra.mxu0 %v1620
        %1657 = vmatprep.subr.mxu0 0.0
        %1658 = vmatpush1.msra.mxu0 %v1621
        %1659 = vmatprep.subr.mxu0 0.0
        %1660 = vmatpush1.msra.mxu0 %v1622
        %1661 = vmatprep.subr.mxu0 0.0
        %1662 = vmatpush1.msra.mxu0 %v1623
        %1663 = vmatprep.subr.mxu0 0.0
        %1664 = vmatpush1.msra.mxu0 %v1624
        %1665 = vmatprep.subr.mxu0 0.0
        %1666 = vmatpush1.msra.mxu0 %v1625
        %1667 = vmatprep.subr.mxu0 0.0
        %1668 = vmatpush1.msra.mxu0 %v1626
        %1669 = vmatprep.subr.mxu0 0.0
        %1670 = vmatpush1.msra.mxu0 %v1627
        %1671 = vmatprep.subr.mxu0 0.0
        %1672 = vmatpush1.msra.mxu0 %v1628
        %1673 = vmatprep.subr.mxu0 0.0
        %1674 = vmatpush1.msra.mxu0 %v1629
        %1675 = vmatprep.subr.mxu0 0.0
        %1676 = vmatpush1.msra.mxu0 %v1630
        %1677 = vmatprep.subr.mxu0 0.0
        %1678 = vmatpush1.msra.mxu0 %v1631
        %1679 = vmatprep.subr.mxu0 0.0
        %1680 = vmatpush1.msra.mxu0 %v1632
        %1681 = vmatprep.subr.mxu0 0.0
        %1682 = vmatpush1.msra.mxu0 %v1633
        %1683 = vmatprep.subr.mxu0 0.0
        %1684 = vmatpush1.msra.mxu0 %v1634
        %1685 = vmatprep.subr.mxu0 0.0
        %1686 = vmatpush1.msra.mxu0 %v1635
        %1687 = vmatprep.subr.mxu0 0.0
        %1688 = vmatpush1.msra.mxu0 %v1636
        %1689 = vmatprep.subr.mxu0 0.0
        %1690 = vmatpush1.msra.mxu0 %v1637
        %1691 = vmatprep.subr.mxu0 0.0
        %1692 = vmatpush1.msra.mxu0 %v1638
        %1693 = vmatprep.subr.mxu0 0.0
        %1694 = vmatpush1.msra.mxu0 %v1639
        %1695 = vmatprep.subr.mxu0 0.0
        %1696 = vmatpush1.msra.mxu0 %v1640
        %1697 = vmatprep.subr.mxu0 0.0
        %1698 = vmatpush1.msra.mxu0 %v1641
        %1699 = vmatprep.subr.mxu0 0.0
        %1700 = vmatpush1.msra.mxu0 %v1642
        %1701 = vmatprep.subr.mxu0 0.0
        %1702 = vmatpush1.msra.mxu0 %v1643
        %1703 = vmatprep.subr.mxu0 0.0
        %1704 = vmatpush1.msra.mxu0 %v1644
        %1705 = vmatprep.subr.mxu0 0.0
        %1706 = vmatpush1.msra.mxu0 %v1645
        %1707 = vmatprep.subr.mxu0 0.0
        %1708 = vmatpush1.msra.mxu0 %v1646
        %1709 = vmatprep.subr.mxu0 0.0
        %1710 = vmatpush1.msra.mxu0 %v1647
        %1711 = vmatprep.subr.mxu0 0.0
        %1712 = vmatpush1.msra.mxu0 %v1648
        %1713 = vmatprep.mubr.f32.mxu0 %v1615
        %1714 = vmatmul.mubr.f32.gmra.mrb[0].mxu0 %v1613
        %v1715 = vpop.f32.mrb[0].mxu0
        %v1716 = vadd.f32 0.0, %v1715
        %v1717 = vpop.f32.mrb[0].mxu0
        %1718 = vdwg.mxu0
        %v1719 = vsub.f32 %v578, %v1716
        %v1720 = vld [vmem:[#allocation10] sm:$0xff]
        %v1721 = vld [vmem:[#allocation10 + $0x8] sm:$0xff]
        %v1722 = vld [vmem:[#allocation10 + $0x10] sm:$0xff]
        %v1723 = vld [vmem:[#allocation10 + $0x18] sm:$0xff]
        %v1724 = vld [vmem:[#allocation10 + $0x20] sm:$0xff]
        %v1725 = vld [vmem:[#allocation10 + $0x28] sm:$0xff]
        %v1726 = vld [vmem:[#allocation10 + $0x30] sm:$0xff]
        %v1727 = vld [vmem:[#allocation10 + $0x38] sm:$0xff]
        %v1728 = vld [vmem:[#allocation10 + $0x40] sm:$0xff]
        %v1729 = vld [vmem:[#allocation10 + $0x48] sm:$0xff]
        %v1730 = vld [vmem:[#allocation10 + $0x50] sm:$0xff]
        %v1731 = vld [vmem:[#allocation10 + $0x58] sm:$0xff]
        %v1732 = vld [vmem:[#allocation10 + $0x60] sm:$0xff]
        %v1733 = vld [vmem:[#allocation10 + $0x68] sm:$0xff]
        %v1734 = vld [vmem:[#allocation10 + $0x70] sm:$0xff]
        %v1735 = vld [vmem:[#allocation10 + $0x78] sm:$0xff]
        %v1736 = vld [vmem:[#allocation10 + $0x80] sm:$0xff]
        %v1737 = vld [vmem:[#allocation10 + $0x88] sm:$0xff]
        %v1738 = vld [vmem:[#allocation10 + $0x90] sm:$0xff]
        %v1739 = vld [vmem:[#allocation10 + $0x98] sm:$0xff]
        %v1740 = vld [vmem:[#allocation10 + $0xa0] sm:$0xff]
        %v1741 = vld [vmem:[#allocation10 + $0xa8] sm:$0xff]
        %v1742 = vld [vmem:[#allocation10 + $0xb0] sm:$0xff]
        %v1743 = vld [vmem:[#allocation10 + $0xb8] sm:$0xff]
        %v1744 = vld [vmem:[#allocation10 + $0xc0] sm:$0xff]
        %v1745 = vld [vmem:[#allocation10 + $0xc8] sm:$0xff]
        %v1746 = vld [vmem:[#allocation10 + $0xd0] sm:$0xff]
        %v1747 = vld [vmem:[#allocation10 + $0xd8] sm:$0xff]
        %v1748 = vld [vmem:[#allocation10 + $0xe0] sm:$0xff]
        %v1749 = vld [vmem:[#allocation10 + $0xe8] sm:$0xff]
        %v1750 = vld [vmem:[#allocation10 + $0xf0] sm:$0xff]
        %v1751 = vld [vmem:[#allocation10 + $0xf8] sm:$0xff]
        %v1752 = vld [vmem:[%s12] sm:$0x3]
        %v1754 = vlaneseq
        %v1755 = vshrl.u32 %v1754, 7
        %v1756 = vsub.s32 0, %v1755
        %v1757 = vrot.slane %v1752, %v1756
        %v1758 = vlaneseq
        %v1759 = vshrl.u32 %v1758, 7
        %v1760 = vsub.s32 1, %v1759
        %v1761 = vrot.slane %v1752, %v1760
        %1764 = vmatprep.subr.mxu0 %v1721
        %1765 = vmatpush1.msra.mxu0 %v1720
        %1766 = vmatprep.subr.mxu0 %v1723
        %1767 = vmatpush1.msra.mxu0 %v1722
        %1768 = vmatprep.subr.mxu0 %v1725
        %1769 = vmatpush1.msra.mxu0 %v1724
        %1770 = vmatprep.subr.mxu0 %v1727
        %1771 = vmatpush1.msra.mxu0 %v1726
        %1772 = vmatprep.subr.mxu0 %v1729
        %1773 = vmatpush1.msra.mxu0 %v1728
        %1774 = vmatprep.subr.mxu0 %v1731
        %1775 = vmatpush1.msra.mxu0 %v1730
        %1776 = vmatprep.subr.mxu0 %v1733
        %1777 = vmatpush1.msra.mxu0 %v1732
        %1778 = vmatprep.subr.mxu0 %v1735
        %1779 = vmatpush1.msra.mxu0 %v1734
        %1780 = vmatprep.subr.mxu0 %v1737
        %1781 = vmatpush1.msra.mxu0 %v1736
        %1782 = vmatprep.subr.mxu0 %v1739
        %1783 = vmatpush1.msra.mxu0 %v1738
        %1784 = vmatprep.subr.mxu0 %v1741
        %1785 = vmatpush1.msra.mxu0 %v1740
        %1786 = vmatprep.subr.mxu0 %v1743
        %1787 = vmatpush1.msra.mxu0 %v1742
        %1788 = vmatprep.subr.mxu0 %v1745
        %1789 = vmatpush1.msra.mxu0 %v1744
        %1790 = vmatprep.subr.mxu0 %v1747
        %1791 = vmatpush1.msra.mxu0 %v1746
        %1792 = vmatprep.subr.mxu0 %v1749
        %1793 = vmatpush1.msra.mxu0 %v1748
        %1794 = vmatprep.subr.mxu0 %v1751
        %1795 = vmatpush1.msra.mxu0 %v1750
        %1796 = vmatprep.subr.mxu0 0.0
        %1797 = vmatpush1.msra.mxu0 0.0
        %1798 = vmatprep.subr.mxu0 0.0
        %1799 = vmatpush1.msra.mxu0 0.0
        %1800 = vmatprep.subr.mxu0 0.0
        %1801 = vmatpush1.msra.mxu0 0.0
        %1802 = vmatprep.subr.mxu0 0.0
        %1803 = vmatpush1.msra.mxu0 0.0
        %1804 = vmatprep.subr.mxu0 0.0
        %1805 = vmatpush1.msra.mxu0 0.0
        %1806 = vmatprep.subr.mxu0 0.0
        %1807 = vmatpush1.msra.mxu0 0.0
        %1808 = vmatprep.subr.mxu0 0.0
        %1809 = vmatpush1.msra.mxu0 0.0
        %1810 = vmatprep.subr.mxu0 0.0
        %1811 = vmatpush1.msra.mxu0 0.0
        %1812 = vmatprep.subr.mxu0 0.0
        %1813 = vmatpush1.msra.mxu0 0.0
        %1814 = vmatprep.subr.mxu0 0.0
        %1815 = vmatpush1.msra.mxu0 0.0
        %1816 = vmatprep.subr.mxu0 0.0
        %1817 = vmatpush1.msra.mxu0 0.0
        %1818 = vmatprep.subr.mxu0 0.0
        %1819 = vmatpush1.msra.mxu0 0.0
        %1820 = vmatprep.subr.mxu0 0.0
        %1821 = vmatpush1.msra.mxu0 0.0
        %1822 = vmatprep.subr.mxu0 0.0
        %1823 = vmatpush1.msra.mxu0 0.0
        %1824 = vmatprep.subr.mxu0 0.0
        %1825 = vmatpush1.msra.mxu0 0.0
        %1826 = vmatprep.subr.mxu0 0.0
        %1827 = vmatpush1.msra.mxu0 0.0
        %1828 = vmatprep.mubr.f32.mxu0 0.0
        %1829 = vmatmul.mubr.f32.gmra.mrb[0].mxu0 %v1719
        %v1830 = vpop.f32.mrb[0].mxu0
        %v1831 = vadd.f32 %v1757, %v1830
        %v1832 = vpop.f32.mrb[0].mxu0
        %v1833 = vadd.f32 %v1761, %v1832
        %1834 = vdwg.mxu0
        %v1835 = vmax.f32 %v1831, 0.0
        %v1836 = vmax.f32 %v1833, 0.0
        %v1837 = vld [vmem:[#allocation11] sm:$0xff]
        %v1838 = vld [vmem:[#allocation11 + $0x8] sm:$0xff]
        %v1839 = vld [vmem:[#allocation11 + $0x10] sm:$0xff]
        %v1840 = vld [vmem:[#allocation11 + $0x18] sm:$0xff]
        %v1841 = vld [vmem:[#allocation11 + $0x20] sm:$0xff]
        %v1842 = vld [vmem:[#allocation11 + $0x28] sm:$0xff]
        %v1843 = vld [vmem:[#allocation11 + $0x30] sm:$0xff]
        %v1844 = vld [vmem:[#allocation11 + $0x38] sm:$0xff]
        %v1845 = vld [vmem:[#allocation11 + $0x40] sm:$0xff]
        %v1846 = vld [vmem:[#allocation11 + $0x48] sm:$0xff]
        %v1847 = vld [vmem:[#allocation11 + $0x50] sm:$0xff]
        %v1848 = vld [vmem:[#allocation11 + $0x58] sm:$0xff]
        %v1849 = vld [vmem:[#allocation11 + $0x60] sm:$0xff]
        %v1850 = vld [vmem:[#allocation11 + $0x68] sm:$0xff]
        %v1851 = vld [vmem:[#allocation11 + $0x70] sm:$0xff]
        %v1852 = vld [vmem:[#allocation11 + $0x78] sm:$0xff]
        %v1853 = vld [vmem:[#allocation11 + $0x80] sm:$0xff]
        %v1854 = vld [vmem:[#allocation11 + $0x88] sm:$0xff]
        %v1855 = vld [vmem:[#allocation11 + $0x90] sm:$0xff]
        %v1856 = vld [vmem:[#allocation11 + $0x98] sm:$0xff]
        %v1857 = vld [vmem:[#allocation11 + $0xa0] sm:$0xff]
        %v1858 = vld [vmem:[#allocation11 + $0xa8] sm:$0xff]
        %v1859 = vld [vmem:[#allocation11 + $0xb0] sm:$0xff]
        %v1860 = vld [vmem:[#allocation11 + $0xb8] sm:$0xff]
        %v1861 = vld [vmem:[#allocation11 + $0xc0] sm:$0xff]
        %v1862 = vld [vmem:[#allocation11 + $0xc8] sm:$0xff]
        %v1863 = vld [vmem:[#allocation11 + $0xd0] sm:$0xff]
        %v1864 = vld [vmem:[#allocation11 + $0xd8] sm:$0xff]
        %v1865 = vld [vmem:[#allocation11 + $0xe0] sm:$0xff]
        %v1866 = vld [vmem:[#allocation11 + $0xe8] sm:$0xff]
        %v1867 = vld [vmem:[#allocation11 + $0xf0] sm:$0xff]
        %v1868 = vld [vmem:[#allocation11 + $0xf8] sm:$0xff]
        %v1869 = vld [vmem:[#allocation11 + $0x100] sm:$0xff]
        %v1870 = vld [vmem:[#allocation11 + $0x108] sm:$0xff]
        %v1871 = vld [vmem:[#allocation11 + $0x110] sm:$0xff]
        %v1872 = vld [vmem:[#allocation11 + $0x118] sm:$0xff]
        %v1873 = vld [vmem:[#allocation11 + $0x120] sm:$0xff]
        %v1874 = vld [vmem:[#allocation11 + $0x128] sm:$0xff]
        %v1875 = vld [vmem:[#allocation11 + $0x130] sm:$0xff]
        %v1876 = vld [vmem:[#allocation11 + $0x138] sm:$0xff]
        %v1877 = vld [vmem:[#allocation11 + $0x140] sm:$0xff]
        %v1878 = vld [vmem:[#allocation11 + $0x148] sm:$0xff]
        %v1879 = vld [vmem:[#allocation11 + $0x150] sm:$0xff]
        %v1880 = vld [vmem:[#allocation11 + $0x158] sm:$0xff]
        %v1881 = vld [vmem:[#allocation11 + $0x160] sm:$0xff]
        %v1882 = vld [vmem:[#allocation11 + $0x168] sm:$0xff]
        %v1883 = vld [vmem:[#allocation11 + $0x170] sm:$0xff]
        %v1884 = vld [vmem:[#allocation11 + $0x178] sm:$0xff]
        %v1885 = vld [vmem:[#allocation11 + $0x180] sm:$0xff]
        %v1886 = vld [vmem:[#allocation11 + $0x188] sm:$0xff]
        %v1887 = vld [vmem:[#allocation11 + $0x190] sm:$0xff]
        %v1888 = vld [vmem:[#allocation11 + $0x198] sm:$0xff]
        %v1889 = vld [vmem:[#allocation11 + $0x1a0] sm:$0xff]
        %v1890 = vld [vmem:[#allocation11 + $0x1a8] sm:$0xff]
        %v1891 = vld [vmem:[#allocation11 + $0x1b0] sm:$0xff]
        %v1892 = vld [vmem:[#allocation11 + $0x1b8] sm:$0xff]
        %v1893 = vld [vmem:[#allocation11 + $0x1c0] sm:$0xff]
        %v1894 = vld [vmem:[#allocation11 + $0x1c8] sm:$0xff]
        %v1895 = vld [vmem:[#allocation11 + $0x1d0] sm:$0xff]
        %v1896 = vld [vmem:[#allocation11 + $0x1d8] sm:$0xff]
        %v1897 = vld [vmem:[#allocation11 + $0x1e0] sm:$0xff]
        %v1898 = vld [vmem:[#allocation11 + $0x1e8] sm:$0xff]
        %v1899 = vld [vmem:[#allocation11 + $0x1f0] sm:$0xff]
        %v1900 = vld [vmem:[#allocation11 + $0x1f8] sm:$0xff]
        %v1901 = vld [vmem:[%s14] sm:$0x3]
        %v1903 = vlaneseq
        %v1904 = vshrl.u32 %v1903, 7
        %v1905 = vsub.s32 0, %v1904
        %v1906 = vrot.slane %v1901, %v1905
        %v1907 = vlaneseq
        %v1908 = vshrl.u32 %v1907, 7
        %v1909 = vsub.s32 1, %v1908
        %v1910 = vrot.slane %v1901, %v1909
        %1913 = vmatprep.subr.mxu0 %v1838
        %1914 = vmatpush1.msra.mxu0 %v1837
        %1915 = vmatprep.subr.mxu0 %v1840
        %1916 = vmatpush1.msra.mxu0 %v1839
        %1917 = vmatprep.subr.mxu0 %v1842
        %1918 = vmatpush1.msra.mxu0 %v1841
        %1919 = vmatprep.subr.mxu0 %v1844
        %1920 = vmatpush1.msra.mxu0 %v1843
        %1921 = vmatprep.subr.mxu0 %v1846
        %1922 = vmatpush1.msra.mxu0 %v1845
        %1923 = vmatprep.subr.mxu0 %v1848
        %1924 = vmatpush1.msra.mxu0 %v1847
        %1925 = vmatprep.subr.mxu0 %v1850
        %1926 = vmatpush1.msra.mxu0 %v1849
        %1927 = vmatprep.subr.mxu0 %v1852
        %1928 = vmatpush1.msra.mxu0 %v1851
        %1929 = vmatprep.subr.mxu0 %v1854
        %1930 = vmatpush1.msra.mxu0 %v1853
        %1931 = vmatprep.subr.mxu0 %v1856
        %1932 = vmatpush1.msra.mxu0 %v1855
        %1933 = vmatprep.subr.mxu0 %v1858
        %1934 = vmatpush1.msra.mxu0 %v1857
        %1935 = vmatprep.subr.mxu0 %v1860
        %1936 = vmatpush1.msra.mxu0 %v1859
        %1937 = vmatprep.subr.mxu0 %v1862
        %1938 = vmatpush1.msra.mxu0 %v1861
        %1939 = vmatprep.subr.mxu0 %v1864
        %1940 = vmatpush1.msra.mxu0 %v1863
        %1941 = vmatprep.subr.mxu0 %v1866
        %1942 = vmatpush1.msra.mxu0 %v1865
        %1943 = vmatprep.subr.mxu0 %v1868
        %1944 = vmatpush1.msra.mxu0 %v1867
        %1945 = vmatprep.subr.mxu0 %v1870
        %1946 = vmatpush1.msra.mxu0 %v1869
        %1947 = vmatprep.subr.mxu0 %v1872
        %1948 = vmatpush1.msra.mxu0 %v1871
        %1949 = vmatprep.subr.mxu0 %v1874
        %1950 = vmatpush1.msra.mxu0 %v1873
        %1951 = vmatprep.subr.mxu0 %v1876
        %1952 = vmatpush1.msra.mxu0 %v1875
        %1953 = vmatprep.subr.mxu0 %v1878
        %1954 = vmatpush1.msra.mxu0 %v1877
        %1955 = vmatprep.subr.mxu0 %v1880
        %1956 = vmatpush1.msra.mxu0 %v1879
        %1957 = vmatprep.subr.mxu0 %v1882
        %1958 = vmatpush1.msra.mxu0 %v1881
        %1959 = vmatprep.subr.mxu0 %v1884
        %1960 = vmatpush1.msra.mxu0 %v1883
        %1961 = vmatprep.subr.mxu0 %v1886
        %1962 = vmatpush1.msra.mxu0 %v1885
        %1963 = vmatprep.subr.mxu0 %v1888
        %1964 = vmatpush1.msra.mxu0 %v1887
        %1965 = vmatprep.subr.mxu0 %v1890
        %1966 = vmatpush1.msra.mxu0 %v1889
        %1967 = vmatprep.subr.mxu0 %v1892
        %1968 = vmatpush1.msra.mxu0 %v1891
        %1969 = vmatprep.subr.mxu0 %v1894
        %1970 = vmatpush1.msra.mxu0 %v1893
        %1971 = vmatprep.subr.mxu0 %v1896
        %1972 = vmatpush1.msra.mxu0 %v1895
        %1973 = vmatprep.subr.mxu0 %v1898
        %1974 = vmatpush1.msra.mxu0 %v1897
        %1975 = vmatprep.subr.mxu0 %v1900
        %1976 = vmatpush1.msra.mxu0 %v1899
        %1977 = vmatprep.mubr.f32.mxu0 %v1836
        %1978 = vmatmul.mubr.f32.gmra.mrb[0].mxu0 %v1835
        %v1979 = vpop.f32.mrb[0].mxu0
        %v1980 = vadd.f32 %v1906, %v1979
        %v1981 = vpop.f32.mrb[0].mxu0
        %v1982 = vadd.f32 %v1910, %v1981
        %1983 = vdwg.mxu0
        %v1984 = vsub.f32 %v1719, %v1980
        %v1985 = vadd.f32 %v1982, 0.0
        %s1986 = scalar_lea.vmem [#allocation10], 256
        %v1987 = vld [vmem:[%s1986] sm:$0xff]
        %v1988 = vld [vmem:[%s1986 + $0x8] sm:$0xff]
        %v1989 = vld [vmem:[%s1986 + $0x10] sm:$0xff]
        %v1990 = vld [vmem:[%s1986 + $0x18] sm:$0xff]
        %v1991 = vld [vmem:[%s1986 + $0x20] sm:$0xff]
        %v1992 = vld [vmem:[%s1986 + $0x28] sm:$0xff]
        %v1993 = vld [vmem:[%s1986 + $0x30] sm:$0xff]
        %v1994 = vld [vmem:[%s1986 + $0x38] sm:$0xff]
        %v1995 = vld [vmem:[%s1986 + $0x40] sm:$0xff]
        %v1996 = vld [vmem:[%s1986 + $0x48] sm:$0xff]
        %v1997 = vld [vmem:[%s1986 + $0x50] sm:$0xff]
        %v1998 = vld [vmem:[%s1986 + $0x58] sm:$0xff]
        %v1999 = vld [vmem:[%s1986 + $0x60] sm:$0xff]
        %v2000 = vld [vmem:[%s1986 + $0x68] sm:$0xff]
        %v2001 = vld [vmem:[%s1986 + $0x70] sm:$0xff]
        %v2002 = vld [vmem:[%s1986 + $0x78] sm:$0xff]
        %v2003 = vld [vmem:[%s1986 + $0x80] sm:$0xff]
        %v2004 = vld [vmem:[%s1986 + $0x88] sm:$0xff]
        %v2005 = vld [vmem:[%s1986 + $0x90] sm:$0xff]
        %v2006 = vld [vmem:[%s1986 + $0x98] sm:$0xff]
        %v2007 = vld [vmem:[%s1986 + $0xa0] sm:$0xff]
        %v2008 = vld [vmem:[%s1986 + $0xa8] sm:$0xff]
        %v2009 = vld [vmem:[%s1986 + $0xb0] sm:$0xff]
        %v2010 = vld [vmem:[%s1986 + $0xb8] sm:$0xff]
        %v2011 = vld [vmem:[%s1986 + $0xc0] sm:$0xff]
        %v2012 = vld [vmem:[%s1986 + $0xc8] sm:$0xff]
        %v2013 = vld [vmem:[%s1986 + $0xd0] sm:$0xff]
        %v2014 = vld [vmem:[%s1986 + $0xd8] sm:$0xff]
        %v2015 = vld [vmem:[%s1986 + $0xe0] sm:$0xff]
        %v2016 = vld [vmem:[%s1986 + $0xe8] sm:$0xff]
        %v2017 = vld [vmem:[%s1986 + $0xf0] sm:$0xff]
        %v2018 = vld [vmem:[%s1986 + $0xf8] sm:$0xff]
        %s2019 = scalar_lea.vmem %s12, 2
        %v2020 = vld [vmem:[%s2019] sm:$0x3]
        %v2022 = vlaneseq
        %v2023 = vshrl.u32 %v2022, 7
        %v2024 = vsub.s32 0, %v2023
        %v2025 = vrot.slane %v2020, %v2024
        %v2026 = vlaneseq
        %v2027 = vshrl.u32 %v2026, 7
        %v2028 = vsub.s32 1, %v2027
        %v2029 = vrot.slane %v2020, %v2028
        %2032 = vmatprep.subr.mxu0 %v1988
        %2033 = vmatpush1.msra.mxu0 %v1987
        %2034 = vmatprep.subr.mxu0 %v1990
        %2035 = vmatpush1.msra.mxu0 %v1989
        %2036 = vmatprep.subr.mxu0 %v1992
        %2037 = vmatpush1.msra.mxu0 %v1991
        %2038 = vmatprep.subr.mxu0 %v1994
        %2039 = vmatpush1.msra.mxu0 %v1993
        %2040 = vmatprep.subr.mxu0 %v1996
        %2041 = vmatpush1.msra.mxu0 %v1995
        %2042 = vmatprep.subr.mxu0 %v1998
        %2043 = vmatpush1.msra.mxu0 %v1997
        %2044 = vmatprep.subr.mxu0 %v2000
        %2045 = vmatpush1.msra.mxu0 %v1999
        %2046 = vmatprep.subr.mxu0 %v2002
        %2047 = vmatpush1.msra.mxu0 %v2001
        %2048 = vmatprep.subr.mxu0 %v2004
        %2049 = vmatpush1.msra.mxu0 %v2003
        %2050 = vmatprep.subr.mxu0 %v2006
        %2051 = vmatpush1.msra.mxu0 %v2005
        %2052 = vmatprep.subr.mxu0 %v2008
        %2053 = vmatpush1.msra.mxu0 %v2007
        %2054 = vmatprep.subr.mxu0 %v2010
        %2055 = vmatpush1.msra.mxu0 %v2009
        %2056 = vmatprep.subr.mxu0 %v2012
        %2057 = vmatpush1.msra.mxu0 %v2011
        %2058 = vmatprep.subr.mxu0 %v2014
        %2059 = vmatpush1.msra.mxu0 %v2013
        %2060 = vmatprep.subr.mxu0 %v2016
        %2061 = vmatpush1.msra.mxu0 %v2015
        %2062 = vmatprep.subr.mxu0 %v2018
        %2063 = vmatpush1.msra.mxu0 %v2017
        %2064 = vmatprep.subr.mxu0 0.0
        %2065 = vmatpush1.msra.mxu0 0.0
        %2066 = vmatprep.subr.mxu0 0.0
        %2067 = vmatpush1.msra.mxu0 0.0
        %2068 = vmatprep.subr.mxu0 0.0
        %2069 = vmatpush1.msra.mxu0 0.0
        %2070 = vmatprep.subr.mxu0 0.0
        %2071 = vmatpush1.msra.mxu0 0.0
        %2072 = vmatprep.subr.mxu0 0.0
        %2073 = vmatpush1.msra.mxu0 0.0
        %2074 = vmatprep.subr.mxu0 0.0
        %2075 = vmatpush1.msra.mxu0 0.0
        %2076 = vmatprep.subr.mxu0 0.0
        %2077 = vmatpush1.msra.mxu0 0.0
        %2078 = vmatprep.subr.mxu0 0.0
        %2079 = vmatpush1.msra.mxu0 0.0
        %2080 = vmatprep.subr.mxu0 0.0
        %2081 = vmatpush1.msra.mxu0 0.0
        %2082 = vmatprep.subr.mxu0 0.0
        %2083 = vmatpush1.msra.mxu0 0.0
        %2084 = vmatprep.subr.mxu0 0.0
        %2085 = vmatpush1.msra.mxu0 0.0
        %2086 = vmatprep.subr.mxu0 0.0
        %2087 = vmatpush1.msra.mxu0 0.0
        %2088 = vmatprep.subr.mxu0 0.0
        %2089 = vmatpush1.msra.mxu0 0.0
        %2090 = vmatprep.subr.mxu0 0.0
        %2091 = vmatpush1.msra.mxu0 0.0
        %2092 = vmatprep.subr.mxu0 0.0
        %2093 = vmatpush1.msra.mxu0 0.0
        %2094 = vmatprep.subr.mxu0 0.0
        %2095 = vmatpush1.msra.mxu0 0.0
        %2096 = vmatprep.mubr.f32.mxu0 0.0
        %2097 = vmatmul.mubr.f32.gmra.mrb[0].mxu0 %v1984
        %v2098 = vpop.f32.mrb[0].mxu0
        %v2099 = vadd.f32 %v2025, %v2098
        %v2100 = vpop.f32.mrb[0].mxu0
        %v2101 = vadd.f32 %v2029, %v2100
        %2102 = vdwg.mxu0
        %v2103 = vmax.f32 %v2099, 0.0
        %v2104 = vmax.f32 %v2101, 0.0
        %s2105 = scalar_lea.vmem [#allocation11], 512
        %v2106 = vld [vmem:[%s2105] sm:$0xff]
        %v2107 = vld [vmem:[%s2105 + $0x8] sm:$0xff]
        %v2108 = vld [vmem:[%s2105 + $0x10] sm:$0xff]
        %v2109 = vld [vmem:[%s2105 + $0x18] sm:$0xff]
        %v2110 = vld [vmem:[%s2105 + $0x20] sm:$0xff]
        %v2111 = vld [vmem:[%s2105 + $0x28] sm:$0xff]
        %v2112 = vld [vmem:[%s2105 + $0x30] sm:$0xff]
        %v2113 = vld [vmem:[%s2105 + $0x38] sm:$0xff]
        %v2114 = vld [vmem:[%s2105 + $0x40] sm:$0xff]
        %v2115 = vld [vmem:[%s2105 + $0x48] sm:$0xff]
        %v2116 = vld [vmem:[%s2105 + $0x50] sm:$0xff]
        %v2117 = vld [vmem:[%s2105 + $0x58] sm:$0xff]
        %v2118 = vld [vmem:[%s2105 + $0x60] sm:$0xff]
        %v2119 = vld [vmem:[%s2105 + $0x68] sm:$0xff]
        %v2120 = vld [vmem:[%s2105 + $0x70] sm:$0xff]
        %v2121 = vld [vmem:[%s2105 + $0x78] sm:$0xff]
        %v2122 = vld [vmem:[%s2105 + $0x80] sm:$0xff]
        %v2123 = vld [vmem:[%s2105 + $0x88] sm:$0xff]
        %v2124 = vld [vmem:[%s2105 + $0x90] sm:$0xff]
        %v2125 = vld [vmem:[%s2105 + $0x98] sm:$0xff]
        %v2126 = vld [vmem:[%s2105 + $0xa0] sm:$0xff]
        %v2127 = vld [vmem:[%s2105 + $0xa8] sm:$0xff]
        %v2128 = vld [vmem:[%s2105 + $0xb0] sm:$0xff]
        %v2129 = vld [vmem:[%s2105 + $0xb8] sm:$0xff]
        %v2130 = vld [vmem:[%s2105 + $0xc0] sm:$0xff]
        %v2131 = vld [vmem:[%s2105 + $0xc8] sm:$0xff]
        %v2132 = vld [vmem:[%s2105 + $0xd0] sm:$0xff]
        %v2133 = vld [vmem:[%s2105 + $0xd8] sm:$0xff]
        %v2134 = vld [vmem:[%s2105 + $0xe0] sm:$0xff]
        %v2135 = vld [vmem:[%s2105 + $0xe8] sm:$0xff]
        %v2136 = vld [vmem:[%s2105 + $0xf0] sm:$0xff]
        %v2137 = vld [vmem:[%s2105 + $0xf8] sm:$0xff]
        %v2138 = vld [vmem:[%s2105 + $0x100] sm:$0xff]
        %v2139 = vld [vmem:[%s2105 + $0x108] sm:$0xff]
        %v2140 = vld [vmem:[%s2105 + $0x110] sm:$0xff]
        %v2141 = vld [vmem:[%s2105 + $0x118] sm:$0xff]
        %v2142 = vld [vmem:[%s2105 + $0x120] sm:$0xff]
        %v2143 = vld [vmem:[%s2105 + $0x128] sm:$0xff]
        %v2144 = vld [vmem:[%s2105 + $0x130] sm:$0xff]
        %v2145 = vld [vmem:[%s2105 + $0x138] sm:$0xff]
        %v2146 = vld [vmem:[%s2105 + $0x140] sm:$0xff]
        %v2147 = vld [vmem:[%s2105 + $0x148] sm:$0xff]
        %v2148 = vld [vmem:[%s2105 + $0x150] sm:$0xff]
        %v2149 = vld [vmem:[%s2105 + $0x158] sm:$0xff]
        %v2150 = vld [vmem:[%s2105 + $0x160] sm:$0xff]
        %v2151 = vld [vmem:[%s2105 + $0x168] sm:$0xff]
        %v2152 = vld [vmem:[%s2105 + $0x170] sm:$0xff]
        %v2153 = vld [vmem:[%s2105 + $0x178] sm:$0xff]
        %v2154 = vld [vmem:[%s2105 + $0x180] sm:$0xff]
        %v2155 = vld [vmem:[%s2105 + $0x188] sm:$0xff]
        %v2156 = vld [vmem:[%s2105 + $0x190] sm:$0xff]
        %v2157 = vld [vmem:[%s2105 + $0x198] sm:$0xff]
        %v2158 = vld [vmem:[%s2105 + $0x1a0] sm:$0xff]
        %v2159 = vld [vmem:[%s2105 + $0x1a8] sm:$0xff]
        %v2160 = vld [vmem:[%s2105 + $0x1b0] sm:$0xff]
        %v2161 = vld [vmem:[%s2105 + $0x1b8] sm:$0xff]
        %v2162 = vld [vmem:[%s2105 + $0x1c0] sm:$0xff]
        %v2163 = vld [vmem:[%s2105 + $0x1c8] sm:$0xff]
        %v2164 = vld [vmem:[%s2105 + $0x1d0] sm:$0xff]
        %v2165 = vld [vmem:[%s2105 + $0x1d8] sm:$0xff]
        %v2166 = vld [vmem:[%s2105 + $0x1e0] sm:$0xff]
        %v2167 = vld [vmem:[%s2105 + $0x1e8] sm:$0xff]
        %v2168 = vld [vmem:[%s2105 + $0x1f0] sm:$0xff]
        %v2169 = vld [vmem:[%s2105 + $0x1f8] sm:$0xff]
        %s2170 = scalar_lea.vmem %s14, 2
        %v2171 = vld [vmem:[%s2170] sm:$0x3]
        %v2173 = vlaneseq
        %v2174 = vshrl.u32 %v2173, 7
        %v2175 = vsub.s32 0, %v2174
        %v2176 = vrot.slane %v2171, %v2175
        %v2177 = vlaneseq
        %v2178 = vshrl.u32 %v2177, 7
        %v2179 = vsub.s32 1, %v2178
        %v2180 = vrot.slane %v2171, %v2179
        %2183 = vmatprep.subr.mxu0 %v2107
        %2184 = vmatpush1.msra.mxu0 %v2106
        %2185 = vmatprep.subr.mxu0 %v2109
        %2186 = vmatpush1.msra.mxu0 %v2108
        %2187 = vmatprep.subr.mxu0 %v2111
        %2188 = vmatpush1.msra.mxu0 %v2110
        %2189 = vmatprep.subr.mxu0 %v2113
        %2190 = vmatpush1.msra.mxu0 %v2112
        %2191 = vmatprep.subr.mxu0 %v2115
        %2192 = vmatpush1.msra.mxu0 %v2114
        %2193 = vmatprep.subr.mxu0 %v2117
        %2194 = vmatpush1.msra.mxu0 %v2116
        %2195 = vmatprep.subr.mxu0 %v2119
        %2196 = vmatpush1.msra.mxu0 %v2118
        %2197 = vmatprep.subr.mxu0 %v2121
        %2198 = vmatpush1.msra.mxu0 %v2120
        %2199 = vmatprep.subr.mxu0 %v2123
        %2200 = vmatpush1.msra.mxu0 %v2122
        %2201 = vmatprep.subr.mxu0 %v2125
        %2202 = vmatpush1.msra.mxu0 %v2124
        %2203 = vmatprep.subr.mxu0 %v2127
        %2204 = vmatpush1.msra.mxu0 %v2126
        %2205 = vmatprep.subr.mxu0 %v2129
        %2206 = vmatpush1.msra.mxu0 %v2128
        %2207 = vmatprep.subr.mxu0 %v2131
        %2208 = vmatpush1.msra.mxu0 %v2130
        %2209 = vmatprep.subr.mxu0 %v2133
        %2210 = vmatpush1.msra.mxu0 %v2132
        %2211 = vmatprep.subr.mxu0 %v2135
        %2212 = vmatpush1.msra.mxu0 %v2134
        %2213 = vmatprep.subr.mxu0 %v2137
        %2214 = vmatpush1.msra.mxu0 %v2136
        %2215 = vmatprep.subr.mxu0 %v2139
        %2216 = vmatpush1.msra.mxu0 %v2138
        %2217 = vmatprep.subr.mxu0 %v2141
        %2218 = vmatpush1.msra.mxu0 %v2140
        %2219 = vmatprep.subr.mxu0 %v2143
        %2220 = vmatpush1.msra.mxu0 %v2142
        %2221 = vmatprep.subr.mxu0 %v2145
        %2222 = vmatpush1.msra.mxu0 %v2144
        %2223 = vmatprep.subr.mxu0 %v2147
        %2224 = vmatpush1.msra.mxu0 %v2146
        %2225 = vmatprep.subr.mxu0 %v2149
        %2226 = vmatpush1.msra.mxu0 %v2148
        %2227 = vmatprep.subr.mxu0 %v2151
        %2228 = vmatpush1.msra.mxu0 %v2150
        %2229 = vmatprep.subr.mxu0 %v2153
        %2230 = vmatpush1.msra.mxu0 %v2152
        %2231 = vmatprep.subr.mxu0 %v2155
        %2232 = vmatpush1.msra.mxu0 %v2154
        %2233 = vmatprep.subr.mxu0 %v2157
        %2234 = vmatpush1.msra.mxu0 %v2156
        %2235 = vmatprep.subr.mxu0 %v2159
        %2236 = vmatpush1.msra.mxu0 %v2158
        %2237 = vmatprep.subr.mxu0 %v2161
        %2238 = vmatpush1.msra.mxu0 %v2160
        %2239 = vmatprep.subr.mxu0 %v2163
        %2240 = vmatpush1.msra.mxu0 %v2162
        %2241 = vmatprep.subr.mxu0 %v2165
        %2242 = vmatpush1.msra.mxu0 %v2164
        %2243 = vmatprep.subr.mxu0 %v2167
        %2244 = vmatpush1.msra.mxu0 %v2166
        %2245 = vmatprep.subr.mxu0 %v2169
        %2246 = vmatpush1.msra.mxu0 %v2168
        %2247 = vmatprep.mubr.f32.mxu0 %v2104
        %2248 = vmatmul.mubr.f32.gmra.mrb[0].mxu0 %v2103
        %v2249 = vpop.f32.mrb[0].mxu0
        %v2250 = vadd.f32 %v2176, %v2249
        %v2251 = vpop.f32.mrb[0].mxu0
        %v2252 = vadd.f32 %v2180, %v2251
        %2253 = vdwg.mxu0
        %v2254 = vsub.f32 %v1984, %v2250
        %v2255 = vadd.f32 %v1985, %v2252
        %s2256 = scalar_lea.vmem [#allocation10], 512
        %v2257 = vld [vmem:[%s2256] sm:$0xff]
        %v2258 = vld [vmem:[%s2256 + $0x8] sm:$0xff]
        %v2259 = vld [vmem:[%s2256 + $0x10] sm:$0xff]
        %v2260 = vld [vmem:[%s2256 + $0x18] sm:$0xff]
        %v2261 = vld [vmem:[%s2256 + $0x20] sm:$0xff]
        %v2262 = vld [vmem:[%s2256 + $0x28] sm:$0xff]
        %v2263 = vld [vmem:[%s2256 + $0x30] sm:$0xff]
        %v2264 = vld [vmem:[%s2256 + $0x38] sm:$0xff]
        %v2265 = vld [vmem:[%s2256 + $0x40] sm:$0xff]
        %v2266 = vld [vmem:[%s2256 + $0x48] sm:$0xff]
        %v2267 = vld [vmem:[%s2256 + $0x50] sm:$0xff]
        %v2268 = vld [vmem:[%s2256 + $0x58] sm:$0xff]
        %v2269 = vld [vmem:[%s2256 + $0x60] sm:$0xff]
        %v2270 = vld [vmem:[%s2256 + $0x68] sm:$0xff]
        %v2271 = vld [vmem:[%s2256 + $0x70] sm:$0xff]
        %v2272 = vld [vmem:[%s2256 + $0x78] sm:$0xff]
        %v2273 = vld [vmem:[%s2256 + $0x80] sm:$0xff]
        %v2274 = vld [vmem:[%s2256 + $0x88] sm:$0xff]
        %v2275 = vld [vmem:[%s2256 + $0x90] sm:$0xff]
        %v2276 = vld [vmem:[%s2256 + $0x98] sm:$0xff]
        %v2277 = vld [vmem:[%s2256 + $0xa0] sm:$0xff]
        %v2278 = vld [vmem:[%s2256 + $0xa8] sm:$0xff]
        %v2279 = vld [vmem:[%s2256 + $0xb0] sm:$0xff]
        %v2280 = vld [vmem:[%s2256 + $0xb8] sm:$0xff]
        %v2281 = vld [vmem:[%s2256 + $0xc0] sm:$0xff]
        %v2282 = vld [vmem:[%s2256 + $0xc8] sm:$0xff]
        %v2283 = vld [vmem:[%s2256 + $0xd0] sm:$0xff]
        %v2284 = vld [vmem:[%s2256 + $0xd8] sm:$0xff]
        %v2285 = vld [vmem:[%s2256 + $0xe0] sm:$0xff]
        %v2286 = vld [vmem:[%s2256 + $0xe8] sm:$0xff]
        %v2287 = vld [vmem:[%s2256 + $0xf0] sm:$0xff]
        %v2288 = vld [vmem:[%s2256 + $0xf8] sm:$0xff]
        %s2289 = scalar_lea.vmem %s12, 4
        %v2290 = vld [vmem:[%s2289] sm:$0x3]
        %v2292 = vlaneseq
        %v2293 = vshrl.u32 %v2292, 7
        %v2294 = vsub.s32 0, %v2293
        %v2295 = vrot.slane %v2290, %v2294
        %v2296 = vlaneseq
        %v2297 = vshrl.u32 %v2296, 7
        %v2298 = vsub.s32 1, %v2297
        %v2299 = vrot.slane %v2290, %v2298
        %2302 = vmatprep.subr.mxu0 %v2258
        %2303 = vmatpush1.msra.mxu0 %v2257
        %2304 = vmatprep.subr.mxu0 %v2260
        %2305 = vmatpush1.msra.mxu0 %v2259
        %2306 = vmatprep.subr.mxu0 %v2262
        %2307 = vmatpush1.msra.mxu0 %v2261
        %2308 = vmatprep.subr.mxu0 %v2264
        %2309 = vmatpush1.msra.mxu0 %v2263
        %2310 = vmatprep.subr.mxu0 %v2266
        %2311 = vmatpush1.msra.mxu0 %v2265
        %2312 = vmatprep.subr.mxu0 %v2268
        %2313 = vmatpush1.msra.mxu0 %v2267
        %2314 = vmatprep.subr.mxu0 %v2270
        %2315 = vmatpush1.msra.mxu0 %v2269
        %2316 = vmatprep.subr.mxu0 %v2272
        %2317 = vmatpush1.msra.mxu0 %v2271
        %2318 = vmatprep.subr.mxu0 %v2274
        %2319 = vmatpush1.msra.mxu0 %v2273
        %2320 = vmatprep.subr.mxu0 %v2276
        %2321 = vmatpush1.msra.mxu0 %v2275
        %2322 = vmatprep.subr.mxu0 %v2278
        %2323 = vmatpush1.msra.mxu0 %v2277
        %2324 = vmatprep.subr.mxu0 %v2280
        %2325 = vmatpush1.msra.mxu0 %v2279
        %2326 = vmatprep.subr.mxu0 %v2282
        %2327 = vmatpush1.msra.mxu0 %v2281
        %2328 = vmatprep.subr.mxu0 %v2284
        %2329 = vmatpush1.msra.mxu0 %v2283
        %2330 = vmatprep.subr.mxu0 %v2286
        %2331 = vmatpush1.msra.mxu0 %v2285
        %2332 = vmatprep.subr.mxu0 %v2288
        %2333 = vmatpush1.msra.mxu0 %v2287
        %2334 = vmatprep.subr.mxu0 0.0
        %2335 = vmatpush1.msra.mxu0 0.0
        %2336 = vmatprep.subr.mxu0 0.0
        %2337 = vmatpush1.msra.mxu0 0.0
        %2338 = vmatprep.subr.mxu0 0.0
        %2339 = vmatpush1.msra.mxu0 0.0
        %2340 = vmatprep.subr.mxu0 0.0
        %2341 = vmatpush1.msra.mxu0 0.0
        %2342 = vmatprep.subr.mxu0 0.0
        %2343 = vmatpush1.msra.mxu0 0.0
        %2344 = vmatprep.subr.mxu0 0.0
        %2345 = vmatpush1.msra.mxu0 0.0
        %2346 = vmatprep.subr.mxu0 0.0
        %2347 = vmatpush1.msra.mxu0 0.0
        %2348 = vmatprep.subr.mxu0 0.0
        %2349 = vmatpush1.msra.mxu0 0.0
        %2350 = vmatprep.subr.mxu0 0.0
        %2351 = vmatpush1.msra.mxu0 0.0
        %2352 = vmatprep.subr.mxu0 0.0
        %2353 = vmatpush1.msra.mxu0 0.0
        %2354 = vmatprep.subr.mxu0 0.0
        %2355 = vmatpush1.msra.mxu0 0.0
        %2356 = vmatprep.subr.mxu0 0.0
        %2357 = vmatpush1.msra.mxu0 0.0
        %2358 = vmatprep.subr.mxu0 0.0
        %2359 = vmatpush1.msra.mxu0 0.0
        %2360 = vmatprep.subr.mxu0 0.0
        %2361 = vmatpush1.msra.mxu0 0.0
        %2362 = vmatprep.subr.mxu0 0.0
        %2363 = vmatpush1.msra.mxu0 0.0
        %2364 = vmatprep.subr.mxu0 0.0
        %2365 = vmatpush1.msra.mxu0 0.0
        %2366 = vmatprep.mubr.f32.mxu0 0.0
        %2367 = vmatmul.mubr.f32.gmra.mrb[0].mxu0 %v2254
        %v2368 = vpop.f32.mrb[0].mxu0
        %v2369 = vadd.f32 %v2295, %v2368
        %v2370 = vpop.f32.mrb[0].mxu0
        %v2371 = vadd.f32 %v2299, %v2370
        %2372 = vdwg.mxu0
        %v2373 = vmax.f32 %v2369, 0.0
        %v2374 = vmax.f32 %v2371, 0.0
        %s2375 = scalar_lea.vmem [#allocation11], 1024
        %v2376 = vld [vmem:[%s2375] sm:$0xff]
        %v2377 = vld [vmem:[%s2375 + $0x8] sm:$0xff]
        %v2378 = vld [vmem:[%s2375 + $0x10] sm:$0xff]
        %v2379 = vld [vmem:[%s2375 + $0x18] sm:$0xff]
        %v2380 = vld [vmem:[%s2375 + $0x20] sm:$0xff]
        %v2381 = vld [vmem:[%s2375 + $0x28] sm:$0xff]
        %v2382 = vld [vmem:[%s2375 + $0x30] sm:$0xff]
        %v2383 = vld [vmem:[%s2375 + $0x38] sm:$0xff]
        %v2384 = vld [vmem:[%s2375 + $0x40] sm:$0xff]
        %v2385 = vld [vmem:[%s2375 + $0x48] sm:$0xff]
        %v2386 = vld [vmem:[%s2375 + $0x50] sm:$0xff]
        %v2387 = vld [vmem:[%s2375 + $0x58] sm:$0xff]
        %v2388 = vld [vmem:[%s2375 + $0x60] sm:$0xff]
        %v2389 = vld [vmem:[%s2375 + $0x68] sm:$0xff]
        %v2390 = vld [vmem:[%s2375 + $0x70] sm:$0xff]
        %v2391 = vld [vmem:[%s2375 + $0x78] sm:$0xff]
        %v2392 = vld [vmem:[%s2375 + $0x80] sm:$0xff]
        %v2393 = vld [vmem:[%s2375 + $0x88] sm:$0xff]
        %v2394 = vld [vmem:[%s2375 + $0x90] sm:$0xff]
        %v2395 = vld [vmem:[%s2375 + $0x98] sm:$0xff]
        %v2396 = vld [vmem:[%s2375 + $0xa0] sm:$0xff]
        %v2397 = vld [vmem:[%s2375 + $0xa8] sm:$0xff]
        %v2398 = vld [vmem:[%s2375 + $0xb0] sm:$0xff]
        %v2399 = vld [vmem:[%s2375 + $0xb8] sm:$0xff]
        %v2400 = vld [vmem:[%s2375 + $0xc0] sm:$0xff]
        %v2401 = vld [vmem:[%s2375 + $0xc8] sm:$0xff]
        %v2402 = vld [vmem:[%s2375 + $0xd0] sm:$0xff]
        %v2403 = vld [vmem:[%s2375 + $0xd8] sm:$0xff]
        %v2404 = vld [vmem:[%s2375 + $0xe0] sm:$0xff]
        %v2405 = vld [vmem:[%s2375 + $0xe8] sm:$0xff]
        %v2406 = vld [vmem:[%s2375 + $0xf0] sm:$0xff]
        %v2407 = vld [vmem:[%s2375 + $0xf8] sm:$0xff]
        %v2408 = vld [vmem:[%s2375 + $0x100] sm:$0xff]
        %v2409 = vld [vmem:[%s2375 + $0x108] sm:$0xff]
        %v2410 = vld [vmem:[%s2375 + $0x110] sm:$0xff]
        %v2411 = vld [vmem:[%s2375 + $0x118] sm:$0xff]
        %v2412 = vld [vmem:[%s2375 + $0x120] sm:$0xff]
        %v2413 = vld [vmem:[%s2375 + $0x128] sm:$0xff]
        %v2414 = vld [vmem:[%s2375 + $0x130] sm:$0xff]
        %v2415 = vld [vmem:[%s2375 + $0x138] sm:$0xff]
        %v2416 = vld [vmem:[%s2375 + $0x140] sm:$0xff]
        %v2417 = vld [vmem:[%s2375 + $0x148] sm:$0xff]
        %v2418 = vld [vmem:[%s2375 + $0x150] sm:$0xff]
        %v2419 = vld [vmem:[%s2375 + $0x158] sm:$0xff]
        %v2420 = vld [vmem:[%s2375 + $0x160] sm:$0xff]
        %v2421 = vld [vmem:[%s2375 + $0x168] sm:$0xff]
        %v2422 = vld [vmem:[%s2375 + $0x170] sm:$0xff]
        %v2423 = vld [vmem:[%s2375 + $0x178] sm:$0xff]
        %v2424 = vld [vmem:[%s2375 + $0x180] sm:$0xff]
        %v2425 = vld [vmem:[%s2375 + $0x188] sm:$0xff]
        %v2426 = vld [vmem:[%s2375 + $0x190] sm:$0xff]
        %v2427 = vld [vmem:[%s2375 + $0x198] sm:$0xff]
        %v2428 = vld [vmem:[%s2375 + $0x1a0] sm:$0xff]
        %v2429 = vld [vmem:[%s2375 + $0x1a8] sm:$0xff]
        %v2430 = vld [vmem:[%s2375 + $0x1b0] sm:$0xff]
        %v2431 = vld [vmem:[%s2375 + $0x1b8] sm:$0xff]
        %v2432 = vld [vmem:[%s2375 + $0x1c0] sm:$0xff]
        %v2433 = vld [vmem:[%s2375 + $0x1c8] sm:$0xff]
        %v2434 = vld [vmem:[%s2375 + $0x1d0] sm:$0xff]
        %v2435 = vld [vmem:[%s2375 + $0x1d8] sm:$0xff]
        %v2436 = vld [vmem:[%s2375 + $0x1e0] sm:$0xff]
        %v2437 = vld [vmem:[%s2375 + $0x1e8] sm:$0xff]
        %v2438 = vld [vmem:[%s2375 + $0x1f0] sm:$0xff]
        %v2439 = vld [vmem:[%s2375 + $0x1f8] sm:$0xff]
        %s2440 = scalar_lea.vmem %s14, 4
        %v2441 = vld [vmem:[%s2440] sm:$0x3]
        %v2443 = vlaneseq
        %v2444 = vshrl.u32 %v2443, 7
        %v2445 = vsub.s32 1, %v2444
        %v2446 = vrot.slane %v2441, %v2445
        %2448 = vmatprep.subr.mxu0 %v2377
        %2449 = vmatpush1.msra.mxu0 %v2376
        %2450 = vmatprep.subr.mxu0 %v2379
        %2451 = vmatpush1.msra.mxu0 %v2378
        %2452 = vmatprep.subr.mxu0 %v2381
        %2453 = vmatpush1.msra.mxu0 %v2380
        %2454 = vmatprep.subr.mxu0 %v2383
        %2455 = vmatpush1.msra.mxu0 %v2382
        %2456 = vmatprep.subr.mxu0 %v2385
        %2457 = vmatpush1.msra.mxu0 %v2384
        %2458 = vmatprep.subr.mxu0 %v2387
        %2459 = vmatpush1.msra.mxu0 %v2386
        %2460 = vmatprep.subr.mxu0 %v2389
        %2461 = vmatpush1.msra.mxu0 %v2388
        %2462 = vmatprep.subr.mxu0 %v2391
        %2463 = vmatpush1.msra.mxu0 %v2390
        %2464 = vmatprep.subr.mxu0 %v2393
        %2465 = vmatpush1.msra.mxu0 %v2392
        %2466 = vmatprep.subr.mxu0 %v2395
        %2467 = vmatpush1.msra.mxu0 %v2394
        %2468 = vmatprep.subr.mxu0 %v2397
        %2469 = vmatpush1.msra.mxu0 %v2396
        %2470 = vmatprep.subr.mxu0 %v2399
        %2471 = vmatpush1.msra.mxu0 %v2398
        %2472 = vmatprep.subr.mxu0 %v2401
        %2473 = vmatpush1.msra.mxu0 %v2400
        %2474 = vmatprep.subr.mxu0 %v2403
        %2475 = vmatpush1.msra.mxu0 %v2402
        %2476 = vmatprep.subr.mxu0 %v2405
        %2477 = vmatpush1.msra.mxu0 %v2404
        %2478 = vmatprep.subr.mxu0 %v2407
        %2479 = vmatpush1.msra.mxu0 %v2406
        %2480 = vmatprep.subr.mxu0 %v2409
        %2481 = vmatpush1.msra.mxu0 %v2408
        %2482 = vmatprep.subr.mxu0 %v2411
        %2483 = vmatpush1.msra.mxu0 %v2410
        %2484 = vmatprep.subr.mxu0 %v2413
        %2485 = vmatpush1.msra.mxu0 %v2412
        %2486 = vmatprep.subr.mxu0 %v2415
        %2487 = vmatpush1.msra.mxu0 %v2414
        %2488 = vmatprep.subr.mxu0 %v2417
        %2489 = vmatpush1.msra.mxu0 %v2416
        %2490 = vmatprep.subr.mxu0 %v2419
        %2491 = vmatpush1.msra.mxu0 %v2418
        %2492 = vmatprep.subr.mxu0 %v2421
        %2493 = vmatpush1.msra.mxu0 %v2420
        %2494 = vmatprep.subr.mxu0 %v2423
        %2495 = vmatpush1.msra.mxu0 %v2422
        %2496 = vmatprep.subr.mxu0 %v2425
        %2497 = vmatpush1.msra.mxu0 %v2424
        %2498 = vmatprep.subr.mxu0 %v2427
        %2499 = vmatpush1.msra.mxu0 %v2426
        %2500 = vmatprep.subr.mxu0 %v2429
        %2501 = vmatpush1.msra.mxu0 %v2428
        %2502 = vmatprep.subr.mxu0 %v2431
        %2503 = vmatpush1.msra.mxu0 %v2430
        %2504 = vmatprep.subr.mxu0 %v2433
        %2505 = vmatpush1.msra.mxu0 %v2432
        %2506 = vmatprep.subr.mxu0 %v2435
        %2507 = vmatpush1.msra.mxu0 %v2434
        %2508 = vmatprep.subr.mxu0 %v2437
        %2509 = vmatpush1.msra.mxu0 %v2436
        %2510 = vmatprep.subr.mxu0 %v2439
        %2511 = vmatpush1.msra.mxu0 %v2438
        %2512 = vmatprep.mubr.f32.mxu0 %v2374
        %2513 = vmatmul.mubr.f32.gmra.mrb[0].mxu0 %v2373
        %v2514 = vpop.f32.mrb[0].mxu0
        %v2515 = vpop.f32.mrb[0].mxu0
        %v2516 = vadd.f32 %v2446, %v2515
        %2517 = vdwg.mxu0
        %v2518 = vadd.f32 %v2255, %v2516
        %2519 = vst [vmem:[%s573] sm:$0xff] %v2518
        %s2520 = sand.u32 %s361, 1
        %s2521 = scalar_lea.sflag [#allocation4], %s2520
        %s2522 = sand.u32 %s361, 1
        %s2523 = smul.addr %s2522, 8
        %s2524 = scalar_lea.vmem [#allocation13], %s2523
        // Predicated region
        $region105: #{tpu_custom_call.1} parent=79 // pred_check
          %p2525 = pneg %p371
        $region106: #{tpu_custom_call.1} parent=79 // pred_check_branch
          %2527 = sbr.rel (%p2525) target = $region108
        $region107: #{tpu_custom_call.1} parent=79 // pred_region
          %s2529 = ssub.s32 128, 128
          %2530 = vsyncadd %s2521, %s2529
          %s2531 = smul.addr %s33, 128
          %s2532 = scalar_lea.hbm %s15, %s2531
          %s2534 = sshll.u32 %s2524, 4
          %s2535 = int_to_ptr.vmem [resolvable:$true] %s2534
          %2537 = dma.vmem_to_hbm [thread:$0]  %s2535, 128, %s2532, %s2521
        $region108: #{tpu_custom_call.1} parent=79 // pred_fallthru
          _
      $region80: #{tpu_custom_call.1} parent=5 // pred_fallthru
        _
      %p2538 = scmp.le.s32.totalorder 2, %s28
      // Predicated region
      $region109: #{tpu_custom_call.1} parent=5 // pred_check
        %p2539 = pneg %p2538
      $region110: #{tpu_custom_call.1} parent=5 // pred_check_branch
        %2541 = sbr.rel (%p2539) target = $region112
      $region111: #{tpu_custom_call.1} parent=5 // pred_region
        %s2542 = ssub.s32 %s28, 2
        // Predicated region
        $region113: #{tpu_custom_call.1} parent=111 // pred_check
          %p2543 = pneg %p377
        $region114: #{tpu_custom_call.1} parent=111 // pred_check_branch
          %2545 = sbr.rel (%p2543) target = $region116
        $region115: #{tpu_custom_call.1} parent=111 // pred_region
          %s2546 = sand.u32 %s362, 1
          %s2547 = scalar_lea.sflag [#allocation4], %s2546
          %s2548 = sand.u32 %s362, 1
          %s2549 = smul.addr %s2548, 8
          %s2550 = scalar_lea.vmem [#allocation13], %s2549
          %2551 = dma.done %s2547, 128
        $region116: #{tpu_custom_call.1} parent=111 // pred_fallthru
          _
      $region112: #{tpu_custom_call.1} parent=5 // pred_fallthru
        _
    $region6: #{tpu_custom_call.1} parent=1 // loop_footer
      %s32 = sadd.s32 1, %s28
    $region7: #{tpu_custom_call.1} parent=1 // loop_footer_branch
      %27 = sbr.rel target = $region3
    $region8: #{tpu_custom_call.1} parent=1 // loop_exit
      _
    %2552 = vsyncpa [#allocation3], 1
    %s2553 = scalar_lea.sflag [#allocation3], 1
    %2554 = vsyncpa %s2553, 1
    %2555 = vsyncpa [#allocation6], 1
    %2556 = vsyncpa [#allocation9], 1
    %2557 = vsyncpa [#allocation12], 1
    %2558 = vsyncpa [#allocation4], 1
    %s2559 = scalar_lea.sflag [#allocation4], 1
    %2560 = vsyncpa %s2559, 1

// kernel: tpu_custom_call.1
$region0: #{tpu_custom_call.1}
  #allocation0 [shape = 'u32[]', space=smem, size = 0x4, offset = 0x4, fixed_abs, tag = 'smem constant byte address 0x4 - core index']
  #allocation1 [shape = 'u32[144,128]{1,0:T(1,128)}', space=vmem, size = 0x12000, scoped, tag = 'internal scratch']
  %s0 = inlined_call_operand.vmem [shape: f32[16,128], index: 0, kind: input, shape index: {}]
  %s1 = inlined_call_operand.hbm [shape: f32[128,256], index: 1, kind: input, shape index: {}]
  %s2 = inlined_call_operand.hbm [shape: f32[256,128], index: 2, kind: input, shape index: {}]
  %s3 = inlined_call_operand.vmem [shape: f32[2,8], index: 3, kind: input, shape index: {}]
  %s4 = inlined_call_operand.vmem [shape: f32[8,2], index: 4, kind: input, shape index: {}]
  %s5 = inlined_call_operand.vmem [shape: f32[128,2], index: 5, kind: input, shape index: {}]
  %s6 = inlined_call_operand.vmem [shape: f32[1,2], index: 6, kind: input, shape index: {}]
  %s7 = inlined_call_operand.hbm [shape: f32[256,512], index: 7, kind: input, shape index: {}]
  %s8 = inlined_call_operand.vmem [shape: f32[1,512], index: 8, kind: input, shape index: {}]
  %s9 = inlined_call_operand.hbm [shape: f32[512,256], index: 9, kind: input, shape index: {}]
  %s10 = inlined_call_operand.vmem [shape: f32[2,256], index: 10, kind: input, shape index: {}]
  %s11 = inlined_call_operand.hbm [shape: f32[3,128,256], index: 11, kind: input, shape index: {}]
  %s12 = inlined_call_operand.vmem [shape: f32[3,1,256], index: 12, kind: input, shape index: {}]
  %s13 = inlined_call_operand.hbm [shape: f32[3,256,256], index: 13, kind: input, shape index: {}]
  %s14 = inlined_call_operand.vmem [shape: f32[3,1,256], index: 14, kind: input, shape index: {}]
  %s15 = inlined_call_operand.hbm [shape: f32[16,128], index: 15, kind: output, shape index: {}]
  %s16 = sld [smem:[#allocation0]]
  $region117: #{tpu_custom_call.1} parent=0
    _
  %s18 = ssub.s32 1, %s16
  %s19 = scalar_select 0, %s18, %s16
  $region1: #{tpu_custom_call.1} parent=0
    #allocation2 [shape = 'u8[131072]{0}', space=vmem, size = 0x20000, scoped, tag = 'input window, operand 1, single buffered']
    #allocation3 [shape = 's32[2]{0}', space=sflag, size = 0x8, scoped, tag = 'scoped memory for tpu_custom_call.1']
    #allocation4 [shape = 's32[2]{0}', space=sflag, size = 0x8, scoped, tag = 'scoped memory for tpu_custom_call.1']
    #allocation5 [shape = 'u8[131072]{0}', space=vmem, size = 0x20000, scoped, tag = 'input window, operand 2, single buffered']
    #allocation6 [shape = 's32[1]{0}', space=sflag, size = 0x4, scoped, tag = 'scoped memory for tpu_custom_call.1']
    #allocation7 [shape = 'u8[524288]{0}', space=vmem, size = 0x80000, scoped, tag = 'input window, operand 7, single buffered']
    #allocation8 [shape = 'u8[524288]{0}', space=vmem, size = 0x80000, scoped, tag = 'input window, operand 9, single buffered']
    #allocation9 [shape = 's32[1]{0}', space=sflag, size = 0x4, scoped, tag = 'scoped memory for tpu_custom_call.1']
    #allocation10 [shape = 'u8[393216]{0}', space=vmem, size = 0x60000, scoped, tag = 'input window, operand 11, single buffered']
    #allocation11 [shape = 'u8[786432]{0}', space=vmem, size = 0xc0000, scoped, tag = 'input window, operand 13, single buffered']
    #allocation12 [shape = 's32[1]{0}', space=sflag, size = 0x4, scoped, tag = 'scoped memory for tpu_custom_call.1']
    #allocation13 [shape = 'u8[8192]{0}', space=vmem, size = 0x2000, scoped, tag = 'output window, operand 0']
    %20 = vsyncpa [#allocation3], 0
    %21 = vsyncpa [#allocation6], 0
    %22 = vsyncpa [#allocation9], 0
    %23 = vsyncpa [#allocation12], 0
    %24 = vsyncpa [#allocation4], 0
    %s25 = scalar_lea.sflag [#allocation4], 1
    %26 = vsyncpa %s25, 0
    loop: start=0, step=1, limit=4
    $region2: #{tpu_custom_call.1} parent=1 // loop_pre_header
      _
    $region3: #{tpu_custom_call.1} parent=1 // loop_header
      %s28 = sphi 0, %s32
      %p29 = scmp.ge.s32.totalorder %s28, 4
      %s38 = sphi 0, %s40
      %s41 = sphi 0, %s38
      %s42 = sphi 0, %s41
      %s58 = sphi 0, %s42
      %s62 = sphi 0, %s62
      %s64 = sphi 0, %s62
      %s65 = sphi 0, %s64
      %s79 = sphi 0, %s65
      %s83 = sphi 0, %s83
      %s85 = sphi 0, %s83
      %s86 = sphi 0, %s85
      %s100 = sphi 0, %s86
      %s104 = sphi 0, %s104
      %s106 = sphi 0, %s104
      %s107 = sphi 0, %s106
      %s121 = sphi 0, %s107
      %s125 = sphi 0, %s125
      %s127 = sphi 0, %s125
      %s128 = sphi 0, %s127
      %s142 = sphi 0, %s128
      %s146 = sphi 0, %s146
      %s148 = sphi 0, %s146
      %s149 = sphi 0, %s148
      %s163 = sphi 0, %s149
      %s167 = sphi 0, %s167
      %s169 = sphi 0, %s167
      %s170 = sphi 0, %s169
      %s184 = sphi 0, %s170
      %s188 = sphi 0, %s188
      %s190 = sphi 0, %s188
      %s191 = sphi 0, %s190
      %s205 = sphi 0, %s191
      %s209 = sphi 0, %s209
      %s211 = sphi 0, %s209
      %s212 = sphi 0, %s211
      %s226 = sphi 0, %s212
      %s230 = sphi 0, %s230
      %s232 = sphi 0, %s230
      %s233 = sphi 0, %s232
      %s247 = sphi 0, %s233
      %s251 = sphi 0, %s251
      %s253 = sphi 0, %s251
      %s254 = sphi 0, %s253
      %s268 = sphi 0, %s254
      %s272 = sphi 0, %s272
      %s274 = sphi 0, %s272
      %s275 = sphi 0, %s274
      %s289 = sphi 0, %s275
      %s293 = sphi 0, %s293
      %s295 = sphi 0, %s293
      %s296 = sphi 0, %s295
      %s310 = sphi 0, %s296
      %s314 = sphi 0, %s314
      %s316 = sphi 0, %s314
      %s317 = sphi 0, %s316
      %s331 = sphi 0, %s317
      %s335 = sphi 0, %s335
      %s337 = sphi 0, %s335
      %s338 = sphi 0, %s337
      %s352 = sphi 0, %s338
      %s358 = sphi 0, %s360
      %s361 = sphi 0, %s358
      %s362 = sphi 0, %s361
      %s378 = sphi 0, %s362
    $region4: #{tpu_custom_call.1} parent=1 // loop_header_branch
      %31 = sbr.rel (%p29) target = $region8
    $region5: #{tpu_custom_call.1} parent=1 // loop_body
      %s33 = ssub.s32 %s28, 1
      %s34 = ssub.s32 %s28, 2
      %s35 = sadd.s32 %s28, 1
      %s36 = ssub.s32 %s28, %s35
      %p37 = scmp.eq.s32.totalorder %s36, 0
      %s39 = sadd.s32 %s38, 1
      %s40 = scalar_select %p37, %s38, %s39
      %p43 = pneg %p37
      %p44 = scmp.eq.s32.totalorder %s28, 1
      %p45 = por %p43, %p44
      %p46 = scmp.ne.s32.totalorder %s38, %s41
      %p47 = scmp.eq.s32.totalorder %s28, 0
      %p48 = por %p46, %p47
      %p49 = scmp.ne.s32.totalorder %s38, %s41
      %p50 = scmp.eq.s32.totalorder %s33, 1
      %p51 = por %p49, %p50
      %p52 = scmp.ne.s32.totalorder %s41, %s42
      %p53 = scmp.eq.s32.totalorder %s33, 0
      %p54 = por %p52, %p53
      %p55 = scmp.ne.s32.totalorder %s41, %s42
      %p56 = scmp.eq.s32.totalorder %s34, 1
      %p57 = por %p55, %p56
      %p59 = scmp.ne.s32.totalorder %s42, %s58
      %p60 = scmp.eq.s32.totalorder %s34, 0
      %p61 = por %p59, %p60
      %s63 = sadd.s32 %s62, 1
      %p66 = scmp.eq.s32.totalorder %s28, 1
      %p67 = scmp.ne.s32.totalorder %s62, %s64
      %p68 = scmp.eq.s32.totalorder %s28, 0
      %p69 = por %p67, %p68
      %p70 = scmp.ne.s32.totalorder %s62, %s64
      %p71 = scmp.eq.s32.totalorder %s33, 1
      %p72 = por %p70, %p71
      %p73 = scmp.ne.s32.totalorder %s64, %s65
      %p74 = scmp.eq.s32.totalorder %s33, 0
      %p75 = por %p73, %p74
      %p76 = scmp.ne.s32.totalorder %s64, %s65
      %p77 = scmp.eq.s32.totalorder %s34, 1
      %p78 = por %p76, %p77
      %p80 = scmp.ne.s32.totalorder %s65, %s79
      %p81 = scmp.eq.s32.totalorder %s34, 0
      %p82 = por %p80, %p81
      %s84 = sadd.s32 %s83, 1
      %p87 = scmp.eq.s32.totalorder %s28, 1
      %p88 = scmp.ne.s32.totalorder %s83, %s85
      %p89 = scmp.eq.s32.totalorder %s28, 0
      %p90 = por %p88, %p89
      %p91 = scmp.ne.s32.totalorder %s83, %s85
      %p92 = scmp.eq.s32.totalorder %s33, 1
      %p93 = por %p91, %p92
      %p94 = scmp.ne.s32.totalorder %s85, %s86
      %p95 = scmp.eq.s32.totalorder %s33, 0
      %p96 = por %p94, %p95
      %p97 = scmp.ne.s32.totalorder %s85, %s86
      %p98 = scmp.eq.s32.totalorder %s34, 1
      %p99 = por %p97, %p98
      %p101 = scmp.ne.s32.totalorder %s86, %s100
      %p102 = scmp.eq.s32.totalorder %s34, 0
      %p103 = por %p101, %p102
      %s105 = sadd.s32 %s104, 1
      %p108 = scmp.eq.s32.totalorder %s28, 1
      %p109 = scmp.ne.s32.totalorder %s104, %s106
      %p110 = scmp.eq.s32.totalorder %s28, 0
      %p111 = por %p109, %p110
      %p112 = scmp.ne.s32.totalorder %s104, %s106
      %p113 = scmp.eq.s32.totalorder %s33, 1
      %p114 = por %p112, %p113
      %p115 = scmp.ne.s32.totalorder %s106, %s107
      %p116 = scmp.eq.s32.totalorder %s33, 0
      %p117 = por %p115, %p116
      %p118 = scmp.ne.s32.totalorder %s106, %s107
      %p119 = scmp.eq.s32.totalorder %s34, 1
      %p120 = por %p118, %p119
      %p122 = scmp.ne.s32.totalorder %s107, %s121
      %p123 = scmp.eq.s32.totalorder %s34, 0
      %p124 = por %p122, %p123
      %s126 = sadd.s32 %s125, 1
      %p129 = scmp.eq.s32.totalorder %s28, 1
      %p130 = scmp.ne.s32.totalorder %s125, %s127
      %p131 = scmp.eq.s32.totalorder %s28, 0
      %p132 = por %p130, %p131
      %p133 = scmp.ne.s32.totalorder %s125, %s127
      %p134 = scmp.eq.s32.totalorder %s33, 1
      %p135 = por %p133, %p134
      %p136 = scmp.ne.s32.totalorder %s127, %s128
      %p137 = scmp.eq.s32.totalorder %s33, 0
      %p138 = por %p136, %p137
      %p139 = scmp.ne.s32.totalorder %s127, %s128
      %p140 = scmp.eq.s32.totalorder %s34, 1
      %p141 = por %p139, %p140
      %p143 = scmp.ne.s32.totalorder %s128, %s142
      %p144 = scmp.eq.s32.totalorder %s34, 0
      %p145 = por %p143, %p144
      %s147 = sadd.s32 %s146, 1
      %p150 = scmp.eq.s32.totalorder %s28, 1
      %p151 = scmp.ne.s32.totalorder %s146, %s148
      %p152 = scmp.eq.s32.totalorder %s28, 0
      %p153 = por %p151, %p152
      %p154 = scmp.ne.s32.totalorder %s146, %s148
      %p155 = scmp.eq.s32.totalorder %s33, 1
      %p156 = por %p154, %p155
      %p157 = scmp.ne.s32.totalorder %s148, %s149
      %p158 = scmp.eq.s32.totalorder %s33, 0
      %p159 = por %p157, %p158
      %p160 = scmp.ne.s32.totalorder %s148, %s149
      %p161 = scmp.eq.s32.totalorder %s34, 1
      %p162 = por %p160, %p161
      %p164 = scmp.ne.s32.totalorder %s149, %s163
      %p165 = scmp.eq.s32.totalorder %s34, 0
      %p166 = por %p164, %p165
      %s168 = sadd.s32 %s167, 1
      %p171 = scmp.eq.s32.totalorder %s28, 1
      %p172 = scmp.ne.s32.totalorder %s167, %s169
      %p173 = scmp.eq.s32.totalorder %s28, 0
      %p174 = por %p172, %p173
      %p175 = scmp.ne.s32.totalorder %s167, %s169
      %p176 = scmp.eq.s32.totalorder %s33, 1
      %p177 = por %p175, %p176
      %p178 = scmp.ne.s32.totalorder %s169, %s170
      %p179 = scmp.eq.s32.totalorder %s33, 0
      %p180 = por %p178, %p179
      %p181 = scmp.ne.s32.totalorder %s169, %s170
      %p182 = scmp.eq.s32.totalorder %s34, 1
      %p183 = por %p181, %p182
      %p185 = scmp.ne.s32.totalorder %s170, %s184
      %p186 = scmp.eq.s32.totalorder %s34, 0
      %p187 = por %p185, %p186
      %s189 = sadd.s32 %s188, 1
      %p192 = scmp.eq.s32.totalorder %s28, 1
      %p193 = scmp.ne.s32.totalorder %s188, %s190
      %p194 = scmp.eq.s32.totalorder %s28, 0
      %p195 = por %p193, %p194
      %p196 = scmp.ne.s32.totalorder %s188, %s190
      %p197 = scmp.eq.s32.totalorder %s33, 1
      %p198 = por %p196, %p197
      %p199 = scmp.ne.s32.totalorder %s190, %s191
      %p200 = scmp.eq.s32.totalorder %s33, 0
      %p201 = por %p199, %p200
      %p202 = scmp.ne.s32.totalorder %s190, %s191
      %p203 = scmp.eq.s32.totalorder %s34, 1
      %p204 = por %p202, %p203
      %p206 = scmp.ne.s32.totalorder %s191, %s205
      %p207 = scmp.eq.s32.totalorder %s34, 0
      %p208 = por %p206, %p207
      %s210 = sadd.s32 %s209, 1
      %p213 = scmp.eq.s32.totalorder %s28, 1
      %p214 = scmp.ne.s32.totalorder %s209, %s211
      %p215 = scmp.eq.s32.totalorder %s28, 0
      %p216 = por %p214, %p215
      %p217 = scmp.ne.s32.totalorder %s209, %s211
      %p218 = scmp.eq.s32.totalorder %s33, 1
      %p219 = por %p217, %p218
      %p220 = scmp.ne.s32.totalorder %s211, %s212
      %p221 = scmp.eq.s32.totalorder %s33, 0
      %p222 = por %p220, %p221
      %p223 = scmp.ne.s32.totalorder %s211, %s212
      %p224 = scmp.eq.s32.totalorder %s34, 1
      %p225 = por %p223, %p224
      %p227 = scmp.ne.s32.totalorder %s212, %s226
      %p228 = scmp.eq.s32.totalorder %s34, 0
      %p229 = por %p227, %p228
      %s231 = sadd.s32 %s230, 1
      %p234 = scmp.eq.s32.totalorder %s28, 1
      %p235 = scmp.ne.s32.totalorder %s230, %s232
      %p236 = scmp.eq.s32.totalorder %s28, 0
      %p237 = por %p235, %p236
      %p238 = scmp.ne.s32.totalorder %s230, %s232
      %p239 = scmp.eq.s32.totalorder %s33, 1
      %p240 = por %p238, %p239
      %p241 = scmp.ne.s32.totalorder %s232, %s233
      %p242 = scmp.eq.s32.totalorder %s33, 0
      %p243 = por %p241, %p242
      %p244 = scmp.ne.s32.totalorder %s232, %s233
      %p245 = scmp.eq.s32.totalorder %s34, 1
      %p246 = por %p244, %p245
      %p248 = scmp.ne.s32.totalorder %s233, %s247
      %p249 = scmp.eq.s32.totalorder %s34, 0
      %p250 = por %p248, %p249
      %s252 = sadd.s32 %s251, 1
      %p255 = scmp.eq.s32.totalorder %s28, 1
      %p256 = scmp.ne.s32.totalorder %s251, %s253
      %p257 = scmp.eq.s32.totalorder %s28, 0
      %p258 = por %p256, %p257
      %p259 = scmp.ne.s32.totalorder %s251, %s253
      %p260 = scmp.eq.s32.totalorder %s33, 1
      %p261 = por %p259, %p260
      %p262 = scmp.ne.s32.totalorder %s253, %s254
      %p263 = scmp.eq.s32.totalorder %s33, 0
      %p264 = por %p262, %p263
      %p265 = scmp.ne.s32.totalorder %s253, %s254
      %p266 = scmp.eq.s32.totalorder %s34, 1
      %p267 = por %p265, %p266
      %p269 = scmp.ne.s32.totalorder %s254, %s268
      %p270 = scmp.eq.s32.totalorder %s34, 0
      %p271 = por %p269, %p270
      %s273 = sadd.s32 %s272, 1
      %p276 = scmp.eq.s32.totalorder %s28, 1
      %p277 = scmp.ne.s32.totalorder %s272, %s274
      %p278 = scmp.eq.s32.totalorder %s28, 0
      %p279 = por %p277, %p278
      %p280 = scmp.ne.s32.totalorder %s272, %s274
      %p281 = scmp.eq.s32.totalorder %s33, 1
      %p282 = por %p280, %p281
      %p283 = scmp.ne.s32.totalorder %s274, %s275
      %p284 = scmp.eq.s32.totalorder %s33, 0
      %p285 = por %p283, %p284
      %p286 = scmp.ne.s32.totalorder %s274, %s275
      %p287 = scmp.eq.s32.totalorder %s34, 1
      %p288 = por %p286, %p287
      %p290 = scmp.ne.s32.totalorder %s275, %s289
      %p291 = scmp.eq.s32.totalorder %s34, 0
      %p292 = por %p290, %p291
      %s294 = sadd.s32 %s293, 1
      %p297 = scmp.eq.s32.totalorder %s28, 1
      %p298 = scmp.ne.s32.totalorder %s293, %s295
      %p299 = scmp.eq.s32.totalorder %s28, 0
      %p300 = por %p298, %p299
      %p301 = scmp.ne.s32.totalorder %s293, %s295
      %p302 = scmp.eq.s32.totalorder %s33, 1
      %p303 = por %p301, %p302
      %p304 = scmp.ne.s32.totalorder %s295, %s296
      %p305 = scmp.eq.s32.totalorder %s33, 0
      %p306 = por %p304, %p305
      %p307 = scmp.ne.s32.totalorder %s295, %s296
      %p308 = scmp.eq.s32.totalorder %s34, 1
      %p309 = por %p307, %p308
      %p311 = scmp.ne.s32.totalorder %s296, %s310
      %p312 = scmp.eq.s32.totalorder %s34, 0
      %p313 = por %p311, %p312
      %s315 = sadd.s32 %s314, 1
      %p318 = scmp.eq.s32.totalorder %s28, 1
      %p319 = scmp.ne.s32.totalorder %s314, %s316
      %p320 = scmp.eq.s32.totalorder %s28, 0
      %p321 = por %p319, %p320
      %p322 = scmp.ne.s32.totalorder %s314, %s316
      %p323 = scmp.eq.s32.totalorder %s33, 1
      %p324 = por %p322, %p323
      %p325 = scmp.ne.s32.totalorder %s316, %s317
      %p326 = scmp.eq.s32.totalorder %s33, 0
      %p327 = por %p325, %p326
      %p328 = scmp.ne.s32.totalorder %s316, %s317
      %p329 = scmp.eq.s32.totalorder %s34, 1
      %p330 = por %p328, %p329
      %p332 = scmp.ne.s32.totalorder %s317, %s331
      %p333 = scmp.eq.s32.totalorder %s34, 0
      %p334 = por %p332, %p333
      %s336 = sadd.s32 %s335, 1
      %p339 = scmp.eq.s32.totalorder %s28, 1
      %p340 = scmp.ne.s32.totalorder %s335, %s337
      %p341 = scmp.eq.s32.totalorder %s28, 0
      %p342 = por %p340, %p341
      %p343 = scmp.ne.s32.totalorder %s335, %s337
      %p344 = scmp.eq.s32.totalorder %s33, 1
      %p345 = por %p343, %p344
      %p346 = scmp.ne.s32.totalorder %s337, %s338
      %p347 = scmp.eq.s32.totalorder %s33, 0
      %p348 = por %p346, %p347
      %p349 = scmp.ne.s32.totalorder %s337, %s338
      %p350 = scmp.eq.s32.totalorder %s34, 1
      %p351 = por %p349, %p350
      %p353 = scmp.ne.s32.totalorder %s338, %s352
      %p354 = scmp.eq.s32.totalorder %s34, 0
      %p355 = por %p353, %p354
      %s356 = ssub.s32 %s28, %s35
      %p357 = scmp.eq.s32.totalorder %s356, 0
      %s359 = sadd.s32 %s358, 1
      %s360 = scalar_select %p357, %s358, %s359
      %p363 = pneg %p357
      %p364 = scmp.eq.s32.totalorder %s28, 1
      %p365 = por %p363, %p364
      %p366 = scmp.ne.s32.totalorder %s358, %s361
      %p367 = scmp.eq.s32.totalorder %s28, 0
      %p368 = por %p366, %p367
      %p369 = scmp.ne.s32.totalorder %s358, %s361
      %p370 = scmp.eq.s32.totalorder %s33, 1
      %p371 = por %p369, %p370
      %p372 = scmp.ne.s32.totalorder %s361, %s362
      %p373 = scmp.eq.s32.totalorder %s33, 0
      %p374 = por %p372, %p373
      %p375 = scmp.ne.s32.totalorder %s361, %s362
      %p376 = scmp.eq.s32.totalorder %s34, 1
      %p377 = por %p375, %p376
      %p379 = scmp.ne.s32.totalorder %s362, %s378
      %p380 = scmp.eq.s32.totalorder %s34, 0
      %p381 = por %p379, %p380
      %p382 = scmp.le.s32.totalorder 1, %s28
      %p383 = scmp.lt.s32.totalorder %s28, 3
      %p384 = pnand %p382, %p383
      %p385 = pneg %p384
      // Predicated region
      $region9: #{tpu_custom_call.1} parent=5 // pred_check
        _
      $region10: #{tpu_custom_call.1} parent=5 // pred_check_branch
        %387 = sbr.rel (%p384) target = $region12
      $region11: #{tpu_custom_call.1} parent=5 // pred_region
        %s388 = ssub.s32 %s28, 1
        // Predicated region
        $region13: #{tpu_custom_call.1} parent=11 // pred_check
          %p389 = pneg %p75
        $region14: #{tpu_custom_call.1} parent=11 // pred_check_branch
          %391 = sbr.rel (%p389) target = $region16
        $region15: #{tpu_custom_call.1} parent=11 // pred_region
          %s393 = ssub.s32 4096, 4096
          %394 = vsyncadd [#allocation3], %s393
          %s395 = sshll.u32 [#allocation2], 4
          %s396 = int_to_ptr.vmem [resolvable:$true] %s395
          %401 = dma.hbm_to_vmem [thread:$0]  %s1, 4096, %s396, [#allocation3], 256, 256, 16
        $region16: #{tpu_custom_call.1} parent=11 // pred_fallthru
          _
        // Predicated region
        $region17: #{tpu_custom_call.1} parent=11 // pred_check
          %p402 = pneg %p96
        $region18: #{tpu_custom_call.1} parent=11 // pred_check_branch
          %404 = sbr.rel (%p402) target = $region20
        $region19: #{tpu_custom_call.1} parent=11 // pred_region
          %s406 = ssub.s32 4096, 4096
          %407 = vsyncadd [#allocation6], %s406
          %s408 = sshll.u32 [#allocation5], 4
          %s409 = int_to_ptr.vmem [resolvable:$true] %s408
          %414 = dma.hbm_to_vmem [thread:$0]  %s2, 4096, %s409, [#allocation6], 128, 128, 8
        $region20: #{tpu_custom_call.1} parent=11 // pred_fallthru
          _
        // Predicated region
        $region21: #{tpu_custom_call.1} parent=11 // pred_check
          %p415 = pneg %p117
        $region22: #{tpu_custom_call.1} parent=11 // pred_check_branch
          %417 = sbr.rel (%p415) target = $region24
        $region23: #{tpu_custom_call.1} parent=11 // pred_region
          _
        $region24: #{tpu_custom_call.1} parent=11 // pred_fallthru
          _
        // Predicated region
        $region25: #{tpu_custom_call.1} parent=11 // pred_check
          %p418 = pneg %p138
        $region26: #{tpu_custom_call.1} parent=11 // pred_check_branch
          %420 = sbr.rel (%p418) target = $region28
        $region27: #{tpu_custom_call.1} parent=11 // pred_region
          _
        $region28: #{tpu_custom_call.1} parent=11 // pred_fallthru
          _
        // Predicated region
        $region29: #{tpu_custom_call.1} parent=11 // pred_check
          %p421 = pneg %p159
        $region30: #{tpu_custom_call.1} parent=11 // pred_check_branch
          %423 = sbr.rel (%p421) target = $region32
        $region31: #{tpu_custom_call.1} parent=11 // pred_region
          _
        $region32: #{tpu_custom_call.1} parent=11 // pred_fallthru
          _
        // Predicated region
        $region33: #{tpu_custom_call.1} parent=11 // pred_check
          %p424 = pneg %p180
        $region34: #{tpu_custom_call.1} parent=11 // pred_check_branch
          %426 = sbr.rel (%p424) target = $region36
        $region35: #{tpu_custom_call.1} parent=11 // pred_region
          _
        $region36: #{tpu_custom_call.1} parent=11 // pred_fallthru
          _
        // Predicated region
        $region37: #{tpu_custom_call.1} parent=11 // pred_check
          %p427 = pneg %p201
        $region38: #{tpu_custom_call.1} parent=11 // pred_check_branch
          %429 = sbr.rel (%p427) target = $region40
        $region39: #{tpu_custom_call.1} parent=11 // pred_region
          %s431 = ssub.s32 16384, 16384
          %432 = vsyncadd [#allocation6], %s431
          %s433 = sshll.u32 [#allocation7], 4
          %s434 = int_to_ptr.vmem [resolvable:$true] %s433
          %439 = dma.hbm_to_vmem [thread:$0]  %s7, 16384, %s434, [#allocation6], 512, 512, 32
        $region40: #{tpu_custom_call.1} parent=11 // pred_fallthru
          _
        // Predicated region
        $region41: #{tpu_custom_call.1} parent=11 // pred_check
          %p440 = pneg %p222
        $region42: #{tpu_custom_call.1} parent=11 // pred_check_branch
          %442 = sbr.rel (%p440) target = $region44
        $region43: #{tpu_custom_call.1} parent=11 // pred_region
          _
        $region44: #{tpu_custom_call.1} parent=11 // pred_fallthru
          _
        // Predicated region
        $region45: #{tpu_custom_call.1} parent=11 // pred_check
          %p443 = pneg %p243
        $region46: #{tpu_custom_call.1} parent=11 // pred_check_branch
          %445 = sbr.rel (%p443) target = $region48
        $region47: #{tpu_custom_call.1} parent=11 // pred_region
          %s447 = ssub.s32 16384, 16384
          %448 = vsyncadd [#allocation9], %s447
          %s449 = sshll.u32 [#allocation8], 4
          %s450 = int_to_ptr.vmem [resolvable:$true] %s449
          %455 = dma.hbm_to_vmem [thread:$0]  %s9, 16384, %s450, [#allocation9], 256, 256, 16
        $region48: #{tpu_custom_call.1} parent=11 // pred_fallthru
          _
        // Predicated region
        $region49: #{tpu_custom_call.1} parent=11 // pred_check
          %p456 = pneg %p264
        $region50: #{tpu_custom_call.1} parent=11 // pred_check_branch
          %458 = sbr.rel (%p456) target = $region52
        $region51: #{tpu_custom_call.1} parent=11 // pred_region
          _
        $region52: #{tpu_custom_call.1} parent=11 // pred_fallthru
          _
        // Predicated region
        $region53: #{tpu_custom_call.1} parent=11 // pred_check
          %p459 = pneg %p285
        $region54: #{tpu_custom_call.1} parent=11 // pred_check_branch
          %461 = sbr.rel (%p459) target = $region56
        $region55: #{tpu_custom_call.1} parent=11 // pred_region
          %s463 = ssub.s32 12288, 12288
          %464 = vsyncadd [#allocation9], %s463
          %s465 = sshll.u32 [#allocation10], 4
          %s466 = int_to_ptr.vmem [resolvable:$true] %s465
          %471 = dma.hbm_to_vmem [thread:$0]  %s11, 12288, %s466, [#allocation9], 256, 256, 16
        $region56: #{tpu_custom_call.1} parent=11 // pred_fallthru
          _
        // Predicated region
        $region57: #{tpu_custom_call.1} parent=11 // pred_check
          %p472 = pneg %p306
        $region58: #{tpu_custom_call.1} parent=11 // pred_check_branch
          %474 = sbr.rel (%p472) target = $region60
        $region59: #{tpu_custom_call.1} parent=11 // pred_region
          _
        $region60: #{tpu_custom_call.1} parent=11 // pred_fallthru
          _
        // Predicated region
        $region61: #{tpu_custom_call.1} parent=11 // pred_check
          %p475 = pneg %p327
        $region62: #{tpu_custom_call.1} parent=11 // pred_check_branch
          %477 = sbr.rel (%p475) target = $region64
        $region63: #{tpu_custom_call.1} parent=11 // pred_region
          %s479 = ssub.s32 24576, 24576
          %480 = vsyncadd [#allocation12], %s479
          %s481 = sshll.u32 [#allocation11], 4
          %s482 = int_to_ptr.vmem [resolvable:$true] %s481
          %487 = dma.hbm_to_vmem [thread:$0]  %s13, 24576, %s482, [#allocation12], 256, 256, 16
        $region64: #{tpu_custom_call.1} parent=11 // pred_fallthru
          _
        // Predicated region
        $region65: #{tpu_custom_call.1} parent=11 // pred_check
          %p488 = pneg %p348
        $region66: #{tpu_custom_call.1} parent=11 // pred_check_branch
          %490 = sbr.rel (%p488) target = $region68
        $region67: #{tpu_custom_call.1} parent=11 // pred_region
          _
        $region68: #{tpu_custom_call.1} parent=11 // pred_fallthru
          _
      $region12: #{tpu_custom_call.1} parent=5 // pred_fallthru
        _
      %p491 = scmp.lt.s32.totalorder %s28, 2
      // Predicated region
      $region69: #{tpu_custom_call.1} parent=5 // pred_check
        %p492 = pneg %p491
      $region70: #{tpu_custom_call.1} parent=5 // pred_check_branch
        %494 = sbr.rel (%p492) target = $region72
      $region71: #{tpu_custom_call.1} parent=5 // pred_region
        // Predicated region
        $region73: #{tpu_custom_call.1} parent=71 // pred_check
          %p495 = pneg %p48
        $region74: #{tpu_custom_call.1} parent=71 // pred_check_branch
          %497 = sbr.rel (%p495) target = $region76
        $region75: #{tpu_custom_call.1} parent=71 // pred_region
          %p498 = scmp.lt.s32.totalorder %s28, 1
          %s499 = scalar_select %p498, %s28, 1
          %s500 = smul.addr %s499, 8
          %s501 = scalar_lea.vmem %s0, %s500
        $region76: #{tpu_custom_call.1} parent=71 // pred_fallthru
          _
      $region72: #{tpu_custom_call.1} parent=5 // pred_fallthru
        _
      %p502 = scmp.le.s32.totalorder 1, %s28
      %p503 = scmp.lt.s32.totalorder %s28, 3
      %p504 = pnand %p502, %p503
      %p505 = pneg %p504
      // Predicated region
      $region77: #{tpu_custom_call.1} parent=5 // pred_check
        _
      $region78: #{tpu_custom_call.1} parent=5 // pred_check_branch
        %507 = sbr.rel (%p504) target = $region80
      $region79: #{tpu_custom_call.1} parent=5 // pred_region
        %s508 = ssub.s32 %s28, 1
        // Predicated region
        $region81: #{tpu_custom_call.1} parent=79 // pred_check
          %p509 = pneg %p75
        $region82: #{tpu_custom_call.1} parent=79 // pred_check_branch
          %511 = sbr.rel (%p509) target = $region84
        $region83: #{tpu_custom_call.1} parent=79 // pred_region
          %512 = dma.done [#allocation3], 4096
        $region84: #{tpu_custom_call.1} parent=79 // pred_fallthru
          _
        // Predicated region
        $region85: #{tpu_custom_call.1} parent=79 // pred_check
          %p513 = pneg %p96
        $region86: #{tpu_custom_call.1} parent=79 // pred_check_branch
          %515 = sbr.rel (%p513) target = $region88
        $region87: #{tpu_custom_call.1} parent=79 // pred_region
          %516 = dma.done [#allocation6], 4096
        $region88: #{tpu_custom_call.1} parent=79 // pred_fallthru
          _
        // Predicated region
        $region89: #{tpu_custom_call.1} parent=79 // pred_check
          %p517 = pneg %p201
        $region90: #{tpu_custom_call.1} parent=79 // pred_check_branch
          %519 = sbr.rel (%p517) target = $region92
        $region91: #{tpu_custom_call.1} parent=79 // pred_region
          %520 = dma.done [#allocation6], 16384
        $region92: #{tpu_custom_call.1} parent=79 // pred_fallthru
          _
        // Predicated region
        $region93: #{tpu_custom_call.1} parent=79 // pred_check
          %p521 = pneg %p243
        $region94: #{tpu_custom_call.1} parent=79 // pred_check_branch
          %523 = sbr.rel (%p521) target = $region96
        $region95: #{tpu_custom_call.1} parent=79 // pred_region
          %524 = dma.done [#allocation9], 16384
        $region96: #{tpu_custom_call.1} parent=79 // pred_fallthru
          _
        // Predicated region
        $region97: #{tpu_custom_call.1} parent=79 // pred_check
          %p525 = pneg %p285
        $region98: #{tpu_custom_call.1} parent=79 // pred_check_branch
          %527 = sbr.rel (%p525) target = $region100
        $region99: #{tpu_custom_call.1} parent=79 // pred_region
          %528 = dma.done [#allocation9], 12288
        $region100: #{tpu_custom_call.1} parent=79 // pred_fallthru
          _
        // Predicated region
        $region101: #{tpu_custom_call.1} parent=79 // pred_check
          %p529 = pneg %p327
        $region102: #{tpu_custom_call.1} parent=79 // pred_check_branch
          %531 = sbr.rel (%p529) target = $region104
        $region103: #{tpu_custom_call.1} parent=79 // pred_region
          %532 = dma.done [#allocation12], 24576
        $region104: #{tpu_custom_call.1} parent=79 // pred_fallthru
          _
        %p533 = scmp.lt.s32.totalorder %s33, 1
        %s534 = scalar_select %p533, %s33, 1
        %s535 = smul.addr %s534, 8
        %s536 = scalar_lea.vmem %s0, %s535
        %p537 = pneg %p54
        %p538 = pneg %p51
        %p539 = pneg %p75
        %p540 = pneg %p72
        %p541 = pneg %p96
        %p542 = pneg %p93
        %p543 = pneg %p117
        %p544 = pneg %p114
        %p545 = pneg %p138
        %p546 = pneg %p135
        %p547 = pneg %p159
        %p548 = pneg %p156
        %p549 = pneg %p180
        %p550 = pneg %p177
        %p551 = pneg %p201
        %p552 = pneg %p198
        %p553 = pneg %p222
        %p554 = pneg %p219
        %p555 = pneg %p243
        %p556 = pneg %p240
        %p557 = pneg %p264
        %p558 = pneg %p261
        %p559 = pneg %p285
        %p560 = pneg %p282
        %p561 = pneg %p306
        %p562 = pneg %p303
        %p563 = pneg %p327
        %p564 = pneg %p324
        %p565 = pneg %p348
        %p566 = pneg %p345
        %p567 = pneg %p374
        %p568 = pneg %p371
        %s569 = sand.u32 %s361, 1
        %s570 = scalar_lea.sflag [#allocation4], %s569
        %s571 = sand.u32 %s361, 1
        %s572 = smul.addr %s571, 8
        %s573 = scalar_lea.vmem [#allocation13], %s572
        %p574 = scmp.lt.s32.totalorder %s33, 1
        %s575 = scalar_select %p574, %s33, 1
        %s576 = smul.addr %s575, 8
        %s577 = scalar_lea.vmem %s0, %s576
        %v578 = vld [vmem:[%s577] sm:$0xff]
        %v579 = vld [vmem:[#allocation2] sm:$0xff]
        %v580 = vld [vmem:[#allocation2 + $0x8] sm:$0xff]
        %v581 = vld [vmem:[#allocation2 + $0x10] sm:$0xff]
        %v582 = vld [vmem:[#allocation2 + $0x18] sm:$0xff]
        %v583 = vld [vmem:[#allocation2 + $0x20] sm:$0xff]
        %v584 = vld [vmem:[#allocation2 + $0x28] sm:$0xff]
        %v585 = vld [vmem:[#allocation2 + $0x30] sm:$0xff]
        %v586 = vld [vmem:[#allocation2 + $0x38] sm:$0xff]
        %v587 = vld [vmem:[#allocation2 + $0x40] sm:$0xff]
        %v588 = vld [vmem:[#allocation2 + $0x48] sm:$0xff]
        %v589 = vld [vmem:[#allocation2 + $0x50] sm:$0xff]
        %v590 = vld [vmem:[#allocation2 + $0x58] sm:$0xff]
        %v591 = vld [vmem:[#allocation2 + $0x60] sm:$0xff]
        %v592 = vld [vmem:[#allocation2 + $0x68] sm:$0xff]
        %v593 = vld [vmem:[#allocation2 + $0x70] sm:$0xff]
        %v594 = vld [vmem:[#allocation2 + $0x78] sm:$0xff]
        %v595 = vld [vmem:[#allocation2 + $0x80] sm:$0xff]
        %v596 = vld [vmem:[#allocation2 + $0x88] sm:$0xff]
        %v597 = vld [vmem:[#allocation2 + $0x90] sm:$0xff]
        %v598 = vld [vmem:[#allocation2 + $0x98] sm:$0xff]
        %v599 = vld [vmem:[#allocation2 + $0xa0] sm:$0xff]
        %v600 = vld [vmem:[#allocation2 + $0xa8] sm:$0xff]
        %v601 = vld [vmem:[#allocation2 + $0xb0] sm:$0xff]
        %v602 = vld [vmem:[#allocation2 + $0xb8] sm:$0xff]
        %v603 = vld [vmem:[#allocation2 + $0xc0] sm:$0xff]
        %v604 = vld [vmem:[#allocation2 + $0xc8] sm:$0xff]
        %v605 = vld [vmem:[#allocation2 + $0xd0] sm:$0xff]
        %v606 = vld [vmem:[#allocation2 + $0xd8] sm:$0xff]
        %v607 = vld [vmem:[#allocation2 + $0xe0] sm:$0xff]
        %v608 = vld [vmem:[#allocation2 + $0xe8] sm:$0xff]
        %v609 = vld [vmem:[#allocation2 + $0xf0] sm:$0xff]
        %v610 = vld [vmem:[#allocation2 + $0xf8] sm:$0xff]
        %611 = vmatprep.subr.mxu0 %v580
        %612 = vmatpush1.msra.mxu0 %v579
        %613 = vmatprep.subr.mxu0 %v582
        %614 = vmatpush1.msra.mxu0 %v581
        %615 = vmatprep.subr.mxu0 %v584
        %616 = vmatpush1.msra.mxu0 %v583
        %617 = vmatprep.subr.mxu0 %v586
        %618 = vmatpush1.msra.mxu0 %v585
        %619 = vmatprep.subr.mxu0 %v588
        %620 = vmatpush1.msra.mxu0 %v587
        %621 = vmatprep.subr.mxu0 %v590
        %622 = vmatpush1.msra.mxu0 %v589
        %623 = vmatprep.subr.mxu0 %v592
        %624 = vmatpush1.msra.mxu0 %v591
        %625 = vmatprep.subr.mxu0 %v594
        %626 = vmatpush1.msra.mxu0 %v593
        %627 = vmatprep.subr.mxu0 %v596
        %628 = vmatpush1.msra.mxu0 %v595
        %629 = vmatprep.subr.mxu0 %v598
        %630 = vmatpush1.msra.mxu0 %v597
        %631 = vmatprep.subr.mxu0 %v600
        %632 = vmatpush1.msra.mxu0 %v599
        %633 = vmatprep.subr.mxu0 %v602
        %634 = vmatpush1.msra.mxu0 %v601
        %635 = vmatprep.subr.mxu0 %v604
        %636 = vmatpush1.msra.mxu0 %v603
        %637 = vmatprep.subr.mxu0 %v606
        %638 = vmatpush1.msra.mxu0 %v605
        %639 = vmatprep.subr.mxu0 %v608
        %640 = vmatpush1.msra.mxu0 %v607
        %641 = vmatprep.subr.mxu0 %v610
        %642 = vmatpush1.msra.mxu0 %v609
        %643 = vmatprep.subr.mxu0 0.0
        %644 = vmatpush1.msra.mxu0 0.0
        %645 = vmatprep.subr.mxu0 0.0
        %646 = vmatpush1.msra.mxu0 0.0
        %647 = vmatprep.subr.mxu0 0.0
        %648 = vmatpush1.msra.mxu0 0.0
        %649 = vmatprep.subr.mxu0 0.0
        %650 = vmatpush1.msra.mxu0 0.0
        %651 = vmatprep.subr.mxu0 0.0
        %652 = vmatpush1.msra.mxu0 0.0
        %653 = vmatprep.subr.mxu0 0.0
        %654 = vmatpush1.msra.mxu0 0.0
        %655 = vmatprep.subr.mxu0 0.0
        %656 = vmatpush1.msra.mxu0 0.0
        %657 = vmatprep.subr.mxu0 0.0
        %658 = vmatpush1.msra.mxu0 0.0
        %659 = vmatprep.subr.mxu0 0.0
        %660 = vmatpush1.msra.mxu0 0.0
        %661 = vmatprep.subr.mxu0 0.0
        %662 = vmatpush1.msra.mxu0 0.0
        %663 = vmatprep.subr.mxu0 0.0
        %664 = vmatpush1.msra.mxu0 0.0
        %665 = vmatprep.subr.mxu0 0.0
        %666 = vmatpush1.msra.mxu0 0.0
        %667 = vmatprep.subr.mxu0 0.0
        %668 = vmatpush1.msra.mxu0 0.0
        %669 = vmatprep.subr.mxu0 0.0
        %670 = vmatpush1.msra.mxu0 0.0
        %671 = vmatprep.subr.mxu0 0.0
        %672 = vmatpush1.msra.mxu0 0.0
        %673 = vmatprep.subr.mxu0 0.0
        %674 = vmatpush1.msra.mxu0 0.0
        %675 = vmatprep.mubr.f32.mxu0 0.0
        %676 = vmatmul.mubr.f32.gmra.mrb[0].mxu0 %v578
        %v677 = vpop.f32.mrb[0].mxu0
        %v678 = vadd.f32 0.0, %v677
        %v679 = vpop.f32.mrb[0].mxu0
        %v680 = vadd.f32 0.0, %v679
        %681 = vdwg.mxu0
        %v682 = vmul.f32 %v678, %v678
        %v683 = vmul.f32 %v680, %v680
        %v684 = vadd.f32 %v682, %v683
        %v685 = vrsqrt.pop %v684
        %v686 = vmul.f32 %v684, %v685
        %vm687 = vcmp.eq.f32.partialorder %v684, inf
        %v688 = vsel %vm687, %v684, %v686
        %vm689 = vcmp.eq.f32.partialorder %v684, 0.0
        %v690 = vand.u32 %v684, 2147483648
        %v691 = vsel %vm689, %v690, %v688
        %v692 = vld [vmem:[%s3] sm:$0x3]
        %vm693 = vcmask 64512
        %v695 = vsel %vm693, %v692, 0
        %697 = vmatprep.subr.mxu0 0.0
        %698 = vmatpush1.msra.mxu0 %v691
        %699 = vmatprep.subr.mxu0 0.0
        %700 = vmatpush1.msra.mxu0 0.0
        %701 = vmatprep.subr.mxu0 0.0
        %702 = vmatpush1.msra.mxu0 0.0
        %703 = vmatprep.subr.mxu0 0.0
        %704 = vmatpush1.msra.mxu0 0.0
        %705 = vmatprep.subr.mxu0 0.0
        %706 = vmatpush1.msra.mxu0 0.0
        %707 = vmatprep.subr.mxu0 0.0
        %708 = vmatpush1.msra.mxu0 0.0
        %709 = vmatprep.subr.mxu0 0.0
        %710 = vmatpush1.msra.mxu0 0.0
        %711 = vmatprep.subr.mxu0 0.0
        %712 = vmatpush1.msra.mxu0 0.0
        %713 = vmatprep.subr.mxu0 0.0
        %714 = vmatpush1.msra.mxu0 0.0
        %715 = vmatprep.subr.mxu0 0.0
        %716 = vmatpush1.msra.mxu0 0.0
        %717 = vmatprep.subr.mxu0 0.0
        %718 = vmatpush1.msra.mxu0 0.0
        %719 = vmatprep.subr.mxu0 0.0
        %720 = vmatpush1.msra.mxu0 0.0
        %721 = vmatprep.subr.mxu0 0.0
        %722 = vmatpush1.msra.mxu0 0.0
        %723 = vmatprep.subr.mxu0 0.0
        %724 = vmatpush1.msra.mxu0 0.0
        %725 = vmatprep.subr.mxu0 0.0
        %726 = vmatpush1.msra.mxu0 0.0
        %727 = vmatprep.subr.mxu0 0.0
        %728 = vmatpush1.msra.mxu0 0.0
        %729 = vmatprep.subr.mxu0 0.0
        %730 = vmatpush1.msra.mxu0 0.0
        %731 = vmatprep.subr.mxu0 0.0
        %732 = vmatpush1.msra.mxu0 0.0
        %733 = vmatprep.subr.mxu0 0.0
        %734 = vmatpush1.msra.mxu0 0.0
        %735 = vmatprep.subr.mxu0 0.0
        %736 = vmatpush1.msra.mxu0 0.0
        %737 = vmatprep.subr.mxu0 0.0
        %738 = vmatpush1.msra.mxu0 0.0
        %739 = vmatprep.subr.mxu0 0.0
        %740 = vmatpush1.msra.mxu0 0.0
        %741 = vmatprep.subr.mxu0 0.0
        %742 = vmatpush1.msra.mxu0 0.0
        %743 = vmatprep.subr.mxu0 0.0
        %744 = vmatpush1.msra.mxu0 0.0
        %745 = vmatprep.subr.mxu0 0.0
        %746 = vmatpush1.msra.mxu0 0.0
        %747 = vmatprep.subr.mxu0 0.0
        %748 = vmatpush1.msra.mxu0 0.0
        %749 = vmatprep.subr.mxu0 0.0
        %750 = vmatpush1.msra.mxu0 0.0
        %751 = vmatprep.subr.mxu0 0.0
        %752 = vmatpush1.msra.mxu0 0.0
        %753 = vmatprep.subr.mxu0 0.0
        %754 = vmatpush1.msra.mxu0 0.0
        %755 = vmatprep.subr.mxu0 0.0
        %756 = vmatpush1.msra.mxu0 0.0
        %757 = vmatprep.subr.mxu0 0.0
        %758 = vmatpush1.msra.mxu0 0.0
        %759 = vmatprep.subr.mxu0 0.0
        %760 = vmatpush1.msra.mxu0 0.0
        %761 = vmatprep.mubr.f32.mxu0 0.0
        %762 = vmatmul.mubr.f32.gmra.mrb[0].mxu0 %v695
        %v763 = vpop.f32.mrb[0].mxu0
        %v764 = vadd.f32 0.0, %v763
        %v765 = vpop.f32.mrb[0].mxu0
        %766 = vdwg.mxu0
        %v767 = vld [vmem:[%s5] sm:$0xff]
        %v768 = vld [vmem:[%s5 + $0x8] sm:$0xff]
        %v769 = vld [vmem:[%s5 + $0x10] sm:$0xff]
        %v770 = vld [vmem:[%s5 + $0x18] sm:$0xff]
        %v771 = vld [vmem:[%s5 + $0x20] sm:$0xff]
        %v772 = vld [vmem:[%s5 + $0x28] sm:$0xff]
        %v773 = vld [vmem:[%s5 + $0x30] sm:$0xff]
        %v774 = vld [vmem:[%s5 + $0x38] sm:$0xff]
        %v775 = vld [vmem:[%s5 + $0x40] sm:$0xff]
        %v776 = vld [vmem:[%s5 + $0x48] sm:$0xff]
        %v777 = vld [vmem:[%s5 + $0x50] sm:$0xff]
        %v778 = vld [vmem:[%s5 + $0x58] sm:$0xff]
        %v779 = vld [vmem:[%s5 + $0x60] sm:$0xff]
        %v780 = vld [vmem:[%s5 + $0x68] sm:$0xff]
        %v781 = vld [vmem:[%s5 + $0x70] sm:$0xff]
        %v782 = vld [vmem:[%s5 + $0x78] sm:$0xff]
        %v783 = vld [vmem:[%s6] sm:$0x1]
        %v785 = vlaneseq
        %v786 = vshrl.u32 %v785, 7
        %v787 = vsub.s32 0, %v786
        %v788 = vrot.slane %v783, %v787
        %790 = vmatprep.subr.mxu0 0.0
        %791 = vmatpush1.msra.mxu0 %v767
        %792 = vmatprep.subr.mxu0 0.0
        %793 = vmatpush1.msra.mxu0 %v768
        %794 = vmatprep.subr.mxu0 0.0
        %795 = vmatpush1.msra.mxu0 %v769
        %796 = vmatprep.subr.mxu0 0.0
        %797 = vmatpush1.msra.mxu0 %v770
        %798 = vmatprep.subr.mxu0 0.0
        %799 = vmatpush1.msra.mxu0 %v771
        %800 = vmatprep.subr.mxu0 0.0
        %801 = vmatpush1.msra.mxu0 %v772
        %802 = vmatprep.subr.mxu0 0.0
        %803 = vmatpush1.msra.mxu0 %v773
        %804 = vmatprep.subr.mxu0 0.0
        %805 = vmatpush1.msra.mxu0 %v774
        %806 = vmatprep.subr.mxu0 0.0
        %807 = vmatpush1.msra.mxu0 %v775
        %808 = vmatprep.subr.mxu0 0.0
        %809 = vmatpush1.msra.mxu0 %v776
        %810 = vmatprep.subr.mxu0 0.0
        %811 = vmatpush1.msra.mxu0 %v777
        %812 = vmatprep.subr.mxu0 0.0
        %813 = vmatpush1.msra.mxu0 %v778
        %814 = vmatprep.subr.mxu0 0.0
        %815 = vmatpush1.msra.mxu0 %v779
        %816 = vmatprep.subr.mxu0 0.0
        %817 = vmatpush1.msra.mxu0 %v780
        %818 = vmatprep.subr.mxu0 0.0
        %819 = vmatpush1.msra.mxu0 %v781
        %820 = vmatprep.subr.mxu0 0.0
        %821 = vmatpush1.msra.mxu0 %v782
        %822 = vmatprep.subr.mxu0 0.0
        %823 = vmatpush1.msra.mxu0 0.0
        %824 = vmatprep.subr.mxu0 0.0
        %825 = vmatpush1.msra.mxu0 0.0
        %826 = vmatprep.subr.mxu0 0.0
        %827 = vmatpush1.msra.mxu0 0.0
        %828 = vmatprep.subr.mxu0 0.0
        %829 = vmatpush1.msra.mxu0 0.0
        %830 = vmatprep.subr.mxu0 0.0
        %831 = vmatpush1.msra.mxu0 0.0
        %832 = vmatprep.subr.mxu0 0.0
        %833 = vmatpush1.msra.mxu0 0.0
        %834 = vmatprep.subr.mxu0 0.0
        %835 = vmatpush1.msra.mxu0 0.0
        %836 = vmatprep.subr.mxu0 0.0
        %837 = vmatpush1.msra.mxu0 0.0
        %838 = vmatprep.subr.mxu0 0.0
        %839 = vmatpush1.msra.mxu0 0.0
        %840 = vmatprep.subr.mxu0 0.0
        %841 = vmatpush1.msra.mxu0 0.0
        %842 = vmatprep.subr.mxu0 0.0
        %843 = vmatpush1.msra.mxu0 0.0
        %844 = vmatprep.subr.mxu0 0.0
        %845 = vmatpush1.msra.mxu0 0.0
        %846 = vmatprep.subr.mxu0 0.0
        %847 = vmatpush1.msra.mxu0 0.0
        %848 = vmatprep.subr.mxu0 0.0
        %849 = vmatpush1.msra.mxu0 0.0
        %850 = vmatprep.subr.mxu0 0.0
        %851 = vmatpush1.msra.mxu0 0.0
        %852 = vmatprep.subr.mxu0 0.0
        %853 = vmatpush1.msra.mxu0 0.0
        %854 = vmatprep.mubr.f32.mxu0 0.0
        %855 = vmatmul.mubr.f32.gmra.mrb[0].mxu0 %v764
        %v856 = vpop.f32.mrb[0].mxu0
        %v857 = vadd.f32 %v788, %v856
        %v858 = vpop.f32.mrb[0].mxu0
        %859 = vdwg.mxu0
        %vm860 = vcmask 9216
        %v861 = vsel %vm860, %v857, -inf
        %862 = vmax.xlane.f32.xlu0 %v861
        %v863 = vpop.xlane.xlu0 %862
        %v864 = vsub.f32 %v857, %v863
        %v865 = vmul.f32 %v864, 1.442695
        %v866 = vpow.pop %v865
        %v867 = vsel %vm860, %v866, 0.0
        %868 = vadd.xlane.f32.xlu0 %v867
        %v869 = vpop.xlane.xlu0 %868
        %v870 = vrcp.pop %v869
        %v871 = vmul.f32 %v866, %v870
        %v872 = vld [vmem:[%s4] sm:$0xff]
        %vm873 = vcmask 15360
        %v875 = vsel %vm873, %v872, 0
        %vm877 = vcmask 1041408
        %v879 = vsel %vm877, %v871, 0
        %881 = vmatprep.subr.mxu0 0.0
        %882 = vmatpush1.msra.mxu0 %v879
        %883 = vmatprep.subr.mxu0 0.0
        %884 = vmatpush1.msra.mxu0 0.0
        %885 = vmatprep.subr.mxu0 0.0
        %886 = vmatpush1.msra.mxu0 0.0
        %887 = vmatprep.subr.mxu0 0.0
        %888 = vmatpush1.msra.mxu0 0.0
        %889 = vmatprep.subr.mxu0 0.0
        %890 = vmatpush1.msra.mxu0 0.0
        %891 = vmatprep.subr.mxu0 0.0
        %892 = vmatpush1.msra.mxu0 0.0
        %893 = vmatprep.subr.mxu0 0.0
        %894 = vmatpush1.msra.mxu0 0.0
        %895 = vmatprep.subr.mxu0 0.0
        %896 = vmatpush1.msra.mxu0 0.0
        %897 = vmatprep.subr.mxu0 0.0
        %898 = vmatpush1.msra.mxu0 0.0
        %899 = vmatprep.subr.mxu0 0.0
        %900 = vmatpush1.msra.mxu0 0.0
        %901 = vmatprep.subr.mxu0 0.0
        %902 = vmatpush1.msra.mxu0 0.0
        %903 = vmatprep.subr.mxu0 0.0
        %904 = vmatpush1.msra.mxu0 0.0
        %905 = vmatprep.subr.mxu0 0.0
        %906 = vmatpush1.msra.mxu0 0.0
        %907 = vmatprep.subr.mxu0 0.0
        %908 = vmatpush1.msra.mxu0 0.0
        %909 = vmatprep.subr.mxu0 0.0
        %910 = vmatpush1.msra.mxu0 0.0
        %911 = vmatprep.subr.mxu0 0.0
        %912 = vmatpush1.msra.mxu0 0.0
        %913 = vmatprep.subr.mxu0 0.0
        %914 = vmatpush1.msra.mxu0 0.0
        %915 = vmatprep.subr.mxu0 0.0
        %916 = vmatpush1.msra.mxu0 0.0
        %917 = vmatprep.subr.mxu0 0.0
        %918 = vmatpush1.msra.mxu0 0.0
        %919 = vmatprep.subr.mxu0 0.0
        %920 = vmatpush1.msra.mxu0 0.0
        %921 = vmatprep.subr.mxu0 0.0
        %922 = vmatpush1.msra.mxu0 0.0
        %923 = vmatprep.subr.mxu0 0.0
        %924 = vmatpush1.msra.mxu0 0.0
        %925 = vmatprep.subr.mxu0 0.0
        %926 = vmatpush1.msra.mxu0 0.0
        %927 = vmatprep.subr.mxu0 0.0
        %928 = vmatpush1.msra.mxu0 0.0
        %929 = vmatprep.subr.mxu0 0.0
        %930 = vmatpush1.msra.mxu0 0.0
        %931 = vmatprep.subr.mxu0 0.0
        %932 = vmatpush1.msra.mxu0 0.0
        %933 = vmatprep.subr.mxu0 0.0
        %934 = vmatpush1.msra.mxu0 0.0
        %935 = vmatprep.subr.mxu0 0.0
        %936 = vmatpush1.msra.mxu0 0.0
        %937 = vmatprep.subr.mxu0 0.0
        %938 = vmatpush1.msra.mxu0 0.0
        %939 = vmatprep.subr.mxu0 0.0
        %940 = vmatpush1.msra.mxu0 0.0
        %941 = vmatprep.subr.mxu0 0.0
        %942 = vmatpush1.msra.mxu0 0.0
        %943 = vmatprep.subr.mxu0 0.0
        %944 = vmatpush1.msra.mxu0 0.0
        %945 = vmatprep.mubr.f32.mxu0 0.0
        %946 = vmatmul.mubr.f32.gmra.mrb[0].mxu0 %v875
        %v947 = vpop.f32.mrb[0].mxu0
        %v948 = vadd.f32 0.0, %v947
        %v949 = vpop.f32.mrb[0].mxu0
        %950 = vdwg.mxu0
        %v951 = vld [vmem:[#allocation7] sm:$0xff]
        %v952 = vld [vmem:[#allocation7 + $0x8] sm:$0xff]
        %v953 = vld [vmem:[#allocation7 + $0x10] sm:$0xff]
        %v954 = vld [vmem:[#allocation7 + $0x18] sm:$0xff]
        %v955 = vld [vmem:[#allocation7 + $0x20] sm:$0xff]
        %v956 = vld [vmem:[#allocation7 + $0x28] sm:$0xff]
        %v957 = vld [vmem:[#allocation7 + $0x30] sm:$0xff]
        %v958 = vld [vmem:[#allocation7 + $0x38] sm:$0xff]
        %v959 = vld [vmem:[#allocation7 + $0x40] sm:$0xff]
        %v960 = vld [vmem:[#allocation7 + $0x48] sm:$0xff]
        %v961 = vld [vmem:[#allocation7 + $0x50] sm:$0xff]
        %v962 = vld [vmem:[#allocation7 + $0x58] sm:$0xff]
        %v963 = vld [vmem:[#allocation7 + $0x60] sm:$0xff]
        %v964 = vld [vmem:[#allocation7 + $0x68] sm:$0xff]
        %v965 = vld [vmem:[#allocation7 + $0x70] sm:$0xff]
        %v966 = vld [vmem:[#allocation7 + $0x78] sm:$0xff]
        %v967 = vld [vmem:[#allocation7 + $0x80] sm:$0xff]
        %v968 = vld [vmem:[#allocation7 + $0x88] sm:$0xff]
        %v969 = vld [vmem:[#allocation7 + $0x90] sm:$0xff]
        %v970 = vld [vmem:[#allocation7 + $0x98] sm:$0xff]
        %v971 = vld [vmem:[#allocation7 + $0xa0] sm:$0xff]
        %v972 = vld [vmem:[#allocation7 + $0xa8] sm:$0xff]
        %v973 = vld [vmem:[#allocation7 + $0xb0] sm:$0xff]
        %v974 = vld [vmem:[#allocation7 + $0xb8] sm:$0xff]
        %v975 = vld [vmem:[#allocation7 + $0xc0] sm:$0xff]
        %v976 = vld [vmem:[#allocation7 + $0xc8] sm:$0xff]
        %v977 = vld [vmem:[#allocation7 + $0xd0] sm:$0xff]
        %v978 = vld [vmem:[#allocation7 + $0xd8] sm:$0xff]
        %v979 = vld [vmem:[#allocation7 + $0xe0] sm:$0xff]
        %v980 = vld [vmem:[#allocation7 + $0xe8] sm:$0xff]
        %v981 = vld [vmem:[#allocation7 + $0xf0] sm:$0xff]
        %v982 = vld [vmem:[#allocation7 + $0xf8] sm:$0xff]
        %v983 = vld [vmem:[#allocation7 + $0x100] sm:$0xff]
        %v984 = vld [vmem:[#allocation7 + $0x108] sm:$0xff]
        %v985 = vld [vmem:[#allocation7 + $0x110] sm:$0xff]
        %v986 = vld [vmem:[#allocation7 + $0x118] sm:$0xff]
        %v987 = vld [vmem:[#allocation7 + $0x120] sm:$0xff]
        %v988 = vld [vmem:[#allocation7 + $0x128] sm:$0xff]
        %v989 = vld [vmem:[#allocation7 + $0x130] sm:$0xff]
        %v990 = vld [vmem:[#allocation7 + $0x138] sm:$0xff]
        %v991 = vld [vmem:[#allocation7 + $0x140] sm:$0xff]
        %v992 = vld [vmem:[#allocation7 + $0x148] sm:$0xff]
        %v993 = vld [vmem:[#allocation7 + $0x150] sm:$0xff]
        %v994 = vld [vmem:[#allocation7 + $0x158] sm:$0xff]
        %v995 = vld [vmem:[#allocation7 + $0x160] sm:$0xff]
        %v996 = vld [vmem:[#allocation7 + $0x168] sm:$0xff]
        %v997 = vld [vmem:[#allocation7 + $0x170] sm:$0xff]
        %v998 = vld [vmem:[#allocation7 + $0x178] sm:$0xff]
        %v999 = vld [vmem:[#allocation7 + $0x180] sm:$0xff]
        %v1000 = vld [vmem:[#allocation7 + $0x188] sm:$0xff]
        %v1001 = vld [vmem:[#allocation7 + $0x190] sm:$0xff]
        %v1002 = vld [vmem:[#allocation7 + $0x198] sm:$0xff]
        %v1003 = vld [vmem:[#allocation7 + $0x1a0] sm:$0xff]
        %v1004 = vld [vmem:[#allocation7 + $0x1a8] sm:$0xff]
        %v1005 = vld [vmem:[#allocation7 + $0x1b0] sm:$0xff]
        %v1006 = vld [vmem:[#allocation7 + $0x1b8] sm:$0xff]
        %v1007 = vld [vmem:[#allocation7 + $0x1c0] sm:$0xff]
        %v1008 = vld [vmem:[#allocation7 + $0x1c8] sm:$0xff]
        %v1009 = vld [vmem:[#allocation7 + $0x1d0] sm:$0xff]
        %v1010 = vld [vmem:[#allocation7 + $0x1d8] sm:$0xff]
        %v1011 = vld [vmem:[#allocation7 + $0x1e0] sm:$0xff]
        %v1012 = vld [vmem:[#allocation7 + $0x1e8] sm:$0xff]
        %v1013 = vld [vmem:[#allocation7 + $0x1f0] sm:$0xff]
        %v1014 = vld [vmem:[#allocation7 + $0x1f8] sm:$0xff]
        %v1015 = vld [vmem:[#allocation7 + $0x200] sm:$0xff]
        %v1016 = vld [vmem:[#allocation7 + $0x208] sm:$0xff]
        %v1017 = vld [vmem:[#allocation7 + $0x210] sm:$0xff]
        %v1018 = vld [vmem:[#allocation7 + $0x218] sm:$0xff]
        %v1019 = vld [vmem:[#allocation7 + $0x220] sm:$0xff]
        %v1020 = vld [vmem:[#allocation7 + $0x228] sm:$0xff]
        %v1021 = vld [vmem:[#allocation7 + $0x230] sm:$0xff]
        %v1022 = vld [vmem:[#allocation7 + $0x238] sm:$0xff]
        %v1023 = vld [vmem:[#allocation7 + $0x240] sm:$0xff]
        %v1024 = vld [vmem:[#allocation7 + $0x248] sm:$0xff]
        %v1025 = vld [vmem:[#allocation7 + $0x250] sm:$0xff]
        %v1026 = vld [vmem:[#allocation7 + $0x258] sm:$0xff]
        %v1027 = vld [vmem:[#allocation7 + $0x260] sm:$0xff]
        %v1028 = vld [vmem:[#allocation7 + $0x268] sm:$0xff]
        %v1029 = vld [vmem:[#allocation7 + $0x270] sm:$0xff]
        %v1030 = vld [vmem:[#allocation7 + $0x278] sm:$0xff]
        %v1031 = vld [vmem:[#allocation7 + $0x280] sm:$0xff]
        %v1032 = vld [vmem:[#allocation7 + $0x288] sm:$0xff]
        %v1033 = vld [vmem:[#allocation7 + $0x290] sm:$0xff]
        %v1034 = vld [vmem:[#allocation7 + $0x298] sm:$0xff]
        %v1035 = vld [vmem:[#allocation7 + $0x2a0] sm:$0xff]
        %v1036 = vld [vmem:[#allocation7 + $0x2a8] sm:$0xff]
        %v1037 = vld [vmem:[#allocation7 + $0x2b0] sm:$0xff]
        %v1038 = vld [vmem:[#allocation7 + $0x2b8] sm:$0xff]
        %v1039 = vld [vmem:[#allocation7 + $0x2c0] sm:$0xff]
        %v1040 = vld [vmem:[#allocation7 + $0x2c8] sm:$0xff]
        %v1041 = vld [vmem:[#allocation7 + $0x2d0] sm:$0xff]
        %v1042 = vld [vmem:[#allocation7 + $0x2d8] sm:$0xff]
        %v1043 = vld [vmem:[#allocation7 + $0x2e0] sm:$0xff]
        %v1044 = vld [vmem:[#allocation7 + $0x2e8] sm:$0xff]
        %v1045 = vld [vmem:[#allocation7 + $0x2f0] sm:$0xff]
        %v1046 = vld [vmem:[#allocation7 + $0x2f8] sm:$0xff]
        %v1047 = vld [vmem:[#allocation7 + $0x300] sm:$0xff]
        %v1048 = vld [vmem:[#allocation7 + $0x308] sm:$0xff]
        %v1049 = vld [vmem:[#allocation7 + $0x310] sm:$0xff]
        %v1050 = vld [vmem:[#allocation7 + $0x318] sm:$0xff]
        %v1051 = vld [vmem:[#allocation7 + $0x320] sm:$0xff]
        %v1052 = vld [vmem:[#allocation7 + $0x328] sm:$0xff]
        %v1053 = vld [vmem:[#allocation7 + $0x330] sm:$0xff]
        %v1054 = vld [vmem:[#allocation7 + $0x338] sm:$0xff]
        %v1055 = vld [vmem:[#allocation7 + $0x340] sm:$0xff]
        %v1056 = vld [vmem:[#allocation7 + $0x348] sm:$0xff]
        %v1057 = vld [vmem:[#allocation7 + $0x350] sm:$0xff]
        %v1058 = vld [vmem:[#allocation7 + $0x358] sm:$0xff]
        %v1059 = vld [vmem:[#allocation7 + $0x360] sm:$0xff]
        %v1060 = vld [vmem:[#allocation7 + $0x368] sm:$0xff]
        %v1061 = vld [vmem:[#allocation7 + $0x370] sm:$0xff]
        %v1062 = vld [vmem:[#allocation7 + $0x378] sm:$0xff]
        %v1063 = vld [vmem:[#allocation7 + $0x380] sm:$0xff]
        %v1064 = vld [vmem:[#allocation7 + $0x388] sm:$0xff]
        %v1065 = vld [vmem:[#allocation7 + $0x390] sm:$0xff]
        %v1066 = vld [vmem:[#allocation7 + $0x398] sm:$0xff]
        %v1067 = vld [vmem:[#allocation7 + $0x3a0] sm:$0xff]
        %v1068 = vld [vmem:[#allocation7 + $0x3a8] sm:$0xff]
        %v1069 = vld [vmem:[#allocation7 + $0x3b0] sm:$0xff]
        %v1070 = vld [vmem:[#allocation7 + $0x3b8] sm:$0xff]
        %v1071 = vld [vmem:[#allocation7 + $0x3c0] sm:$0xff]
        %v1072 = vld [vmem:[#allocation7 + $0x3c8] sm:$0xff]
        %v1073 = vld [vmem:[#allocation7 + $0x3d0] sm:$0xff]
        %v1074 = vld [vmem:[#allocation7 + $0x3d8] sm:$0xff]
        %v1075 = vld [vmem:[#allocation7 + $0x3e0] sm:$0xff]
        %v1076 = vld [vmem:[#allocation7 + $0x3e8] sm:$0xff]
        %v1077 = vld [vmem:[#allocation7 + $0x3f0] sm:$0xff]
        %v1078 = vld [vmem:[#allocation7 + $0x3f8] sm:$0xff]
        %v1079 = vld [vmem:[%s8] sm:$0xf]
        %v1081 = vlaneseq
        %v1082 = vshrl.u32 %v1081, 7
        %v1083 = vsub.s32 0, %v1082
        %v1084 = vrot.slane %v1079, %v1083
        %v1085 = vlaneseq
        %v1086 = vshrl.u32 %v1085, 7
        %v1087 = vsub.s32 1, %v1086
        %v1088 = vrot.slane %v1079, %v1087
        %v1089 = vlaneseq
        %v1090 = vshrl.u32 %v1089, 7
        %v1091 = vsub.s32 2, %v1090
        %v1092 = vrot.slane %v1079, %v1091
        %v1093 = vlaneseq
        %v1094 = vshrl.u32 %v1093, 7
        %v1095 = vsub.s32 3, %v1094
        %v1096 = vrot.slane %v1079, %v1095
        %1101 = vmatprep.subr.mxu0 %v952
        %1102 = vmatpush1.msra.mxu0 %v951
        %1103 = vmatprep.subr.mxu0 %v956
        %1104 = vmatpush1.msra.mxu0 %v955
        %1105 = vmatprep.subr.mxu0 %v960
        %1106 = vmatpush1.msra.mxu0 %v959
        %1107 = vmatprep.subr.mxu0 %v964
        %1108 = vmatpush1.msra.mxu0 %v963
        %1109 = vmatprep.subr.mxu0 %v968
        %1110 = vmatpush1.msra.mxu0 %v967
        %1111 = vmatprep.subr.mxu0 %v972
        %1112 = vmatpush1.msra.mxu0 %v971
        %1113 = vmatprep.subr.mxu0 %v976
        %1114 = vmatpush1.msra.mxu0 %v975
        %1115 = vmatprep.subr.mxu0 %v980
        %1116 = vmatpush1.msra.mxu0 %v979
        %1117 = vmatprep.subr.mxu0 %v984
        %1118 = vmatpush1.msra.mxu0 %v983
        %1119 = vmatprep.subr.mxu0 %v988
        %1120 = vmatpush1.msra.mxu0 %v987
        %1121 = vmatprep.subr.mxu0 %v992
        %1122 = vmatpush1.msra.mxu0 %v991
        %1123 = vmatprep.subr.mxu0 %v996
        %1124 = vmatpush1.msra.mxu0 %v995
        %1125 = vmatprep.subr.mxu0 %v1000
        %1126 = vmatpush1.msra.mxu0 %v999
        %1127 = vmatprep.subr.mxu0 %v1004
        %1128 = vmatpush1.msra.mxu0 %v1003
        %1129 = vmatprep.subr.mxu0 %v1008
        %1130 = vmatpush1.msra.mxu0 %v1007
        %1131 = vmatprep.subr.mxu0 %v1012
        %1132 = vmatpush1.msra.mxu0 %v1011
        %1133 = vmatprep.subr.mxu0 %v1016
        %1134 = vmatpush1.msra.mxu0 %v1015
        %1135 = vmatprep.subr.mxu0 %v1020
        %1136 = vmatpush1.msra.mxu0 %v1019
        %1137 = vmatprep.subr.mxu0 %v1024
        %1138 = vmatpush1.msra.mxu0 %v1023
        %1139 = vmatprep.subr.mxu0 %v1028
        %1140 = vmatpush1.msra.mxu0 %v1027
        %1141 = vmatprep.subr.mxu0 %v1032
        %1142 = vmatpush1.msra.mxu0 %v1031
        %1143 = vmatprep.subr.mxu0 %v1036
        %1144 = vmatpush1.msra.mxu0 %v1035
        %1145 = vmatprep.subr.mxu0 %v1040
        %1146 = vmatpush1.msra.mxu0 %v1039
        %1147 = vmatprep.subr.mxu0 %v1044
        %1148 = vmatpush1.msra.mxu0 %v1043
        %1149 = vmatprep.subr.mxu0 %v1048
        %1150 = vmatpush1.msra.mxu0 %v1047
        %1151 = vmatprep.subr.mxu0 %v1052
        %1152 = vmatpush1.msra.mxu0 %v1051
        %1153 = vmatprep.subr.mxu0 %v1056
        %1154 = vmatpush1.msra.mxu0 %v1055
        %1155 = vmatprep.subr.mxu0 %v1060
        %1156 = vmatpush1.msra.mxu0 %v1059
        %1157 = vmatprep.subr.mxu0 %v1064
        %1158 = vmatpush1.msra.mxu0 %v1063
        %1159 = vmatprep.subr.mxu0 %v1068
        %1160 = vmatpush1.msra.mxu0 %v1067
        %1161 = vmatprep.subr.mxu0 %v1072
        %1162 = vmatpush1.msra.mxu0 %v1071
        %1163 = vmatprep.subr.mxu0 %v1076
        %1164 = vmatpush1.msra.mxu0 %v1075
        %1165 = vmatprep.mubr.f32.mxu0 %v680
        %1166 = vmatmul.mubr.f32.gmra.mrb[0].mxu0 %v678
        %v1167 = vpop.f32.mrb[0].mxu0
        %v1168 = vadd.f32 %v1084, %v1167
        %v1169 = vpop.f32.mrb[0].mxu0
        %v1170 = vadd.f32 %v1088, %v1169
        %1171 = vdwg.mxu0
        %1172 = vmatprep.subr.mxu0 %v954
        %1173 = vmatpush1.msra.mxu0 %v953
        %1174 = vmatprep.subr.mxu0 %v958
        %1175 = vmatpush1.msra.mxu0 %v957
        %1176 = vmatprep.subr.mxu0 %v962
        %1177 = vmatpush1.msra.mxu0 %v961
        %1178 = vmatprep.subr.mxu0 %v966
        %1179 = vmatpush1.msra.mxu0 %v965
        %1180 = vmatprep.subr.mxu0 %v970
        %1181 = vmatpush1.msra.mxu0 %v969
        %1182 = vmatprep.subr.mxu0 %v974
        %1183 = vmatpush1.msra.mxu0 %v973
        %1184 = vmatprep.subr.mxu0 %v978
        %1185 = vmatpush1.msra.mxu0 %v977
        %1186 = vmatprep.subr.mxu0 %v982
        %1187 = vmatpush1.msra.mxu0 %v981
        %1188 = vmatprep.subr.mxu0 %v986
        %1189 = vmatpush1.msra.mxu0 %v985
        %1190 = vmatprep.subr.mxu0 %v990
        %1191 = vmatpush1.msra.mxu0 %v989
        %1192 = vmatprep.subr.mxu0 %v994
        %1193 = vmatpush1.msra.mxu0 %v993
        %1194 = vmatprep.subr.mxu0 %v998
        %1195 = vmatpush1.msra.mxu0 %v997
        %1196 = vmatprep.subr.mxu0 %v1002
        %1197 = vmatpush1.msra.mxu0 %v1001
        %1198 = vmatprep.subr.mxu0 %v1006
        %1199 = vmatpush1.msra.mxu0 %v1005
        %1200 = vmatprep.subr.mxu0 %v1010
        %1201 = vmatpush1.msra.mxu0 %v1009
        %1202 = vmatprep.subr.mxu0 %v1014
        %1203 = vmatpush1.msra.mxu0 %v1013
        %1204 = vmatprep.subr.mxu0 %v1018
        %1205 = vmatpush1.msra.mxu0 %v1017
        %1206 = vmatprep.subr.mxu0 %v1022
        %1207 = vmatpush1.msra.mxu0 %v1021
        %1208 = vmatprep.subr.mxu0 %v1026
        %1209 = vmatpush1.msra.mxu0 %v1025
        %1210 = vmatprep.subr.mxu0 %v1030
        %1211 = vmatpush1.msra.mxu0 %v1029
        %1212 = vmatprep.subr.mxu0 %v1034
        %1213 = vmatpush1.msra.mxu0 %v1033
        %1214 = vmatprep.subr.mxu0 %v1038
        %1215 = vmatpush1.msra.mxu0 %v1037
        %1216 = vmatprep.subr.mxu0 %v1042
        %1217 = vmatpush1.msra.mxu0 %v1041
        %1218 = vmatprep.subr.mxu0 %v1046
        %1219 = vmatpush1.msra.mxu0 %v1045
        %1220 = vmatprep.subr.mxu0 %v1050
        %1221 = vmatpush1.msra.mxu0 %v1049
        %1222 = vmatprep.subr.mxu0 %v1054
        %1223 = vmatpush1.msra.mxu0 %v1053
        %1224 = vmatprep.subr.mxu0 %v1058
        %1225 = vmatpush1.msra.mxu0 %v1057
        %1226 = vmatprep.subr.mxu0 %v1062
        %1227 = vmatpush1.msra.mxu0 %v1061
        %1228 = vmatprep.subr.mxu0 %v1066
        %1229 = vmatpush1.msra.mxu0 %v1065
        %1230 = vmatprep.subr.mxu0 %v1070
        %1231 = vmatpush1.msra.mxu0 %v1069
        %1232 = vmatprep.subr.mxu0 %v1074
        %1233 = vmatpush1.msra.mxu0 %v1073
        %1234 = vmatprep.subr.mxu0 %v1078
        %1235 = vmatpush1.msra.mxu0 %v1077
        %1236 = vmatprep.mubr.f32.mxu0 %v680
        %1237 = vmatmul.mubr.f32.gmra.mrb[0].mxu0 %v678
        %v1238 = vpop.f32.mrb[0].mxu0
        %v1239 = vadd.f32 %v1092, %v1238
        %v1240 = vpop.f32.mrb[0].mxu0
        %v1241 = vadd.f32 %v1096, %v1240
        %1242 = vdwg.mxu0
        %v1243 = vmax.f32 %v1168, 0.0
        %v1244 = vmax.f32 %v1170, 0.0
        %v1245 = vmax.f32 %v1239, 0.0
        %v1246 = vmax.f32 %v1241, 0.0
        %1248 = vset.pattern.permute.xlu0 0
        %1249 = vperm.xlu0 %1248, %v948
        %v1250 = vpop.permute.xlu0 %1249
        %v1252 = vmul.f32 %v1243, %v1250
        %v1253 = vmul.f32 %v1244, %v1250
        %1254 = vset.pattern.permute.xlu0 1
        %1255 = vperm.xlu0 %1254, %v948
        %v1256 = vpop.permute.xlu0 %1255
        %v1258 = vmul.f32 %v1245, %v1256
        %v1259 = vmul.f32 %v1246, %v1256
        %v1260 = vld [vmem:[#allocation8] sm:$0xff]
        %v1261 = vld [vmem:[#allocation8 + $0x8] sm:$0xff]
        %v1262 = vld [vmem:[#allocation8 + $0x10] sm:$0xff]
        %v1263 = vld [vmem:[#allocation8 + $0x18] sm:$0xff]
        %v1264 = vld [vmem:[#allocation8 + $0x20] sm:$0xff]
        %v1265 = vld [vmem:[#allocation8 + $0x28] sm:$0xff]
        %v1266 = vld [vmem:[#allocation8 + $0x30] sm:$0xff]
        %v1267 = vld [vmem:[#allocation8 + $0x38] sm:$0xff]
        %v1268 = vld [vmem:[#allocation8 + $0x40] sm:$0xff]
        %v1269 = vld [vmem:[#allocation8 + $0x48] sm:$0xff]
        %v1270 = vld [vmem:[#allocation8 + $0x50] sm:$0xff]
        %v1271 = vld [vmem:[#allocation8 + $0x58] sm:$0xff]
        %v1272 = vld [vmem:[#allocation8 + $0x60] sm:$0xff]
        %v1273 = vld [vmem:[#allocation8 + $0x68] sm:$0xff]
        %v1274 = vld [vmem:[#allocation8 + $0x70] sm:$0xff]
        %v1275 = vld [vmem:[#allocation8 + $0x78] sm:$0xff]
        %v1276 = vld [vmem:[#allocation8 + $0x80] sm:$0xff]
        %v1277 = vld [vmem:[#allocation8 + $0x88] sm:$0xff]
        %v1278 = vld [vmem:[#allocation8 + $0x90] sm:$0xff]
        %v1279 = vld [vmem:[#allocation8 + $0x98] sm:$0xff]
        %v1280 = vld [vmem:[#allocation8 + $0xa0] sm:$0xff]
        %v1281 = vld [vmem:[#allocation8 + $0xa8] sm:$0xff]
        %v1282 = vld [vmem:[#allocation8 + $0xb0] sm:$0xff]
        %v1283 = vld [vmem:[#allocation8 + $0xb8] sm:$0xff]
        %v1284 = vld [vmem:[#allocation8 + $0xc0] sm:$0xff]
        %v1285 = vld [vmem:[#allocation8 + $0xc8] sm:$0xff]
        %v1286 = vld [vmem:[#allocation8 + $0xd0] sm:$0xff]
        %v1287 = vld [vmem:[#allocation8 + $0xd8] sm:$0xff]
        %v1288 = vld [vmem:[#allocation8 + $0xe0] sm:$0xff]
        %v1289 = vld [vmem:[#allocation8 + $0xe8] sm:$0xff]
        %v1290 = vld [vmem:[#allocation8 + $0xf0] sm:$0xff]
        %v1291 = vld [vmem:[#allocation8 + $0xf8] sm:$0xff]
        %v1292 = vld [vmem:[#allocation8 + $0x100] sm:$0xff]
        %v1293 = vld [vmem:[#allocation8 + $0x108] sm:$0xff]
        %v1294 = vld [vmem:[#allocation8 + $0x110] sm:$0xff]
        %v1295 = vld [vmem:[#allocation8 + $0x118] sm:$0xff]
        %v1296 = vld [vmem:[#allocation8 + $0x120] sm:$0xff]
        %v1297 = vld [vmem:[#allocation8 + $0x128] sm:$0xff]
        %v1298 = vld [vmem:[#allocation8 + $0x130] sm:$0xff]
        %v1299 = vld [vmem:[#allocation8 + $0x138] sm:$0xff]
        %v1300 = vld [vmem:[#allocation8 + $0x140] sm:$0xff]
        %v1301 = vld [vmem:[#allocation8 + $0x148] sm:$0xff]
        %v1302 = vld [vmem:[#allocation8 + $0x150] sm:$0xff]
        %v1303 = vld [vmem:[#allocation8 + $0x158] sm:$0xff]
        %v1304 = vld [vmem:[#allocation8 + $0x160] sm:$0xff]
        %v1305 = vld [vmem:[#allocation8 + $0x168] sm:$0xff]
        %v1306 = vld [vmem:[#allocation8 + $0x170] sm:$0xff]
        %v1307 = vld [vmem:[#allocation8 + $0x178] sm:$0xff]
        %v1308 = vld [vmem:[#allocation8 + $0x180] sm:$0xff]
        %v1309 = vld [vmem:[#allocation8 + $0x188] sm:$0xff]
        %v1310 = vld [vmem:[#allocation8 + $0x190] sm:$0xff]
        %v1311 = vld [vmem:[#allocation8 + $0x198] sm:$0xff]
        %v1312 = vld [vmem:[#allocation8 + $0x1a0] sm:$0xff]
        %v1313 = vld [vmem:[#allocation8 + $0x1a8] sm:$0xff]
        %v1314 = vld [vmem:[#allocation8 + $0x1b0] sm:$0xff]
        %v1315 = vld [vmem:[#allocation8 + $0x1b8] sm:$0xff]
        %v1316 = vld [vmem:[#allocation8 + $0x1c0] sm:$0xff]
        %v1317 = vld [vmem:[#allocation8 + $0x1c8] sm:$0xff]
        %v1318 = vld [vmem:[#allocation8 + $0x1d0] sm:$0xff]
        %v1319 = vld [vmem:[#allocation8 + $0x1d8] sm:$0xff]
        %v1320 = vld [vmem:[#allocation8 + $0x1e0] sm:$0xff]
        %v1321 = vld [vmem:[#allocation8 + $0x1e8] sm:$0xff]
        %v1322 = vld [vmem:[#allocation8 + $0x1f0] sm:$0xff]
        %v1323 = vld [vmem:[#allocation8 + $0x1f8] sm:$0xff]
        %v1324 = vld [vmem:[#allocation8 + $0x200] sm:$0xff]
        %v1325 = vld [vmem:[#allocation8 + $0x208] sm:$0xff]
        %v1326 = vld [vmem:[#allocation8 + $0x210] sm:$0xff]
        %v1327 = vld [vmem:[#allocation8 + $0x218] sm:$0xff]
        %v1328 = vld [vmem:[#allocation8 + $0x220] sm:$0xff]
        %v1329 = vld [vmem:[#allocation8 + $0x228] sm:$0xff]
        %v1330 = vld [vmem:[#allocation8 + $0x230] sm:$0xff]
        %v1331 = vld [vmem:[#allocation8 + $0x238] sm:$0xff]
        %v1332 = vld [vmem:[#allocation8 + $0x240] sm:$0xff]
        %v1333 = vld [vmem:[#allocation8 + $0x248] sm:$0xff]
        %v1334 = vld [vmem:[#allocation8 + $0x250] sm:$0xff]
        %v1335 = vld [vmem:[#allocation8 + $0x258] sm:$0xff]
        %v1336 = vld [vmem:[#allocation8 + $0x260] sm:$0xff]
        %v1337 = vld [vmem:[#allocation8 + $0x268] sm:$0xff]
        %v1338 = vld [vmem:[#allocation8 + $0x270] sm:$0xff]
        %v1339 = vld [vmem:[#allocation8 + $0x278] sm:$0xff]
        %v1340 = vld [vmem:[#allocation8 + $0x280] sm:$0xff]
        %v1341 = vld [vmem:[#allocation8 + $0x288] sm:$0xff]
        %v1342 = vld [vmem:[#allocation8 + $0x290] sm:$0xff]
        %v1343 = vld [vmem:[#allocation8 + $0x298] sm:$0xff]
        %v1344 = vld [vmem:[#allocation8 + $0x2a0] sm:$0xff]
        %v1345 = vld [vmem:[#allocation8 + $0x2a8] sm:$0xff]
        %v1346 = vld [vmem:[#allocation8 + $0x2b0] sm:$0xff]
        %v1347 = vld [vmem:[#allocation8 + $0x2b8] sm:$0xff]
        %v1348 = vld [vmem:[#allocation8 + $0x2c0] sm:$0xff]
        %v1349 = vld [vmem:[#allocation8 + $0x2c8] sm:$0xff]
        %v1350 = vld [vmem:[#allocation8 + $0x2d0] sm:$0xff]
        %v1351 = vld [vmem:[#allocation8 + $0x2d8] sm:$0xff]
        %v1352 = vld [vmem:[#allocation8 + $0x2e0] sm:$0xff]
        %v1353 = vld [vmem:[#allocation8 + $0x2e8] sm:$0xff]
        %v1354 = vld [vmem:[#allocation8 + $0x2f0] sm:$0xff]
        %v1355 = vld [vmem:[#allocation8 + $0x2f8] sm:$0xff]
        %v1356 = vld [vmem:[#allocation8 + $0x300] sm:$0xff]
        %v1357 = vld [vmem:[#allocation8 + $0x308] sm:$0xff]
        %v1358 = vld [vmem:[#allocation8 + $0x310] sm:$0xff]
        %v1359 = vld [vmem:[#allocation8 + $0x318] sm:$0xff]
        %v1360 = vld [vmem:[#allocation8 + $0x320] sm:$0xff]
        %v1361 = vld [vmem:[#allocation8 + $0x328] sm:$0xff]
        %v1362 = vld [vmem:[#allocation8 + $0x330] sm:$0xff]
        %v1363 = vld [vmem:[#allocation8 + $0x338] sm:$0xff]
        %v1364 = vld [vmem:[#allocation8 + $0x340] sm:$0xff]
        %v1365 = vld [vmem:[#allocation8 + $0x348] sm:$0xff]
        %v1366 = vld [vmem:[#allocation8 + $0x350] sm:$0xff]
        %v1367 = vld [vmem:[#allocation8 + $0x358] sm:$0xff]
        %v1368 = vld [vmem:[#allocation8 + $0x360] sm:$0xff]
        %v1369 = vld [vmem:[#allocation8 + $0x368] sm:$0xff]
        %v1370 = vld [vmem:[#allocation8 + $0x370] sm:$0xff]
        %v1371 = vld [vmem:[#allocation8 + $0x378] sm:$0xff]
        %v1372 = vld [vmem:[#allocation8 + $0x380] sm:$0xff]
        %v1373 = vld [vmem:[#allocation8 + $0x388] sm:$0xff]
        %v1374 = vld [vmem:[#allocation8 + $0x390] sm:$0xff]
        %v1375 = vld [vmem:[#allocation8 + $0x398] sm:$0xff]
        %v1376 = vld [vmem:[#allocation8 + $0x3a0] sm:$0xff]
        %v1377 = vld [vmem:[#allocation8 + $0x3a8] sm:$0xff]
        %v1378 = vld [vmem:[#allocation8 + $0x3b0] sm:$0xff]
        %v1379 = vld [vmem:[#allocation8 + $0x3b8] sm:$0xff]
        %v1380 = vld [vmem:[#allocation8 + $0x3c0] sm:$0xff]
        %v1381 = vld [vmem:[#allocation8 + $0x3c8] sm:$0xff]
        %v1382 = vld [vmem:[#allocation8 + $0x3d0] sm:$0xff]
        %v1383 = vld [vmem:[#allocation8 + $0x3d8] sm:$0xff]
        %v1384 = vld [vmem:[#allocation8 + $0x3e0] sm:$0xff]
        %v1385 = vld [vmem:[#allocation8 + $0x3e8] sm:$0xff]
        %v1386 = vld [vmem:[#allocation8 + $0x3f0] sm:$0xff]
        %v1387 = vld [vmem:[#allocation8 + $0x3f8] sm:$0xff]
        %v1388 = vld [vmem:[%s10] sm:$0xf]
        %v1391 = vunpack.c.l.s4 1983009808
        %v1392 = vunpack.c.0.s8 %v1391
        %v1393 = vlaneseq
        %v1394 = vshrl.u32 %v1393, 7
        %v1395 = vsub.s32 %v1392, %v1394
        %v1396 = vrot.slane %v1388, %v1395
        %v1397 = vcombine.high %v1396, %v1396
        %v1398 = vsel %vm873, %v948, 0
        %v1400 = vsel %vm877, %v1396, 0
        %v1402 = vsel %vm877, %v1397, 0
        %1404 = vmatprep.subr.mxu0 %v1402
        %1405 = vmatpush1.msra.mxu0 %v1400
        %1406 = vmatprep.subr.mxu0 0.0
        %1407 = vmatpush1.msra.mxu0 0.0
        %1408 = vmatprep.subr.mxu0 0.0
        %1409 = vmatpush1.msra.mxu0 0.0
        %1410 = vmatprep.subr.mxu0 0.0
        %1411 = vmatpush1.msra.mxu0 0.0
        %1412 = vmatprep.subr.mxu0 0.0
        %1413 = vmatpush1.msra.mxu0 0.0
        %1414 = vmatprep.subr.mxu0 0.0
        %1415 = vmatpush1.msra.mxu0 0.0
        %1416 = vmatprep.subr.mxu0 0.0
        %1417 = vmatpush1.msra.mxu0 0.0
        %1418 = vmatprep.subr.mxu0 0.0
        %1419 = vmatpush1.msra.mxu0 0.0
        %1420 = vmatprep.subr.mxu0 0.0
        %1421 = vmatpush1.msra.mxu0 0.0
        %1422 = vmatprep.subr.mxu0 0.0
        %1423 = vmatpush1.msra.mxu0 0.0
        %1424 = vmatprep.subr.mxu0 0.0
        %1425 = vmatpush1.msra.mxu0 0.0
        %1426 = vmatprep.subr.mxu0 0.0
        %1427 = vmatpush1.msra.mxu0 0.0
        %1428 = vmatprep.subr.mxu0 0.0
        %1429 = vmatpush1.msra.mxu0 0.0
        %1430 = vmatprep.subr.mxu0 0.0
        %1431 = vmatpush1.msra.mxu0 0.0
        %1432 = vmatprep.subr.mxu0 0.0
        %1433 = vmatpush1.msra.mxu0 0.0
        %1434 = vmatprep.subr.mxu0 0.0
        %1435 = vmatpush1.msra.mxu0 0.0
        %1436 = vmatprep.subr.mxu0 0.0
        %1437 = vmatpush1.msra.mxu0 0.0
        %1438 = vmatprep.subr.mxu0 0.0
        %1439 = vmatpush1.msra.mxu0 0.0
        %1440 = vmatprep.subr.mxu0 0.0
        %1441 = vmatpush1.msra.mxu0 0.0
        %1442 = vmatprep.subr.mxu0 0.0
        %1443 = vmatpush1.msra.mxu0 0.0
        %1444 = vmatprep.subr.mxu0 0.0
        %1445 = vmatpush1.msra.mxu0 0.0
        %1446 = vmatprep.subr.mxu0 0.0
        %1447 = vmatpush1.msra.mxu0 0.0
        %1448 = vmatprep.subr.mxu0 0.0
        %1449 = vmatpush1.msra.mxu0 0.0
        %1450 = vmatprep.subr.mxu0 0.0
        %1451 = vmatpush1.msra.mxu0 0.0
        %1452 = vmatprep.subr.mxu0 0.0
        %1453 = vmatpush1.msra.mxu0 0.0
        %1454 = vmatprep.subr.mxu0 0.0
        %1455 = vmatpush1.msra.mxu0 0.0
        %1456 = vmatprep.subr.mxu0 0.0
        %1457 = vmatpush1.msra.mxu0 0.0
        %1458 = vmatprep.subr.mxu0 0.0
        %1459 = vmatpush1.msra.mxu0 0.0
        %1460 = vmatprep.subr.mxu0 0.0
        %1461 = vmatpush1.msra.mxu0 0.0
        %1462 = vmatprep.subr.mxu0 0.0
        %1463 = vmatpush1.msra.mxu0 0.0
        %1464 = vmatprep.subr.mxu0 0.0
        %1465 = vmatpush1.msra.mxu0 0.0
        %1466 = vmatprep.subr.mxu0 0.0
        %1467 = vmatpush1.msra.mxu0 0.0
        %1468 = vmatprep.mubr.f32.mxu0 0.0
        %1469 = vmatmul.mubr.f32.gmra.mrb[0].mxu0 %v1398
        %v1470 = vpop.f32.mrb[0].mxu0
        %v1471 = vadd.f32 0.0, %v1470
        %v1472 = vpop.f32.mrb[0].mxu0
        %v1473 = vadd.f32 0.0, %v1472
        %1474 = vdwg.mxu0
        %1475 = vmatprep.subr.mxu0 %v1261
        %1476 = vmatpush1.msra.mxu0 %v1260
        %1477 = vmatprep.subr.mxu0 %v1263
        %1478 = vmatpush1.msra.mxu0 %v1262
        %1479 = vmatprep.subr.mxu0 %v1265
        %1480 = vmatpush1.msra.mxu0 %v1264
        %1481 = vmatprep.subr.mxu0 %v1267
        %1482 = vmatpush1.msra.mxu0 %v1266
        %1483 = vmatprep.subr.mxu0 %v1269
        %1484 = vmatpush1.msra.mxu0 %v1268
        %1485 = vmatprep.subr.mxu0 %v1271
        %1486 = vmatpush1.msra.mxu0 %v1270
        %1487 = vmatprep.subr.mxu0 %v1273
        %1488 = vmatpush1.msra.mxu0 %v1272
        %1489 = vmatprep.subr.mxu0 %v1275
        %1490 = vmatpush1.msra.mxu0 %v1274
        %1491 = vmatprep.subr.mxu0 %v1277
        %1492 = vmatpush1.msra.mxu0 %v1276
        %1493 = vmatprep.subr.mxu0 %v1279
        %1494 = vmatpush1.msra.mxu0 %v1278
        %1495 = vmatprep.subr.mxu0 %v1281
        %1496 = vmatpush1.msra.mxu0 %v1280
        %1497 = vmatprep.subr.mxu0 %v1283
        %1498 = vmatpush1.msra.mxu0 %v1282
        %1499 = vmatprep.subr.mxu0 %v1285
        %1500 = vmatpush1.msra.mxu0 %v1284
        %1501 = vmatprep.subr.mxu0 %v1287
        %1502 = vmatpush1.msra.mxu0 %v1286
        %1503 = vmatprep.subr.mxu0 %v1289
        %1504 = vmatpush1.msra.mxu0 %v1288
        %1505 = vmatprep.subr.mxu0 %v1291
        %1506 = vmatpush1.msra.mxu0 %v1290
        %1507 = vmatprep.subr.mxu0 %v1293
        %1508 = vmatpush1.msra.mxu0 %v1292
        %1509 = vmatprep.subr.mxu0 %v1295
        %1510 = vmatpush1.msra.mxu0 %v1294
        %1511 = vmatprep.subr.mxu0 %v1297
        %1512 = vmatpush1.msra.mxu0 %v1296
        %1513 = vmatprep.subr.mxu0 %v1299
        %1514 = vmatpush1.msra.mxu0 %v1298
        %1515 = vmatprep.subr.mxu0 %v1301
        %1516 = vmatpush1.msra.mxu0 %v1300
        %1517 = vmatprep.subr.mxu0 %v1303
        %1518 = vmatpush1.msra.mxu0 %v1302
        %1519 = vmatprep.subr.mxu0 %v1305
        %1520 = vmatpush1.msra.mxu0 %v1304
        %1521 = vmatprep.subr.mxu0 %v1307
        %1522 = vmatpush1.msra.mxu0 %v1306
        %1523 = vmatprep.subr.mxu0 %v1309
        %1524 = vmatpush1.msra.mxu0 %v1308
        %1525 = vmatprep.subr.mxu0 %v1311
        %1526 = vmatpush1.msra.mxu0 %v1310
        %1527 = vmatprep.subr.mxu0 %v1313
        %1528 = vmatpush1.msra.mxu0 %v1312
        %1529 = vmatprep.subr.mxu0 %v1315
        %1530 = vmatpush1.msra.mxu0 %v1314
        %1531 = vmatprep.subr.mxu0 %v1317
        %1532 = vmatpush1.msra.mxu0 %v1316
        %1533 = vmatprep.subr.mxu0 %v1319
        %1534 = vmatpush1.msra.mxu0 %v1318
        %1535 = vmatprep.subr.mxu0 %v1321
        %1536 = vmatpush1.msra.mxu0 %v1320
        %1537 = vmatprep.subr.mxu0 %v1323
        %1538 = vmatpush1.msra.mxu0 %v1322
        %1539 = vmatprep.mubr.f32.mxu0 %v1253
        %1540 = vmatmul.mubr.f32.gmra.mrb[0].mxu0 %v1252
        %v1541 = vpop.f32.mrb[0].mxu0
        %v1542 = vadd.f32 %v1471, %v1541
        %v1543 = vpop.f32.mrb[0].mxu0
        %v1544 = vadd.f32 %v1473, %v1543
        %1545 = vdwg.mxu0
        %1546 = vmatprep.subr.mxu0 %v1325
        %1547 = vmatpush1.msra.mxu0 %v1324
        %1548 = vmatprep.subr.mxu0 %v1327
        %1549 = vmatpush1.msra.mxu0 %v1326
        %1550 = vmatprep.subr.mxu0 %v1329
        %1551 = vmatpush1.msra.mxu0 %v1328
        %1552 = vmatprep.subr.mxu0 %v1331
        %1553 = vmatpush1.msra.mxu0 %v1330
        %1554 = vmatprep.subr.mxu0 %v1333
        %1555 = vmatpush1.msra.mxu0 %v1332
        %1556 = vmatprep.subr.mxu0 %v1335
        %1557 = vmatpush1.msra.mxu0 %v1334
        %1558 = vmatprep.subr.mxu0 %v1337
        %1559 = vmatpush1.msra.mxu0 %v1336
        %1560 = vmatprep.subr.mxu0 %v1339
        %1561 = vmatpush1.msra.mxu0 %v1338
        %1562 = vmatprep.subr.mxu0 %v1341
        %1563 = vmatpush1.msra.mxu0 %v1340
        %1564 = vmatprep.subr.mxu0 %v1343
        %1565 = vmatpush1.msra.mxu0 %v1342
        %1566 = vmatprep.subr.mxu0 %v1345
        %1567 = vmatpush1.msra.mxu0 %v1344
        %1568 = vmatprep.subr.mxu0 %v1347
        %1569 = vmatpush1.msra.mxu0 %v1346
        %1570 = vmatprep.subr.mxu0 %v1349
        %1571 = vmatpush1.msra.mxu0 %v1348
        %1572 = vmatprep.subr.mxu0 %v1351
        %1573 = vmatpush1.msra.mxu0 %v1350
        %1574 = vmatprep.subr.mxu0 %v1353
        %1575 = vmatpush1.msra.mxu0 %v1352
        %1576 = vmatprep.subr.mxu0 %v1355
        %1577 = vmatpush1.msra.mxu0 %v1354
        %1578 = vmatprep.subr.mxu0 %v1357
        %1579 = vmatpush1.msra.mxu0 %v1356
        %1580 = vmatprep.subr.mxu0 %v1359
        %1581 = vmatpush1.msra.mxu0 %v1358
        %1582 = vmatprep.subr.mxu0 %v1361
        %1583 = vmatpush1.msra.mxu0 %v1360
        %1584 = vmatprep.subr.mxu0 %v1363
        %1585 = vmatpush1.msra.mxu0 %v1362
        %1586 = vmatprep.subr.mxu0 %v1365
        %1587 = vmatpush1.msra.mxu0 %v1364
        %1588 = vmatprep.subr.mxu0 %v1367
        %1589 = vmatpush1.msra.mxu0 %v1366
        %1590 = vmatprep.subr.mxu0 %v1369
        %1591 = vmatpush1.msra.mxu0 %v1368
        %1592 = vmatprep.subr.mxu0 %v1371
        %1593 = vmatpush1.msra.mxu0 %v1370
        %1594 = vmatprep.subr.mxu0 %v1373
        %1595 = vmatpush1.msra.mxu0 %v1372
        %1596 = vmatprep.subr.mxu0 %v1375
        %1597 = vmatpush1.msra.mxu0 %v1374
        %1598 = vmatprep.subr.mxu0 %v1377
        %1599 = vmatpush1.msra.mxu0 %v1376
        %1600 = vmatprep.subr.mxu0 %v1379
        %1601 = vmatpush1.msra.mxu0 %v1378
        %1602 = vmatprep.subr.mxu0 %v1381
        %1603 = vmatpush1.msra.mxu0 %v1380
        %1604 = vmatprep.subr.mxu0 %v1383
        %1605 = vmatpush1.msra.mxu0 %v1382
        %1606 = vmatprep.subr.mxu0 %v1385
        %1607 = vmatpush1.msra.mxu0 %v1384
        %1608 = vmatprep.subr.mxu0 %v1387
        %1609 = vmatpush1.msra.mxu0 %v1386
        %1610 = vmatprep.mubr.f32.mxu0 %v1259
        %1611 = vmatmul.mubr.f32.gmra.mrb[0].mxu0 %v1258
        %v1612 = vpop.f32.mrb[0].mxu0
        %v1613 = vadd.f32 %v1542, %v1612
        %v1614 = vpop.f32.mrb[0].mxu0
        %v1615 = vadd.f32 %v1544, %v1614
        %1616 = vdwg.mxu0
        %v1617 = vld [vmem:[#allocation5] sm:$0xff]
        %v1618 = vld [vmem:[#allocation5 + $0x8] sm:$0xff]
        %v1619 = vld [vmem:[#allocation5 + $0x10] sm:$0xff]
        %v1620 = vld [vmem:[#allocation5 + $0x18] sm:$0xff]
        %v1621 = vld [vmem:[#allocation5 + $0x20] sm:$0xff]
        %v1622 = vld [vmem:[#allocation5 + $0x28] sm:$0xff]
        %v1623 = vld [vmem:[#allocation5 + $0x30] sm:$0xff]
        %v1624 = vld [vmem:[#allocation5 + $0x38] sm:$0xff]
        %v1625 = vld [vmem:[#allocation5 + $0x40] sm:$0xff]
        %v1626 = vld [vmem:[#allocation5 + $0x48] sm:$0xff]
        %v1627 = vld [vmem:[#allocation5 + $0x50] sm:$0xff]
        %v1628 = vld [vmem:[#allocation5 + $0x58] sm:$0xff]
        %v1629 = vld [vmem:[#allocation5 + $0x60] sm:$0xff]
        %v1630 = vld [vmem:[#allocation5 + $0x68] sm:$0xff]
        %v1631 = vld [vmem:[#allocation5 + $0x70] sm:$0xff]
        %v1632 = vld [vmem:[#allocation5 + $0x78] sm:$0xff]
        %v1633 = vld [vmem:[#allocation5 + $0x80] sm:$0xff]
        %v1634 = vld [vmem:[#allocation5 + $0x88] sm:$0xff]
        %v1635 = vld [vmem:[#allocation5 + $0x90] sm:$0xff]
        %v1636 = vld [vmem:[#allocation5 + $0x98] sm:$0xff]
        %v1637 = vld [vmem:[#allocation5 + $0xa0] sm:$0xff]
        %v1638 = vld [vmem:[#allocation5 + $0xa8] sm:$0xff]
        %v1639 = vld [vmem:[#allocation5 + $0xb0] sm:$0xff]
        %v1640 = vld [vmem:[#allocation5 + $0xb8] sm:$0xff]
        %v1641 = vld [vmem:[#allocation5 + $0xc0] sm:$0xff]
        %v1642 = vld [vmem:[#allocation5 + $0xc8] sm:$0xff]
        %v1643 = vld [vmem:[#allocation5 + $0xd0] sm:$0xff]
        %v1644 = vld [vmem:[#allocation5 + $0xd8] sm:$0xff]
        %v1645 = vld [vmem:[#allocation5 + $0xe0] sm:$0xff]
        %v1646 = vld [vmem:[#allocation5 + $0xe8] sm:$0xff]
        %v1647 = vld [vmem:[#allocation5 + $0xf0] sm:$0xff]
        %v1648 = vld [vmem:[#allocation5 + $0xf8] sm:$0xff]
        %1649 = vmatprep.subr.mxu0 0.0
        %1650 = vmatpush1.msra.mxu0 %v1617
        %1651 = vmatprep.subr.mxu0 0.0
        %1652 = vmatpush1.msra.mxu0 %v1618
        %1653 = vmatprep.subr.mxu0 0.0
        %1654 = vmatpush1.msra.mxu0 %v1619
        %1655 = vmatprep.subr.mxu0 0.0
        %1656 = vmatpush1.msra.mxu0 %v1620
        %1657 = vmatprep.subr.mxu0 0.0
        %1658 = vmatpush1.msra.mxu0 %v1621
        %1659 = vmatprep.subr.mxu0 0.0
        %1660 = vmatpush1.msra.mxu0 %v1622
        %1661 = vmatprep.subr.mxu0 0.0
        %1662 = vmatpush1.msra.mxu0 %v1623
        %1663 = vmatprep.subr.mxu0 0.0
        %1664 = vmatpush1.msra.mxu0 %v1624
        %1665 = vmatprep.subr.mxu0 0.0
        %1666 = vmatpush1.msra.mxu0 %v1625
        %1667 = vmatprep.subr.mxu0 0.0
        %1668 = vmatpush1.msra.mxu0 %v1626
        %1669 = vmatprep.subr.mxu0 0.0
        %1670 = vmatpush1.msra.mxu0 %v1627
        %1671 = vmatprep.subr.mxu0 0.0
        %1672 = vmatpush1.msra.mxu0 %v1628
        %1673 = vmatprep.subr.mxu0 0.0
        %1674 = vmatpush1.msra.mxu0 %v1629
        %1675 = vmatprep.subr.mxu0 0.0
        %1676 = vmatpush1.msra.mxu0 %v1630
        %1677 = vmatprep.subr.mxu0 0.0
        %1678 = vmatpush1.msra.mxu0 %v1631
        %1679 = vmatprep.subr.mxu0 0.0
        %1680 = vmatpush1.msra.mxu0 %v1632
        %1681 = vmatprep.subr.mxu0 0.0
        %1682 = vmatpush1.msra.mxu0 %v1633
        %1683 = vmatprep.subr.mxu0 0.0
        %1684 = vmatpush1.msra.mxu0 %v1634
        %1685 = vmatprep.subr.mxu0 0.0
        %1686 = vmatpush1.msra.mxu0 %v1635
        %1687 = vmatprep.subr.mxu0 0.0
        %1688 = vmatpush1.msra.mxu0 %v1636
        %1689 = vmatprep.subr.mxu0 0.0
        %1690 = vmatpush1.msra.mxu0 %v1637
        %1691 = vmatprep.subr.mxu0 0.0
        %1692 = vmatpush1.msra.mxu0 %v1638
        %1693 = vmatprep.subr.mxu0 0.0
        %1694 = vmatpush1.msra.mxu0 %v1639
        %1695 = vmatprep.subr.mxu0 0.0
        %1696 = vmatpush1.msra.mxu0 %v1640
        %1697 = vmatprep.subr.mxu0 0.0
        %1698 = vmatpush1.msra.mxu0 %v1641
        %1699 = vmatprep.subr.mxu0 0.0
        %1700 = vmatpush1.msra.mxu0 %v1642
        %1701 = vmatprep.subr.mxu0 0.0
        %1702 = vmatpush1.msra.mxu0 %v1643
        %1703 = vmatprep.subr.mxu0 0.0
        %1704 = vmatpush1.msra.mxu0 %v1644
        %1705 = vmatprep.subr.mxu0 0.0
        %1706 = vmatpush1.msra.mxu0 %v1645
        %1707 = vmatprep.subr.mxu0 0.0
        %1708 = vmatpush1.msra.mxu0 %v1646
        %1709 = vmatprep.subr.mxu0 0.0
        %1710 = vmatpush1.msra.mxu0 %v1647
        %1711 = vmatprep.subr.mxu0 0.0
        %1712 = vmatpush1.msra.mxu0 %v1648
        %1713 = vmatprep.mubr.f32.mxu0 %v1615
        %1714 = vmatmul.mubr.f32.gmra.mrb[0].mxu0 %v1613
        %v1715 = vpop.f32.mrb[0].mxu0
        %v1716 = vadd.f32 0.0, %v1715
        %v1717 = vpop.f32.mrb[0].mxu0
        %1718 = vdwg.mxu0
        %v1719 = vsub.f32 %v578, %v1716
        %v1720 = vld [vmem:[#allocation10] sm:$0xff]
        %v1721 = vld [vmem:[#allocation10 + $0x8] sm:$0xff]
        %v1722 = vld [vmem:[#allocation10 + $0x10] sm:$0xff]
        %v1723 = vld [vmem:[#allocation10 + $0x18] sm:$0xff]
        %v1724 = vld [vmem:[#allocation10 + $0x20] sm:$0xff]
        %v1725 = vld [vmem:[#allocation10 + $0x28] sm:$0xff]
        %v1726 = vld [vmem:[#allocation10 + $0x30] sm:$0xff]
        %v1727 = vld [vmem:[#allocation10 + $0x38] sm:$0xff]
        %v1728 = vld [vmem:[#allocation10 + $0x40] sm:$0xff]
        %v1729 = vld [vmem:[#allocation10 + $0x48] sm:$0xff]
        %v1730 = vld [vmem:[#allocation10 + $0x50] sm:$0xff]
        %v1731 = vld [vmem:[#allocation10 + $0x58] sm:$0xff]
        %v1732 = vld [vmem:[#allocation10 + $0x60] sm:$0xff]
        %v1733 = vld [vmem:[#allocation10 + $0x68] sm:$0xff]
        %v1734 = vld [vmem:[#allocation10 + $0x70] sm:$0xff]
        %v1735 = vld [vmem:[#allocation10 + $0x78] sm:$0xff]
        %v1736 = vld [vmem:[#allocation10 + $0x80] sm:$0xff]
        %v1737 = vld [vmem:[#allocation10 + $0x88] sm:$0xff]
        %v1738 = vld [vmem:[#allocation10 + $0x90] sm:$0xff]
        %v1739 = vld [vmem:[#allocation10 + $0x98] sm:$0xff]
        %v1740 = vld [vmem:[#allocation10 + $0xa0] sm:$0xff]
        %v1741 = vld [vmem:[#allocation10 + $0xa8] sm:$0xff]
        %v1742 = vld [vmem:[#allocation10 + $0xb0] sm:$0xff]
        %v1743 = vld [vmem:[#allocation10 + $0xb8] sm:$0xff]
        %v1744 = vld [vmem:[#allocation10 + $0xc0] sm:$0xff]
        %v1745 = vld [vmem:[#allocation10 + $0xc8] sm:$0xff]
        %v1746 = vld [vmem:[#allocation10 + $0xd0] sm:$0xff]
        %v1747 = vld [vmem:[#allocation10 + $0xd8] sm:$0xff]
        %v1748 = vld [vmem:[#allocation10 + $0xe0] sm:$0xff]
        %v1749 = vld [vmem:[#allocation10 + $0xe8] sm:$0xff]
        %v1750 = vld [vmem:[#allocation10 + $0xf0] sm:$0xff]
        %v1751 = vld [vmem:[#allocation10 + $0xf8] sm:$0xff]
        %v1752 = vld [vmem:[%s12] sm:$0x3]
        %v1754 = vlaneseq
        %v1755 = vshrl.u32 %v1754, 7
        %v1756 = vsub.s32 0, %v1755
        %v1757 = vrot.slane %v1752, %v1756
        %v1758 = vlaneseq
        %v1759 = vshrl.u32 %v1758, 7
        %v1760 = vsub.s32 1, %v1759
        %v1761 = vrot.slane %v1752, %v1760
        %1764 = vmatprep.subr.mxu0 %v1721
        %1765 = vmatpush1.msra.mxu0 %v1720
        %1766 = vmatprep.subr.mxu0 %v1723
        %1767 = vmatpush1.msra.mxu0 %v1722
        %1768 = vmatprep.subr.mxu0 %v1725
        %1769 = vmatpush1.msra.mxu0 %v1724
        %1770 = vmatprep.subr.mxu0 %v1727
        %1771 = vmatpush1.msra.mxu0 %v1726
        %1772 = vmatprep.subr.mxu0 %v1729
        %1773 = vmatpush1.msra.mxu0 %v1728
        %1774 = vmatprep.subr.mxu0 %v1731
        %1775 = vmatpush1.msra.mxu0 %v1730
        %1776 = vmatprep.subr.mxu0 %v1733
        %1777 = vmatpush1.msra.mxu0 %v1732
        %1778 = vmatprep.subr.mxu0 %v1735
        %1779 = vmatpush1.msra.mxu0 %v1734
        %1780 = vmatprep.subr.mxu0 %v1737
        %1781 = vmatpush1.msra.mxu0 %v1736
        %1782 = vmatprep.subr.mxu0 %v1739
        %1783 = vmatpush1.msra.mxu0 %v1738
        %1784 = vmatprep.subr.mxu0 %v1741
        %1785 = vmatpush1.msra.mxu0 %v1740
        %1786 = vmatprep.subr.mxu0 %v1743
        %1787 = vmatpush1.msra.mxu0 %v1742
        %1788 = vmatprep.subr.mxu0 %v1745
        %1789 = vmatpush1.msra.mxu0 %v1744
        %1790 = vmatprep.subr.mxu0 %v1747
        %1791 = vmatpush1.msra.mxu0 %v1746
        %1792 = vmatprep.subr.mxu0 %v1749
        %1793 = vmatpush1.msra.mxu0 %v1748
        %1794 = vmatprep.subr.mxu0 %v1751
        %1795 = vmatpush1.msra.mxu0 %v1750
        %1796 = vmatprep.subr.mxu0 0.0
        %1797 = vmatpush1.msra.mxu0 0.0
        %1798 = vmatprep.subr.mxu0 0.0
        %1799 = vmatpush1.msra.mxu0 0.0
        %1800 = vmatprep.subr.mxu0 0.0
        %1801 = vmatpush1.msra.mxu0 0.0
        %1802 = vmatprep.subr.mxu0 0.0
        %1803 = vmatpush1.msra.mxu0 0.0
        %1804 = vmatprep.subr.mxu0 0.0
        %1805 = vmatpush1.msra.mxu0 0.0
        %1806 = vmatprep.subr.mxu0 0.0
        %1807 = vmatpush1.msra.mxu0 0.0
        %1808 = vmatprep.subr.mxu0 0.0
        %1809 = vmatpush1.msra.mxu0 0.0
        %1810 = vmatprep.subr.mxu0 0.0
        %1811 = vmatpush1.msra.mxu0 0.0
        %1812 = vmatprep.subr.mxu0 0.0
        %1813 = vmatpush1.msra.mxu0 0.0
        %1814 = vmatprep.subr.mxu0 0.0
        %1815 = vmatpush1.msra.mxu0 0.0
        %1816 = vmatprep.subr.mxu0 0.0
        %1817 = vmatpush1.msra.mxu0 0.0
        %1818 = vmatprep.subr.mxu0 0.0
        %1819 = vmatpush1.msra.mxu0 0.0
        %1820 = vmatprep.subr.mxu0 0.0
        %1821 = vmatpush1.msra.mxu0 0.0
        %1822 = vmatprep.subr.mxu0 0.0
        %1823 = vmatpush1.msra.mxu0 0.0
        %1824 = vmatprep.subr.mxu0 0.0
        %1825 = vmatpush1.msra.mxu0 0.0
        %1826 = vmatprep.subr.mxu0 0.0
        %1827 = vmatpush1.msra.mxu0 0.0
        %1828 = vmatprep.mubr.f32.mxu0 0.0
        %1829 = vmatmul.mubr.f32.gmra.mrb[0].mxu0 %v1719
        %v1830 = vpop.f32.mrb[0].mxu0
        %v1831 = vadd.f32 %v1757, %v1830
        %v1832 = vpop.f32.mrb[0].mxu0
        %v1833 = vadd.f32 %v1761, %v1832
        %1834 = vdwg.mxu0
        %v1835 = vmax.f32 %v1831, 0.0
        %v1836 = vmax.f32 %v1833, 0.0
        %v1837 = vld [vmem:[#allocation11] sm:$0xff]
        %v1838 = vld [vmem:[#allocation11 + $0x8] sm:$0xff]
        %v1839 = vld [vmem:[#allocation11 + $0x10] sm:$0xff]
        %v1840 = vld [vmem:[#allocation11 + $0x18] sm:$0xff]
        %v1841 = vld [vmem:[#allocation11 + $0x20] sm:$0xff]
        %v1842 = vld [vmem:[#allocation11 + $0x28] sm:$0xff]
        %v1843 = vld [vmem:[#allocation11 + $0x30] sm:$0xff]
        %v1844 = vld [vmem:[#allocation11 + $0x38] sm:$0xff]
        %v1845 = vld [vmem:[#allocation11 + $0x40] sm:$0xff]
        %v1846 = vld [vmem:[#allocation11 + $0x48] sm:$0xff]
        %v1847 = vld [vmem:[#allocation11 + $0x50] sm:$0xff]
        %v1848 = vld [vmem:[#allocation11 + $0x58] sm:$0xff]
        %v1849 = vld [vmem:[#allocation11 + $0x60] sm:$0xff]
        %v1850 = vld [vmem:[#allocation11 + $0x68] sm:$0xff]
        %v1851 = vld [vmem:[#allocation11 + $0x70] sm:$0xff]
        %v1852 = vld [vmem:[#allocation11 + $0x78] sm:$0xff]
        %v1853 = vld [vmem:[#allocation11 + $0x80] sm:$0xff]
        %v1854 = vld [vmem:[#allocation11 + $0x88] sm:$0xff]
        %v1855 = vld [vmem:[#allocation11 + $0x90] sm:$0xff]
        %v1856 = vld [vmem:[#allocation11 + $0x98] sm:$0xff]
        %v1857 = vld [vmem:[#allocation11 + $0xa0] sm:$0xff]
        %v1858 = vld [vmem:[#allocation11 + $0xa8] sm:$0xff]
        %v1859 = vld [vmem:[#allocation11 + $0xb0] sm:$0xff]
        %v1860 = vld [vmem:[#allocation11 + $0xb8] sm:$0xff]
        %v1861 = vld [vmem:[#allocation11 + $0xc0] sm:$0xff]
        %v1862 = vld [vmem:[#allocation11 + $0xc8] sm:$0xff]
        %v1863 = vld [vmem:[#allocation11 + $0xd0] sm:$0xff]
        %v1864 = vld [vmem:[#allocation11 + $0xd8] sm:$0xff]
        %v1865 = vld [vmem:[#allocation11 + $0xe0] sm:$0xff]
        %v1866 = vld [vmem:[#allocation11 + $0xe8] sm:$0xff]
        %v1867 = vld [vmem:[#allocation11 + $0xf0] sm:$0xff]
        %v1868 = vld [vmem:[#allocation11 + $0xf8] sm:$0xff]
        %v1869 = vld [vmem:[#allocation11 + $0x100] sm:$0xff]
        %v1870 = vld [vmem:[#allocation11 + $0x108] sm:$0xff]
        %v1871 = vld [vmem:[#allocation11 + $0x110] sm:$0xff]
        %v1872 = vld [vmem:[#allocation11 + $0x118] sm:$0xff]
        %v1873 = vld [vmem:[#allocation11 + $0x120] sm:$0xff]
        %v1874 = vld [vmem:[#allocation11 + $0x128] sm:$0xff]
        %v1875 = vld [vmem:[#allocation11 + $0x130] sm:$0xff]
        %v1876 = vld [vmem:[#allocation11 + $0x138] sm:$0xff]
        %v1877 = vld [vmem:[#allocation11 + $0x140] sm:$0xff]
        %v1878 = vld [vmem:[#allocation11 + $0x148] sm:$0xff]
        %v1879 = vld [vmem:[#allocation11 + $0x150] sm:$0xff]
        %v1880 = vld [vmem:[#allocation11 + $0x158] sm:$0xff]
        %v1881 = vld [vmem:[#allocation11 + $0x160] sm:$0xff]
        %v1882 = vld [vmem:[#allocation11 + $0x168] sm:$0xff]
        %v1883 = vld [vmem:[#allocation11 + $0x170] sm:$0xff]
        %v1884 = vld [vmem:[#allocation11 + $0x178] sm:$0xff]
        %v1885 = vld [vmem:[#allocation11 + $0x180] sm:$0xff]
        %v1886 = vld [vmem:[#allocation11 + $0x188] sm:$0xff]
        %v1887 = vld [vmem:[#allocation11 + $0x190] sm:$0xff]
        %v1888 = vld [vmem:[#allocation11 + $0x198] sm:$0xff]
        %v1889 = vld [vmem:[#allocation11 + $0x1a0] sm:$0xff]
        %v1890 = vld [vmem:[#allocation11 + $0x1a8] sm:$0xff]
        %v1891 = vld [vmem:[#allocation11 + $0x1b0] sm:$0xff]
        %v1892 = vld [vmem:[#allocation11 + $0x1b8] sm:$0xff]
        %v1893 = vld [vmem:[#allocation11 + $0x1c0] sm:$0xff]
        %v1894 = vld [vmem:[#allocation11 + $0x1c8] sm:$0xff]
        %v1895 = vld [vmem:[#allocation11 + $0x1d0] sm:$0xff]
        %v1896 = vld [vmem:[#allocation11 + $0x1d8] sm:$0xff]
        %v1897 = vld [vmem:[#allocation11 + $0x1e0] sm:$0xff]
        %v1898 = vld [vmem:[#allocation11 + $0x1e8] sm:$0xff]
        %v1899 = vld [vmem:[#allocation11 + $0x1f0] sm:$0xff]
        %v1900 = vld [vmem:[#allocation11 + $0x1f8] sm:$0xff]
        %v1901 = vld [vmem:[%s14] sm:$0x3]
        %v1903 = vlaneseq
        %v1904 = vshrl.u32 %v1903, 7
        %v1905 = vsub.s32 0, %v1904
        %v1906 = vrot.slane %v1901, %v1905
        %v1907 = vlaneseq
        %v1908 = vshrl.u32 %v1907, 7
        %v1909 = vsub.s32 1, %v1908
        %v1910 = vrot.slane %v1901, %v1909
        %1913 = vmatprep.subr.mxu0 %v1838
        %1914 = vmatpush1.msra.mxu0 %v1837
        %1915 = vmatprep.subr.mxu0 %v1840
        %1916 = vmatpush1.msra.mxu0 %v1839
        %1917 = vmatprep.subr.mxu0 %v1842
        %1918 = vmatpush1.msra.mxu0 %v1841
        %1919 = vmatprep.subr.mxu0 %v1844
        %1920 = vmatpush1.msra.mxu0 %v1843
        %1921 = vmatprep.subr.mxu0 %v1846
        %1922 = vmatpush1.msra.mxu0 %v1845
        %1923 = vmatprep.subr.mxu0 %v1848
        %1924 = vmatpush1.msra.mxu0 %v1847
        %1925 = vmatprep.subr.mxu0 %v1850
        %1926 = vmatpush1.msra.mxu0 %v1849
        %1927 = vmatprep.subr.mxu0 %v1852
        %1928 = vmatpush1.msra.mxu0 %v1851
        %1929 = vmatprep.subr.mxu0 %v1854
        %1930 = vmatpush1.msra.mxu0 %v1853
        %1931 = vmatprep.subr.mxu0 %v1856
        %1932 = vmatpush1.msra.mxu0 %v1855
        %1933 = vmatprep.subr.mxu0 %v1858
        %1934 = vmatpush1.msra.mxu0 %v1857
        %1935 = vmatprep.subr.mxu0 %v1860
        %1936 = vmatpush1.msra.mxu0 %v1859
        %1937 = vmatprep.subr.mxu0 %v1862
        %1938 = vmatpush1.msra.mxu0 %v1861
        %1939 = vmatprep.subr.mxu0 %v1864
        %1940 = vmatpush1.msra.mxu0 %v1863
        %1941 = vmatprep.subr.mxu0 %v1866
        %1942 = vmatpush1.msra.mxu0 %v1865
        %1943 = vmatprep.subr.mxu0 %v1868
        %1944 = vmatpush1.msra.mxu0 %v1867
        %1945 = vmatprep.subr.mxu0 %v1870
        %1946 = vmatpush1.msra.mxu0 %v1869
        %1947 = vmatprep.subr.mxu0 %v1872
        %1948 = vmatpush1.msra.mxu0 %v1871
        %1949 = vmatprep.subr.mxu0 %v1874
        %1950 = vmatpush1.msra.mxu0 %v1873
        %1951 = vmatprep.subr.mxu0 %v1876
        %1952 = vmatpush1.msra.mxu0 %v1875
        %1953 = vmatprep.subr.mxu0 %v1878
        %1954 = vmatpush1.msra.mxu0 %v1877
        %1955 = vmatprep.subr.mxu0 %v1880
        %1956 = vmatpush1.msra.mxu0 %v1879
        %1957 = vmatprep.subr.mxu0 %v1882
        %1958 = vmatpush1.msra.mxu0 %v1881
        %1959 = vmatprep.subr.mxu0 %v1884
        %1960 = vmatpush1.msra.mxu0 %v1883
        %1961 = vmatprep.subr.mxu0 %v1886
        %1962 = vmatpush1.msra.mxu0 %v1885
        %1963 = vmatprep.subr.mxu0 %v1888
        %1964 = vmatpush1.msra.mxu0 %v1887
        %1965 = vmatprep.subr.mxu0 %v1890
        %1966 = vmatpush1.msra.mxu0 %v1889
        %1967 = vmatprep.subr.mxu0 %v1892
        %1968 = vmatpush1.msra.mxu0 %v1891
        %1969 = vmatprep.subr.mxu0 %v1894
        %1970 = vmatpush1.msra.mxu0 %v1893
        %1971 = vmatprep.subr.mxu0 %v1896
        %1972 = vmatpush1.msra.mxu0 %v1895
        %1973 = vmatprep.subr.mxu0 %v1898
        %1974 = vmatpush1.msra.mxu0 %v1897
        %1975 = vmatprep.subr.mxu0 %v1900
        %1976 = vmatpush1.msra.mxu0 %v1899
        %1977 = vmatprep.mubr.f32.mxu0 %v1836
        %1978 = vmatmul.mubr.f32.gmra.mrb[0].mxu0 %v1835
        %v1979 = vpop.f32.mrb[0].mxu0
        %v1980 = vadd.f32 %v1906, %v1979
        %v1981 = vpop.f32.mrb[0].mxu0
        %v1982 = vadd.f32 %v1910, %v1981
        %1983 = vdwg.mxu0
        %v1984 = vsub.f32 %v1719, %v1980
        %v1985 = vadd.f32 %v1982, 0.0
        %s1986 = scalar_lea.vmem [#allocation10], 256
        %v1987 = vld [vmem:[%s1986] sm:$0xff]
        %v1988 = vld [vmem:[%s1986 + $0x8] sm:$0xff]
        %v1989 = vld [vmem:[%s1986 + $0x10] sm:$0xff]
        %v1990 = vld [vmem:[%s1986 + $0x18] sm:$0xff]
        %v1991 = vld [vmem:[%s1986 + $0x20] sm:$0xff]
        %v1992 = vld [vmem:[%s1986 + $0x28] sm:$0xff]
        %v1993 = vld [vmem:[%s1986 + $0x30] sm:$0xff]
        %v1994 = vld [vmem:[%s1986 + $0x38] sm:$0xff]
        %v1995 = vld [vmem:[%s1986 + $0x40] sm:$0xff]
        %v1996 = vld [vmem:[%s1986 + $0x48] sm:$0xff]
        %v1997 = vld [vmem:[%s1986 + $0x50] sm:$0xff]
        %v1998 = vld [vmem:[%s1986 + $0x58] sm:$0xff]
        %v1999 = vld [vmem:[%s1986 + $0x60] sm:$0xff]
        %v2000 = vld [vmem:[%s1986 + $0x68] sm:$0xff]
        %v2001 = vld [vmem:[%s1986 + $0x70] sm:$0xff]
        %v2002 = vld [vmem:[%s1986 + $0x78] sm:$0xff]
        %v2003 = vld [vmem:[%s1986 + $0x80] sm:$0xff]
        %v2004 = vld [vmem:[%s1986 + $0x88] sm:$0xff]
        %v2005 = vld [vmem:[%s1986 + $0x90] sm:$0xff]
        %v2006 = vld [vmem:[%s1986 + $0x98] sm:$0xff]
        %v2007 = vld [vmem:[%s1986 + $0xa0] sm:$0xff]
        %v2008 = vld [vmem:[%s1986 + $0xa8] sm:$0xff]
        %v2009 = vld [vmem:[%s1986 + $0xb0] sm:$0xff]
        %v2010 = vld [vmem:[%s1986 + $0xb8] sm:$0xff]
        %v2011 = vld [vmem:[%s1986 + $0xc0] sm:$0xff]
        %v2012 = vld [vmem:[%s1986 + $0xc8] sm:$0xff]
        %v2013 = vld [vmem:[%s1986 + $0xd0] sm:$0xff]
        %v2014 = vld [vmem:[%s1986 + $0xd8] sm:$0xff]
        %v2015 = vld [vmem:[%s1986 + $0xe0] sm:$0xff]
        %v2016 = vld [vmem:[%s1986 + $0xe8] sm:$0xff]
        %v2017 = vld [vmem:[%s1986 + $0xf0] sm:$0xff]
        %v2018 = vld [vmem:[%s1986 + $0xf8] sm:$0xff]
        %s2019 = scalar_lea.vmem %s12, 2
        %v2020 = vld [vmem:[%s2019] sm:$0x3]
        %v2022 = vlaneseq
        %v2023 = vshrl.u32 %v2022, 7
        %v2024 = vsub.s32 0, %v2023
        %v2025 = vrot.slane %v2020, %v2024
        %v2026 = vlaneseq
        %v2027 = vshrl.u32 %v2026, 7
        %v2028 = vsub.s32 1, %v2027
        %v2029 = vrot.slane %v2020, %v2028
        %2032 = vmatprep.subr.mxu0 %v1988
        %2033 = vmatpush1.msra.mxu0 %v1987
        %2034 = vmatprep.subr.mxu0 %v1990
        %2035 = vmatpush1.msra.mxu0 %v1989
        %2036 = vmatprep.subr.mxu0 %v1992
        %2037 = vmatpush1.msra.mxu0 %v1991
        %2038 = vmatprep.subr.mxu0 %v1994
        %2039 = vmatpush1.msra.mxu0 %v1993
        %2040 = vmatprep.subr.mxu0 %v1996
        %2041 = vmatpush1.msra.mxu0 %v1995
        %2042 = vmatprep.subr.mxu0 %v1998
        %2043 = vmatpush1.msra.mxu0 %v1997
        %2044 = vmatprep.subr.mxu0 %v2000
        %2045 = vmatpush1.msra.mxu0 %v1999
        %2046 = vmatprep.subr.mxu0 %v2002
        %2047 = vmatpush1.msra.mxu0 %v2001
        %2048 = vmatprep.subr.mxu0 %v2004
        %2049 = vmatpush1.msra.mxu0 %v2003
        %2050 = vmatprep.subr.mxu0 %v2006
        %2051 = vmatpush1.msra.mxu0 %v2005
        %2052 = vmatprep.subr.mxu0 %v2008
        %2053 = vmatpush1.msra.mxu0 %v2007
        %2054 = vmatprep.subr.mxu0 %v2010
        %2055 = vmatpush1.msra.mxu0 %v2009
        %2056 = vmatprep.subr.mxu0 %v2012
        %2057 = vmatpush1.msra.mxu0 %v2011
        %2058 = vmatprep.subr.mxu0 %v2014
        %2059 = vmatpush1.msra.mxu0 %v2013
        %2060 = vmatprep.subr.mxu0 %v2016
        %2061 = vmatpush1.msra.mxu0 %v2015
        %2062 = vmatprep.subr.mxu0 %v2018
        %2063 = vmatpush1.msra.mxu0 %v2017
        %2064 = vmatprep.subr.mxu0 0.0
        %2065 = vmatpush1.msra.mxu0 0.0
        %2066 = vmatprep.subr.mxu0 0.0
        %2067 = vmatpush1.msra.mxu0 0.0
        %2068 = vmatprep.subr.mxu0 0.0
        %2069 = vmatpush1.msra.mxu0 0.0
        %2070 = vmatprep.subr.mxu0 0.0
        %2071 = vmatpush1.msra.mxu0 0.0
        %2072 = vmatprep.subr.mxu0 0.0
        %2073 = vmatpush1.msra.mxu0 0.0
        %2074 = vmatprep.subr.mxu0 0.0
        %2075 = vmatpush1.msra.mxu0 0.0
        %2076 = vmatprep.subr.mxu0 0.0
        %2077 = vmatpush1.msra.mxu0 0.0
        %2078 = vmatprep.subr.mxu0 0.0
        %2079 = vmatpush1.msra.mxu0 0.0
        %2080 = vmatprep.subr.mxu0 0.0
        %2081 = vmatpush1.msra.mxu0 0.0
        %2082 = vmatprep.subr.mxu0 0.0
        %2083 = vmatpush1.msra.mxu0 0.0
        %2084 = vmatprep.subr.mxu0 0.0
        %2085 = vmatpush1.msra.mxu0 0.0
        %2086 = vmatprep.subr.mxu0 0.0
        %2087 = vmatpush1.msra.mxu0 0.0
        %2088 = vmatprep.subr.mxu0 0.0
        %2089 = vmatpush1.msra.mxu0 0.0
        %2090 = vmatprep.subr.mxu0 0.0
        %2091 = vmatpush1.msra.mxu0 0.0
        %2092 = vmatprep.subr.mxu0 0.0
        %2093 = vmatpush1.msra.mxu0 0.0
        %2094 = vmatprep.subr.mxu0 0.0
        %2095 = vmatpush1.msra.mxu0 0.0
        %2096 = vmatprep.mubr.f32.mxu0 0.0
        %2097 = vmatmul.mubr.f32.gmra.mrb[0].mxu0 %v1984
        %v2098 = vpop.f32.mrb[0].mxu0
        %v2099 = vadd.f32 %v2025, %v2098
        %v2100 = vpop.f32.mrb[0].mxu0
        %v2101 = vadd.f32 %v2029, %v2100
        %2102 = vdwg.mxu0
        %v2103 = vmax.f32 %v2099, 0.0
        %v2104 = vmax.f32 %v2101, 0.0
        %s2105 = scalar_lea.vmem [#allocation11], 512
        %v2106 = vld [vmem:[%s2105] sm:$0xff]
        %v2107 = vld [vmem:[%s2105 + $0x8] sm:$0xff]
        %v2108 = vld [vmem:[%s2105 + $0x10] sm:$0xff]
        %v2109 = vld [vmem:[%s2105 + $0x18] sm:$0xff]
        %v2110 = vld [vmem:[%s2105 + $0x20] sm:$0xff]
        %v2111 = vld [vmem:[%s2105 + $0x28] sm:$0xff]
        %v2112 = vld [vmem:[%s2105 + $0x30] sm:$0xff]
        %v2113 = vld [vmem:[%s2105 + $0x38] sm:$0xff]
        %v2114 = vld [vmem:[%s2105 + $0x40] sm:$0xff]
        %v2115 = vld [vmem:[%s2105 + $0x48] sm:$0xff]
        %v2116 = vld [vmem:[%s2105 + $0x50] sm:$0xff]
        %v2117 = vld [vmem:[%s2105 + $0x58] sm:$0xff]
        %v2118 = vld [vmem:[%s2105 + $0x60] sm:$0xff]
        %v2119 = vld [vmem:[%s2105 + $0x68] sm:$0xff]
        %v2120 = vld [vmem:[%s2105 + $0x70] sm:$0xff]
        %v2121 = vld [vmem:[%s2105 + $0x78] sm:$0xff]
        %v2122 = vld [vmem:[%s2105 + $0x80] sm:$0xff]
        %v2123 = vld [vmem:[%s2105 + $0x88] sm:$0xff]
        %v2124 = vld [vmem:[%s2105 + $0x90] sm:$0xff]
        %v2125 = vld [vmem:[%s2105 + $0x98] sm:$0xff]
        %v2126 = vld [vmem:[%s2105 + $0xa0] sm:$0xff]
        %v2127 = vld [vmem:[%s2105 + $0xa8] sm:$0xff]
        %v2128 = vld [vmem:[%s2105 + $0xb0] sm:$0xff]
        %v2129 = vld [vmem:[%s2105 + $0xb8] sm:$0xff]
        %v2130 = vld [vmem:[%s2105 + $0xc0] sm:$0xff]
        %v2131 = vld [vmem:[%s2105 + $0xc8] sm:$0xff]
        %v2132 = vld [vmem:[%s2105 + $0xd0] sm:$0xff]
        %v2133 = vld [vmem:[%s2105 + $0xd8] sm:$0xff]
        %v2134 = vld [vmem:[%s2105 + $0xe0] sm:$0xff]
        %v2135 = vld [vmem:[%s2105 + $0xe8] sm:$0xff]
        %v2136 = vld [vmem:[%s2105 + $0xf0] sm:$0xff]
        %v2137 = vld [vmem:[%s2105 + $0xf8] sm:$0xff]
        %v2138 = vld [vmem:[%s2105 + $0x100] sm:$0xff]
        %v2139 = vld [vmem:[%s2105 + $0x108] sm:$0xff]
        %v2140 = vld [vmem:[%s2105 + $0x110] sm:$0xff]
        %v2141 = vld [vmem:[%s2105 + $0x118] sm:$0xff]
        %v2142 = vld [vmem:[%s2105 + $0x120] sm:$0xff]
        %v2143 = vld [vmem:[%s2105 + $0x128] sm:$0xff]
        %v2144 = vld [vmem:[%s2105 + $0x130] sm:$0xff]
        %v2145 = vld [vmem:[%s2105 + $0x138] sm:$0xff]
        %v2146 = vld [vmem:[%s2105 + $0x140] sm:$0xff]
        %v2147 = vld [vmem:[%s2105 + $0x148] sm:$0xff]
        %v2148 = vld [vmem:[%s2105 + $0x150] sm:$0xff]
        %v2149 = vld [vmem:[%s2105 + $0x158] sm:$0xff]
        %v2150 = vld [vmem:[%s2105 + $0x160] sm:$0xff]
        %v2151 = vld [vmem:[%s2105 + $0x168] sm:$0xff]
        %v2152 = vld [vmem:[%s2105 + $0x170] sm:$0xff]
        %v2153 = vld [vmem:[%s2105 + $0x178] sm:$0xff]
        %v2154 = vld [vmem:[%s2105 + $0x180] sm:$0xff]
        %v2155 = vld [vmem:[%s2105 + $0x188] sm:$0xff]
        %v2156 = vld [vmem:[%s2105 + $0x190] sm:$0xff]
        %v2157 = vld [vmem:[%s2105 + $0x198] sm:$0xff]
        %v2158 = vld [vmem:[%s2105 + $0x1a0] sm:$0xff]
        %v2159 = vld [vmem:[%s2105 + $0x1a8] sm:$0xff]
        %v2160 = vld [vmem:[%s2105 + $0x1b0] sm:$0xff]
        %v2161 = vld [vmem:[%s2105 + $0x1b8] sm:$0xff]
        %v2162 = vld [vmem:[%s2105 + $0x1c0] sm:$0xff]
        %v2163 = vld [vmem:[%s2105 + $0x1c8] sm:$0xff]
        %v2164 = vld [vmem:[%s2105 + $0x1d0] sm:$0xff]
        %v2165 = vld [vmem:[%s2105 + $0x1d8] sm:$0xff]
        %v2166 = vld [vmem:[%s2105 + $0x1e0] sm:$0xff]
        %v2167 = vld [vmem:[%s2105 + $0x1e8] sm:$0xff]
        %v2168 = vld [vmem:[%s2105 + $0x1f0] sm:$0xff]
        %v2169 = vld [vmem:[%s2105 + $0x1f8] sm:$0xff]
        %s2170 = scalar_lea.vmem %s14, 2
        %v2171 = vld [vmem:[%s2170] sm:$0x3]
        %v2173 = vlaneseq
        %v2174 = vshrl.u32 %v2173, 7
        %v2175 = vsub.s32 0, %v2174
        %v2176 = vrot.slane %v2171, %v2175
        %v2177 = vlaneseq
        %v2178 = vshrl.u32 %v2177, 7
        %v2179 = vsub.s32 1, %v2178
        %v2180 = vrot.slane %v2171, %v2179
        %2183 = vmatprep.subr.mxu0 %v2107
        %2184 = vmatpush1.msra.mxu0 %v2106
        %2185 = vmatprep.subr.mxu0 %v2109
        %2186 = vmatpush1.msra.mxu0 %v2108
        %2187 = vmatprep.subr.mxu0 %v2111
        %2188 = vmatpush1.msra.mxu0 %v2110
        %2189 = vmatprep.subr.mxu0 %v2113
        %2190 = vmatpush1.msra.mxu0 %v2112
        %2191 = vmatprep.subr.mxu0 %v2115
        %2192 = vmatpush1.msra.mxu0 %v2114
        %2193 = vmatprep.subr.mxu0 %v2117
        %2194 = vmatpush1.msra.mxu0 %v2116
        %2195 = vmatprep.subr.mxu0 %v2119
        %2196 = vmatpush1.msra.mxu0 %v2118
        %2197 = vmatprep.subr.mxu0 %v2121
        %2198 = vmatpush1.msra.mxu0 %v2120
        %2199 = vmatprep.subr.mxu0 %v2123
        %2200 = vmatpush1.msra.mxu0 %v2122
        %2201 = vmatprep.subr.mxu0 %v2125
        %2202 = vmatpush1.msra.mxu0 %v2124
        %2203 = vmatprep.subr.mxu0 %v2127
        %2204 = vmatpush1.msra.mxu0 %v2126
        %2205 = vmatprep.subr.mxu0 %v2129
        %2206 = vmatpush1.msra.mxu0 %v2128
        %2207 = vmatprep.subr.mxu0 %v2131
        %2208 = vmatpush1.msra.mxu0 %v2130
        %2209 = vmatprep.subr.mxu0 %v2133
        %2210 = vmatpush1.msra.mxu0 %v2132
        %2211 = vmatprep.subr.mxu0 %v2135
        %2212 = vmatpush1.msra.mxu0 %v2134
        %2213 = vmatprep.subr.mxu0 %v2137
        %2214 = vmatpush1.msra.mxu0 %v2136
        %2215 = vmatprep.subr.mxu0 %v2139
        %2216 = vmatpush1.msra.mxu0 %v2138
        %2217 = vmatprep.subr.mxu0 %v2141
        %2218 = vmatpush1.msra.mxu0 %v2140
        %2219 = vmatprep.subr.mxu0 %v2143
        %2220 = vmatpush1.msra.mxu0 %v2142
        %2221 = vmatprep.subr.mxu0 %v2145
        %2222 = vmatpush1.msra.mxu0 %v2144
        %2223 = vmatprep.subr.mxu0 %v2147
        %2224 = vmatpush1.msra.mxu0 %v2146
        %2225 = vmatprep.subr.mxu0 %v2149
        %2226 = vmatpush1.msra.mxu0 %v2148
        %2227 = vmatprep.subr.mxu0 %v2151
        %2228 = vmatpush1.msra.mxu0 %v2150
        %2229 = vmatprep.subr.mxu0 %v2153
        %2230 = vmatpush1.msra.mxu0 %v2152
        %2231 = vmatprep.subr.mxu0 %v2155
        %2232 = vmatpush1.msra.mxu0 %v2154
        %2233 = vmatprep.subr.mxu0 %v2157
        %2234 = vmatpush1.msra.mxu0 %v2156
        %2235 = vmatprep.subr.mxu0 %v2159
        %2236 = vmatpush1.msra.mxu0 %v2158
        %2237 = vmatprep.subr.mxu0 %v2161
        %2238 = vmatpush1.msra.mxu0 %v2160
        %2239 = vmatprep.subr.mxu0 %v2163
        %2240 = vmatpush1.msra.mxu0 %v2162
        %2241 = vmatprep.subr.mxu0 %v2165
        %2242 = vmatpush1.msra.mxu0 %v2164
        %2243 = vmatprep.subr.mxu0 %v2167
        %2244 = vmatpush1.msra.mxu0 %v2166
        %2245 = vmatprep.subr.mxu0 %v2169
        %2246 = vmatpush1.msra.mxu0 %v2168
        %2247 = vmatprep.mubr.f32.mxu0 %v2104
        %2248 = vmatmul.mubr.f32.gmra.mrb[0].mxu0 %v2103
        %v2249 = vpop.f32.mrb[0].mxu0
        %v2250 = vadd.f32 %v2176, %v2249
        %v2251 = vpop.f32.mrb[0].mxu0
        %v2252 = vadd.f32 %v2180, %v2251
        %2253 = vdwg.mxu0
        %v2254 = vsub.f32 %v1984, %v2250
        %v2255 = vadd.f32 %v1985, %v2252
        %s2256 = scalar_lea.vmem [#allocation10], 512
        %v2257 = vld [vmem:[%s2256] sm:$0xff]
        %v2258 = vld [vmem:[%s2256 + $0x8] sm:$0xff]
        %v2259 = vld [vmem:[%s2256 + $0x10] sm:$0xff]
        %v2260 = vld [vmem:[%s2256 + $0x18] sm:$0xff]
        %v2261 = vld [vmem:[%s2256 + $0x20] sm:$0xff]
        %v2262 = vld [vmem:[%s2256 + $0x28] sm:$0xff]
        %v2263 = vld [vmem:[%s2256 + $0x30] sm:$0xff]
        %v2264 = vld [vmem:[%s2256 + $0x38] sm:$0xff]
        %v2265 = vld [vmem:[%s2256 + $0x40] sm:$0xff]
        %v2266 = vld [vmem:[%s2256 + $0x48] sm:$0xff]
        %v2267 = vld [vmem:[%s2256 + $0x50] sm:$0xff]
        %v2268 = vld [vmem:[%s2256 + $0x58] sm:$0xff]
        %v2269 = vld [vmem:[%s2256 + $0x60] sm:$0xff]
        %v2270 = vld [vmem:[%s2256 + $0x68] sm:$0xff]
        %v2271 = vld [vmem:[%s2256 + $0x70] sm:$0xff]
        %v2272 = vld [vmem:[%s2256 + $0x78] sm:$0xff]
        %v2273 = vld [vmem:[%s2256 + $0x80] sm:$0xff]
        %v2274 = vld [vmem:[%s2256 + $0x88] sm:$0xff]
        %v2275 = vld [vmem:[%s2256 + $0x90] sm:$0xff]
        %v2276 = vld [vmem:[%s2256 + $0x98] sm:$0xff]
        %v2277 = vld [vmem:[%s2256 + $0xa0] sm:$0xff]
        %v2278 = vld [vmem:[%s2256 + $0xa8] sm:$0xff]
        %v2279 = vld [vmem:[%s2256 + $0xb0] sm:$0xff]
        %v2280 = vld [vmem:[%s2256 + $0xb8] sm:$0xff]
        %v2281 = vld [vmem:[%s2256 + $0xc0] sm:$0xff]
        %v2282 = vld [vmem:[%s2256 + $0xc8] sm:$0xff]
        %v2283 = vld [vmem:[%s2256 + $0xd0] sm:$0xff]
        %v2284 = vld [vmem:[%s2256 + $0xd8] sm:$0xff]
        %v2285 = vld [vmem:[%s2256 + $0xe0] sm:$0xff]
        %v2286 = vld [vmem:[%s2256 + $0xe8] sm:$0xff]
        %v2287 = vld [vmem:[%s2256 + $0xf0] sm:$0xff]
        %v2288 = vld [vmem:[%s2256 + $0xf8] sm:$0xff]
        %s2289 = scalar_lea.vmem %s12, 4
        %v2290 = vld [vmem:[%s2289] sm:$0x3]
        %v2292 = vlaneseq
        %v2293 = vshrl.u32 %v2292, 7
        %v2294 = vsub.s32 0, %v2293
        %v2295 = vrot.slane %v2290, %v2294
        %v2296 = vlaneseq
        %v2297 = vshrl.u32 %v2296, 7
        %v2298 = vsub.s32 1, %v2297
        %v2299 = vrot.slane %v2290, %v2298
        %2302 = vmatprep.subr.mxu0 %v2258
        %2303 = vmatpush1.msra.mxu0 %v2257
        %2304 = vmatprep.subr.mxu0 %v2260
        %2305 = vmatpush1.msra.mxu0 %v2259
        %2306 = vmatprep.subr.mxu0 %v2262
        %2307 = vmatpush1.msra.mxu0 %v2261
        %2308 = vmatprep.subr.mxu0 %v2264
        %2309 = vmatpush1.msra.mxu0 %v2263
        %2310 = vmatprep.subr.mxu0 %v2266
        %2311 = vmatpush1.msra.mxu0 %v2265
        %2312 = vmatprep.subr.mxu0 %v2268
        %2313 = vmatpush1.msra.mxu0 %v2267
        %2314 = vmatprep.subr.mxu0 %v2270
        %2315 = vmatpush1.msra.mxu0 %v2269
        %2316 = vmatprep.subr.mxu0 %v2272
        %2317 = vmatpush1.msra.mxu0 %v2271
        %2318 = vmatprep.subr.mxu0 %v2274
        %2319 = vmatpush1.msra.mxu0 %v2273
        %2320 = vmatprep.subr.mxu0 %v2276
        %2321 = vmatpush1.msra.mxu0 %v2275
        %2322 = vmatprep.subr.mxu0 %v2278
        %2323 = vmatpush1.msra.mxu0 %v2277
        %2324 = vmatprep.subr.mxu0 %v2280
        %2325 = vmatpush1.msra.mxu0 %v2279
        %2326 = vmatprep.subr.mxu0 %v2282
        %2327 = vmatpush1.msra.mxu0 %v2281
        %2328 = vmatprep.subr.mxu0 %v2284
        %2329 = vmatpush1.msra.mxu0 %v2283
        %2330 = vmatprep.subr.mxu0 %v2286
        %2331 = vmatpush1.msra.mxu0 %v2285
        %2332 = vmatprep.subr.mxu0 %v2288
        %2333 = vmatpush1.msra.mxu0 %v2287
        %2334 = vmatprep.subr.mxu0 0.0
        %2335 = vmatpush1.msra.mxu0 0.0
        %2336 = vmatprep.subr.mxu0 0.0
        %2337 = vmatpush1.msra.mxu0 0.0
        %2338 = vmatprep.subr.mxu0 0.0
        %2339 = vmatpush1.msra.mxu0 0.0
        %2340 = vmatprep.subr.mxu0 0.0
        %2341 = vmatpush1.msra.mxu0 0.0
        %2342 = vmatprep.subr.mxu0 0.0
        %2343 = vmatpush1.msra.mxu0 0.0
        %2344 = vmatprep.subr.mxu0 0.0
        %2345 = vmatpush1.msra.mxu0 0.0
        %2346 = vmatprep.subr.mxu0 0.0
        %2347 = vmatpush1.msra.mxu0 0.0
        %2348 = vmatprep.subr.mxu0 0.0
        %2349 = vmatpush1.msra.mxu0 0.0
        %2350 = vmatprep.subr.mxu0 0.0
        %2351 = vmatpush1.msra.mxu0 0.0
        %2352 = vmatprep.subr.mxu0 0.0
        %2353 = vmatpush1.msra.mxu0 0.0
        %2354 = vmatprep.subr.mxu0 0.0
        %2355 = vmatpush1.msra.mxu0 0.0
        %2356 = vmatprep.subr.mxu0 0.0
        %2357 = vmatpush1.msra.mxu0 0.0
        %2358 = vmatprep.subr.mxu0 0.0
        %2359 = vmatpush1.msra.mxu0 0.0
        %2360 = vmatprep.subr.mxu0 0.0
        %2361 = vmatpush1.msra.mxu0 0.0
        %2362 = vmatprep.subr.mxu0 0.0
        %2363 = vmatpush1.msra.mxu0 0.0
        %2364 = vmatprep.subr.mxu0 0.0
        %2365 = vmatpush1.msra.mxu0 0.0
        %2366 = vmatprep.mubr.f32.mxu0 0.0
        %2367 = vmatmul.mubr.f32.gmra.mrb[0].mxu0 %v2254
        %v2368 = vpop.f32.mrb[0].mxu0
        %v2369 = vadd.f32 %v2295, %v2368
        %v2370 = vpop.f32.mrb[0].mxu0
        %v2371 = vadd.f32 %v2299, %v2370
        %2372 = vdwg.mxu0
        %v2373 = vmax.f32 %v2369, 0.0
        %v2374 = vmax.f32 %v2371, 0.0
        %s2375 = scalar_lea.vmem [#allocation11], 1024
        %v2376 = vld [vmem:[%s2375] sm:$0xff]
        %v2377 = vld [vmem:[%s2375 + $0x8] sm:$0xff]
        %v2378 = vld [vmem:[%s2375 + $0x10] sm:$0xff]
        %v2379 = vld [vmem:[%s2375 + $0x18] sm:$0xff]
        %v2380 = vld [vmem:[%s2375 + $0x20] sm:$0xff]
        %v2381 = vld [vmem:[%s2375 + $0x28] sm:$0xff]
        %v2382 = vld [vmem:[%s2375 + $0x30] sm:$0xff]
        %v2383 = vld [vmem:[%s2375 + $0x38] sm:$0xff]
        %v2384 = vld [vmem:[%s2375 + $0x40] sm:$0xff]
        %v2385 = vld [vmem:[%s2375 + $0x48] sm:$0xff]
        %v2386 = vld [vmem:[%s2375 + $0x50] sm:$0xff]
        %v2387 = vld [vmem:[%s2375 + $0x58] sm:$0xff]
        %v2388 = vld [vmem:[%s2375 + $0x60] sm:$0xff]
        %v2389 = vld [vmem:[%s2375 + $0x68] sm:$0xff]
        %v2390 = vld [vmem:[%s2375 + $0x70] sm:$0xff]
        %v2391 = vld [vmem:[%s2375 + $0x78] sm:$0xff]
        %v2392 = vld [vmem:[%s2375 + $0x80] sm:$0xff]
        %v2393 = vld [vmem:[%s2375 + $0x88] sm:$0xff]
        %v2394 = vld [vmem:[%s2375 + $0x90] sm:$0xff]
        %v2395 = vld [vmem:[%s2375 + $0x98] sm:$0xff]
        %v2396 = vld [vmem:[%s2375 + $0xa0] sm:$0xff]
        %v2397 = vld [vmem:[%s2375 + $0xa8] sm:$0xff]
        %v2398 = vld [vmem:[%s2375 + $0xb0] sm:$0xff]
        %v2399 = vld [vmem:[%s2375 + $0xb8] sm:$0xff]
        %v2400 = vld [vmem:[%s2375 + $0xc0] sm:$0xff]
        %v2401 = vld [vmem:[%s2375 + $0xc8] sm:$0xff]
        %v2402 = vld [vmem:[%s2375 + $0xd0] sm:$0xff]
        %v2403 = vld [vmem:[%s2375 + $0xd8] sm:$0xff]
        %v2404 = vld [vmem:[%s2375 + $0xe0] sm:$0xff]
        %v2405 = vld [vmem:[%s2375 + $0xe8] sm:$0xff]
        %v2406 = vld [vmem:[%s2375 + $0xf0] sm:$0xff]
        %v2407 = vld [vmem:[%s2375 + $0xf8] sm:$0xff]
        %v2408 = vld [vmem:[%s2375 + $0x100] sm:$0xff]
        %v2409 = vld [vmem:[%s2375 + $0x108] sm:$0xff]
        %v2410 = vld [vmem:[%s2375 + $0x110] sm:$0xff]
        %v2411 = vld [vmem:[%s2375 + $0x118] sm:$0xff]
        %v2412 = vld [vmem:[%s2375 + $0x120] sm:$0xff]
        %v2413 = vld [vmem:[%s2375 + $0x128] sm:$0xff]
        %v2414 = vld [vmem:[%s2375 + $0x130] sm:$0xff]
        %v2415 = vld [vmem:[%s2375 + $0x138] sm:$0xff]
        %v2416 = vld [vmem:[%s2375 + $0x140] sm:$0xff]
        %v2417 = vld [vmem:[%s2375 + $0x148] sm:$0xff]
        %v2418 = vld [vmem:[%s2375 + $0x150] sm:$0xff]
        %v2419 = vld [vmem:[%s2375 + $0x158] sm:$0xff]
        %v2420 = vld [vmem:[%s2375 + $0x160] sm:$0xff]
        %v2421 = vld [vmem:[%s2375 + $0x168] sm:$0xff]
        %v2422 = vld [vmem:[%s2375 + $0x170] sm:$0xff]
        %v2423 = vld [vmem:[%s2375 + $0x178] sm:$0xff]
        %v2424 = vld [vmem:[%s2375 + $0x180] sm:$0xff]
        %v2425 = vld [vmem:[%s2375 + $0x188] sm:$0xff]
        %v2426 = vld [vmem:[%s2375 + $0x190] sm:$0xff]
        %v2427 = vld [vmem:[%s2375 + $0x198] sm:$0xff]
        %v2428 = vld [vmem:[%s2375 + $0x1a0] sm:$0xff]
        %v2429 = vld [vmem:[%s2375 + $0x1a8] sm:$0xff]
        %v2430 = vld [vmem:[%s2375 + $0x1b0] sm:$0xff]
        %v2431 = vld [vmem:[%s2375 + $0x1b8] sm:$0xff]
        %v2432 = vld [vmem:[%s2375 + $0x1c0] sm:$0xff]
        %v2433 = vld [vmem:[%s2375 + $0x1c8] sm:$0xff]
        %v2434 = vld [vmem:[%s2375 + $0x1d0] sm:$0xff]
        %v2435 = vld [vmem:[%s2375 + $0x1d8] sm:$0xff]
        %v2436 = vld [vmem:[%s2375 + $0x1e0] sm:$0xff]
        %v2437 = vld [vmem:[%s2375 + $0x1e8] sm:$0xff]
        %v2438 = vld [vmem:[%s2375 + $0x1f0] sm:$0xff]
        %v2439 = vld [vmem:[%s2375 + $0x1f8] sm:$0xff]
        %s2440 = scalar_lea.vmem %s14, 4
        %v2441 = vld [vmem:[%s2440] sm:$0x3]
        %v2443 = vlaneseq
        %v2444 = vshrl.u32 %v2443, 7
        %v2445 = vsub.s32 1, %v2444
        %v2446 = vrot.slane %v2441, %v2445
        %2448 = vmatprep.subr.mxu0 %v2377
        %2449 = vmatpush1.msra.mxu0 %v2376
        %2450 = vmatprep.subr.mxu0 %v2379
        %2451 = vmatpush1.msra.mxu0 %v2378
        %2452 = vmatprep.subr.mxu0 %v2381
        %2453 = vmatpush1.msra.mxu0 %v2380
        %2454 = vmatprep.subr.mxu0 %v2383
        %2455 = vmatpush1.msra.mxu0 %v2382
        %2456 = vmatprep.subr.mxu0 %v2385
        %2457 = vmatpush1.msra.mxu0 %v2384
        %2458 = vmatprep.subr.mxu0 %v2387
        %2459 = vmatpush1.msra.mxu0 %v2386
        %2460 = vmatprep.subr.mxu0 %v2389
        %2461 = vmatpush1.msra.mxu0 %v2388
        %2462 = vmatprep.subr.mxu0 %v2391
        %2463 = vmatpush1.msra.mxu0 %v2390
        %2464 = vmatprep.subr.mxu0 %v2393
        %2465 = vmatpush1.msra.mxu0 %v2392
        %2466 = vmatprep.subr.mxu0 %v2395
        %2467 = vmatpush1.msra.mxu0 %v2394
        %2468 = vmatprep.subr.mxu0 %v2397
        %2469 = vmatpush1.msra.mxu0 %v2396
        %2470 = vmatprep.subr.mxu0 %v2399
        %2471 = vmatpush1.msra.mxu0 %v2398
        %2472 = vmatprep.subr.mxu0 %v2401
        %2473 = vmatpush1.msra.mxu0 %v2400
        %2474 = vmatprep.subr.mxu0 %v2403
        %2475 = vmatpush1.msra.mxu0 %v2402
        %2476 = vmatprep.subr.mxu0 %v2405
        %2477 = vmatpush1.msra.mxu0 %v2404
        %2478 = vmatprep.subr.mxu0 %v2407
        %2479 = vmatpush1.msra.mxu0 %v2406
        %2480 = vmatprep.subr.mxu0 %v2409
        %2481 = vmatpush1.msra.mxu0 %v2408
        %2482 = vmatprep.subr.mxu0 %v2411
        %2483 = vmatpush1.msra.mxu0 %v2410
        %2484 = vmatprep.subr.mxu0 %v2413
        %2485 = vmatpush1.msra.mxu0 %v2412
        %2486 = vmatprep.subr.mxu0 %v2415
        %2487 = vmatpush1.msra.mxu0 %v2414
        %2488 = vmatprep.subr.mxu0 %v2417
        %2489 = vmatpush1.msra.mxu0 %v2416
        %2490 = vmatprep.subr.mxu0 %v2419
        %2491 = vmatpush1.msra.mxu0 %v2418
        %2492 = vmatprep.subr.mxu0 %v2421
        %2493 = vmatpush1.msra.mxu0 %v2420
        %2494 = vmatprep.subr.mxu0 %v2423
        %2495 = vmatpush1.msra.mxu0 %v2422
        %2496 = vmatprep.subr.mxu0 %v2425
        %2497 = vmatpush1.msra.mxu0 %v2424
        %2498 = vmatprep.subr.mxu0 %v2427
        %2499 = vmatpush1.msra.mxu0 %v2426
        %2500 = vmatprep.subr.mxu0 %v2429
        %2501 = vmatpush1.msra.mxu0 %v2428
        %2502 = vmatprep.subr.mxu0 %v2431
        %2503 = vmatpush1.msra.mxu0 %v2430
        %2504 = vmatprep.subr.mxu0 %v2433
        %2505 = vmatpush1.msra.mxu0 %v2432
        %2506 = vmatprep.subr.mxu0 %v2435
        %2507 = vmatpush1.msra.mxu0 %v2434
        %2508 = vmatprep.subr.mxu0 %v2437
        %2509 = vmatpush1.msra.mxu0 %v2436
        %2510 = vmatprep.subr.mxu0 %v2439
        %2511 = vmatpush1.msra.mxu0 %v2438
        %2512 = vmatprep.mubr.f32.mxu0 %v2374
        %2513 = vmatmul.mubr.f32.gmra.mrb[0].mxu0 %v2373
        %v2514 = vpop.f32.mrb[0].mxu0
        %v2515 = vpop.f32.mrb[0].mxu0
        %v2516 = vadd.f32 %v2446, %v2515
        %2517 = vdwg.mxu0
        %v2518 = vadd.f32 %v2255, %v2516
        %2519 = vst [vmem:[%s573] sm:$0xff] %v2518
        %s2520 = sand.u32 %s361, 1
        %s2521 = scalar_lea.sflag [#allocation4], %s2520
        %s2522 = sand.u32 %s361, 1
        %s2523 = smul.addr %s2522, 8
        %s2524 = scalar_lea.vmem [#allocation13], %s2523
        // Predicated region
        $region105: #{tpu_custom_call.1} parent=79 // pred_check
          %p2525 = pneg %p371
        $region106: #{tpu_custom_call.1} parent=79 // pred_check_branch
          %2527 = sbr.rel (%p2525) target = $region108
        $region107: #{tpu_custom_call.1} parent=79 // pred_region
          %s2529 = ssub.s32 128, 128
          %2530 = vsyncadd %s2521, %s2529
          %s2531 = smul.addr %s33, 128
          %s2532 = scalar_lea.hbm %s15, %s2531
          %s2534 = sshll.u32 %s2524, 4
          %s2535 = int_to_ptr.vmem [resolvable:$true] %s2534
          %2537 = dma.vmem_to_hbm [thread:$0]  %s2535, 128, %s2532, %s2521
        $region108: #{tpu_custom_call.1} parent=79 // pred_fallthru
          _
      $region80: #{tpu_custom_call.1} parent=5 // pred_fallthru
        _
      %p2538 = scmp.le.s32.totalorder 2, %s28
      // Predicated region
      $region109: #{tpu_custom_call.1} parent=5 // pred_check
        %p2539 = pneg %p2538
      $region110: #{tpu_custom_call.1} parent=5 // pred_check_branch
        %2541 = sbr.rel (%p2539) target = $region112
      $region111: #{tpu_custom_call.1} parent=5 // pred_region
        %s2542 = ssub.s32 %s28, 2
        // Predicated region
        $region113: #{tpu_custom_call.1} parent=111 // pred_check
          %p2543 = pneg %p377
        $region114: #{tpu_custom_call.1} parent=111 // pred_check_branch
          %2545 = sbr.rel (%p2543) target = $region116
        $region115: #{tpu_custom_call.1} parent=111 // pred_region
          %s2546 = sand.u32 %s362, 1
          %s2547 = scalar_lea.sflag [#allocation4], %s2546
          %s2548 = sand.u32 %s362, 1
          %s2549 = smul.addr %s2548, 8
          %s2550 = scalar_lea.vmem [#allocation13], %s2549
          %2551 = dma.done %s2547, 128
        $region116: #{tpu_custom_call.1} parent=111 // pred_fallthru
          _
      $region112: #{tpu_custom_call.1} parent=5 // pred_fallthru
        _
    $region6: #{tpu_custom_call.1} parent=1 // loop_footer
      %s32 = sadd.s32 1, %s28
    $region7: #{tpu_custom_call.1} parent=1 // loop_footer_branch
      %27 = sbr.rel target = $region3
    $region8: #{tpu_custom_call.1} parent=1 // loop_exit
      _
    %2552 = vsyncpa [#allocation3], 1
    %s2553 = scalar_lea.sflag [#allocation3], 1
    %2554 = vsyncpa %s2553, 1
    %2555 = vsyncpa [#allocation6], 1
    %2556 = vsyncpa [#allocation9], 1
    %2557 = vsyncpa [#allocation12], 1
    %2558 = vsyncpa [#allocation4], 1
    %s2559 = scalar_lea.sflag [#allocation4], 1
    %2560 = vsyncpa %s2559, 1

</llo_original>
